<compile_context>
chip_gen: v7x
topology: tpu7x:2x2x1
jax: 0.10.0
libtpu: 0.0.40
codegen_flags: <defaults>
</compile_context>

<pallas_src>
import jax
import jax.numpy as jnp
from jax.experimental import pallas as pl
from jax.experimental.pallas import tpu as pltpu


def _basic_block_kernel(xp_ref, w1_ref, b1_ref, w2_ref, b2_ref, o_ref, mid_ref):
    """One batch element per grid step (fully fused BasicBlock).

    xp_ref : (1, H+2, W+2, C)  zero-padded input tile (VMEM)
    w1_ref : (9, C, C)         conv1 weight, tap-major, BN1 scale pre-folded
    b1_ref : (1, C)            BN1 shift (beta - mean*scale)
    w2_ref : (9, C, C)         conv2 weight, tap-major, BN2 scale pre-folded
    b2_ref : (1, C)            BN2 shift
    o_ref  : (1, H, W, C)      output tile
    mid_ref: (H+2, W+2, C) f32 VMEM scratch holding the padded intermediate
                               relu(bn1(conv1(x))) -- never touches HBM.
    """
    _, h, w, cout = o_ref.shape

    xp = xp_ref[0].astype(jnp.float32)  # (H+2, W+2, C)

    def conv3x3(a, w_ref):
        # 3x3 "SAME" conv on a zero-padded (H+2, W+2, C) tile, expressed as
        # 9 shifted [H*W, C] x [C, C] MXU matmuls accumulated in f32.
        acc = jnp.zeros((h * w, cout), jnp.float32)
        for dy in range(3):
            for dx in range(3):
                patch = a[dy:dy + h, dx:dx + w, :].reshape(h * w, -1)
                acc = acc + jnp.dot(
                    patch, w_ref[dy * 3 + dx],
                    preferred_element_type=jnp.float32)
        return acc

    # ---- conv1 -> bn1 (scale folded into w1, only shift here) -> relu ------
    out1 = jnp.maximum(conv3x3(xp, w1_ref) + b1_ref[0], 0.0)  # (H*W, C)

    # Keep the padded intermediate resident in VMEM: zero halo + interior
    # write.  (Zeroed every step so it is correct under multi-core "parallel"
    # sharding of the batch axis.)
    mid_ref[...] = jnp.zeros_like(mid_ref)
    mid_ref[1:h + 1, 1:w + 1, :] = out1.reshape(h, w, cout)

    # ---- conv2 -> bn2 -> + residual -> relu --------------------------------
    out2 = conv3x3(mid_ref[...], w2_ref) + b2_ref[0]
    # residual = interior of the already-loaded padded input (no extra DMA)
    out2 = out2 + xp[1:h + 1, 1:w + 1, :].reshape(h * w, cout)
    o_ref[0] = jnp.maximum(out2, 0.0).reshape(h, w, cout).astype(o_ref.dtype)


def _fold_conv_bn(w_oihw, gamma, beta, mean, var, eps=1e-5):
    """Fold eval-mode BN into the conv weight (scale) and a per-channel shift.

    Returns:
      w9   : (9, Cin, Cout)  tap-major conv weight with BN scale folded in
      shift: (1, Cout)       BN shift to add after the matmul accumulation
    """
    scale = gamma * jax.lax.rsqrt(var + eps)            # (Cout,)
    shift = beta - mean * scale                         # (Cout,)
    cout, cin = w_oihw.shape[0], w_oihw.shape[1]
    # (Cout, Cin, 3, 3) -> (3, 3, Cin, Cout) -> (9, Cin, Cout)
    w9 = jnp.transpose(w_oihw, (2, 3, 1, 0)).reshape(9, cin, cout)
    w9 = w9 * scale[None, None, :]
    return w9.astype(jnp.float32), shift[None, :].astype(jnp.float32)


def basic_block_forward(x_nchw, params, eps=1e-5):
    """BasicBlock.forward (stride=1, downsample=None). Input/output NCHW."""
    x = jnp.transpose(x_nchw, (0, 2, 3, 1))             # -> NHWC
    b, h, w, c = x.shape

    w1, s1 = _fold_conv_bn(params["conv1_w"], params["bn1_gamma"],
                           params["bn1_beta"], params["bn1_mean"],
                           params["bn1_var"], eps)
    w2, s2 = _fold_conv_bn(params["conv2_w"], params["bn2_gamma"],
                           params["bn2_beta"], params["bn2_mean"],
                           params["bn2_var"], eps)
    cout = w1.shape[-1]
    assert cout == c, "fused kernel assumes inplanes == planes (no downsample)"

    # Single SAME-padding of the input; the intermediate between the two convs
    # is never padded/written in HBM (it stays in VMEM scratch).
    xp = jnp.pad(x, ((0, 0), (1, 1), (1, 1), (0, 0)))

    out = pl.pallas_call(
        _basic_block_kernel,
        out_shape=jax.ShapeDtypeStruct((b, h, w, cout), x.dtype),
        grid_spec=pltpu.PrefetchScalarGridSpec(
            num_scalar_prefetch=0,
            grid=(b,),
            in_specs=[
                pl.BlockSpec((1, h + 2, w + 2, c), lambda i: (i, 0, 0, 0)),
                pl.BlockSpec((9, c, cout), lambda i: (0, 0, 0)),
                pl.BlockSpec((1, cout), lambda i: (0, 0)),
                pl.BlockSpec((9, cout, cout), lambda i: (0, 0, 0)),
                pl.BlockSpec((1, cout), lambda i: (0, 0)),
            ],
            out_specs=pl.BlockSpec((1, h, w, cout), lambda i: (i, 0, 0, 0)),
            scratch_shapes=[pltpu.VMEM((h + 2, w + 2, cout), jnp.float32)],
        ),
        compiler_params=pltpu.CompilerParams(
            dimension_semantics=("parallel",),
        ),
    )(xp, w1, s1, w2, s2)

    return jnp.transpose(out, (0, 3, 1, 2))             # -> NCHW


def _reference_basic_block(x_nchw, params, eps=1e-5):
    """Pure-JAX (lax.conv) reference for correctness checking."""
    def conv(x, w):
        return jax.lax.conv_general_dilated(
            x, w, window_strides=(1, 1), padding=((1, 1), (1, 1)),
            dimension_numbers=("NCHW", "OIHW", "NCHW"))

    def bn(x, g, b, m, v):
        g, b, m, v = (a[None, :, None, None] for a in (g, b, m, v))
        return (x - m) / jnp.sqrt(v + eps) * g + b

    out = conv(x_nchw, params["conv1_w"])
    out = bn(out, params["bn1_gamma"], params["bn1_beta"],
             params["bn1_mean"], params["bn1_var"])
    out = jnp.maximum(out, 0.0)
    out = conv(out, params["conv2_w"])
    out = bn(out, params["bn2_gamma"], params["bn2_beta"],
             params["bn2_mean"], params["bn2_var"])
    out = out + x_nchw
    return jnp.maximum(out, 0.0)


if __name__ == "__main__":
    key = jax.random.PRNGKey(0)
    B, C, H, W = 2, 4, 16, 16      # inplanes = planes = 4, stride = 1
    ks = jax.random.split(key, 10)

    x = jax.random.normal(ks[0], (B, C, H, W), jnp.float32)
    params = {
        "conv1_w": jax.random.normal(ks[1], (C, C, 3, 3), jnp.float32) * 0.1,
        "conv2_w": jax.random.normal(ks[2], (C, C, 3, 3), jnp.float32) * 0.1,
        "bn1_gamma": 1.0 + 0.1 * jax.random.normal(ks[3], (C,), jnp.float32),
        "bn1_beta": 0.1 * jax.random.normal(ks[4], (C,), jnp.float32),
        "bn1_mean": 0.05 * jax.random.normal(ks[5], (C,), jnp.float32),
        "bn1_var": jnp.abs(1.0 + 0.1 * jax.random.normal(ks[6], (C,), jnp.float32)),
        "bn2_gamma": 1.0 + 0.1 * jax.random.normal(ks[7], (C,), jnp.float32),
        "bn2_beta": 0.1 * jax.random.normal(ks[8], (C,), jnp.float32),
        "bn2_mean": 0.05 * jax.random.normal(ks[9], (C,), jnp.float32),
        "bn2_var": jnp.ones((C,), jnp.float32),
    }

    out = jax.block_until_ready(basic_block_forward(x, params))
    ref = jax.block_until_ready(_reference_basic_block(x, params))

    assert out.shape == (B, C, H, W)
    assert jnp.allclose(out, ref, atol=1e-4, rtol=1e-4), "mismatch vs reference"
    print("KERNEL_OK")
</pallas_src>

<mosaic_0001>
module attributes {stable_mosaic.version = 11 : i64} {
  func.func @_basic_block_kernel(%arg0: i32, %arg1: memref<1x18x18x4xf32, #tpu.memory_space<vmem>>, %arg2: memref<9x4x4xf32, #tpu.memory_space<vmem>>, %arg3: memref<1x4xf32, #tpu.memory_space<vmem>>, %arg4: memref<9x4x4xf32, #tpu.memory_space<vmem>>, %arg5: memref<1x4xf32, #tpu.memory_space<vmem>>, %arg6: memref<1x16x16x4xf32, #tpu.memory_space<vmem>>, %arg7: memref<18x18x4xf32, #tpu.memory_space<vmem>>) attributes {dimension_semantics = [#tpu.dimension_semantics<parallel>], iteration_bounds = array<i64: 2>, scalar_prefetch = 0 : i64, scratch_operands = 1 : i64, tpu.core_type = #tpu.core_type<tc>, window_params = [{transform_indices = @transform_0, window_bounds = array<i64: 1, 18, 18, 4>}, {pipeline_mode = #tpu.pipeline_mode<synchronous>, transform_indices = @transform_1, window_bounds = array<i64: 9, 4, 4>}, {pipeline_mode = #tpu.pipeline_mode<synchronous>, transform_indices = @transform_2, window_bounds = array<i64: 1, 4>}, {pipeline_mode = #tpu.pipeline_mode<synchronous>, transform_indices = @transform_3, window_bounds = array<i64: 9, 4, 4>}, {pipeline_mode = #tpu.pipeline_mode<synchronous>, transform_indices = @transform_4, window_bounds = array<i64: 1, 4>}, {transform_indices = @transform_5, window_bounds = array<i64: 1, 16, 16, 4>}]} {
    %c0 = arith.constant 0 : index
    %c0_0 = arith.constant 0 : index
    %c0_1 = arith.constant 0 : index
    %c0_2 = arith.constant 0 : index
    %0 = vector.load %arg1[%c0, %c0_0, %c0_1, %c0_2] : memref<1x18x18x4xf32, #tpu.memory_space<vmem>>, vector<1x18x18x4xf32>
    %1 = vector.shape_cast %0 : vector<1x18x18x4xf32> to vector<18x18x4xf32>
    %cst = arith.constant 0.000000e+00 : f32
    %2 = vector.broadcast %cst : f32 to vector<256x4xf32>
    %3 = vector.extract_strided_slice %1 {offsets = [0, 0, 0], sizes = [16, 16, 4], strides = [1, 1, 1]} : vector<18x18x4xf32> to vector<16x16x4xf32>
    %4 = vector.shape_cast %3 : vector<16x16x4xf32> to vector<256x4xf32>
    %c0_3 = arith.constant 0 : index
    %c0_4 = arith.constant 0 : index
    %c0_5 = arith.constant 0 : index
    %5 = vector.load %arg2[%c0_3, %c0_4, %c0_5] : memref<9x4x4xf32, #tpu.memory_space<vmem>>, vector<1x4x4xf32>
    %6 = vector.shape_cast %5 : vector<1x4x4xf32> to vector<4x4xf32>
    %cst_6 = arith.constant dense<0.000000e+00> : vector<256x4xf32>
    %7 = tpu.matmul %4, %6, %cst_6 {dimension_numbers = #tpu.dot_dimension_numbers<[1], [0], [0], [1], [0, 0, 1, 1], [], []>} : vector<256x4xf32>, vector<4x4xf32>, vector<256x4xf32> -> vector<256x4xf32>
    %8 = arith.addf %2, %7 : vector<256x4xf32>
    %9 = vector.extract_strided_slice %1 {offsets = [0, 1, 0], sizes = [16, 16, 4], strides = [1, 1, 1]} : vector<18x18x4xf32> to vector<16x16x4xf32>
    %10 = vector.shape_cast %9 : vector<16x16x4xf32> to vector<256x4xf32>
    %c1 = arith.constant 1 : index
    %c0_7 = arith.constant 0 : index
    %c0_8 = arith.constant 0 : index
    %11 = vector.load %arg2[%c1, %c0_7, %c0_8] : memref<9x4x4xf32, #tpu.memory_space<vmem>>, vector<1x4x4xf32>
    %12 = vector.shape_cast %11 : vector<1x4x4xf32> to vector<4x4xf32>
    %cst_9 = arith.constant dense<0.000000e+00> : vector<256x4xf32>
    %13 = tpu.matmul %10, %12, %cst_9 {dimension_numbers = #tpu.dot_dimension_numbers<[1], [0], [0], [1], [0, 0, 1, 1], [], []>} : vector<256x4xf32>, vector<4x4xf32>, vector<256x4xf32> -> vector<256x4xf32>
    %14 = arith.addf %8, %13 : vector<256x4xf32>
    %15 = vector.extract_strided_slice %1 {offsets = [0, 2, 0], sizes = [16, 16, 4], strides = [1, 1, 1]} : vector<18x18x4xf32> to vector<16x16x4xf32>
    %16 = vector.shape_cast %15 : vector<16x16x4xf32> to vector<256x4xf32>
    %c2 = arith.constant 2 : index
    %c0_10 = arith.constant 0 : index
    %c0_11 = arith.constant 0 : index
    %17 = vector.load %arg2[%c2, %c0_10, %c0_11] : memref<9x4x4xf32, #tpu.memory_space<vmem>>, vector<1x4x4xf32>
    %18 = vector.shape_cast %17 : vector<1x4x4xf32> to vector<4x4xf32>
    %cst_12 = arith.constant dense<0.000000e+00> : vector<256x4xf32>
    %19 = tpu.matmul %16, %18, %cst_12 {dimension_numbers = #tpu.dot_dimension_numbers<[1], [0], [0], [1], [0, 0, 1, 1], [], []>} : vector<256x4xf32>, vector<4x4xf32>, vector<256x4xf32> -> vector<256x4xf32>
    %20 = arith.addf %14, %19 : vector<256x4xf32>
    %21 = vector.extract_strided_slice %1 {offsets = [1, 0, 0], sizes = [16, 16, 4], strides = [1, 1, 1]} : vector<18x18x4xf32> to vector<16x16x4xf32>
    %22 = vector.shape_cast %21 : vector<16x16x4xf32> to vector<256x4xf32>
    %c3 = arith.constant 3 : index
    %c0_13 = arith.constant 0 : index
    %c0_14 = arith.constant 0 : index
    %23 = vector.load %arg2[%c3, %c0_13, %c0_14] : memref<9x4x4xf32, #tpu.memory_space<vmem>>, vector<1x4x4xf32>
    %24 = vector.shape_cast %23 : vector<1x4x4xf32> to vector<4x4xf32>
    %cst_15 = arith.constant dense<0.000000e+00> : vector<256x4xf32>
    %25 = tpu.matmul %22, %24, %cst_15 {dimension_numbers = #tpu.dot_dimension_numbers<[1], [0], [0], [1], [0, 0, 1, 1], [], []>} : vector<256x4xf32>, vector<4x4xf32>, vector<256x4xf32> -> vector<256x4xf32>
    %26 = arith.addf %20, %25 : vector<256x4xf32>
    %27 = vector.extract_strided_slice %1 {offsets = [1, 1, 0], sizes = [16, 16, 4], strides = [1, 1, 1]} : vector<18x18x4xf32> to vector<16x16x4xf32>
    %28 = vector.shape_cast %27 : vector<16x16x4xf32> to vector<256x4xf32>
    %c4 = arith.constant 4 : index
    %c0_16 = arith.constant 0 : index
    %c0_17 = arith.constant 0 : index
    %29 = vector.load %arg2[%c4, %c0_16, %c0_17] : memref<9x4x4xf32, #tpu.memory_space<vmem>>, vector<1x4x4xf32>
    %30 = vector.shape_cast %29 : vector<1x4x4xf32> to vector<4x4xf32>
    %cst_18 = arith.constant dense<0.000000e+00> : vector<256x4xf32>
    %31 = tpu.matmul %28, %30, %cst_18 {dimension_numbers = #tpu.dot_dimension_numbers<[1], [0], [0], [1], [0, 0, 1, 1], [], []>} : vector<256x4xf32>, vector<4x4xf32>, vector<256x4xf32> -> vector<256x4xf32>
    %32 = arith.addf %26, %31 : vector<256x4xf32>
    %33 = vector.extract_strided_slice %1 {offsets = [1, 2, 0], sizes = [16, 16, 4], strides = [1, 1, 1]} : vector<18x18x4xf32> to vector<16x16x4xf32>
    %34 = vector.shape_cast %33 : vector<16x16x4xf32> to vector<256x4xf32>
    %c5 = arith.constant 5 : index
    %c0_19 = arith.constant 0 : index
    %c0_20 = arith.constant 0 : index
    %35 = vector.load %arg2[%c5, %c0_19, %c0_20] : memref<9x4x4xf32, #tpu.memory_space<vmem>>, vector<1x4x4xf32>
    %36 = vector.shape_cast %35 : vector<1x4x4xf32> to vector<4x4xf32>
    %cst_21 = arith.constant dense<0.000000e+00> : vector<256x4xf32>
    %37 = tpu.matmul %34, %36, %cst_21 {dimension_numbers = #tpu.dot_dimension_numbers<[1], [0], [0], [1], [0, 0, 1, 1], [], []>} : vector<256x4xf32>, vector<4x4xf32>, vector<256x4xf32> -> vector<256x4xf32>
    %38 = arith.addf %32, %37 : vector<256x4xf32>
    %39 = vector.extract_strided_slice %1 {offsets = [2, 0, 0], sizes = [16, 16, 4], strides = [1, 1, 1]} : vector<18x18x4xf32> to vector<16x16x4xf32>
    %40 = vector.shape_cast %39 : vector<16x16x4xf32> to vector<256x4xf32>
    %c6 = arith.constant 6 : index
    %c0_22 = arith.constant 0 : index
    %c0_23 = arith.constant 0 : index
    %41 = vector.load %arg2[%c6, %c0_22, %c0_23] : memref<9x4x4xf32, #tpu.memory_space<vmem>>, vector<1x4x4xf32>
    %42 = vector.shape_cast %41 : vector<1x4x4xf32> to vector<4x4xf32>
    %cst_24 = arith.constant dense<0.000000e+00> : vector<256x4xf32>
    %43 = tpu.matmul %40, %42, %cst_24 {dimension_numbers = #tpu.dot_dimension_numbers<[1], [0], [0], [1], [0, 0, 1, 1], [], []>} : vector<256x4xf32>, vector<4x4xf32>, vector<256x4xf32> -> vector<256x4xf32>
    %44 = arith.addf %38, %43 : vector<256x4xf32>
    %45 = vector.extract_strided_slice %1 {offsets = [2, 1, 0], sizes = [16, 16, 4], strides = [1, 1, 1]} : vector<18x18x4xf32> to vector<16x16x4xf32>
    %46 = vector.shape_cast %45 : vector<16x16x4xf32> to vector<256x4xf32>
    %c7 = arith.constant 7 : index
    %c0_25 = arith.constant 0 : index
    %c0_26 = arith.constant 0 : index
    %47 = vector.load %arg2[%c7, %c0_25, %c0_26] : memref<9x4x4xf32, #tpu.memory_space<vmem>>, vector<1x4x4xf32>
    %48 = vector.shape_cast %47 : vector<1x4x4xf32> to vector<4x4xf32>
    %cst_27 = arith.constant dense<0.000000e+00> : vector<256x4xf32>
    %49 = tpu.matmul %46, %48, %cst_27 {dimension_numbers = #tpu.dot_dimension_numbers<[1], [0], [0], [1], [0, 0, 1, 1], [], []>} : vector<256x4xf32>, vector<4x4xf32>, vector<256x4xf32> -> vector<256x4xf32>
    %50 = arith.addf %44, %49 : vector<256x4xf32>
    %51 = vector.extract_strided_slice %1 {offsets = [2, 2, 0], sizes = [16, 16, 4], strides = [1, 1, 1]} : vector<18x18x4xf32> to vector<16x16x4xf32>
    %52 = vector.shape_cast %51 : vector<16x16x4xf32> to vector<256x4xf32>
    %c8 = arith.constant 8 : index
    %c0_28 = arith.constant 0 : index
    %c0_29 = arith.constant 0 : index
    %53 = vector.load %arg2[%c8, %c0_28, %c0_29] : memref<9x4x4xf32, #tpu.memory_space<vmem>>, vector<1x4x4xf32>
    %54 = vector.shape_cast %53 : vector<1x4x4xf32> to vector<4x4xf32>
    %cst_30 = arith.constant dense<0.000000e+00> : vector<256x4xf32>
    %55 = tpu.matmul %52, %54, %cst_30 {dimension_numbers = #tpu.dot_dimension_numbers<[1], [0], [0], [1], [0, 0, 1, 1], [], []>} : vector<256x4xf32>, vector<4x4xf32>, vector<256x4xf32> -> vector<256x4xf32>
    %56 = arith.addf %50, %55 : vector<256x4xf32>
    %c0_31 = arith.constant 0 : index
    %c0_32 = arith.constant 0 : index
    %57 = vector.load %arg3[%c0_31, %c0_32] : memref<1x4xf32, #tpu.memory_space<vmem>>, vector<1x4xf32>
    %58 = vector.shape_cast %57 : vector<1x4xf32> to vector<4xf32>
    %59 = vector.shape_cast %58 : vector<4xf32> to vector<1x4xf32>
    %60 = vector.broadcast %59 : vector<1x4xf32> to vector<256x4xf32>
    %61 = arith.addf %56, %60 : vector<256x4xf32>
    %cst_33 = arith.constant 0.000000e+00 : f32
    %62 = vector.broadcast %cst_33 : f32 to vector<256x4xf32>
    %63 = arith.maximumf %61, %62 : vector<256x4xf32>
    %cst_34 = arith.constant 0.000000e+00 : f32
    %64 = vector.broadcast %cst_34 : f32 to vector<18x18x4xf32>
    %c0_35 = arith.constant 0 : index
    %c0_36 = arith.constant 0 : index
    %c0_37 = arith.constant 0 : index
    %65 = vector.load %arg7[%c0_35, %c0_36, %c0_37] : memref<18x18x4xf32, #tpu.memory_space<vmem>>, vector<18x18x4xf32>
    tpu.vector_store %arg7[%c0_35, %c0_36, %c0_37], %64 {strides = array<i32>} : memref<18x18x4xf32, #tpu.memory_space<vmem>>, vector<18x18x4xf32>,
    %66 = vector.shape_cast %63 : vector<256x4xf32> to vector<16x16x4xf32>
    %c1_38 = arith.constant 1 : index
    %c1_39 = arith.constant 1 : index
    %c0_40 = arith.constant 0 : index
    %67 = vector.load %arg7[%c1_38, %c1_39, %c0_40] : memref<18x18x4xf32, #tpu.memory_space<vmem>>, vector<16x16x4xf32>
    tpu.vector_store %arg7[%c1_38, %c1_39, %c0_40], %66 {strides = array<i32>} : memref<18x18x4xf32, #tpu.memory_space<vmem>>, vector<16x16x4xf32>,
    %c0_41 = arith.constant 0 : index
    %c0_42 = arith.constant 0 : index
    %c0_43 = arith.constant 0 : index
    %68 = vector.load %arg7[%c0_41, %c0_42, %c0_43] : memref<18x18x4xf32, #tpu.memory_space<vmem>>, vector<18x18x4xf32>
    %cst_44 = arith.constant 0.000000e+00 : f32
    %69 = vector.broadcast %cst_44 : f32 to vector<256x4xf32>
    %70 = vector.extract_strided_slice %68 {offsets = [0, 0, 0], sizes = [16, 16, 4], strides = [1, 1, 1]} : vector<18x18x4xf32> to vector<16x16x4xf32>
    %71 = vector.shape_cast %70 : vector<16x16x4xf32> to vector<256x4xf32>
    %c0_45 = arith.constant 0 : index
    %c0_46 = arith.constant 0 : index
    %c0_47 = arith.constant 0 : index
    %72 = vector.load %arg4[%c0_45, %c0_46, %c0_47] : memref<9x4x4xf32, #tpu.memory_space<vmem>>, vector<1x4x4xf32>
    %73 = vector.shape_cast %72 : vector<1x4x4xf32> to vector<4x4xf32>
    %cst_48 = arith.constant dense<0.000000e+00> : vector<256x4xf32>
    %74 = tpu.matmul %71, %73, %cst_48 {dimension_numbers = #tpu.dot_dimension_numbers<[1], [0], [0], [1], [0, 0, 1, 1], [], []>} : vector<256x4xf32>, vector<4x4xf32>, vector<256x4xf32> -> vector<256x4xf32>
    %75 = arith.addf %69, %74 : vector<256x4xf32>
    %76 = vector.extract_strided_slice %68 {offsets = [0, 1, 0], sizes = [16, 16, 4], strides = [1, 1, 1]} : vector<18x18x4xf32> to vector<16x16x4xf32>
    %77 = vector.shape_cast %76 : vector<16x16x4xf32> to vector<256x4xf32>
    %c1_49 = arith.constant 1 : index
    %c0_50 = arith.constant 0 : index
    %c0_51 = arith.constant 0 : index
    %78 = vector.load %arg4[%c1_49, %c0_50, %c0_51] : memref<9x4x4xf32, #tpu.memory_space<vmem>>, vector<1x4x4xf32>
    %79 = vector.shape_cast %78 : vector<1x4x4xf32> to vector<4x4xf32>
    %cst_52 = arith.constant dense<0.000000e+00> : vector<256x4xf32>
    %80 = tpu.matmul %77, %79, %cst_52 {dimension_numbers = #tpu.dot_dimension_numbers<[1], [0], [0], [1], [0, 0, 1, 1], [], []>} : vector<256x4xf32>, vector<4x4xf32>, vector<256x4xf32> -> vector<256x4xf32>
    %81 = arith.addf %75, %80 : vector<256x4xf32>
    %82 = vector.extract_strided_slice %68 {offsets = [0, 2, 0], sizes = [16, 16, 4], strides = [1, 1, 1]} : vector<18x18x4xf32> to vector<16x16x4xf32>
    %83 = vector.shape_cast %82 : vector<16x16x4xf32> to vector<256x4xf32>
    %c2_53 = arith.constant 2 : index
    %c0_54 = arith.constant 0 : index
    %c0_55 = arith.constant 0 : index
    %84 = vector.load %arg4[%c2_53, %c0_54, %c0_55] : memref<9x4x4xf32, #tpu.memory_space<vmem>>, vector<1x4x4xf32>
    %85 = vector.shape_cast %84 : vector<1x4x4xf32> to vector<4x4xf32>
    %cst_56 = arith.constant dense<0.000000e+00> : vector<256x4xf32>
    %86 = tpu.matmul %83, %85, %cst_56 {dimension_numbers = #tpu.dot_dimension_numbers<[1], [0], [0], [1], [0, 0, 1, 1], [], []>} : vector<256x4xf32>, vector<4x4xf32>, vector<256x4xf32> -> vector<256x4xf32>
    %87 = arith.addf %81, %86 : vector<256x4xf32>
    %88 = vector.extract_strided_slice %68 {offsets = [1, 0, 0], sizes = [16, 16, 4], strides = [1, 1, 1]} : vector<18x18x4xf32> to vector<16x16x4xf32>
    %89 = vector.shape_cast %88 : vector<16x16x4xf32> to vector<256x4xf32>
    %c3_57 = arith.constant 3 : index
    %c0_58 = arith.constant 0 : index
    %c0_59 = arith.constant 0 : index
    %90 = vector.load %arg4[%c3_57, %c0_58, %c0_59] : memref<9x4x4xf32, #tpu.memory_space<vmem>>, vector<1x4x4xf32>
    %91 = vector.shape_cast %90 : vector<1x4x4xf32> to vector<4x4xf32>
    %cst_60 = arith.constant dense<0.000000e+00> : vector<256x4xf32>
    %92 = tpu.matmul %89, %91, %cst_60 {dimension_numbers = #tpu.dot_dimension_numbers<[1], [0], [0], [1], [0, 0, 1, 1], [], []>} : vector<256x4xf32>, vector<4x4xf32>, vector<256x4xf32> -> vector<256x4xf32>
    %93 = arith.addf %87, %92 : vector<256x4xf32>
    %94 = vector.extract_strided_slice %68 {offsets = [1, 1, 0], sizes = [16, 16, 4], strides = [1, 1, 1]} : vector<18x18x4xf32> to vector<16x16x4xf32>
    %95 = vector.shape_cast %94 : vector<16x16x4xf32> to vector<256x4xf32>
    %c4_61 = arith.constant 4 : index
    %c0_62 = arith.constant 0 : index
    %c0_63 = arith.constant 0 : index
    %96 = vector.load %arg4[%c4_61, %c0_62, %c0_63] : memref<9x4x4xf32, #tpu.memory_space<vmem>>, vector<1x4x4xf32>
    %97 = vector.shape_cast %96 : vector<1x4x4xf32> to vector<4x4xf32>
    %cst_64 = arith.constant dense<0.000000e+00> : vector<256x4xf32>
    %98 = tpu.matmul %95, %97, %cst_64 {dimension_numbers = #tpu.dot_dimension_numbers<[1], [0], [0], [1], [0, 0, 1, 1], [], []>} : vector<256x4xf32>, vector<4x4xf32>, vector<256x4xf32> -> vector<256x4xf32>
    %99 = arith.addf %93, %98 : vector<256x4xf32>
    %100 = vector.extract_strided_slice %68 {offsets = [1, 2, 0], sizes = [16, 16, 4], strides = [1, 1, 1]} : vector<18x18x4xf32> to vector<16x16x4xf32>
    %101 = vector.shape_cast %100 : vector<16x16x4xf32> to vector<256x4xf32>
    %c5_65 = arith.constant 5 : index
    %c0_66 = arith.constant 0 : index
    %c0_67 = arith.constant 0 : index
    %102 = vector.load %arg4[%c5_65, %c0_66, %c0_67] : memref<9x4x4xf32, #tpu.memory_space<vmem>>, vector<1x4x4xf32>
    %103 = vector.shape_cast %102 : vector<1x4x4xf32> to vector<4x4xf32>
    %cst_68 = arith.constant dense<0.000000e+00> : vector<256x4xf32>
    %104 = tpu.matmul %101, %103, %cst_68 {dimension_numbers = #tpu.dot_dimension_numbers<[1], [0], [0], [1], [0, 0, 1, 1], [], []>} : vector<256x4xf32>, vector<4x4xf32>, vector<256x4xf32> -> vector<256x4xf32>
    %105 = arith.addf %99, %104 : vector<256x4xf32>
    %106 = vector.extract_strided_slice %68 {offsets = [2, 0, 0], sizes = [16, 16, 4], strides = [1, 1, 1]} : vector<18x18x4xf32> to vector<16x16x4xf32>
    %107 = vector.shape_cast %106 : vector<16x16x4xf32> to vector<256x4xf32>
    %c6_69 = arith.constant 6 : index
    %c0_70 = arith.constant 0 : index
    %c0_71 = arith.constant 0 : index
    %108 = vector.load %arg4[%c6_69, %c0_70, %c0_71] : memref<9x4x4xf32, #tpu.memory_space<vmem>>, vector<1x4x4xf32>
    %109 = vector.shape_cast %108 : vector<1x4x4xf32> to vector<4x4xf32>
    %cst_72 = arith.constant dense<0.000000e+00> : vector<256x4xf32>
    %110 = tpu.matmul %107, %109, %cst_72 {dimension_numbers = #tpu.dot_dimension_numbers<[1], [0], [0], [1], [0, 0, 1, 1], [], []>} : vector<256x4xf32>, vector<4x4xf32>, vector<256x4xf32> -> vector<256x4xf32>
    %111 = arith.addf %105, %110 : vector<256x4xf32>
    %112 = vector.extract_strided_slice %68 {offsets = [2, 1, 0], sizes = [16, 16, 4], strides = [1, 1, 1]} : vector<18x18x4xf32> to vector<16x16x4xf32>
    %113 = vector.shape_cast %112 : vector<16x16x4xf32> to vector<256x4xf32>
    %c7_73 = arith.constant 7 : index
    %c0_74 = arith.constant 0 : index
    %c0_75 = arith.constant 0 : index
    %114 = vector.load %arg4[%c7_73, %c0_74, %c0_75] : memref<9x4x4xf32, #tpu.memory_space<vmem>>, vector<1x4x4xf32>
    %115 = vector.shape_cast %114 : vector<1x4x4xf32> to vector<4x4xf32>
    %cst_76 = arith.constant dense<0.000000e+00> : vector<256x4xf32>
    %116 = tpu.matmul %113, %115, %cst_76 {dimension_numbers = #tpu.dot_dimension_numbers<[1], [0], [0], [1], [0, 0, 1, 1], [], []>} : vector<256x4xf32>, vector<4x4xf32>, vector<256x4xf32> -> vector<256x4xf32>
    %117 = arith.addf %111, %116 : vector<256x4xf32>
    %118 = vector.extract_strided_slice %68 {offsets = [2, 2, 0], sizes = [16, 16, 4], strides = [1, 1, 1]} : vector<18x18x4xf32> to vector<16x16x4xf32>
    %119 = vector.shape_cast %118 : vector<16x16x4xf32> to vector<256x4xf32>
    %c8_77 = arith.constant 8 : index
    %c0_78 = arith.constant 0 : index
    %c0_79 = arith.constant 0 : index
    %120 = vector.load %arg4[%c8_77, %c0_78, %c0_79] : memref<9x4x4xf32, #tpu.memory_space<vmem>>, vector<1x4x4xf32>
    %121 = vector.shape_cast %120 : vector<1x4x4xf32> to vector<4x4xf32>
    %cst_80 = arith.constant dense<0.000000e+00> : vector<256x4xf32>
    %122 = tpu.matmul %119, %121, %cst_80 {dimension_numbers = #tpu.dot_dimension_numbers<[1], [0], [0], [1], [0, 0, 1, 1], [], []>} : vector<256x4xf32>, vector<4x4xf32>, vector<256x4xf32> -> vector<256x4xf32>
    %123 = arith.addf %117, %122 : vector<256x4xf32>
    %c0_81 = arith.constant 0 : index
    %c0_82 = arith.constant 0 : index
    %124 = vector.load %arg5[%c0_81, %c0_82] : memref<1x4xf32, #tpu.memory_space<vmem>>, vector<1x4xf32>
    %125 = vector.shape_cast %124 : vector<1x4xf32> to vector<4xf32>
    %126 = vector.shape_cast %125 : vector<4xf32> to vector<1x4xf32>
    %127 = vector.broadcast %126 : vector<1x4xf32> to vector<256x4xf32>
    %128 = arith.addf %123, %127 : vector<256x4xf32>
    %129 = vector.extract_strided_slice %1 {offsets = [1, 1, 0], sizes = [16, 16, 4], strides = [1, 1, 1]} : vector<18x18x4xf32> to vector<16x16x4xf32>
    %130 = vector.shape_cast %129 : vector<16x16x4xf32> to vector<256x4xf32>
    %131 = arith.addf %128, %130 : vector<256x4xf32>
    %cst_83 = arith.constant 0.000000e+00 : f32
    %132 = vector.broadcast %cst_83 : f32 to vector<256x4xf32>
    %133 = arith.maximumf %131, %132 : vector<256x4xf32>
    %134 = vector.shape_cast %133 : vector<256x4xf32> to vector<16x16x4xf32>
    %c0_84 = arith.constant 0 : index
    %c0_85 = arith.constant 0 : index
    %c0_86 = arith.constant 0 : index
    %c0_87 = arith.constant 0 : index
    %135 = vector.load %arg6[%c0_84, %c0_85, %c0_86, %c0_87] : memref<1x16x16x4xf32, #tpu.memory_space<vmem>>, vector<1x16x16x4xf32>
    %136 = vector.shape_cast %135 : vector<1x16x16x4xf32> to vector<16x16x4xf32>
    %137 = vector.shape_cast %134 : vector<16x16x4xf32> to vector<1x16x16x4xf32>
    tpu.vector_store %arg6[%c0_84, %c0_85, %c0_86, %c0_87], %137 {strides = array<i32>} : memref<1x16x16x4xf32, #tpu.memory_space<vmem>>, vector<1x16x16x4xf32>,
    return
  }
  func.func @transform_0(%arg0: i32) -> (i32, i32, i32, i32) {
    %c0_i32 = arith.constant 0 : i32
    %c0_i32_0 = arith.constant 0 : i32
    %c0_i32_1 = arith.constant 0 : i32
    %c0_i32_2 = arith.constant 0 : i32
    return %arg0, %c0_i32, %c0_i32_0, %c0_i32_1 : i32, i32, i32, i32
  }
  func.func @transform_1(%arg0: i32) -> (i32, i32, i32) {
    %c0_i32 = arith.constant 0 : i32
    %c0_i32_0 = arith.constant 0 : i32
    %c0_i32_1 = arith.constant 0 : i32
    %c0_i32_2 = arith.constant 0 : i32
    return %c0_i32, %c0_i32_0, %c0_i32_1 : i32, i32, i32
  }
  func.func @transform_2(%arg0: i32) -> (i32, i32) {
    %c0_i32 = arith.constant 0 : i32
    %c0_i32_0 = arith.constant 0 : i32
    %c0_i32_1 = arith.constant 0 : i32
    return %c0_i32, %c0_i32_0 : i32, i32
  }
  func.func @transform_3(%arg0: i32) -> (i32, i32, i32) {
    %c0_i32 = arith.constant 0 : i32
    %c0_i32_0 = arith.constant 0 : i32
    %c0_i32_1 = arith.constant 0 : i32
    %c0_i32_2 = arith.constant 0 : i32
    return %c0_i32, %c0_i32_0, %c0_i32_1 : i32, i32, i32
  }
  func.func @transform_4(%arg0: i32) -> (i32, i32) {
    %c0_i32 = arith.constant 0 : i32
    %c0_i32_0 = arith.constant 0 : i32
    %c0_i32_1 = arith.constant 0 : i32
    return %c0_i32, %c0_i32_0 : i32, i32
  }
  func.func @transform_5(%arg0: i32) -> (i32, i32, i32, i32) {
    %c0_i32 = arith.constant 0 : i32
    %c0_i32_0 = arith.constant 0 : i32
    %c0_i32_1 = arith.constant 0 : i32
    %c0_i32_2 = arith.constant 0 : i32
    return %arg0, %c0_i32, %c0_i32_0, %c0_i32_1 : i32, i32, i32, i32
  }
}

</mosaic_0001>

<llo_original>
// kernel: tpu_custom_call.1
$region0: #{tpu_custom_call.1}
  #allocation0 [shape = 'u32[]', space=smem, size = 0x4, offset = 0x4, fixed_abs, tag = 'smem constant byte address 0x4 - core index']
  #allocation1 [shape = 'u32[144,128]{1,0:T(1,128)}', space=vmem, size = 0x12000, scoped, tag = 'internal scratch']
  #allocation2 [shape = 'f32[18,18,4]{2,1,0:T(8,128)}', space=vmem, size = 0x36000, scoped, tag = 'scratch operand']
  %s0 = inlined_call_operand.vmem [shape: f32[2,18,18,4], index: 0, kind: input, shape index: {}]
  %s1 = inlined_call_operand.vmem [shape: f32[9,4,4], index: 1, kind: input, shape index: {}]
  %s2 = inlined_call_operand.vmem [shape: f32[1,4], index: 2, kind: input, shape index: {}]
  %s3 = inlined_call_operand.vmem [shape: f32[9,4,4], index: 3, kind: input, shape index: {}]
  %s4 = inlined_call_operand.vmem [shape: f32[1,4], index: 4, kind: input, shape index: {}]
  %s5 = inlined_call_operand.vmem [shape: f32[2,16,16,4], index: 5, kind: output, shape index: {}]
  %s6 = sld [smem:[#allocation0]]
  $region53: #{tpu_custom_call.1} parent=0
    _
  %s8 = ssub.s32 1, %s6
  %s9 = scalar_select 0, %s8, %s6
  loop: start=0, step=1, limit=4
  $region2: #{tpu_custom_call.1} parent=0 // loop_pre_header
    _
  $region3: #{tpu_custom_call.1} parent=0 // loop_header
    %s11 = sphi 0, %s15
    %p12 = scmp.ge.s32.totalorder %s11, 4
    %s21 = sphi 0, %s23
    %s24 = sphi 0, %s21
    %s25 = sphi 0, %s24
    %s41 = sphi 0, %s25
    %s45 = sphi 0, %s45
    %s47 = sphi 0, %s45
    %s48 = sphi 0, %s47
    %s62 = sphi 0, %s48
    %s66 = sphi 0, %s66
    %s68 = sphi 0, %s66
    %s69 = sphi 0, %s68
    %s83 = sphi 0, %s69
    %s87 = sphi 0, %s87
    %s89 = sphi 0, %s87
    %s90 = sphi 0, %s89
    %s104 = sphi 0, %s90
    %s108 = sphi 0, %s108
    %s110 = sphi 0, %s108
    %s111 = sphi 0, %s110
    %s125 = sphi 0, %s111
    %s131 = sphi 0, %s133
    %s134 = sphi 0, %s131
    %s135 = sphi 0, %s134
    %s151 = sphi 0, %s135
  $region4: #{tpu_custom_call.1} parent=0 // loop_header_branch
    %14 = sbr.rel (%p12) target = $region8
  $region5: #{tpu_custom_call.1} parent=0 // loop_body
    %s16 = ssub.s32 %s11, 1
    %s17 = ssub.s32 %s11, 2
    %s18 = sadd.s32 %s11, 1
    %s19 = ssub.s32 %s11, %s18
    %p20 = scmp.eq.s32.totalorder %s19, 0
    %s22 = sadd.s32 %s21, 1
    %s23 = scalar_select %p20, %s21, %s22
    %p26 = pneg %p20
    %p27 = scmp.eq.s32.totalorder %s11, 1
    %p28 = por %p26, %p27
    %p29 = scmp.ne.s32.totalorder %s21, %s24
    %p30 = scmp.eq.s32.totalorder %s11, 0
    %p31 = por %p29, %p30
    %p32 = scmp.ne.s32.totalorder %s21, %s24
    %p33 = scmp.eq.s32.totalorder %s16, 1
    %p34 = por %p32, %p33
    %p35 = scmp.ne.s32.totalorder %s24, %s25
    %p36 = scmp.eq.s32.totalorder %s16, 0
    %p37 = por %p35, %p36
    %p38 = scmp.ne.s32.totalorder %s24, %s25
    %p39 = scmp.eq.s32.totalorder %s17, 1
    %p40 = por %p38, %p39
    %p42 = scmp.ne.s32.totalorder %s25, %s41
    %p43 = scmp.eq.s32.totalorder %s17, 0
    %p44 = por %p42, %p43
    %s46 = sadd.s32 %s45, 1
    %p49 = scmp.eq.s32.totalorder %s11, 1
    %p50 = scmp.ne.s32.totalorder %s45, %s47
    %p51 = scmp.eq.s32.totalorder %s11, 0
    %p52 = por %p50, %p51
    %p53 = scmp.ne.s32.totalorder %s45, %s47
    %p54 = scmp.eq.s32.totalorder %s16, 1
    %p55 = por %p53, %p54
    %p56 = scmp.ne.s32.totalorder %s47, %s48
    %p57 = scmp.eq.s32.totalorder %s16, 0
    %p58 = por %p56, %p57
    %p59 = scmp.ne.s32.totalorder %s47, %s48
    %p60 = scmp.eq.s32.totalorder %s17, 1
    %p61 = por %p59, %p60
    %p63 = scmp.ne.s32.totalorder %s48, %s62
    %p64 = scmp.eq.s32.totalorder %s17, 0
    %p65 = por %p63, %p64
    %s67 = sadd.s32 %s66, 1
    %p70 = scmp.eq.s32.totalorder %s11, 1
    %p71 = scmp.ne.s32.totalorder %s66, %s68
    %p72 = scmp.eq.s32.totalorder %s11, 0
    %p73 = por %p71, %p72
    %p74 = scmp.ne.s32.totalorder %s66, %s68
    %p75 = scmp.eq.s32.totalorder %s16, 1
    %p76 = por %p74, %p75
    %p77 = scmp.ne.s32.totalorder %s68, %s69
    %p78 = scmp.eq.s32.totalorder %s16, 0
    %p79 = por %p77, %p78
    %p80 = scmp.ne.s32.totalorder %s68, %s69
    %p81 = scmp.eq.s32.totalorder %s17, 1
    %p82 = por %p80, %p81
    %p84 = scmp.ne.s32.totalorder %s69, %s83
    %p85 = scmp.eq.s32.totalorder %s17, 0
    %p86 = por %p84, %p85
    %s88 = sadd.s32 %s87, 1
    %p91 = scmp.eq.s32.totalorder %s11, 1
    %p92 = scmp.ne.s32.totalorder %s87, %s89
    %p93 = scmp.eq.s32.totalorder %s11, 0
    %p94 = por %p92, %p93
    %p95 = scmp.ne.s32.totalorder %s87, %s89
    %p96 = scmp.eq.s32.totalorder %s16, 1
    %p97 = por %p95, %p96
    %p98 = scmp.ne.s32.totalorder %s89, %s90
    %p99 = scmp.eq.s32.totalorder %s16, 0
    %p100 = por %p98, %p99
    %p101 = scmp.ne.s32.totalorder %s89, %s90
    %p102 = scmp.eq.s32.totalorder %s17, 1
    %p103 = por %p101, %p102
    %p105 = scmp.ne.s32.totalorder %s90, %s104
    %p106 = scmp.eq.s32.totalorder %s17, 0
    %p107 = por %p105, %p106
    %s109 = sadd.s32 %s108, 1
    %p112 = scmp.eq.s32.totalorder %s11, 1
    %p113 = scmp.ne.s32.totalorder %s108, %s110
    %p114 = scmp.eq.s32.totalorder %s11, 0
    %p115 = por %p113, %p114
    %p116 = scmp.ne.s32.totalorder %s108, %s110
    %p117 = scmp.eq.s32.totalorder %s16, 1
    %p118 = por %p116, %p117
    %p119 = scmp.ne.s32.totalorder %s110, %s111
    %p120 = scmp.eq.s32.totalorder %s16, 0
    %p121 = por %p119, %p120
    %p122 = scmp.ne.s32.totalorder %s110, %s111
    %p123 = scmp.eq.s32.totalorder %s17, 1
    %p124 = por %p122, %p123
    %p126 = scmp.ne.s32.totalorder %s111, %s125
    %p127 = scmp.eq.s32.totalorder %s17, 0
    %p128 = por %p126, %p127
    %s129 = ssub.s32 %s11, %s18
    %p130 = scmp.eq.s32.totalorder %s129, 0
    %s132 = sadd.s32 %s131, 1
    %s133 = scalar_select %p130, %s131, %s132
    %p136 = pneg %p130
    %p137 = scmp.eq.s32.totalorder %s11, 1
    %p138 = por %p136, %p137
    %p139 = scmp.ne.s32.totalorder %s131, %s134
    %p140 = scmp.eq.s32.totalorder %s11, 0
    %p141 = por %p139, %p140
    %p142 = scmp.ne.s32.totalorder %s131, %s134
    %p143 = scmp.eq.s32.totalorder %s16, 1
    %p144 = por %p142, %p143
    %p145 = scmp.ne.s32.totalorder %s134, %s135
    %p146 = scmp.eq.s32.totalorder %s16, 0
    %p147 = por %p145, %p146
    %p148 = scmp.ne.s32.totalorder %s134, %s135
    %p149 = scmp.eq.s32.totalorder %s17, 1
    %p150 = por %p148, %p149
    %p152 = scmp.ne.s32.totalorder %s135, %s151
    %p153 = scmp.eq.s32.totalorder %s17, 0
    %p154 = por %p152, %p153
    %p155 = scmp.le.s32.totalorder 1, %s11
    %p156 = scmp.lt.s32.totalorder %s11, 3
    %p157 = pnand %p155, %p156
    %p158 = pneg %p157
    // Predicated region
    $region9: #{tpu_custom_call.1} parent=5 // pred_check
      _
    $region10: #{tpu_custom_call.1} parent=5 // pred_check_branch
      %160 = sbr.rel (%p157) target = $region12
    $region11: #{tpu_custom_call.1} parent=5 // pred_region
      %s161 = ssub.s32 %s11, 1
      // Predicated region
      $region13: #{tpu_custom_call.1} parent=11 // pred_check
        %p162 = pneg %p58
      $region14: #{tpu_custom_call.1} parent=11 // pred_check_branch
        %164 = sbr.rel (%p162) target = $region16
      $region15: #{tpu_custom_call.1} parent=11 // pred_region
        _
      $region16: #{tpu_custom_call.1} parent=11 // pred_fallthru
        _
      // Predicated region
      $region17: #{tpu_custom_call.1} parent=11 // pred_check
        %p165 = pneg %p79
      $region18: #{tpu_custom_call.1} parent=11 // pred_check_branch
        %167 = sbr.rel (%p165) target = $region20
      $region19: #{tpu_custom_call.1} parent=11 // pred_region
        _
      $region20: #{tpu_custom_call.1} parent=11 // pred_fallthru
        _
      // Predicated region
      $region21: #{tpu_custom_call.1} parent=11 // pred_check
        %p168 = pneg %p100
      $region22: #{tpu_custom_call.1} parent=11 // pred_check_branch
        %170 = sbr.rel (%p168) target = $region24
      $region23: #{tpu_custom_call.1} parent=11 // pred_region
        _
      $region24: #{tpu_custom_call.1} parent=11 // pred_fallthru
        _
      // Predicated region
      $region25: #{tpu_custom_call.1} parent=11 // pred_check
        %p171 = pneg %p121
      $region26: #{tpu_custom_call.1} parent=11 // pred_check_branch
        %173 = sbr.rel (%p171) target = $region28
      $region27: #{tpu_custom_call.1} parent=11 // pred_region
        _
      $region28: #{tpu_custom_call.1} parent=11 // pred_fallthru
        _
    $region12: #{tpu_custom_call.1} parent=5 // pred_fallthru
      _
    %p174 = scmp.lt.s32.totalorder %s11, 2
    // Predicated region
    $region29: #{tpu_custom_call.1} parent=5 // pred_check
      %p175 = pneg %p174
    $region30: #{tpu_custom_call.1} parent=5 // pred_check_branch
      %177 = sbr.rel (%p175) target = $region32
    $region31: #{tpu_custom_call.1} parent=5 // pred_region
      // Predicated region
      $region33: #{tpu_custom_call.1} parent=31 // pred_check
        %p178 = pneg %p31
      $region34: #{tpu_custom_call.1} parent=31 // pred_check_branch
        %180 = sbr.rel (%p178) target = $region36
      $region35: #{tpu_custom_call.1} parent=31 // pred_region
        %p181 = scmp.lt.s32.totalorder %s11, 1
        %s182 = scalar_select %p181, %s11, 1
        %s183 = smul.addr %s182, 54
        %s184 = smul.addr %s183, 8
        %s185 = scalar_lea.vmem %s0, %s184
      $region36: #{tpu_custom_call.1} parent=31 // pred_fallthru
        _
    $region32: #{tpu_custom_call.1} parent=5 // pred_fallthru
      _
    %p186 = scmp.le.s32.totalorder 1, %s11
    %p187 = scmp.lt.s32.totalorder %s11, 3
    %p188 = pnand %p186, %p187
    %p189 = pneg %p188
    // Predicated region
    $region37: #{tpu_custom_call.1} parent=5 // pred_check
      _
    $region38: #{tpu_custom_call.1} parent=5 // pred_check_branch
      %191 = sbr.rel (%p188) target = $region40
    $region39: #{tpu_custom_call.1} parent=5 // pred_region
      %s192 = ssub.s32 %s11, 1
      %p193 = scmp.lt.s32.totalorder %s16, 1
      %s194 = scalar_select %p193, %s16, 1
      %s195 = smul.addr %s194, 54
      %s196 = smul.addr %s195, 8
      %s197 = scalar_lea.vmem %s0, %s196
      %p198 = pneg %p37
      %p199 = pneg %p34
      %p200 = pneg %p58
      %p201 = pneg %p55
      %p202 = pneg %p79
      %p203 = pneg %p76
      %p204 = pneg %p100
      %p205 = pneg %p97
      %p206 = pneg %p121
      %p207 = pneg %p118
      %p208 = pneg %p147
      %p209 = pneg %p144
      %p210 = scmp.lt.s32.totalorder %s16, 1
      %s211 = scalar_select %p210, %s16, 1
      %s212 = smul.addr %s211, 32
      %s213 = smul.addr %s212, 8
      %s214 = scalar_lea.vmem %s5, %s213
      %p215 = scmp.lt.s32.totalorder %s16, 1
      %s216 = scalar_select %p215, %s16, 1
      %s217 = smul.addr %s216, 54
      %s218 = smul.addr %s217, 8
      %s219 = scalar_lea.vmem %s0, %s218
      %p220 = scmp.lt.s32.totalorder %s16, 1
      %s221 = scalar_select %p220, %s16, 1
      %s222 = smul.addr %s221, 32
      %s223 = smul.addr %s222, 8
      %s224 = scalar_lea.vmem %s5, %s223
      %v225 = vld [vmem:[%s219] sm:$0xff]
      %v226 = vld [vmem:[%s219 + $0x8] sm:$0xff]
      %v227 = vld [vmem:[%s219 + $0x10] sm:$0x3]
      %v228 = vld [vmem:[%s219 + $0x18] sm:$0xff]
      %v229 = vld [vmem:[%s219 + $0x20] sm:$0xff]
      %v230 = vld [vmem:[%s219 + $0x28] sm:$0x3]
      %v231 = vld [vmem:[%s219 + $0x30] sm:$0xff]
      %v232 = vld [vmem:[%s219 + $0x38] sm:$0xff]
      %v233 = vld [vmem:[%s219 + $0x40] sm:$0x3]
      %v234 = vld [vmem:[%s219 + $0x48] sm:$0xff]
      %v235 = vld [vmem:[%s219 + $0x50] sm:$0xff]
      %v236 = vld [vmem:[%s219 + $0x58] sm:$0x3]
      %v237 = vld [vmem:[%s219 + $0x60] sm:$0xff]
      %v238 = vld [vmem:[%s219 + $0x68] sm:$0xff]
      %v239 = vld [vmem:[%s219 + $0x70] sm:$0x3]
      %v240 = vld [vmem:[%s219 + $0x78] sm:$0xff]
      %v241 = vld [vmem:[%s219 + $0x80] sm:$0xff]
      %v242 = vld [vmem:[%s219 + $0x88] sm:$0x3]
      %v243 = vld [vmem:[%s219 + $0x90] sm:$0xff]
      %v244 = vld [vmem:[%s219 + $0x98] sm:$0xff]
      %v245 = vld [vmem:[%s219 + $0xa0] sm:$0x3]
      %v246 = vld [vmem:[%s219 + $0xa8] sm:$0xff]
      %v247 = vld [vmem:[%s219 + $0xb0] sm:$0xff]
      %v248 = vld [vmem:[%s219 + $0xb8] sm:$0x3]
      %v249 = vld [vmem:[%s219 + $0xc0] sm:$0xff]
      %v250 = vld [vmem:[%s219 + $0xc8] sm:$0xff]
      %v251 = vld [vmem:[%s219 + $0xd0] sm:$0x3]
      %v252 = vld [vmem:[%s219 + $0xd8] sm:$0xff]
      %v253 = vld [vmem:[%s219 + $0xe0] sm:$0xff]
      %v254 = vld [vmem:[%s219 + $0xe8] sm:$0x3]
      %v255 = vld [vmem:[%s219 + $0xf0] sm:$0xff]
      %v256 = vld [vmem:[%s219 + $0xf8] sm:$0xff]
      %v257 = vld [vmem:[%s219 + $0x100] sm:$0x3]
      %v258 = vld [vmem:[%s219 + $0x108] sm:$0xff]
      %v259 = vld [vmem:[%s219 + $0x110] sm:$0xff]
      %v260 = vld [vmem:[%s219 + $0x118] sm:$0x3]
      %v261 = vld [vmem:[%s219 + $0x120] sm:$0xff]
      %v262 = vld [vmem:[%s219 + $0x128] sm:$0xff]
      %v263 = vld [vmem:[%s219 + $0x130] sm:$0x3]
      %v264 = vld [vmem:[%s219 + $0x138] sm:$0xff]
      %v265 = vld [vmem:[%s219 + $0x140] sm:$0xff]
      %v266 = vld [vmem:[%s219 + $0x148] sm:$0x3]
      %v267 = vld [vmem:[%s219 + $0x150] sm:$0xff]
      %v268 = vld [vmem:[%s219 + $0x158] sm:$0xff]
      %v269 = vld [vmem:[%s219 + $0x160] sm:$0x3]
      %v270 = vld [vmem:[%s219 + $0x168] sm:$0xff]
      %v271 = vld [vmem:[%s219 + $0x170] sm:$0xff]
      %v272 = vld [vmem:[%s219 + $0x178] sm:$0x3]
      %v273 = vld [vmem:[%s219 + $0x180] sm:$0xff]
      %v274 = vld [vmem:[%s219 + $0x188] sm:$0xff]
      %v275 = vld [vmem:[%s219 + $0x190] sm:$0x3]
      %v276 = vld [vmem:[%s219 + $0x198] sm:$0xff]
      %v277 = vld [vmem:[%s219 + $0x1a0] sm:$0xff]
      %v278 = vld [vmem:[%s219 + $0x1a8] sm:$0x3]
      %v279 = vld [vmem:[%s1] sm:$0xf]
      %vm328 = vcmask 1046528
      %v329 = vrot.slane %v225, 1
      %v330 = vrot.slane %v226, 1
      %v331 = vsel %vm328, %v329, %v330
      %v332 = vrot.slane %v227, 1
      %v333 = vsel %vm328, %v330, %v332
      %v334 = vrot.slane %v228, 1
      %v335 = vrot.slane %v229, 1
      %v336 = vsel %vm328, %v334, %v335
      %v337 = vrot.slane %v230, 1
      %v338 = vsel %vm328, %v335, %v337
      %v339 = vrot.slane %v231, 1
      %v340 = vrot.slane %v232, 1
      %v341 = vsel %vm328, %v339, %v340
      %v342 = vrot.slane %v233, 1
      %v343 = vsel %vm328, %v340, %v342
      %v344 = vrot.slane %v234, 1
      %v345 = vrot.slane %v235, 1
      %v346 = vsel %vm328, %v344, %v345
      %v347 = vrot.slane %v236, 1
      %v348 = vsel %vm328, %v345, %v347
      %v349 = vrot.slane %v237, 1
      %v350 = vrot.slane %v238, 1
      %v351 = vsel %vm328, %v349, %v350
      %v352 = vrot.slane %v239, 1
      %v353 = vsel %vm328, %v350, %v352
      %v354 = vrot.slane %v240, 1
      %v355 = vrot.slane %v241, 1
      %v356 = vsel %vm328, %v354, %v355
      %v357 = vrot.slane %v242, 1
      %v358 = vsel %vm328, %v355, %v357
      %v359 = vrot.slane %v243, 1
      %v360 = vrot.slane %v244, 1
      %v361 = vsel %vm328, %v359, %v360
      %v362 = vrot.slane %v245, 1
      %v363 = vsel %vm328, %v360, %v362
      %v364 = vrot.slane %v246, 1
      %v365 = vrot.slane %v247, 1
      %v366 = vsel %vm328, %v364, %v365
      %v367 = vrot.slane %v248, 1
      %v368 = vsel %vm328, %v365, %v367
      %v369 = vrot.slane %v249, 1
      %v370 = vrot.slane %v250, 1
      %v371 = vsel %vm328, %v369, %v370
      %v372 = vrot.slane %v251, 1
      %v373 = vsel %vm328, %v370, %v372
      %v374 = vrot.slane %v252, 1
      %v375 = vrot.slane %v253, 1
      %v376 = vsel %vm328, %v374, %v375
      %v377 = vrot.slane %v254, 1
      %v378 = vsel %vm328, %v375, %v377
      %v379 = vrot.slane %v255, 1
      %v380 = vrot.slane %v256, 1
      %v381 = vsel %vm328, %v379, %v380
      %v382 = vrot.slane %v257, 1
      %v383 = vsel %vm328, %v380, %v382
      %v384 = vrot.slane %v258, 1
      %v385 = vrot.slane %v259, 1
      %v386 = vsel %vm328, %v384, %v385
      %v387 = vrot.slane %v260, 1
      %v388 = vsel %vm328, %v385, %v387
      %v389 = vrot.slane %v261, 1
      %v390 = vrot.slane %v262, 1
      %v391 = vsel %vm328, %v389, %v390
      %v392 = vrot.slane %v263, 1
      %v393 = vsel %vm328, %v390, %v392
      %v394 = vrot.slane %v264, 1
      %v395 = vrot.slane %v265, 1
      %v396 = vsel %vm328, %v394, %v395
      %v397 = vrot.slane %v266, 1
      %v398 = vsel %vm328, %v395, %v397
      %v399 = vrot.slane %v267, 1
      %v400 = vrot.slane %v268, 1
      %v401 = vsel %vm328, %v399, %v400
      %v402 = vrot.slane %v269, 1
      %v403 = vsel %vm328, %v400, %v402
      %v404 = vrot.slane %v270, 1
      %v405 = vrot.slane %v271, 1
      %v406 = vsel %vm328, %v404, %v405
      %v407 = vrot.slane %v272, 1
      %v408 = vsel %vm328, %v405, %v407
      %s409 = scalar_lea.vmem %s1, 4
      %v410 = vld [vmem:[%s409] sm:$0xf]
      %vm411 = vcmask 31744
      %v412 = vsel %vm411, %v331, 0
      %v414 = vsel %vm411, %v333, 0
      %v416 = vsel %vm411, %v336, 0
      %v418 = vsel %vm411, %v338, 0
      %v420 = vsel %vm411, %v341, 0
      %v422 = vsel %vm411, %v343, 0
      %v424 = vsel %vm411, %v346, 0
      %v426 = vsel %vm411, %v348, 0
      %v428 = vsel %vm411, %v351, 0
      %v430 = vsel %vm411, %v353, 0
      %v432 = vsel %vm411, %v356, 0
      %v434 = vsel %vm411, %v358, 0
      %v436 = vsel %vm411, %v361, 0
      %v438 = vsel %vm411, %v363, 0
      %v440 = vsel %vm411, %v366, 0
      %v442 = vsel %vm411, %v368, 0
      %v444 = vsel %vm411, %v371, 0
      %v446 = vsel %vm411, %v373, 0
      %v448 = vsel %vm411, %v376, 0
      %v450 = vsel %vm411, %v378, 0
      %v452 = vsel %vm411, %v381, 0
      %v454 = vsel %vm411, %v383, 0
      %v456 = vsel %vm411, %v386, 0
      %v458 = vsel %vm411, %v388, 0
      %v460 = vsel %vm411, %v391, 0
      %v462 = vsel %vm411, %v393, 0
      %v464 = vsel %vm411, %v396, 0
      %v466 = vsel %vm411, %v398, 0
      %v468 = vsel %vm411, %v401, 0
      %v470 = vsel %vm411, %v403, 0
      %v472 = vsel %vm411, %v406, 0
      %v474 = vsel %vm411, %v408, 0
      %vm476 = vcmask 1043456
      %v478 = vsel %vm476, %v410, 0
      %480 = vmatprep.subr.mxu0 0.0
      %481 = vmatpush1.msra.mxu0 %v478
      %482 = vmatprep.subr.mxu0 0.0
      %483 = vmatpush1.msra.mxu0 0.0
      %484 = vmatprep.subr.mxu0 0.0
      %485 = vmatpush1.msra.mxu0 0.0
      %486 = vmatprep.subr.mxu0 0.0
      %487 = vmatpush1.msra.mxu0 0.0
      %488 = vmatprep.subr.mxu0 0.0
      %489 = vmatpush1.msra.mxu0 0.0
      %490 = vmatprep.subr.mxu0 0.0
      %491 = vmatpush1.msra.mxu0 0.0
      %492 = vmatprep.subr.mxu0 0.0
      %493 = vmatpush1.msra.mxu0 0.0
      %494 = vmatprep.subr.mxu0 0.0
      %495 = vmatpush1.msra.mxu0 0.0
      %496 = vmatprep.subr.mxu0 0.0
      %497 = vmatpush1.msra.mxu0 0.0
      %498 = vmatprep.subr.mxu0 0.0
      %499 = vmatpush1.msra.mxu0 0.0
      %500 = vmatprep.subr.mxu0 0.0
      %501 = vmatpush1.msra.mxu0 0.0
      %502 = vmatprep.subr.mxu0 0.0
      %503 = vmatpush1.msra.mxu0 0.0
      %504 = vmatprep.subr.mxu0 0.0
      %505 = vmatpush1.msra.mxu0 0.0
      %506 = vmatprep.subr.mxu0 0.0
      %507 = vmatpush1.msra.mxu0 0.0
      %508 = vmatprep.subr.mxu0 0.0
      %509 = vmatpush1.msra.mxu0 0.0
      %510 = vmatprep.subr.mxu0 0.0
      %511 = vmatpush1.msra.mxu0 0.0
      %512 = vmatprep.subr.mxu0 0.0
      %513 = vmatpush1.msra.mxu0 0.0
      %514 = vmatprep.subr.mxu0 0.0
      %515 = vmatpush1.msra.mxu0 0.0
      %516 = vmatprep.subr.mxu0 0.0
      %517 = vmatpush1.msra.mxu0 0.0
      %518 = vmatprep.subr.mxu0 0.0
      %519 = vmatpush1.msra.mxu0 0.0
      %520 = vmatprep.subr.mxu0 0.0
      %521 = vmatpush1.msra.mxu0 0.0
      %522 = vmatprep.subr.mxu0 0.0
      %523 = vmatpush1.msra.mxu0 0.0
      %524 = vmatprep.subr.mxu0 0.0
      %525 = vmatpush1.msra.mxu0 0.0
      %526 = vmatprep.subr.mxu0 0.0
      %527 = vmatpush1.msra.mxu0 0.0
      %528 = vmatprep.subr.mxu0 0.0
      %529 = vmatpush1.msra.mxu0 0.0
      %530 = vmatprep.subr.mxu0 0.0
      %531 = vmatpush1.msra.mxu0 0.0
      %532 = vmatprep.subr.mxu0 0.0
      %533 = vmatpush1.msra.mxu0 0.0
      %534 = vmatprep.subr.mxu0 0.0
      %535 = vmatpush1.msra.mxu0 0.0
      %536 = vmatprep.subr.mxu0 0.0
      %537 = vmatpush1.msra.mxu0 0.0
      %538 = vmatprep.subr.mxu0 0.0
      %539 = vmatpush1.msra.mxu0 0.0
      %540 = vmatprep.subr.mxu0 0.0
      %541 = vmatpush1.msra.mxu0 0.0
      %542 = vmatprep.subr.mxu0 0.0
      %543 = vmatpush1.msra.mxu0 0.0
      %544 = vmatprep.mubr.f32.mxu0 0.0
      %545 = vmatmul.mubr.f32.gmra.mrb[0].mxu0 %v412
      %v546 = vpop.f32.mrb[0].mxu0
      %v547 = vadd.f32 0.0, %v546
      %v548 = vpop.f32.mrb[0].mxu0
      %549 = vmatprep.mubr.f32.mxu0 0.0
      %550 = vmatmul.mubr.f32.gmra.mrb[0].mxu0 %v414
      %v551 = vpop.f32.mrb[0].mxu0
      %v552 = vadd.f32 0.0, %v551
      %v553 = vpop.f32.mrb[0].mxu0
      %554 = vmatprep.mubr.f32.mxu0 0.0
      %555 = vmatmul.mubr.f32.gmra.mrb[0].mxu0 %v416
      %v556 = vpop.f32.mrb[0].mxu0
      %v557 = vadd.f32 0.0, %v556
      %v558 = vpop.f32.mrb[0].mxu0
      %559 = vmatprep.mubr.f32.mxu0 0.0
      %560 = vmatmul.mubr.f32.gmra.mrb[0].mxu0 %v418
      %v561 = vpop.f32.mrb[0].mxu0
      %v562 = vadd.f32 0.0, %v561
      %v563 = vpop.f32.mrb[0].mxu0
      %564 = vmatprep.mubr.f32.mxu0 0.0
      %565 = vmatmul.mubr.f32.gmra.mrb[0].mxu0 %v420
      %v566 = vpop.f32.mrb[0].mxu0
      %v567 = vadd.f32 0.0, %v566
      %v568 = vpop.f32.mrb[0].mxu0
      %569 = vmatprep.mubr.f32.mxu0 0.0
      %570 = vmatmul.mubr.f32.gmra.mrb[0].mxu0 %v422
      %v571 = vpop.f32.mrb[0].mxu0
      %v572 = vadd.f32 0.0, %v571
      %v573 = vpop.f32.mrb[0].mxu0
      %574 = vmatprep.mubr.f32.mxu0 0.0
      %575 = vmatmul.mubr.f32.gmra.mrb[0].mxu0 %v424
      %v576 = vpop.f32.mrb[0].mxu0
      %v577 = vadd.f32 0.0, %v576
      %v578 = vpop.f32.mrb[0].mxu0
      %579 = vmatprep.mubr.f32.mxu0 0.0
      %580 = vmatmul.mubr.f32.gmra.mrb[0].mxu0 %v426
      %v581 = vpop.f32.mrb[0].mxu0
      %v582 = vadd.f32 0.0, %v581
      %v583 = vpop.f32.mrb[0].mxu0
      %584 = vmatprep.mubr.f32.mxu0 0.0
      %585 = vmatmul.mubr.f32.gmra.mrb[0].mxu0 %v428
      %v586 = vpop.f32.mrb[0].mxu0
      %v587 = vadd.f32 0.0, %v586
      %v588 = vpop.f32.mrb[0].mxu0
      %589 = vmatprep.mubr.f32.mxu0 0.0
      %590 = vmatmul.mubr.f32.gmra.mrb[0].mxu0 %v430
      %v591 = vpop.f32.mrb[0].mxu0
      %v592 = vadd.f32 0.0, %v591
      %v593 = vpop.f32.mrb[0].mxu0
      %594 = vmatprep.mubr.f32.mxu0 0.0
      %595 = vmatmul.mubr.f32.gmra.mrb[0].mxu0 %v432
      %v596 = vpop.f32.mrb[0].mxu0
      %v597 = vadd.f32 0.0, %v596
      %v598 = vpop.f32.mrb[0].mxu0
      %599 = vmatprep.mubr.f32.mxu0 0.0
      %600 = vmatmul.mubr.f32.gmra.mrb[0].mxu0 %v434
      %v601 = vpop.f32.mrb[0].mxu0
      %v602 = vadd.f32 0.0, %v601
      %v603 = vpop.f32.mrb[0].mxu0
      %604 = vmatprep.mubr.f32.mxu0 0.0
      %605 = vmatmul.mubr.f32.gmra.mrb[0].mxu0 %v436
      %v606 = vpop.f32.mrb[0].mxu0
      %v607 = vadd.f32 0.0, %v606
      %v608 = vpop.f32.mrb[0].mxu0
      %609 = vmatprep.mubr.f32.mxu0 0.0
      %610 = vmatmul.mubr.f32.gmra.mrb[0].mxu0 %v438
      %v611 = vpop.f32.mrb[0].mxu0
      %v612 = vadd.f32 0.0, %v611
      %v613 = vpop.f32.mrb[0].mxu0
      %614 = vmatprep.mubr.f32.mxu0 0.0
      %615 = vmatmul.mubr.f32.gmra.mrb[0].mxu0 %v440
      %v616 = vpop.f32.mrb[0].mxu0
      %v617 = vadd.f32 0.0, %v616
      %v618 = vpop.f32.mrb[0].mxu0
      %619 = vmatprep.mubr.f32.mxu0 0.0
      %620 = vmatmul.mubr.f32.gmra.mrb[0].mxu0 %v442
      %v621 = vpop.f32.mrb[0].mxu0
      %v622 = vadd.f32 0.0, %v621
      %v623 = vpop.f32.mrb[0].mxu0
      %624 = vmatprep.mubr.f32.mxu0 0.0
      %625 = vmatmul.mubr.f32.gmra.mrb[0].mxu0 %v444
      %v626 = vpop.f32.mrb[0].mxu0
      %v627 = vadd.f32 0.0, %v626
      %v628 = vpop.f32.mrb[0].mxu0
      %629 = vmatprep.mubr.f32.mxu0 0.0
      %630 = vmatmul.mubr.f32.gmra.mrb[0].mxu0 %v446
      %v631 = vpop.f32.mrb[0].mxu0
      %v632 = vadd.f32 0.0, %v631
      %v633 = vpop.f32.mrb[0].mxu0
      %634 = vmatprep.mubr.f32.mxu0 0.0
      %635 = vmatmul.mubr.f32.gmra.mrb[0].mxu0 %v448
      %v636 = vpop.f32.mrb[0].mxu0
      %v637 = vadd.f32 0.0, %v636
      %v638 = vpop.f32.mrb[0].mxu0
      %639 = vmatprep.mubr.f32.mxu0 0.0
      %640 = vmatmul.mubr.f32.gmra.mrb[0].mxu0 %v450
      %v641 = vpop.f32.mrb[0].mxu0
      %v642 = vadd.f32 0.0, %v641
      %v643 = vpop.f32.mrb[0].mxu0
      %644 = vmatprep.mubr.f32.mxu0 0.0
      %645 = vmatmul.mubr.f32.gmra.mrb[0].mxu0 %v452
      %v646 = vpop.f32.mrb[0].mxu0
      %v647 = vadd.f32 0.0, %v646
      %v648 = vpop.f32.mrb[0].mxu0
      %649 = vmatprep.mubr.f32.mxu0 0.0
      %650 = vmatmul.mubr.f32.gmra.mrb[0].mxu0 %v454
      %v651 = vpop.f32.mrb[0].mxu0
      %v652 = vadd.f32 0.0, %v651
      %v653 = vpop.f32.mrb[0].mxu0
      %654 = vmatprep.mubr.f32.mxu0 0.0
      %655 = vmatmul.mubr.f32.gmra.mrb[0].mxu0 %v456
      %v656 = vpop.f32.mrb[0].mxu0
      %v657 = vadd.f32 0.0, %v656
      %v658 = vpop.f32.mrb[0].mxu0
      %659 = vmatprep.mubr.f32.mxu0 0.0
      %660 = vmatmul.mubr.f32.gmra.mrb[0].mxu0 %v458
      %v661 = vpop.f32.mrb[0].mxu0
      %v662 = vadd.f32 0.0, %v661
      %v663 = vpop.f32.mrb[0].mxu0
      %664 = vmatprep.mubr.f32.mxu0 0.0
      %665 = vmatmul.mubr.f32.gmra.mrb[0].mxu0 %v460
      %v666 = vpop.f32.mrb[0].mxu0
      %v667 = vadd.f32 0.0, %v666
      %v668 = vpop.f32.mrb[0].mxu0
      %669 = vmatprep.mubr.f32.mxu0 0.0
      %670 = vmatmul.mubr.f32.gmra.mrb[0].mxu0 %v462
      %v671 = vpop.f32.mrb[0].mxu0
      %v672 = vadd.f32 0.0, %v671
      %v673 = vpop.f32.mrb[0].mxu0
      %674 = vmatprep.mubr.f32.mxu0 0.0
      %675 = vmatmul.mubr.f32.gmra.mrb[0].mxu0 %v464
      %v676 = vpop.f32.mrb[0].mxu0
      %v677 = vadd.f32 0.0, %v676
      %v678 = vpop.f32.mrb[0].mxu0
      %679 = vmatprep.mubr.f32.mxu0 0.0
      %680 = vmatmul.mubr.f32.gmra.mrb[0].mxu0 %v466
      %v681 = vpop.f32.mrb[0].mxu0
      %v682 = vadd.f32 0.0, %v681
      %v683 = vpop.f32.mrb[0].mxu0
      %684 = vmatprep.mubr.f32.mxu0 0.0
      %685 = vmatmul.mubr.f32.gmra.mrb[0].mxu0 %v468
      %v686 = vpop.f32.mrb[0].mxu0
      %v687 = vadd.f32 0.0, %v686
      %v688 = vpop.f32.mrb[0].mxu0
      %689 = vmatprep.mubr.f32.mxu0 0.0
      %690 = vmatmul.mubr.f32.gmra.mrb[0].mxu0 %v470
      %v691 = vpop.f32.mrb[0].mxu0
      %v692 = vadd.f32 0.0, %v691
      %v693 = vpop.f32.mrb[0].mxu0
      %694 = vmatprep.mubr.f32.mxu0 0.0
      %695 = vmatmul.mubr.f32.gmra.mrb[0].mxu0 %v472
      %v696 = vpop.f32.mrb[0].mxu0
      %v697 = vadd.f32 0.0, %v696
      %v698 = vpop.f32.mrb[0].mxu0
      %699 = vmatprep.mubr.f32.mxu0 0.0
      %700 = vmatmul.mubr.f32.gmra.mrb[0].mxu0 %v474
      %v701 = vpop.f32.mrb[0].mxu0
      %v702 = vadd.f32 0.0, %v701
      %v703 = vpop.f32.mrb[0].mxu0
      %704 = vdwg.mxu0
      %v705 = vsel %vm411, %v225, 0
      %v707 = vsel %vm411, %v226, 0
      %v709 = vsel %vm411, %v228, 0
      %v711 = vsel %vm411, %v229, 0
      %v713 = vsel %vm411, %v231, 0
      %v715 = vsel %vm411, %v232, 0
      %v717 = vsel %vm411, %v234, 0
      %v719 = vsel %vm411, %v235, 0
      %v721 = vsel %vm411, %v237, 0
      %v723 = vsel %vm411, %v238, 0
      %v725 = vsel %vm411, %v240, 0
      %v727 = vsel %vm411, %v241, 0
      %v729 = vsel %vm411, %v243, 0
      %v731 = vsel %vm411, %v244, 0
      %v733 = vsel %vm411, %v246, 0
      %v735 = vsel %vm411, %v247, 0
      %v737 = vsel %vm411, %v249, 0
      %v739 = vsel %vm411, %v250, 0
      %v741 = vsel %vm411, %v252, 0
      %v743 = vsel %vm411, %v253, 0
      %v745 = vsel %vm411, %v255, 0
      %v747 = vsel %vm411, %v256, 0
      %v749 = vsel %vm411, %v258, 0
      %v751 = vsel %vm411, %v259, 0
      %v753 = vsel %vm411, %v261, 0
      %v755 = vsel %vm411, %v262, 0
      %v757 = vsel %vm411, %v264, 0
      %v759 = vsel %vm411, %v265, 0
      %v761 = vsel %vm411, %v267, 0
      %v763 = vsel %vm411, %v268, 0
      %v765 = vsel %vm411, %v270, 0
      %v767 = vsel %vm411, %v271, 0
      %v770 = vsel %vm476, %v279, 0
      %772 = vmatprep.subr.mxu0 0.0
      %773 = vmatpush1.msra.mxu0 %v770
      %774 = vmatprep.subr.mxu0 0.0
      %775 = vmatpush1.msra.mxu0 0.0
      %776 = vmatprep.subr.mxu0 0.0
      %777 = vmatpush1.msra.mxu0 0.0
      %778 = vmatprep.subr.mxu0 0.0
      %779 = vmatpush1.msra.mxu0 0.0
      %780 = vmatprep.subr.mxu0 0.0
      %781 = vmatpush1.msra.mxu0 0.0
      %782 = vmatprep.subr.mxu0 0.0
      %783 = vmatpush1.msra.mxu0 0.0
      %784 = vmatprep.subr.mxu0 0.0
      %785 = vmatpush1.msra.mxu0 0.0
      %786 = vmatprep.subr.mxu0 0.0
      %787 = vmatpush1.msra.mxu0 0.0
      %788 = vmatprep.subr.mxu0 0.0
      %789 = vmatpush1.msra.mxu0 0.0
      %790 = vmatprep.subr.mxu0 0.0
      %791 = vmatpush1.msra.mxu0 0.0
      %792 = vmatprep.subr.mxu0 0.0
      %793 = vmatpush1.msra.mxu0 0.0
      %794 = vmatprep.subr.mxu0 0.0
      %795 = vmatpush1.msra.mxu0 0.0
      %796 = vmatprep.subr.mxu0 0.0
      %797 = vmatpush1.msra.mxu0 0.0
      %798 = vmatprep.subr.mxu0 0.0
      %799 = vmatpush1.msra.mxu0 0.0
      %800 = vmatprep.subr.mxu0 0.0
      %801 = vmatpush1.msra.mxu0 0.0
      %802 = vmatprep.subr.mxu0 0.0
      %803 = vmatpush1.msra.mxu0 0.0
      %804 = vmatprep.subr.mxu0 0.0
      %805 = vmatpush1.msra.mxu0 0.0
      %806 = vmatprep.subr.mxu0 0.0
      %807 = vmatpush1.msra.mxu0 0.0
      %808 = vmatprep.subr.mxu0 0.0
      %809 = vmatpush1.msra.mxu0 0.0
      %810 = vmatprep.subr.mxu0 0.0
      %811 = vmatpush1.msra.mxu0 0.0
      %812 = vmatprep.subr.mxu0 0.0
      %813 = vmatpush1.msra.mxu0 0.0
      %814 = vmatprep.subr.mxu0 0.0
      %815 = vmatpush1.msra.mxu0 0.0
      %816 = vmatprep.subr.mxu0 0.0
      %817 = vmatpush1.msra.mxu0 0.0
      %818 = vmatprep.subr.mxu0 0.0
      %819 = vmatpush1.msra.mxu0 0.0
      %820 = vmatprep.subr.mxu0 0.0
      %821 = vmatpush1.msra.mxu0 0.0
      %822 = vmatprep.subr.mxu0 0.0
      %823 = vmatpush1.msra.mxu0 0.0
      %824 = vmatprep.subr.mxu0 0.0
      %825 = vmatpush1.msra.mxu0 0.0
      %826 = vmatprep.subr.mxu0 0.0
      %827 = vmatpush1.msra.mxu0 0.0
      %828 = vmatprep.subr.mxu0 0.0
      %829 = vmatpush1.msra.mxu0 0.0
      %830 = vmatprep.subr.mxu0 0.0
      %831 = vmatpush1.msra.mxu0 0.0
      %832 = vmatprep.subr.mxu0 0.0
      %833 = vmatpush1.msra.mxu0 0.0
      %834 = vmatprep.subr.mxu0 0.0
      %835 = vmatpush1.msra.mxu0 0.0
      %836 = vmatprep.mubr.f32.mxu0 0.0
      %837 = vmatmul.mubr.f32.gmra.mrb[0].mxu0 %v705
      %v838 = vpop.f32.mrb[0].mxu0
      %v839 = vadd.f32 %v547, %v838
      %v840 = vpop.f32.mrb[0].mxu0
      %841 = vmatprep.mubr.f32.mxu0 0.0
      %842 = vmatmul.mubr.f32.gmra.mrb[0].mxu0 %v707
      %v843 = vpop.f32.mrb[0].mxu0
      %v844 = vadd.f32 %v552, %v843
      %v845 = vpop.f32.mrb[0].mxu0
      %846 = vmatprep.mubr.f32.mxu0 0.0
      %847 = vmatmul.mubr.f32.gmra.mrb[0].mxu0 %v709
      %v848 = vpop.f32.mrb[0].mxu0
      %v849 = vadd.f32 %v557, %v848
      %v850 = vpop.f32.mrb[0].mxu0
      %851 = vmatprep.mubr.f32.mxu0 0.0
      %852 = vmatmul.mubr.f32.gmra.mrb[0].mxu0 %v711
      %v853 = vpop.f32.mrb[0].mxu0
      %v854 = vadd.f32 %v562, %v853
      %v855 = vpop.f32.mrb[0].mxu0
      %856 = vmatprep.mubr.f32.mxu0 0.0
      %857 = vmatmul.mubr.f32.gmra.mrb[0].mxu0 %v713
      %v858 = vpop.f32.mrb[0].mxu0
      %v859 = vadd.f32 %v567, %v858
      %v860 = vpop.f32.mrb[0].mxu0
      %861 = vmatprep.mubr.f32.mxu0 0.0
      %862 = vmatmul.mubr.f32.gmra.mrb[0].mxu0 %v715
      %v863 = vpop.f32.mrb[0].mxu0
      %v864 = vadd.f32 %v572, %v863
      %v865 = vpop.f32.mrb[0].mxu0
      %866 = vmatprep.mubr.f32.mxu0 0.0
      %867 = vmatmul.mubr.f32.gmra.mrb[0].mxu0 %v717
      %v868 = vpop.f32.mrb[0].mxu0
      %v869 = vadd.f32 %v577, %v868
      %v870 = vpop.f32.mrb[0].mxu0
      %871 = vmatprep.mubr.f32.mxu0 0.0
      %872 = vmatmul.mubr.f32.gmra.mrb[0].mxu0 %v719
      %v873 = vpop.f32.mrb[0].mxu0
      %v874 = vadd.f32 %v582, %v873
      %v875 = vpop.f32.mrb[0].mxu0
      %876 = vmatprep.mubr.f32.mxu0 0.0
      %877 = vmatmul.mubr.f32.gmra.mrb[0].mxu0 %v721
      %v878 = vpop.f32.mrb[0].mxu0
      %v879 = vadd.f32 %v587, %v878
      %v880 = vpop.f32.mrb[0].mxu0
      %881 = vmatprep.mubr.f32.mxu0 0.0
      %882 = vmatmul.mubr.f32.gmra.mrb[0].mxu0 %v723
      %v883 = vpop.f32.mrb[0].mxu0
      %v884 = vadd.f32 %v592, %v883
      %v885 = vpop.f32.mrb[0].mxu0
      %886 = vmatprep.mubr.f32.mxu0 0.0
      %887 = vmatmul.mubr.f32.gmra.mrb[0].mxu0 %v725
      %v888 = vpop.f32.mrb[0].mxu0
      %v889 = vadd.f32 %v597, %v888
      %v890 = vpop.f32.mrb[0].mxu0
      %891 = vmatprep.mubr.f32.mxu0 0.0
      %892 = vmatmul.mubr.f32.gmra.mrb[0].mxu0 %v727
      %v893 = vpop.f32.mrb[0].mxu0
      %v894 = vadd.f32 %v602, %v893
      %v895 = vpop.f32.mrb[0].mxu0
      %896 = vmatprep.mubr.f32.mxu0 0.0
      %897 = vmatmul.mubr.f32.gmra.mrb[0].mxu0 %v729
      %v898 = vpop.f32.mrb[0].mxu0
      %v899 = vadd.f32 %v607, %v898
      %v900 = vpop.f32.mrb[0].mxu0
      %901 = vmatprep.mubr.f32.mxu0 0.0
      %902 = vmatmul.mubr.f32.gmra.mrb[0].mxu0 %v731
      %v903 = vpop.f32.mrb[0].mxu0
      %v904 = vadd.f32 %v612, %v903
      %v905 = vpop.f32.mrb[0].mxu0
      %906 = vmatprep.mubr.f32.mxu0 0.0
      %907 = vmatmul.mubr.f32.gmra.mrb[0].mxu0 %v733
      %v908 = vpop.f32.mrb[0].mxu0
      %v909 = vadd.f32 %v617, %v908
      %v910 = vpop.f32.mrb[0].mxu0
      %911 = vmatprep.mubr.f32.mxu0 0.0
      %912 = vmatmul.mubr.f32.gmra.mrb[0].mxu0 %v735
      %v913 = vpop.f32.mrb[0].mxu0
      %v914 = vadd.f32 %v622, %v913
      %v915 = vpop.f32.mrb[0].mxu0
      %916 = vmatprep.mubr.f32.mxu0 0.0
      %917 = vmatmul.mubr.f32.gmra.mrb[0].mxu0 %v737
      %v918 = vpop.f32.mrb[0].mxu0
      %v919 = vadd.f32 %v627, %v918
      %v920 = vpop.f32.mrb[0].mxu0
      %921 = vmatprep.mubr.f32.mxu0 0.0
      %922 = vmatmul.mubr.f32.gmra.mrb[0].mxu0 %v739
      %v923 = vpop.f32.mrb[0].mxu0
      %v924 = vadd.f32 %v632, %v923
      %v925 = vpop.f32.mrb[0].mxu0
      %926 = vmatprep.mubr.f32.mxu0 0.0
      %927 = vmatmul.mubr.f32.gmra.mrb[0].mxu0 %v741
      %v928 = vpop.f32.mrb[0].mxu0
      %v929 = vadd.f32 %v637, %v928
      %v930 = vpop.f32.mrb[0].mxu0
      %931 = vmatprep.mubr.f32.mxu0 0.0
      %932 = vmatmul.mubr.f32.gmra.mrb[0].mxu0 %v743
      %v933 = vpop.f32.mrb[0].mxu0
      %v934 = vadd.f32 %v642, %v933
      %v935 = vpop.f32.mrb[0].mxu0
      %936 = vmatprep.mubr.f32.mxu0 0.0
      %937 = vmatmul.mubr.f32.gmra.mrb[0].mxu0 %v745
      %v938 = vpop.f32.mrb[0].mxu0
      %v939 = vadd.f32 %v647, %v938
      %v940 = vpop.f32.mrb[0].mxu0
      %941 = vmatprep.mubr.f32.mxu0 0.0
      %942 = vmatmul.mubr.f32.gmra.mrb[0].mxu0 %v747
      %v943 = vpop.f32.mrb[0].mxu0
      %v944 = vadd.f32 %v652, %v943
      %v945 = vpop.f32.mrb[0].mxu0
      %946 = vmatprep.mubr.f32.mxu0 0.0
      %947 = vmatmul.mubr.f32.gmra.mrb[0].mxu0 %v749
      %v948 = vpop.f32.mrb[0].mxu0
      %v949 = vadd.f32 %v657, %v948
      %v950 = vpop.f32.mrb[0].mxu0
      %951 = vmatprep.mubr.f32.mxu0 0.0
      %952 = vmatmul.mubr.f32.gmra.mrb[0].mxu0 %v751
      %v953 = vpop.f32.mrb[0].mxu0
      %v954 = vadd.f32 %v662, %v953
      %v955 = vpop.f32.mrb[0].mxu0
      %956 = vmatprep.mubr.f32.mxu0 0.0
      %957 = vmatmul.mubr.f32.gmra.mrb[0].mxu0 %v753
      %v958 = vpop.f32.mrb[0].mxu0
      %v959 = vadd.f32 %v667, %v958
      %v960 = vpop.f32.mrb[0].mxu0
      %961 = vmatprep.mubr.f32.mxu0 0.0
      %962 = vmatmul.mubr.f32.gmra.mrb[0].mxu0 %v755
      %v963 = vpop.f32.mrb[0].mxu0
      %v964 = vadd.f32 %v672, %v963
      %v965 = vpop.f32.mrb[0].mxu0
      %966 = vmatprep.mubr.f32.mxu0 0.0
      %967 = vmatmul.mubr.f32.gmra.mrb[0].mxu0 %v757
      %v968 = vpop.f32.mrb[0].mxu0
      %v969 = vadd.f32 %v677, %v968
      %v970 = vpop.f32.mrb[0].mxu0
      %971 = vmatprep.mubr.f32.mxu0 0.0
      %972 = vmatmul.mubr.f32.gmra.mrb[0].mxu0 %v759
      %v973 = vpop.f32.mrb[0].mxu0
      %v974 = vadd.f32 %v682, %v973
      %v975 = vpop.f32.mrb[0].mxu0
      %976 = vmatprep.mubr.f32.mxu0 0.0
      %977 = vmatmul.mubr.f32.gmra.mrb[0].mxu0 %v761
      %v978 = vpop.f32.mrb[0].mxu0
      %v979 = vadd.f32 %v687, %v978
      %v980 = vpop.f32.mrb[0].mxu0
      %981 = vmatprep.mubr.f32.mxu0 0.0
      %982 = vmatmul.mubr.f32.gmra.mrb[0].mxu0 %v763
      %v983 = vpop.f32.mrb[0].mxu0
      %v984 = vadd.f32 %v692, %v983
      %v985 = vpop.f32.mrb[0].mxu0
      %986 = vmatprep.mubr.f32.mxu0 0.0
      %987 = vmatmul.mubr.f32.gmra.mrb[0].mxu0 %v765
      %v988 = vpop.f32.mrb[0].mxu0
      %v989 = vadd.f32 %v697, %v988
      %v990 = vpop.f32.mrb[0].mxu0
      %991 = vmatprep.mubr.f32.mxu0 0.0
      %992 = vmatmul.mubr.f32.gmra.mrb[0].mxu0 %v767
      %v993 = vpop.f32.mrb[0].mxu0
      %v994 = vadd.f32 %v702, %v993
      %v995 = vpop.f32.mrb[0].mxu0
      %996 = vdwg.mxu0
      %vm997 = vcmask 1045504
      %v998 = vrot.slane %v225, 2
      %v999 = vrot.slane %v226, 2
      %v1000 = vsel %vm997, %v998, %v999
      %v1001 = vrot.slane %v227, 2
      %v1002 = vsel %vm997, %v999, %v1001
      %v1003 = vrot.slane %v228, 2
      %v1004 = vrot.slane %v229, 2
      %v1005 = vsel %vm997, %v1003, %v1004
      %v1006 = vrot.slane %v230, 2
      %v1007 = vsel %vm997, %v1004, %v1006
      %v1008 = vrot.slane %v231, 2
      %v1009 = vrot.slane %v232, 2
      %v1010 = vsel %vm997, %v1008, %v1009
      %v1011 = vrot.slane %v233, 2
      %v1012 = vsel %vm997, %v1009, %v1011
      %v1013 = vrot.slane %v234, 2
      %v1014 = vrot.slane %v235, 2
      %v1015 = vsel %vm997, %v1013, %v1014
      %v1016 = vrot.slane %v236, 2
      %v1017 = vsel %vm997, %v1014, %v1016
      %v1018 = vrot.slane %v237, 2
      %v1019 = vrot.slane %v238, 2
      %v1020 = vsel %vm997, %v1018, %v1019
      %v1021 = vrot.slane %v239, 2
      %v1022 = vsel %vm997, %v1019, %v1021
      %v1023 = vrot.slane %v240, 2
      %v1024 = vrot.slane %v241, 2
      %v1025 = vsel %vm997, %v1023, %v1024
      %v1026 = vrot.slane %v242, 2
      %v1027 = vsel %vm997, %v1024, %v1026
      %v1028 = vrot.slane %v243, 2
      %v1029 = vrot.slane %v244, 2
      %v1030 = vsel %vm997, %v1028, %v1029
      %v1031 = vrot.slane %v245, 2
      %v1032 = vsel %vm997, %v1029, %v1031
      %v1033 = vrot.slane %v246, 2
      %v1034 = vrot.slane %v247, 2
      %v1035 = vsel %vm997, %v1033, %v1034
      %v1036 = vrot.slane %v248, 2
      %v1037 = vsel %vm997, %v1034, %v1036
      %v1038 = vrot.slane %v249, 2
      %v1039 = vrot.slane %v250, 2
      %v1040 = vsel %vm997, %v1038, %v1039
      %v1041 = vrot.slane %v251, 2
      %v1042 = vsel %vm997, %v1039, %v1041
      %v1043 = vrot.slane %v252, 2
      %v1044 = vrot.slane %v253, 2
      %v1045 = vsel %vm997, %v1043, %v1044
      %v1046 = vrot.slane %v254, 2
      %v1047 = vsel %vm997, %v1044, %v1046
      %v1048 = vrot.slane %v255, 2
      %v1049 = vrot.slane %v256, 2
      %v1050 = vsel %vm997, %v1048, %v1049
      %v1051 = vrot.slane %v257, 2
      %v1052 = vsel %vm997, %v1049, %v1051
      %v1053 = vrot.slane %v258, 2
      %v1054 = vrot.slane %v259, 2
      %v1055 = vsel %vm997, %v1053, %v1054
      %v1056 = vrot.slane %v260, 2
      %v1057 = vsel %vm997, %v1054, %v1056
      %v1058 = vrot.slane %v261, 2
      %v1059 = vrot.slane %v262, 2
      %v1060 = vsel %vm997, %v1058, %v1059
      %v1061 = vrot.slane %v263, 2
      %v1062 = vsel %vm997, %v1059, %v1061
      %v1063 = vrot.slane %v264, 2
      %v1064 = vrot.slane %v265, 2
      %v1065 = vsel %vm997, %v1063, %v1064
      %v1066 = vrot.slane %v266, 2
      %v1067 = vsel %vm997, %v1064, %v1066
      %v1068 = vrot.slane %v267, 2
      %v1069 = vrot.slane %v268, 2
      %v1070 = vsel %vm997, %v1068, %v1069
      %v1071 = vrot.slane %v269, 2
      %v1072 = vsel %vm997, %v1069, %v1071
      %v1073 = vrot.slane %v270, 2
      %v1074 = vrot.slane %v271, 2
      %v1075 = vsel %vm997, %v1073, %v1074
      %v1076 = vrot.slane %v272, 2
      %v1077 = vsel %vm997, %v1074, %v1076
      %s1078 = scalar_lea.vmem %s1, 8
      %v1079 = vld [vmem:[%s1078] sm:$0xf]
      %v1080 = vsel %vm411, %v1000, 0
      %v1082 = vsel %vm411, %v1002, 0
      %v1084 = vsel %vm411, %v1005, 0
      %v1086 = vsel %vm411, %v1007, 0
      %v1088 = vsel %vm411, %v1010, 0
      %v1090 = vsel %vm411, %v1012, 0
      %v1092 = vsel %vm411, %v1015, 0
      %v1094 = vsel %vm411, %v1017, 0
      %v1096 = vsel %vm411, %v1020, 0
      %v1098 = vsel %vm411, %v1022, 0
      %v1100 = vsel %vm411, %v1025, 0
      %v1102 = vsel %vm411, %v1027, 0
      %v1104 = vsel %vm411, %v1030, 0
      %v1106 = vsel %vm411, %v1032, 0
      %v1108 = vsel %vm411, %v1035, 0
      %v1110 = vsel %vm411, %v1037, 0
      %v1112 = vsel %vm411, %v1040, 0
      %v1114 = vsel %vm411, %v1042, 0
      %v1116 = vsel %vm411, %v1045, 0
      %v1118 = vsel %vm411, %v1047, 0
      %v1120 = vsel %vm411, %v1050, 0
      %v1122 = vsel %vm411, %v1052, 0
      %v1124 = vsel %vm411, %v1055, 0
      %v1126 = vsel %vm411, %v1057, 0
      %v1128 = vsel %vm411, %v1060, 0
      %v1130 = vsel %vm411, %v1062, 0
      %v1132 = vsel %vm411, %v1065, 0
      %v1134 = vsel %vm411, %v1067, 0
      %v1136 = vsel %vm411, %v1070, 0
      %v1138 = vsel %vm411, %v1072, 0
      %v1140 = vsel %vm411, %v1075, 0
      %v1142 = vsel %vm411, %v1077, 0
      %v1145 = vsel %vm476, %v1079, 0
      %1147 = vmatprep.subr.mxu0 0.0
      %1148 = vmatpush1.msra.mxu0 %v1145
      %1149 = vmatprep.subr.mxu0 0.0
      %1150 = vmatpush1.msra.mxu0 0.0
      %1151 = vmatprep.subr.mxu0 0.0
      %1152 = vmatpush1.msra.mxu0 0.0
      %1153 = vmatprep.subr.mxu0 0.0
      %1154 = vmatpush1.msra.mxu0 0.0
      %1155 = vmatprep.subr.mxu0 0.0
      %1156 = vmatpush1.msra.mxu0 0.0
      %1157 = vmatprep.subr.mxu0 0.0
      %1158 = vmatpush1.msra.mxu0 0.0
      %1159 = vmatprep.subr.mxu0 0.0
      %1160 = vmatpush1.msra.mxu0 0.0
      %1161 = vmatprep.subr.mxu0 0.0
      %1162 = vmatpush1.msra.mxu0 0.0
      %1163 = vmatprep.subr.mxu0 0.0
      %1164 = vmatpush1.msra.mxu0 0.0
      %1165 = vmatprep.subr.mxu0 0.0
      %1166 = vmatpush1.msra.mxu0 0.0
      %1167 = vmatprep.subr.mxu0 0.0
      %1168 = vmatpush1.msra.mxu0 0.0
      %1169 = vmatprep.subr.mxu0 0.0
      %1170 = vmatpush1.msra.mxu0 0.0
      %1171 = vmatprep.subr.mxu0 0.0
      %1172 = vmatpush1.msra.mxu0 0.0
      %1173 = vmatprep.subr.mxu0 0.0
      %1174 = vmatpush1.msra.mxu0 0.0
      %1175 = vmatprep.subr.mxu0 0.0
      %1176 = vmatpush1.msra.mxu0 0.0
      %1177 = vmatprep.subr.mxu0 0.0
      %1178 = vmatpush1.msra.mxu0 0.0
      %1179 = vmatprep.subr.mxu0 0.0
      %1180 = vmatpush1.msra.mxu0 0.0
      %1181 = vmatprep.subr.mxu0 0.0
      %1182 = vmatpush1.msra.mxu0 0.0
      %1183 = vmatprep.subr.mxu0 0.0
      %1184 = vmatpush1.msra.mxu0 0.0
      %1185 = vmatprep.subr.mxu0 0.0
      %1186 = vmatpush1.msra.mxu0 0.0
      %1187 = vmatprep.subr.mxu0 0.0
      %1188 = vmatpush1.msra.mxu0 0.0
      %1189 = vmatprep.subr.mxu0 0.0
      %1190 = vmatpush1.msra.mxu0 0.0
      %1191 = vmatprep.subr.mxu0 0.0
      %1192 = vmatpush1.msra.mxu0 0.0
      %1193 = vmatprep.subr.mxu0 0.0
      %1194 = vmatpush1.msra.mxu0 0.0
      %1195 = vmatprep.subr.mxu0 0.0
      %1196 = vmatpush1.msra.mxu0 0.0
      %1197 = vmatprep.subr.mxu0 0.0
      %1198 = vmatpush1.msra.mxu0 0.0
      %1199 = vmatprep.subr.mxu0 0.0
      %1200 = vmatpush1.msra.mxu0 0.0
      %1201 = vmatprep.subr.mxu0 0.0
      %1202 = vmatpush1.msra.mxu0 0.0
      %1203 = vmatprep.subr.mxu0 0.0
      %1204 = vmatpush1.msra.mxu0 0.0
      %1205 = vmatprep.subr.mxu0 0.0
      %1206 = vmatpush1.msra.mxu0 0.0
      %1207 = vmatprep.subr.mxu0 0.0
      %1208 = vmatpush1.msra.mxu0 0.0
      %1209 = vmatprep.subr.mxu0 0.0
      %1210 = vmatpush1.msra.mxu0 0.0
      %1211 = vmatprep.mubr.f32.mxu0 0.0
      %1212 = vmatmul.mubr.f32.gmra.mrb[0].mxu0 %v1080
      %v1213 = vpop.f32.mrb[0].mxu0
      %v1214 = vadd.f32 0.0, %v1213
      %v1215 = vpop.f32.mrb[0].mxu0
      %1216 = vmatprep.mubr.f32.mxu0 0.0
      %1217 = vmatmul.mubr.f32.gmra.mrb[0].mxu0 %v1082
      %v1218 = vpop.f32.mrb[0].mxu0
      %v1219 = vadd.f32 0.0, %v1218
      %v1220 = vpop.f32.mrb[0].mxu0
      %1221 = vmatprep.mubr.f32.mxu0 0.0
      %1222 = vmatmul.mubr.f32.gmra.mrb[0].mxu0 %v1084
      %v1223 = vpop.f32.mrb[0].mxu0
      %v1224 = vadd.f32 0.0, %v1223
      %v1225 = vpop.f32.mrb[0].mxu0
      %1226 = vmatprep.mubr.f32.mxu0 0.0
      %1227 = vmatmul.mubr.f32.gmra.mrb[0].mxu0 %v1086
      %v1228 = vpop.f32.mrb[0].mxu0
      %v1229 = vadd.f32 0.0, %v1228
      %v1230 = vpop.f32.mrb[0].mxu0
      %1231 = vmatprep.mubr.f32.mxu0 0.0
      %1232 = vmatmul.mubr.f32.gmra.mrb[0].mxu0 %v1088
      %v1233 = vpop.f32.mrb[0].mxu0
      %v1234 = vadd.f32 0.0, %v1233
      %v1235 = vpop.f32.mrb[0].mxu0
      %1236 = vmatprep.mubr.f32.mxu0 0.0
      %1237 = vmatmul.mubr.f32.gmra.mrb[0].mxu0 %v1090
      %v1238 = vpop.f32.mrb[0].mxu0
      %v1239 = vadd.f32 0.0, %v1238
      %v1240 = vpop.f32.mrb[0].mxu0
      %1241 = vmatprep.mubr.f32.mxu0 0.0
      %1242 = vmatmul.mubr.f32.gmra.mrb[0].mxu0 %v1092
      %v1243 = vpop.f32.mrb[0].mxu0
      %v1244 = vadd.f32 0.0, %v1243
      %v1245 = vpop.f32.mrb[0].mxu0
      %1246 = vmatprep.mubr.f32.mxu0 0.0
      %1247 = vmatmul.mubr.f32.gmra.mrb[0].mxu0 %v1094
      %v1248 = vpop.f32.mrb[0].mxu0
      %v1249 = vadd.f32 0.0, %v1248
      %v1250 = vpop.f32.mrb[0].mxu0
      %1251 = vmatprep.mubr.f32.mxu0 0.0
      %1252 = vmatmul.mubr.f32.gmra.mrb[0].mxu0 %v1096
      %v1253 = vpop.f32.mrb[0].mxu0
      %v1254 = vadd.f32 0.0, %v1253
      %v1255 = vpop.f32.mrb[0].mxu0
      %1256 = vmatprep.mubr.f32.mxu0 0.0
      %1257 = vmatmul.mubr.f32.gmra.mrb[0].mxu0 %v1098
      %v1258 = vpop.f32.mrb[0].mxu0
      %v1259 = vadd.f32 0.0, %v1258
      %v1260 = vpop.f32.mrb[0].mxu0
      %1261 = vmatprep.mubr.f32.mxu0 0.0
      %1262 = vmatmul.mubr.f32.gmra.mrb[0].mxu0 %v1100
      %v1263 = vpop.f32.mrb[0].mxu0
      %v1264 = vadd.f32 0.0, %v1263
      %v1265 = vpop.f32.mrb[0].mxu0
      %1266 = vmatprep.mubr.f32.mxu0 0.0
      %1267 = vmatmul.mubr.f32.gmra.mrb[0].mxu0 %v1102
      %v1268 = vpop.f32.mrb[0].mxu0
      %v1269 = vadd.f32 0.0, %v1268
      %v1270 = vpop.f32.mrb[0].mxu0
      %1271 = vmatprep.mubr.f32.mxu0 0.0
      %1272 = vmatmul.mubr.f32.gmra.mrb[0].mxu0 %v1104
      %v1273 = vpop.f32.mrb[0].mxu0
      %v1274 = vadd.f32 0.0, %v1273
      %v1275 = vpop.f32.mrb[0].mxu0
      %1276 = vmatprep.mubr.f32.mxu0 0.0
      %1277 = vmatmul.mubr.f32.gmra.mrb[0].mxu0 %v1106
      %v1278 = vpop.f32.mrb[0].mxu0
      %v1279 = vadd.f32 0.0, %v1278
      %v1280 = vpop.f32.mrb[0].mxu0
      %1281 = vmatprep.mubr.f32.mxu0 0.0
      %1282 = vmatmul.mubr.f32.gmra.mrb[0].mxu0 %v1108
      %v1283 = vpop.f32.mrb[0].mxu0
      %v1284 = vadd.f32 0.0, %v1283
      %v1285 = vpop.f32.mrb[0].mxu0
      %1286 = vmatprep.mubr.f32.mxu0 0.0
      %1287 = vmatmul.mubr.f32.gmra.mrb[0].mxu0 %v1110
      %v1288 = vpop.f32.mrb[0].mxu0
      %v1289 = vadd.f32 0.0, %v1288
      %v1290 = vpop.f32.mrb[0].mxu0
      %1291 = vmatprep.mubr.f32.mxu0 0.0
      %1292 = vmatmul.mubr.f32.gmra.mrb[0].mxu0 %v1112
      %v1293 = vpop.f32.mrb[0].mxu0
      %v1294 = vadd.f32 0.0, %v1293
      %v1295 = vpop.f32.mrb[0].mxu0
      %1296 = vmatprep.mubr.f32.mxu0 0.0
      %1297 = vmatmul.mubr.f32.gmra.mrb[0].mxu0 %v1114
      %v1298 = vpop.f32.mrb[0].mxu0
      %v1299 = vadd.f32 0.0, %v1298
      %v1300 = vpop.f32.mrb[0].mxu0
      %1301 = vmatprep.mubr.f32.mxu0 0.0
      %1302 = vmatmul.mubr.f32.gmra.mrb[0].mxu0 %v1116
      %v1303 = vpop.f32.mrb[0].mxu0
      %v1304 = vadd.f32 0.0, %v1303
      %v1305 = vpop.f32.mrb[0].mxu0
      %1306 = vmatprep.mubr.f32.mxu0 0.0
      %1307 = vmatmul.mubr.f32.gmra.mrb[0].mxu0 %v1118
      %v1308 = vpop.f32.mrb[0].mxu0
      %v1309 = vadd.f32 0.0, %v1308
      %v1310 = vpop.f32.mrb[0].mxu0
      %1311 = vmatprep.mubr.f32.mxu0 0.0
      %1312 = vmatmul.mubr.f32.gmra.mrb[0].mxu0 %v1120
      %v1313 = vpop.f32.mrb[0].mxu0
      %v1314 = vadd.f32 0.0, %v1313
      %v1315 = vpop.f32.mrb[0].mxu0
      %1316 = vmatprep.mubr.f32.mxu0 0.0
      %1317 = vmatmul.mubr.f32.gmra.mrb[0].mxu0 %v1122
      %v1318 = vpop.f32.mrb[0].mxu0
      %v1319 = vadd.f32 0.0, %v1318
      %v1320 = vpop.f32.mrb[0].mxu0
      %1321 = vmatprep.mubr.f32.mxu0 0.0
      %1322 = vmatmul.mubr.f32.gmra.mrb[0].mxu0 %v1124
      %v1323 = vpop.f32.mrb[0].mxu0
      %v1324 = vadd.f32 0.0, %v1323
      %v1325 = vpop.f32.mrb[0].mxu0
      %1326 = vmatprep.mubr.f32.mxu0 0.0
      %1327 = vmatmul.mubr.f32.gmra.mrb[0].mxu0 %v1126
      %v1328 = vpop.f32.mrb[0].mxu0
      %v1329 = vadd.f32 0.0, %v1328
      %v1330 = vpop.f32.mrb[0].mxu0
      %1331 = vmatprep.mubr.f32.mxu0 0.0
      %1332 = vmatmul.mubr.f32.gmra.mrb[0].mxu0 %v1128
      %v1333 = vpop.f32.mrb[0].mxu0
      %v1334 = vadd.f32 0.0, %v1333
      %v1335 = vpop.f32.mrb[0].mxu0
      %1336 = vmatprep.mubr.f32.mxu0 0.0
      %1337 = vmatmul.mubr.f32.gmra.mrb[0].mxu0 %v1130
      %v1338 = vpop.f32.mrb[0].mxu0
      %v1339 = vadd.f32 0.0, %v1338
      %v1340 = vpop.f32.mrb[0].mxu0
      %1341 = vmatprep.mubr.f32.mxu0 0.0
      %1342 = vmatmul.mubr.f32.gmra.mrb[0].mxu0 %v1132
      %v1343 = vpop.f32.mrb[0].mxu0
      %v1344 = vadd.f32 0.0, %v1343
      %v1345 = vpop.f32.mrb[0].mxu0
      %1346 = vmatprep.mubr.f32.mxu0 0.0
      %1347 = vmatmul.mubr.f32.gmra.mrb[0].mxu0 %v1134
      %v1348 = vpop.f32.mrb[0].mxu0
      %v1349 = vadd.f32 0.0, %v1348
      %v1350 = vpop.f32.mrb[0].mxu0
      %1351 = vmatprep.mubr.f32.mxu0 0.0
      %1352 = vmatmul.mubr.f32.gmra.mrb[0].mxu0 %v1136
      %v1353 = vpop.f32.mrb[0].mxu0
      %v1354 = vadd.f32 0.0, %v1353
      %v1355 = vpop.f32.mrb[0].mxu0
      %1356 = vmatprep.mubr.f32.mxu0 0.0
      %1357 = vmatmul.mubr.f32.gmra.mrb[0].mxu0 %v1138
      %v1358 = vpop.f32.mrb[0].mxu0
      %v1359 = vadd.f32 0.0, %v1358
      %v1360 = vpop.f32.mrb[0].mxu0
      %1361 = vmatprep.mubr.f32.mxu0 0.0
      %1362 = vmatmul.mubr.f32.gmra.mrb[0].mxu0 %v1140
      %v1363 = vpop.f32.mrb[0].mxu0
      %v1364 = vadd.f32 0.0, %v1363
      %v1365 = vpop.f32.mrb[0].mxu0
      %1366 = vmatprep.mubr.f32.mxu0 0.0
      %1367 = vmatmul.mubr.f32.gmra.mrb[0].mxu0 %v1142
      %v1368 = vpop.f32.mrb[0].mxu0
      %v1369 = vadd.f32 0.0, %v1368
      %v1370 = vpop.f32.mrb[0].mxu0
      %1371 = vdwg.mxu0
      %v1372 = vadd.f32 %v839, %v1214
      %v1373 = vadd.f32 %v844, %v1219
      %v1374 = vadd.f32 %v849, %v1224
      %v1375 = vadd.f32 %v854, %v1229
      %v1376 = vadd.f32 %v859, %v1234
      %v1377 = vadd.f32 %v864, %v1239
      %v1378 = vadd.f32 %v869, %v1244
      %v1379 = vadd.f32 %v874, %v1249
      %v1380 = vadd.f32 %v879, %v1254
      %v1381 = vadd.f32 %v884, %v1259
      %v1382 = vadd.f32 %v889, %v1264
      %v1383 = vadd.f32 %v894, %v1269
      %v1384 = vadd.f32 %v899, %v1274
      %v1385 = vadd.f32 %v904, %v1279
      %v1386 = vadd.f32 %v909, %v1284
      %v1387 = vadd.f32 %v914, %v1289
      %v1388 = vadd.f32 %v919, %v1294
      %v1389 = vadd.f32 %v924, %v1299
      %v1390 = vadd.f32 %v929, %v1304
      %v1391 = vadd.f32 %v934, %v1309
      %v1392 = vadd.f32 %v939, %v1314
      %v1393 = vadd.f32 %v944, %v1319
      %v1394 = vadd.f32 %v949, %v1324
      %v1395 = vadd.f32 %v954, %v1329
      %v1396 = vadd.f32 %v959, %v1334
      %v1397 = vadd.f32 %v964, %v1339
      %v1398 = vadd.f32 %v969, %v1344
      %v1399 = vadd.f32 %v974, %v1349
      %v1400 = vadd.f32 %v979, %v1354
      %v1401 = vadd.f32 %v984, %v1359
      %v1402 = vadd.f32 %v989, %v1364
      %v1403 = vadd.f32 %v994, %v1369
      %s1404 = scalar_lea.vmem %s1, 12
      %v1405 = vld [vmem:[%s1404] sm:$0xf]
      %v1407 = vsel %vm411, %v273, 0
      %v1410 = vsel %vm411, %v274, 0
      %v1413 = vsel %vm476, %v1405, 0
      %1415 = vmatprep.subr.mxu0 0.0
      %1416 = vmatpush1.msra.mxu0 %v1413
      %1417 = vmatprep.subr.mxu0 0.0
      %1418 = vmatpush1.msra.mxu0 0.0
      %1419 = vmatprep.subr.mxu0 0.0
      %1420 = vmatpush1.msra.mxu0 0.0
      %1421 = vmatprep.subr.mxu0 0.0
      %1422 = vmatpush1.msra.mxu0 0.0
      %1423 = vmatprep.subr.mxu0 0.0
      %1424 = vmatpush1.msra.mxu0 0.0
      %1425 = vmatprep.subr.mxu0 0.0
      %1426 = vmatpush1.msra.mxu0 0.0
      %1427 = vmatprep.subr.mxu0 0.0
      %1428 = vmatpush1.msra.mxu0 0.0
      %1429 = vmatprep.subr.mxu0 0.0
      %1430 = vmatpush1.msra.mxu0 0.0
      %1431 = vmatprep.subr.mxu0 0.0
      %1432 = vmatpush1.msra.mxu0 0.0
      %1433 = vmatprep.subr.mxu0 0.0
      %1434 = vmatpush1.msra.mxu0 0.0
      %1435 = vmatprep.subr.mxu0 0.0
      %1436 = vmatpush1.msra.mxu0 0.0
      %1437 = vmatprep.subr.mxu0 0.0
      %1438 = vmatpush1.msra.mxu0 0.0
      %1439 = vmatprep.subr.mxu0 0.0
      %1440 = vmatpush1.msra.mxu0 0.0
      %1441 = vmatprep.subr.mxu0 0.0
      %1442 = vmatpush1.msra.mxu0 0.0
      %1443 = vmatprep.subr.mxu0 0.0
      %1444 = vmatpush1.msra.mxu0 0.0
      %1445 = vmatprep.subr.mxu0 0.0
      %1446 = vmatpush1.msra.mxu0 0.0
      %1447 = vmatprep.subr.mxu0 0.0
      %1448 = vmatpush1.msra.mxu0 0.0
      %1449 = vmatprep.subr.mxu0 0.0
      %1450 = vmatpush1.msra.mxu0 0.0
      %1451 = vmatprep.subr.mxu0 0.0
      %1452 = vmatpush1.msra.mxu0 0.0
      %1453 = vmatprep.subr.mxu0 0.0
      %1454 = vmatpush1.msra.mxu0 0.0
      %1455 = vmatprep.subr.mxu0 0.0
      %1456 = vmatpush1.msra.mxu0 0.0
      %1457 = vmatprep.subr.mxu0 0.0
      %1458 = vmatpush1.msra.mxu0 0.0
      %1459 = vmatprep.subr.mxu0 0.0
      %1460 = vmatpush1.msra.mxu0 0.0
      %1461 = vmatprep.subr.mxu0 0.0
      %1462 = vmatpush1.msra.mxu0 0.0
      %1463 = vmatprep.subr.mxu0 0.0
      %1464 = vmatpush1.msra.mxu0 0.0
      %1465 = vmatprep.subr.mxu0 0.0
      %1466 = vmatpush1.msra.mxu0 0.0
      %1467 = vmatprep.subr.mxu0 0.0
      %1468 = vmatpush1.msra.mxu0 0.0
      %1469 = vmatprep.subr.mxu0 0.0
      %1470 = vmatpush1.msra.mxu0 0.0
      %1471 = vmatprep.subr.mxu0 0.0
      %1472 = vmatpush1.msra.mxu0 0.0
      %1473 = vmatprep.subr.mxu0 0.0
      %1474 = vmatpush1.msra.mxu0 0.0
      %1475 = vmatprep.subr.mxu0 0.0
      %1476 = vmatpush1.msra.mxu0 0.0
      %1477 = vmatprep.subr.mxu0 0.0
      %1478 = vmatpush1.msra.mxu0 0.0
      %1479 = vmatprep.mubr.f32.mxu0 0.0
      %1480 = vmatmul.mubr.f32.gmra.mrb[0].mxu0 %v709
      %v1481 = vpop.f32.mrb[0].mxu0
      %v1482 = vadd.f32 0.0, %v1481
      %v1483 = vpop.f32.mrb[0].mxu0
      %1484 = vmatprep.mubr.f32.mxu0 0.0
      %1485 = vmatmul.mubr.f32.gmra.mrb[0].mxu0 %v711
      %v1486 = vpop.f32.mrb[0].mxu0
      %v1487 = vadd.f32 0.0, %v1486
      %v1488 = vpop.f32.mrb[0].mxu0
      %1489 = vmatprep.mubr.f32.mxu0 0.0
      %1490 = vmatmul.mubr.f32.gmra.mrb[0].mxu0 %v713
      %v1491 = vpop.f32.mrb[0].mxu0
      %v1492 = vadd.f32 0.0, %v1491
      %v1493 = vpop.f32.mrb[0].mxu0
      %1494 = vmatprep.mubr.f32.mxu0 0.0
      %1495 = vmatmul.mubr.f32.gmra.mrb[0].mxu0 %v715
      %v1496 = vpop.f32.mrb[0].mxu0
      %v1497 = vadd.f32 0.0, %v1496
      %v1498 = vpop.f32.mrb[0].mxu0
      %1499 = vmatprep.mubr.f32.mxu0 0.0
      %1500 = vmatmul.mubr.f32.gmra.mrb[0].mxu0 %v717
      %v1501 = vpop.f32.mrb[0].mxu0
      %v1502 = vadd.f32 0.0, %v1501
      %v1503 = vpop.f32.mrb[0].mxu0
      %1504 = vmatprep.mubr.f32.mxu0 0.0
      %1505 = vmatmul.mubr.f32.gmra.mrb[0].mxu0 %v719
      %v1506 = vpop.f32.mrb[0].mxu0
      %v1507 = vadd.f32 0.0, %v1506
      %v1508 = vpop.f32.mrb[0].mxu0
      %1509 = vmatprep.mubr.f32.mxu0 0.0
      %1510 = vmatmul.mubr.f32.gmra.mrb[0].mxu0 %v721
      %v1511 = vpop.f32.mrb[0].mxu0
      %v1512 = vadd.f32 0.0, %v1511
      %v1513 = vpop.f32.mrb[0].mxu0
      %1514 = vmatprep.mubr.f32.mxu0 0.0
      %1515 = vmatmul.mubr.f32.gmra.mrb[0].mxu0 %v723
      %v1516 = vpop.f32.mrb[0].mxu0
      %v1517 = vadd.f32 0.0, %v1516
      %v1518 = vpop.f32.mrb[0].mxu0
      %1519 = vmatprep.mubr.f32.mxu0 0.0
      %1520 = vmatmul.mubr.f32.gmra.mrb[0].mxu0 %v725
      %v1521 = vpop.f32.mrb[0].mxu0
      %v1522 = vadd.f32 0.0, %v1521
      %v1523 = vpop.f32.mrb[0].mxu0
      %1524 = vmatprep.mubr.f32.mxu0 0.0
      %1525 = vmatmul.mubr.f32.gmra.mrb[0].mxu0 %v727
      %v1526 = vpop.f32.mrb[0].mxu0
      %v1527 = vadd.f32 0.0, %v1526
      %v1528 = vpop.f32.mrb[0].mxu0
      %1529 = vmatprep.mubr.f32.mxu0 0.0
      %1530 = vmatmul.mubr.f32.gmra.mrb[0].mxu0 %v729
      %v1531 = vpop.f32.mrb[0].mxu0
      %v1532 = vadd.f32 0.0, %v1531
      %v1533 = vpop.f32.mrb[0].mxu0
      %1534 = vmatprep.mubr.f32.mxu0 0.0
      %1535 = vmatmul.mubr.f32.gmra.mrb[0].mxu0 %v731
      %v1536 = vpop.f32.mrb[0].mxu0
      %v1537 = vadd.f32 0.0, %v1536
      %v1538 = vpop.f32.mrb[0].mxu0
      %1539 = vmatprep.mubr.f32.mxu0 0.0
      %1540 = vmatmul.mubr.f32.gmra.mrb[0].mxu0 %v733
      %v1541 = vpop.f32.mrb[0].mxu0
      %v1542 = vadd.f32 0.0, %v1541
      %v1543 = vpop.f32.mrb[0].mxu0
      %1544 = vmatprep.mubr.f32.mxu0 0.0
      %1545 = vmatmul.mubr.f32.gmra.mrb[0].mxu0 %v735
      %v1546 = vpop.f32.mrb[0].mxu0
      %v1547 = vadd.f32 0.0, %v1546
      %v1548 = vpop.f32.mrb[0].mxu0
      %1549 = vmatprep.mubr.f32.mxu0 0.0
      %1550 = vmatmul.mubr.f32.gmra.mrb[0].mxu0 %v737
      %v1551 = vpop.f32.mrb[0].mxu0
      %v1552 = vadd.f32 0.0, %v1551
      %v1553 = vpop.f32.mrb[0].mxu0
      %1554 = vmatprep.mubr.f32.mxu0 0.0
      %1555 = vmatmul.mubr.f32.gmra.mrb[0].mxu0 %v739
      %v1556 = vpop.f32.mrb[0].mxu0
      %v1557 = vadd.f32 0.0, %v1556
      %v1558 = vpop.f32.mrb[0].mxu0
      %1559 = vmatprep.mubr.f32.mxu0 0.0
      %1560 = vmatmul.mubr.f32.gmra.mrb[0].mxu0 %v741
      %v1561 = vpop.f32.mrb[0].mxu0
      %v1562 = vadd.f32 0.0, %v1561
      %v1563 = vpop.f32.mrb[0].mxu0
      %1564 = vmatprep.mubr.f32.mxu0 0.0
      %1565 = vmatmul.mubr.f32.gmra.mrb[0].mxu0 %v743
      %v1566 = vpop.f32.mrb[0].mxu0
      %v1567 = vadd.f32 0.0, %v1566
      %v1568 = vpop.f32.mrb[0].mxu0
      %1569 = vmatprep.mubr.f32.mxu0 0.0
      %1570 = vmatmul.mubr.f32.gmra.mrb[0].mxu0 %v745
      %v1571 = vpop.f32.mrb[0].mxu0
      %v1572 = vadd.f32 0.0, %v1571
      %v1573 = vpop.f32.mrb[0].mxu0
      %1574 = vmatprep.mubr.f32.mxu0 0.0
      %1575 = vmatmul.mubr.f32.gmra.mrb[0].mxu0 %v747
      %v1576 = vpop.f32.mrb[0].mxu0
      %v1577 = vadd.f32 0.0, %v1576
      %v1578 = vpop.f32.mrb[0].mxu0
      %1579 = vmatprep.mubr.f32.mxu0 0.0
      %1580 = vmatmul.mubr.f32.gmra.mrb[0].mxu0 %v749
      %v1581 = vpop.f32.mrb[0].mxu0
      %v1582 = vadd.f32 0.0, %v1581
      %v1583 = vpop.f32.mrb[0].mxu0
      %1584 = vmatprep.mubr.f32.mxu0 0.0
      %1585 = vmatmul.mubr.f32.gmra.mrb[0].mxu0 %v751
      %v1586 = vpop.f32.mrb[0].mxu0
      %v1587 = vadd.f32 0.0, %v1586
      %v1588 = vpop.f32.mrb[0].mxu0
      %1589 = vmatprep.mubr.f32.mxu0 0.0
      %1590 = vmatmul.mubr.f32.gmra.mrb[0].mxu0 %v753
      %v1591 = vpop.f32.mrb[0].mxu0
      %v1592 = vadd.f32 0.0, %v1591
      %v1593 = vpop.f32.mrb[0].mxu0
      %1594 = vmatprep.mubr.f32.mxu0 0.0
      %1595 = vmatmul.mubr.f32.gmra.mrb[0].mxu0 %v755
      %v1596 = vpop.f32.mrb[0].mxu0
      %v1597 = vadd.f32 0.0, %v1596
      %v1598 = vpop.f32.mrb[0].mxu0
      %1599 = vmatprep.mubr.f32.mxu0 0.0
      %1600 = vmatmul.mubr.f32.gmra.mrb[0].mxu0 %v757
      %v1601 = vpop.f32.mrb[0].mxu0
      %v1602 = vadd.f32 0.0, %v1601
      %v1603 = vpop.f32.mrb[0].mxu0
      %1604 = vmatprep.mubr.f32.mxu0 0.0
      %1605 = vmatmul.mubr.f32.gmra.mrb[0].mxu0 %v759
      %v1606 = vpop.f32.mrb[0].mxu0
      %v1607 = vadd.f32 0.0, %v1606
      %v1608 = vpop.f32.mrb[0].mxu0
      %1609 = vmatprep.mubr.f32.mxu0 0.0
      %1610 = vmatmul.mubr.f32.gmra.mrb[0].mxu0 %v761
      %v1611 = vpop.f32.mrb[0].mxu0
      %v1612 = vadd.f32 0.0, %v1611
      %v1613 = vpop.f32.mrb[0].mxu0
      %1614 = vmatprep.mubr.f32.mxu0 0.0
      %1615 = vmatmul.mubr.f32.gmra.mrb[0].mxu0 %v763
      %v1616 = vpop.f32.mrb[0].mxu0
      %v1617 = vadd.f32 0.0, %v1616
      %v1618 = vpop.f32.mrb[0].mxu0
      %1619 = vmatprep.mubr.f32.mxu0 0.0
      %1620 = vmatmul.mubr.f32.gmra.mrb[0].mxu0 %v765
      %v1621 = vpop.f32.mrb[0].mxu0
      %v1622 = vadd.f32 0.0, %v1621
      %v1623 = vpop.f32.mrb[0].mxu0
      %1624 = vmatprep.mubr.f32.mxu0 0.0
      %1625 = vmatmul.mubr.f32.gmra.mrb[0].mxu0 %v767
      %v1626 = vpop.f32.mrb[0].mxu0
      %v1627 = vadd.f32 0.0, %v1626
      %v1628 = vpop.f32.mrb[0].mxu0
      %1629 = vmatprep.mubr.f32.mxu0 0.0
      %1630 = vmatmul.mubr.f32.gmra.mrb[0].mxu0 %v1407
      %v1631 = vpop.f32.mrb[0].mxu0
      %v1632 = vadd.f32 0.0, %v1631
      %v1633 = vpop.f32.mrb[0].mxu0
      %1634 = vmatprep.mubr.f32.mxu0 0.0
      %1635 = vmatmul.mubr.f32.gmra.mrb[0].mxu0 %v1410
      %v1636 = vpop.f32.mrb[0].mxu0
      %v1637 = vadd.f32 0.0, %v1636
      %v1638 = vpop.f32.mrb[0].mxu0
      %1639 = vdwg.mxu0
      %v1640 = vadd.f32 %v1372, %v1482
      %v1641 = vadd.f32 %v1373, %v1487
      %v1642 = vadd.f32 %v1374, %v1492
      %v1643 = vadd.f32 %v1375, %v1497
      %v1644 = vadd.f32 %v1376, %v1502
      %v1645 = vadd.f32 %v1377, %v1507
      %v1646 = vadd.f32 %v1378, %v1512
      %v1647 = vadd.f32 %v1379, %v1517
      %v1648 = vadd.f32 %v1380, %v1522
      %v1649 = vadd.f32 %v1381, %v1527
      %v1650 = vadd.f32 %v1382, %v1532
      %v1651 = vadd.f32 %v1383, %v1537
      %v1652 = vadd.f32 %v1384, %v1542
      %v1653 = vadd.f32 %v1385, %v1547
      %v1654 = vadd.f32 %v1386, %v1552
      %v1655 = vadd.f32 %v1387, %v1557
      %v1656 = vadd.f32 %v1388, %v1562
      %v1657 = vadd.f32 %v1389, %v1567
      %v1658 = vadd.f32 %v1390, %v1572
      %v1659 = vadd.f32 %v1391, %v1577
      %v1660 = vadd.f32 %v1392, %v1582
      %v1661 = vadd.f32 %v1393, %v1587
      %v1662 = vadd.f32 %v1394, %v1592
      %v1663 = vadd.f32 %v1395, %v1597
      %v1664 = vadd.f32 %v1396, %v1602
      %v1665 = vadd.f32 %v1397, %v1607
      %v1666 = vadd.f32 %v1398, %v1612
      %v1667 = vadd.f32 %v1399, %v1617
      %v1668 = vadd.f32 %v1400, %v1622
      %v1669 = vadd.f32 %v1401, %v1627
      %v1670 = vadd.f32 %v1402, %v1632
      %v1671 = vadd.f32 %v1403, %v1637
      %v1673 = vrot.slane %v273, 1
      %v1674 = vrot.slane %v274, 1
      %v1675 = vsel %vm328, %v1673, %v1674
      %v1676 = vrot.slane %v275, 1
      %v1677 = vsel %vm328, %v1674, %v1676
      %s1710 = scalar_lea.vmem %s1, 16
      %v1711 = vld [vmem:[%s1710] sm:$0xf]
      %v1712 = vsel %vm411, %v1675, 0
      %v1714 = vsel %vm411, %v1677, 0
      %v1717 = vsel %vm476, %v1711, 0
      %1719 = vmatprep.subr.mxu0 0.0
      %1720 = vmatpush1.msra.mxu0 %v1717
      %1721 = vmatprep.subr.mxu0 0.0
      %1722 = vmatpush1.msra.mxu0 0.0
      %1723 = vmatprep.subr.mxu0 0.0
      %1724 = vmatpush1.msra.mxu0 0.0
      %1725 = vmatprep.subr.mxu0 0.0
      %1726 = vmatpush1.msra.mxu0 0.0
      %1727 = vmatprep.subr.mxu0 0.0
      %1728 = vmatpush1.msra.mxu0 0.0
      %1729 = vmatprep.subr.mxu0 0.0
      %1730 = vmatpush1.msra.mxu0 0.0
      %1731 = vmatprep.subr.mxu0 0.0
      %1732 = vmatpush1.msra.mxu0 0.0
      %1733 = vmatprep.subr.mxu0 0.0
      %1734 = vmatpush1.msra.mxu0 0.0
      %1735 = vmatprep.subr.mxu0 0.0
      %1736 = vmatpush1.msra.mxu0 0.0
      %1737 = vmatprep.subr.mxu0 0.0
      %1738 = vmatpush1.msra.mxu0 0.0
      %1739 = vmatprep.subr.mxu0 0.0
      %1740 = vmatpush1.msra.mxu0 0.0
      %1741 = vmatprep.subr.mxu0 0.0
      %1742 = vmatpush1.msra.mxu0 0.0
      %1743 = vmatprep.subr.mxu0 0.0
      %1744 = vmatpush1.msra.mxu0 0.0
      %1745 = vmatprep.subr.mxu0 0.0
      %1746 = vmatpush1.msra.mxu0 0.0
      %1747 = vmatprep.subr.mxu0 0.0
      %1748 = vmatpush1.msra.mxu0 0.0
      %1749 = vmatprep.subr.mxu0 0.0
      %1750 = vmatpush1.msra.mxu0 0.0
      %1751 = vmatprep.subr.mxu0 0.0
      %1752 = vmatpush1.msra.mxu0 0.0
      %1753 = vmatprep.subr.mxu0 0.0
      %1754 = vmatpush1.msra.mxu0 0.0
      %1755 = vmatprep.subr.mxu0 0.0
      %1756 = vmatpush1.msra.mxu0 0.0
      %1757 = vmatprep.subr.mxu0 0.0
      %1758 = vmatpush1.msra.mxu0 0.0
      %1759 = vmatprep.subr.mxu0 0.0
      %1760 = vmatpush1.msra.mxu0 0.0
      %1761 = vmatprep.subr.mxu0 0.0
      %1762 = vmatpush1.msra.mxu0 0.0
      %1763 = vmatprep.subr.mxu0 0.0
      %1764 = vmatpush1.msra.mxu0 0.0
      %1765 = vmatprep.subr.mxu0 0.0
      %1766 = vmatpush1.msra.mxu0 0.0
      %1767 = vmatprep.subr.mxu0 0.0
      %1768 = vmatpush1.msra.mxu0 0.0
      %1769 = vmatprep.subr.mxu0 0.0
      %1770 = vmatpush1.msra.mxu0 0.0
      %1771 = vmatprep.subr.mxu0 0.0
      %1772 = vmatpush1.msra.mxu0 0.0
      %1773 = vmatprep.subr.mxu0 0.0
      %1774 = vmatpush1.msra.mxu0 0.0
      %1775 = vmatprep.subr.mxu0 0.0
      %1776 = vmatpush1.msra.mxu0 0.0
      %1777 = vmatprep.subr.mxu0 0.0
      %1778 = vmatpush1.msra.mxu0 0.0
      %1779 = vmatprep.subr.mxu0 0.0
      %1780 = vmatpush1.msra.mxu0 0.0
      %1781 = vmatprep.subr.mxu0 0.0
      %1782 = vmatpush1.msra.mxu0 0.0
      %1783 = vmatprep.mubr.f32.mxu0 0.0
      %1784 = vmatmul.mubr.f32.gmra.mrb[0].mxu0 %v416
      %v1785 = vpop.f32.mrb[0].mxu0
      %v1786 = vadd.f32 0.0, %v1785
      %v1787 = vpop.f32.mrb[0].mxu0
      %1788 = vmatprep.mubr.f32.mxu0 0.0
      %1789 = vmatmul.mubr.f32.gmra.mrb[0].mxu0 %v418
      %v1790 = vpop.f32.mrb[0].mxu0
      %v1791 = vadd.f32 0.0, %v1790
      %v1792 = vpop.f32.mrb[0].mxu0
      %1793 = vmatprep.mubr.f32.mxu0 0.0
      %1794 = vmatmul.mubr.f32.gmra.mrb[0].mxu0 %v420
      %v1795 = vpop.f32.mrb[0].mxu0
      %v1796 = vadd.f32 0.0, %v1795
      %v1797 = vpop.f32.mrb[0].mxu0
      %1798 = vmatprep.mubr.f32.mxu0 0.0
      %1799 = vmatmul.mubr.f32.gmra.mrb[0].mxu0 %v422
      %v1800 = vpop.f32.mrb[0].mxu0
      %v1801 = vadd.f32 0.0, %v1800
      %v1802 = vpop.f32.mrb[0].mxu0
      %1803 = vmatprep.mubr.f32.mxu0 0.0
      %1804 = vmatmul.mubr.f32.gmra.mrb[0].mxu0 %v424
      %v1805 = vpop.f32.mrb[0].mxu0
      %v1806 = vadd.f32 0.0, %v1805
      %v1807 = vpop.f32.mrb[0].mxu0
      %1808 = vmatprep.mubr.f32.mxu0 0.0
      %1809 = vmatmul.mubr.f32.gmra.mrb[0].mxu0 %v426
      %v1810 = vpop.f32.mrb[0].mxu0
      %v1811 = vadd.f32 0.0, %v1810
      %v1812 = vpop.f32.mrb[0].mxu0
      %1813 = vmatprep.mubr.f32.mxu0 0.0
      %1814 = vmatmul.mubr.f32.gmra.mrb[0].mxu0 %v428
      %v1815 = vpop.f32.mrb[0].mxu0
      %v1816 = vadd.f32 0.0, %v1815
      %v1817 = vpop.f32.mrb[0].mxu0
      %1818 = vmatprep.mubr.f32.mxu0 0.0
      %1819 = vmatmul.mubr.f32.gmra.mrb[0].mxu0 %v430
      %v1820 = vpop.f32.mrb[0].mxu0
      %v1821 = vadd.f32 0.0, %v1820
      %v1822 = vpop.f32.mrb[0].mxu0
      %1823 = vmatprep.mubr.f32.mxu0 0.0
      %1824 = vmatmul.mubr.f32.gmra.mrb[0].mxu0 %v432
      %v1825 = vpop.f32.mrb[0].mxu0
      %v1826 = vadd.f32 0.0, %v1825
      %v1827 = vpop.f32.mrb[0].mxu0
      %1828 = vmatprep.mubr.f32.mxu0 0.0
      %1829 = vmatmul.mubr.f32.gmra.mrb[0].mxu0 %v434
      %v1830 = vpop.f32.mrb[0].mxu0
      %v1831 = vadd.f32 0.0, %v1830
      %v1832 = vpop.f32.mrb[0].mxu0
      %1833 = vmatprep.mubr.f32.mxu0 0.0
      %1834 = vmatmul.mubr.f32.gmra.mrb[0].mxu0 %v436
      %v1835 = vpop.f32.mrb[0].mxu0
      %v1836 = vadd.f32 0.0, %v1835
      %v1837 = vpop.f32.mrb[0].mxu0
      %1838 = vmatprep.mubr.f32.mxu0 0.0
      %1839 = vmatmul.mubr.f32.gmra.mrb[0].mxu0 %v438
      %v1840 = vpop.f32.mrb[0].mxu0
      %v1841 = vadd.f32 0.0, %v1840
      %v1842 = vpop.f32.mrb[0].mxu0
      %1843 = vmatprep.mubr.f32.mxu0 0.0
      %1844 = vmatmul.mubr.f32.gmra.mrb[0].mxu0 %v440
      %v1845 = vpop.f32.mrb[0].mxu0
      %v1846 = vadd.f32 0.0, %v1845
      %v1847 = vpop.f32.mrb[0].mxu0
      %1848 = vmatprep.mubr.f32.mxu0 0.0
      %1849 = vmatmul.mubr.f32.gmra.mrb[0].mxu0 %v442
      %v1850 = vpop.f32.mrb[0].mxu0
      %v1851 = vadd.f32 0.0, %v1850
      %v1852 = vpop.f32.mrb[0].mxu0
      %1853 = vmatprep.mubr.f32.mxu0 0.0
      %1854 = vmatmul.mubr.f32.gmra.mrb[0].mxu0 %v444
      %v1855 = vpop.f32.mrb[0].mxu0
      %v1856 = vadd.f32 0.0, %v1855
      %v1857 = vpop.f32.mrb[0].mxu0
      %1858 = vmatprep.mubr.f32.mxu0 0.0
      %1859 = vmatmul.mubr.f32.gmra.mrb[0].mxu0 %v446
      %v1860 = vpop.f32.mrb[0].mxu0
      %v1861 = vadd.f32 0.0, %v1860
      %v1862 = vpop.f32.mrb[0].mxu0
      %1863 = vmatprep.mubr.f32.mxu0 0.0
      %1864 = vmatmul.mubr.f32.gmra.mrb[0].mxu0 %v448
      %v1865 = vpop.f32.mrb[0].mxu0
      %v1866 = vadd.f32 0.0, %v1865
      %v1867 = vpop.f32.mrb[0].mxu0
      %1868 = vmatprep.mubr.f32.mxu0 0.0
      %1869 = vmatmul.mubr.f32.gmra.mrb[0].mxu0 %v450
      %v1870 = vpop.f32.mrb[0].mxu0
      %v1871 = vadd.f32 0.0, %v1870
      %v1872 = vpop.f32.mrb[0].mxu0
      %1873 = vmatprep.mubr.f32.mxu0 0.0
      %1874 = vmatmul.mubr.f32.gmra.mrb[0].mxu0 %v452
      %v1875 = vpop.f32.mrb[0].mxu0
      %v1876 = vadd.f32 0.0, %v1875
      %v1877 = vpop.f32.mrb[0].mxu0
      %1878 = vmatprep.mubr.f32.mxu0 0.0
      %1879 = vmatmul.mubr.f32.gmra.mrb[0].mxu0 %v454
      %v1880 = vpop.f32.mrb[0].mxu0
      %v1881 = vadd.f32 0.0, %v1880
      %v1882 = vpop.f32.mrb[0].mxu0
      %1883 = vmatprep.mubr.f32.mxu0 0.0
      %1884 = vmatmul.mubr.f32.gmra.mrb[0].mxu0 %v456
      %v1885 = vpop.f32.mrb[0].mxu0
      %v1886 = vadd.f32 0.0, %v1885
      %v1887 = vpop.f32.mrb[0].mxu0
      %1888 = vmatprep.mubr.f32.mxu0 0.0
      %1889 = vmatmul.mubr.f32.gmra.mrb[0].mxu0 %v458
      %v1890 = vpop.f32.mrb[0].mxu0
      %v1891 = vadd.f32 0.0, %v1890
      %v1892 = vpop.f32.mrb[0].mxu0
      %1893 = vmatprep.mubr.f32.mxu0 0.0
      %1894 = vmatmul.mubr.f32.gmra.mrb[0].mxu0 %v460
      %v1895 = vpop.f32.mrb[0].mxu0
      %v1896 = vadd.f32 0.0, %v1895
      %v1897 = vpop.f32.mrb[0].mxu0
      %1898 = vmatprep.mubr.f32.mxu0 0.0
      %1899 = vmatmul.mubr.f32.gmra.mrb[0].mxu0 %v462
      %v1900 = vpop.f32.mrb[0].mxu0
      %v1901 = vadd.f32 0.0, %v1900
      %v1902 = vpop.f32.mrb[0].mxu0
      %1903 = vmatprep.mubr.f32.mxu0 0.0
      %1904 = vmatmul.mubr.f32.gmra.mrb[0].mxu0 %v464
      %v1905 = vpop.f32.mrb[0].mxu0
      %v1906 = vadd.f32 0.0, %v1905
      %v1907 = vpop.f32.mrb[0].mxu0
      %1908 = vmatprep.mubr.f32.mxu0 0.0
      %1909 = vmatmul.mubr.f32.gmra.mrb[0].mxu0 %v466
      %v1910 = vpop.f32.mrb[0].mxu0
      %v1911 = vadd.f32 0.0, %v1910
      %v1912 = vpop.f32.mrb[0].mxu0
      %1913 = vmatprep.mubr.f32.mxu0 0.0
      %1914 = vmatmul.mubr.f32.gmra.mrb[0].mxu0 %v468
      %v1915 = vpop.f32.mrb[0].mxu0
      %v1916 = vadd.f32 0.0, %v1915
      %v1917 = vpop.f32.mrb[0].mxu0
      %1918 = vmatprep.mubr.f32.mxu0 0.0
      %1919 = vmatmul.mubr.f32.gmra.mrb[0].mxu0 %v470
      %v1920 = vpop.f32.mrb[0].mxu0
      %v1921 = vadd.f32 0.0, %v1920
      %v1922 = vpop.f32.mrb[0].mxu0
      %1923 = vmatprep.mubr.f32.mxu0 0.0
      %1924 = vmatmul.mubr.f32.gmra.mrb[0].mxu0 %v472
      %v1925 = vpop.f32.mrb[0].mxu0
      %v1926 = vadd.f32 0.0, %v1925
      %v1927 = vpop.f32.mrb[0].mxu0
      %1928 = vmatprep.mubr.f32.mxu0 0.0
      %1929 = vmatmul.mubr.f32.gmra.mrb[0].mxu0 %v474
      %v1930 = vpop.f32.mrb[0].mxu0
      %v1931 = vadd.f32 0.0, %v1930
      %v1932 = vpop.f32.mrb[0].mxu0
      %1933 = vmatprep.mubr.f32.mxu0 0.0
      %1934 = vmatmul.mubr.f32.gmra.mrb[0].mxu0 %v1712
      %v1935 = vpop.f32.mrb[0].mxu0
      %v1936 = vadd.f32 0.0, %v1935
      %v1937 = vpop.f32.mrb[0].mxu0
      %1938 = vmatprep.mubr.f32.mxu0 0.0
      %1939 = vmatmul.mubr.f32.gmra.mrb[0].mxu0 %v1714
      %v1940 = vpop.f32.mrb[0].mxu0
      %v1941 = vadd.f32 0.0, %v1940
      %v1942 = vpop.f32.mrb[0].mxu0
      %1943 = vdwg.mxu0
      %v1944 = vadd.f32 %v1640, %v1786
      %v1945 = vadd.f32 %v1641, %v1791
      %v1946 = vadd.f32 %v1642, %v1796
      %v1947 = vadd.f32 %v1643, %v1801
      %v1948 = vadd.f32 %v1644, %v1806
      %v1949 = vadd.f32 %v1645, %v1811
      %v1950 = vadd.f32 %v1646, %v1816
      %v1951 = vadd.f32 %v1647, %v1821
      %v1952 = vadd.f32 %v1648, %v1826
      %v1953 = vadd.f32 %v1649, %v1831
      %v1954 = vadd.f32 %v1650, %v1836
      %v1955 = vadd.f32 %v1651, %v1841
      %v1956 = vadd.f32 %v1652, %v1846
      %v1957 = vadd.f32 %v1653, %v1851
      %v1958 = vadd.f32 %v1654, %v1856
      %v1959 = vadd.f32 %v1655, %v1861
      %v1960 = vadd.f32 %v1656, %v1866
      %v1961 = vadd.f32 %v1657, %v1871
      %v1962 = vadd.f32 %v1658, %v1876
      %v1963 = vadd.f32 %v1659, %v1881
      %v1964 = vadd.f32 %v1660, %v1886
      %v1965 = vadd.f32 %v1661, %v1891
      %v1966 = vadd.f32 %v1662, %v1896
      %v1967 = vadd.f32 %v1663, %v1901
      %v1968 = vadd.f32 %v1664, %v1906
      %v1969 = vadd.f32 %v1665, %v1911
      %v1970 = vadd.f32 %v1666, %v1916
      %v1971 = vadd.f32 %v1667, %v1921
      %v1972 = vadd.f32 %v1668, %v1926
      %v1973 = vadd.f32 %v1669, %v1931
      %v1974 = vadd.f32 %v1670, %v1936
      %v1975 = vadd.f32 %v1671, %v1941
      %v1976 = vrot.slane %v273, 2
      %v1977 = vrot.slane %v274, 2
      %v1978 = vsel %vm997, %v1976, %v1977
      %v1979 = vrot.slane %v275, 2
      %v1980 = vsel %vm997, %v1977, %v1979
      %s1981 = scalar_lea.vmem %s1, 20
      %v1982 = vld [vmem:[%s1981] sm:$0xf]
      %v1983 = vsel %vm411, %v1978, 0
      %v1985 = vsel %vm411, %v1980, 0
      %v1988 = vsel %vm476, %v1982, 0
      %1990 = vmatprep.subr.mxu0 0.0
      %1991 = vmatpush1.msra.mxu0 %v1988
      %1992 = vmatprep.subr.mxu0 0.0
      %1993 = vmatpush1.msra.mxu0 0.0
      %1994 = vmatprep.subr.mxu0 0.0
      %1995 = vmatpush1.msra.mxu0 0.0
      %1996 = vmatprep.subr.mxu0 0.0
      %1997 = vmatpush1.msra.mxu0 0.0
      %1998 = vmatprep.subr.mxu0 0.0
      %1999 = vmatpush1.msra.mxu0 0.0
      %2000 = vmatprep.subr.mxu0 0.0
      %2001 = vmatpush1.msra.mxu0 0.0
      %2002 = vmatprep.subr.mxu0 0.0
      %2003 = vmatpush1.msra.mxu0 0.0
      %2004 = vmatprep.subr.mxu0 0.0
      %2005 = vmatpush1.msra.mxu0 0.0
      %2006 = vmatprep.subr.mxu0 0.0
      %2007 = vmatpush1.msra.mxu0 0.0
      %2008 = vmatprep.subr.mxu0 0.0
      %2009 = vmatpush1.msra.mxu0 0.0
      %2010 = vmatprep.subr.mxu0 0.0
      %2011 = vmatpush1.msra.mxu0 0.0
      %2012 = vmatprep.subr.mxu0 0.0
      %2013 = vmatpush1.msra.mxu0 0.0
      %2014 = vmatprep.subr.mxu0 0.0
      %2015 = vmatpush1.msra.mxu0 0.0
      %2016 = vmatprep.subr.mxu0 0.0
      %2017 = vmatpush1.msra.mxu0 0.0
      %2018 = vmatprep.subr.mxu0 0.0
      %2019 = vmatpush1.msra.mxu0 0.0
      %2020 = vmatprep.subr.mxu0 0.0
      %2021 = vmatpush1.msra.mxu0 0.0
      %2022 = vmatprep.subr.mxu0 0.0
      %2023 = vmatpush1.msra.mxu0 0.0
      %2024 = vmatprep.subr.mxu0 0.0
      %2025 = vmatpush1.msra.mxu0 0.0
      %2026 = vmatprep.subr.mxu0 0.0
      %2027 = vmatpush1.msra.mxu0 0.0
      %2028 = vmatprep.subr.mxu0 0.0
      %2029 = vmatpush1.msra.mxu0 0.0
      %2030 = vmatprep.subr.mxu0 0.0
      %2031 = vmatpush1.msra.mxu0 0.0
      %2032 = vmatprep.subr.mxu0 0.0
      %2033 = vmatpush1.msra.mxu0 0.0
      %2034 = vmatprep.subr.mxu0 0.0
      %2035 = vmatpush1.msra.mxu0 0.0
      %2036 = vmatprep.subr.mxu0 0.0
      %2037 = vmatpush1.msra.mxu0 0.0
      %2038 = vmatprep.subr.mxu0 0.0
      %2039 = vmatpush1.msra.mxu0 0.0
      %2040 = vmatprep.subr.mxu0 0.0
      %2041 = vmatpush1.msra.mxu0 0.0
      %2042 = vmatprep.subr.mxu0 0.0
      %2043 = vmatpush1.msra.mxu0 0.0
      %2044 = vmatprep.subr.mxu0 0.0
      %2045 = vmatpush1.msra.mxu0 0.0
      %2046 = vmatprep.subr.mxu0 0.0
      %2047 = vmatpush1.msra.mxu0 0.0
      %2048 = vmatprep.subr.mxu0 0.0
      %2049 = vmatpush1.msra.mxu0 0.0
      %2050 = vmatprep.subr.mxu0 0.0
      %2051 = vmatpush1.msra.mxu0 0.0
      %2052 = vmatprep.subr.mxu0 0.0
      %2053 = vmatpush1.msra.mxu0 0.0
      %2054 = vmatprep.mubr.f32.mxu0 0.0
      %2055 = vmatmul.mubr.f32.gmra.mrb[0].mxu0 %v1084
      %v2056 = vpop.f32.mrb[0].mxu0
      %v2057 = vadd.f32 0.0, %v2056
      %v2058 = vpop.f32.mrb[0].mxu0
      %2059 = vmatprep.mubr.f32.mxu0 0.0
      %2060 = vmatmul.mubr.f32.gmra.mrb[0].mxu0 %v1086
      %v2061 = vpop.f32.mrb[0].mxu0
      %v2062 = vadd.f32 0.0, %v2061
      %v2063 = vpop.f32.mrb[0].mxu0
      %2064 = vmatprep.mubr.f32.mxu0 0.0
      %2065 = vmatmul.mubr.f32.gmra.mrb[0].mxu0 %v1088
      %v2066 = vpop.f32.mrb[0].mxu0
      %v2067 = vadd.f32 0.0, %v2066
      %v2068 = vpop.f32.mrb[0].mxu0
      %2069 = vmatprep.mubr.f32.mxu0 0.0
      %2070 = vmatmul.mubr.f32.gmra.mrb[0].mxu0 %v1090
      %v2071 = vpop.f32.mrb[0].mxu0
      %v2072 = vadd.f32 0.0, %v2071
      %v2073 = vpop.f32.mrb[0].mxu0
      %2074 = vmatprep.mubr.f32.mxu0 0.0
      %2075 = vmatmul.mubr.f32.gmra.mrb[0].mxu0 %v1092
      %v2076 = vpop.f32.mrb[0].mxu0
      %v2077 = vadd.f32 0.0, %v2076
      %v2078 = vpop.f32.mrb[0].mxu0
      %2079 = vmatprep.mubr.f32.mxu0 0.0
      %2080 = vmatmul.mubr.f32.gmra.mrb[0].mxu0 %v1094
      %v2081 = vpop.f32.mrb[0].mxu0
      %v2082 = vadd.f32 0.0, %v2081
      %v2083 = vpop.f32.mrb[0].mxu0
      %2084 = vmatprep.mubr.f32.mxu0 0.0
      %2085 = vmatmul.mubr.f32.gmra.mrb[0].mxu0 %v1096
      %v2086 = vpop.f32.mrb[0].mxu0
      %v2087 = vadd.f32 0.0, %v2086
      %v2088 = vpop.f32.mrb[0].mxu0
      %2089 = vmatprep.mubr.f32.mxu0 0.0
      %2090 = vmatmul.mubr.f32.gmra.mrb[0].mxu0 %v1098
      %v2091 = vpop.f32.mrb[0].mxu0
      %v2092 = vadd.f32 0.0, %v2091
      %v2093 = vpop.f32.mrb[0].mxu0
      %2094 = vmatprep.mubr.f32.mxu0 0.0
      %2095 = vmatmul.mubr.f32.gmra.mrb[0].mxu0 %v1100
      %v2096 = vpop.f32.mrb[0].mxu0
      %v2097 = vadd.f32 0.0, %v2096
      %v2098 = vpop.f32.mrb[0].mxu0
      %2099 = vmatprep.mubr.f32.mxu0 0.0
      %2100 = vmatmul.mubr.f32.gmra.mrb[0].mxu0 %v1102
      %v2101 = vpop.f32.mrb[0].mxu0
      %v2102 = vadd.f32 0.0, %v2101
      %v2103 = vpop.f32.mrb[0].mxu0
      %2104 = vmatprep.mubr.f32.mxu0 0.0
      %2105 = vmatmul.mubr.f32.gmra.mrb[0].mxu0 %v1104
      %v2106 = vpop.f32.mrb[0].mxu0
      %v2107 = vadd.f32 0.0, %v2106
      %v2108 = vpop.f32.mrb[0].mxu0
      %2109 = vmatprep.mubr.f32.mxu0 0.0
      %2110 = vmatmul.mubr.f32.gmra.mrb[0].mxu0 %v1106
      %v2111 = vpop.f32.mrb[0].mxu0
      %v2112 = vadd.f32 0.0, %v2111
      %v2113 = vpop.f32.mrb[0].mxu0
      %2114 = vmatprep.mubr.f32.mxu0 0.0
      %2115 = vmatmul.mubr.f32.gmra.mrb[0].mxu0 %v1108
      %v2116 = vpop.f32.mrb[0].mxu0
      %v2117 = vadd.f32 0.0, %v2116
      %v2118 = vpop.f32.mrb[0].mxu0
      %2119 = vmatprep.mubr.f32.mxu0 0.0
      %2120 = vmatmul.mubr.f32.gmra.mrb[0].mxu0 %v1110
      %v2121 = vpop.f32.mrb[0].mxu0
      %v2122 = vadd.f32 0.0, %v2121
      %v2123 = vpop.f32.mrb[0].mxu0
      %2124 = vmatprep.mubr.f32.mxu0 0.0
      %2125 = vmatmul.mubr.f32.gmra.mrb[0].mxu0 %v1112
      %v2126 = vpop.f32.mrb[0].mxu0
      %v2127 = vadd.f32 0.0, %v2126
      %v2128 = vpop.f32.mrb[0].mxu0
      %2129 = vmatprep.mubr.f32.mxu0 0.0
      %2130 = vmatmul.mubr.f32.gmra.mrb[0].mxu0 %v1114
      %v2131 = vpop.f32.mrb[0].mxu0
      %v2132 = vadd.f32 0.0, %v2131
      %v2133 = vpop.f32.mrb[0].mxu0
      %2134 = vmatprep.mubr.f32.mxu0 0.0
      %2135 = vmatmul.mubr.f32.gmra.mrb[0].mxu0 %v1116
      %v2136 = vpop.f32.mrb[0].mxu0
      %v2137 = vadd.f32 0.0, %v2136
      %v2138 = vpop.f32.mrb[0].mxu0
      %2139 = vmatprep.mubr.f32.mxu0 0.0
      %2140 = vmatmul.mubr.f32.gmra.mrb[0].mxu0 %v1118
      %v2141 = vpop.f32.mrb[0].mxu0
      %v2142 = vadd.f32 0.0, %v2141
      %v2143 = vpop.f32.mrb[0].mxu0
      %2144 = vmatprep.mubr.f32.mxu0 0.0
      %2145 = vmatmul.mubr.f32.gmra.mrb[0].mxu0 %v1120
      %v2146 = vpop.f32.mrb[0].mxu0
      %v2147 = vadd.f32 0.0, %v2146
      %v2148 = vpop.f32.mrb[0].mxu0
      %2149 = vmatprep.mubr.f32.mxu0 0.0
      %2150 = vmatmul.mubr.f32.gmra.mrb[0].mxu0 %v1122
      %v2151 = vpop.f32.mrb[0].mxu0
      %v2152 = vadd.f32 0.0, %v2151
      %v2153 = vpop.f32.mrb[0].mxu0
      %2154 = vmatprep.mubr.f32.mxu0 0.0
      %2155 = vmatmul.mubr.f32.gmra.mrb[0].mxu0 %v1124
      %v2156 = vpop.f32.mrb[0].mxu0
      %v2157 = vadd.f32 0.0, %v2156
      %v2158 = vpop.f32.mrb[0].mxu0
      %2159 = vmatprep.mubr.f32.mxu0 0.0
      %2160 = vmatmul.mubr.f32.gmra.mrb[0].mxu0 %v1126
      %v2161 = vpop.f32.mrb[0].mxu0
      %v2162 = vadd.f32 0.0, %v2161
      %v2163 = vpop.f32.mrb[0].mxu0
      %2164 = vmatprep.mubr.f32.mxu0 0.0
      %2165 = vmatmul.mubr.f32.gmra.mrb[0].mxu0 %v1128
      %v2166 = vpop.f32.mrb[0].mxu0
      %v2167 = vadd.f32 0.0, %v2166
      %v2168 = vpop.f32.mrb[0].mxu0
      %2169 = vmatprep.mubr.f32.mxu0 0.0
      %2170 = vmatmul.mubr.f32.gmra.mrb[0].mxu0 %v1130
      %v2171 = vpop.f32.mrb[0].mxu0
      %v2172 = vadd.f32 0.0, %v2171
      %v2173 = vpop.f32.mrb[0].mxu0
      %2174 = vmatprep.mubr.f32.mxu0 0.0
      %2175 = vmatmul.mubr.f32.gmra.mrb[0].mxu0 %v1132
      %v2176 = vpop.f32.mrb[0].mxu0
      %v2177 = vadd.f32 0.0, %v2176
      %v2178 = vpop.f32.mrb[0].mxu0
      %2179 = vmatprep.mubr.f32.mxu0 0.0
      %2180 = vmatmul.mubr.f32.gmra.mrb[0].mxu0 %v1134
      %v2181 = vpop.f32.mrb[0].mxu0
      %v2182 = vadd.f32 0.0, %v2181
      %v2183 = vpop.f32.mrb[0].mxu0
      %2184 = vmatprep.mubr.f32.mxu0 0.0
      %2185 = vmatmul.mubr.f32.gmra.mrb[0].mxu0 %v1136
      %v2186 = vpop.f32.mrb[0].mxu0
      %v2187 = vadd.f32 0.0, %v2186
      %v2188 = vpop.f32.mrb[0].mxu0
      %2189 = vmatprep.mubr.f32.mxu0 0.0
      %2190 = vmatmul.mubr.f32.gmra.mrb[0].mxu0 %v1138
      %v2191 = vpop.f32.mrb[0].mxu0
      %v2192 = vadd.f32 0.0, %v2191
      %v2193 = vpop.f32.mrb[0].mxu0
      %2194 = vmatprep.mubr.f32.mxu0 0.0
      %2195 = vmatmul.mubr.f32.gmra.mrb[0].mxu0 %v1140
      %v2196 = vpop.f32.mrb[0].mxu0
      %v2197 = vadd.f32 0.0, %v2196
      %v2198 = vpop.f32.mrb[0].mxu0
      %2199 = vmatprep.mubr.f32.mxu0 0.0
      %2200 = vmatmul.mubr.f32.gmra.mrb[0].mxu0 %v1142
      %v2201 = vpop.f32.mrb[0].mxu0
      %v2202 = vadd.f32 0.0, %v2201
      %v2203 = vpop.f32.mrb[0].mxu0
      %2204 = vmatprep.mubr.f32.mxu0 0.0
      %2205 = vmatmul.mubr.f32.gmra.mrb[0].mxu0 %v1983
      %v2206 = vpop.f32.mrb[0].mxu0
      %v2207 = vadd.f32 0.0, %v2206
      %v2208 = vpop.f32.mrb[0].mxu0
      %2209 = vmatprep.mubr.f32.mxu0 0.0
      %2210 = vmatmul.mubr.f32.gmra.mrb[0].mxu0 %v1985
      %v2211 = vpop.f32.mrb[0].mxu0
      %v2212 = vadd.f32 0.0, %v2211
      %v2213 = vpop.f32.mrb[0].mxu0
      %2214 = vdwg.mxu0
      %v2215 = vadd.f32 %v1944, %v2057
      %v2216 = vadd.f32 %v1945, %v2062
      %v2217 = vadd.f32 %v1946, %v2067
      %v2218 = vadd.f32 %v1947, %v2072
      %v2219 = vadd.f32 %v1948, %v2077
      %v2220 = vadd.f32 %v1949, %v2082
      %v2221 = vadd.f32 %v1950, %v2087
      %v2222 = vadd.f32 %v1951, %v2092
      %v2223 = vadd.f32 %v1952, %v2097
      %v2224 = vadd.f32 %v1953, %v2102
      %v2225 = vadd.f32 %v1954, %v2107
      %v2226 = vadd.f32 %v1955, %v2112
      %v2227 = vadd.f32 %v1956, %v2117
      %v2228 = vadd.f32 %v1957, %v2122
      %v2229 = vadd.f32 %v1958, %v2127
      %v2230 = vadd.f32 %v1959, %v2132
      %v2231 = vadd.f32 %v1960, %v2137
      %v2232 = vadd.f32 %v1961, %v2142
      %v2233 = vadd.f32 %v1962, %v2147
      %v2234 = vadd.f32 %v1963, %v2152
      %v2235 = vadd.f32 %v1964, %v2157
      %v2236 = vadd.f32 %v1965, %v2162
      %v2237 = vadd.f32 %v1966, %v2167
      %v2238 = vadd.f32 %v1967, %v2172
      %v2239 = vadd.f32 %v1968, %v2177
      %v2240 = vadd.f32 %v1969, %v2182
      %v2241 = vadd.f32 %v1970, %v2187
      %v2242 = vadd.f32 %v1971, %v2192
      %v2243 = vadd.f32 %v1972, %v2197
      %v2244 = vadd.f32 %v1973, %v2202
      %v2245 = vadd.f32 %v1974, %v2207
      %v2246 = vadd.f32 %v1975, %v2212
      %s2247 = scalar_lea.vmem %s1, 24
      %v2248 = vld [vmem:[%s2247] sm:$0xf]
      %v2250 = vsel %vm411, %v276, 0
      %v2253 = vsel %vm411, %v277, 0
      %v2256 = vsel %vm476, %v2248, 0
      %2258 = vmatprep.subr.mxu0 0.0
      %2259 = vmatpush1.msra.mxu0 %v2256
      %2260 = vmatprep.subr.mxu0 0.0
      %2261 = vmatpush1.msra.mxu0 0.0
      %2262 = vmatprep.subr.mxu0 0.0
      %2263 = vmatpush1.msra.mxu0 0.0
      %2264 = vmatprep.subr.mxu0 0.0
      %2265 = vmatpush1.msra.mxu0 0.0
      %2266 = vmatprep.subr.mxu0 0.0
      %2267 = vmatpush1.msra.mxu0 0.0
      %2268 = vmatprep.subr.mxu0 0.0
      %2269 = vmatpush1.msra.mxu0 0.0
      %2270 = vmatprep.subr.mxu0 0.0
      %2271 = vmatpush1.msra.mxu0 0.0
      %2272 = vmatprep.subr.mxu0 0.0
      %2273 = vmatpush1.msra.mxu0 0.0
      %2274 = vmatprep.subr.mxu0 0.0
      %2275 = vmatpush1.msra.mxu0 0.0
      %2276 = vmatprep.subr.mxu0 0.0
      %2277 = vmatpush1.msra.mxu0 0.0
      %2278 = vmatprep.subr.mxu0 0.0
      %2279 = vmatpush1.msra.mxu0 0.0
      %2280 = vmatprep.subr.mxu0 0.0
      %2281 = vmatpush1.msra.mxu0 0.0
      %2282 = vmatprep.subr.mxu0 0.0
      %2283 = vmatpush1.msra.mxu0 0.0
      %2284 = vmatprep.subr.mxu0 0.0
      %2285 = vmatpush1.msra.mxu0 0.0
      %2286 = vmatprep.subr.mxu0 0.0
      %2287 = vmatpush1.msra.mxu0 0.0
      %2288 = vmatprep.subr.mxu0 0.0
      %2289 = vmatpush1.msra.mxu0 0.0
      %2290 = vmatprep.subr.mxu0 0.0
      %2291 = vmatpush1.msra.mxu0 0.0
      %2292 = vmatprep.subr.mxu0 0.0
      %2293 = vmatpush1.msra.mxu0 0.0
      %2294 = vmatprep.subr.mxu0 0.0
      %2295 = vmatpush1.msra.mxu0 0.0
      %2296 = vmatprep.subr.mxu0 0.0
      %2297 = vmatpush1.msra.mxu0 0.0
      %2298 = vmatprep.subr.mxu0 0.0
      %2299 = vmatpush1.msra.mxu0 0.0
      %2300 = vmatprep.subr.mxu0 0.0
      %2301 = vmatpush1.msra.mxu0 0.0
      %2302 = vmatprep.subr.mxu0 0.0
      %2303 = vmatpush1.msra.mxu0 0.0
      %2304 = vmatprep.subr.mxu0 0.0
      %2305 = vmatpush1.msra.mxu0 0.0
      %2306 = vmatprep.subr.mxu0 0.0
      %2307 = vmatpush1.msra.mxu0 0.0
      %2308 = vmatprep.subr.mxu0 0.0
      %2309 = vmatpush1.msra.mxu0 0.0
      %2310 = vmatprep.subr.mxu0 0.0
      %2311 = vmatpush1.msra.mxu0 0.0
      %2312 = vmatprep.subr.mxu0 0.0
      %2313 = vmatpush1.msra.mxu0 0.0
      %2314 = vmatprep.subr.mxu0 0.0
      %2315 = vmatpush1.msra.mxu0 0.0
      %2316 = vmatprep.subr.mxu0 0.0
      %2317 = vmatpush1.msra.mxu0 0.0
      %2318 = vmatprep.subr.mxu0 0.0
      %2319 = vmatpush1.msra.mxu0 0.0
      %2320 = vmatprep.subr.mxu0 0.0
      %2321 = vmatpush1.msra.mxu0 0.0
      %2322 = vmatprep.mubr.f32.mxu0 0.0
      %2323 = vmatmul.mubr.f32.gmra.mrb[0].mxu0 %v713
      %v2324 = vpop.f32.mrb[0].mxu0
      %v2325 = vadd.f32 0.0, %v2324
      %v2326 = vpop.f32.mrb[0].mxu0
      %2327 = vmatprep.mubr.f32.mxu0 0.0
      %2328 = vmatmul.mubr.f32.gmra.mrb[0].mxu0 %v715
      %v2329 = vpop.f32.mrb[0].mxu0
      %v2330 = vadd.f32 0.0, %v2329
      %v2331 = vpop.f32.mrb[0].mxu0
      %2332 = vmatprep.mubr.f32.mxu0 0.0
      %2333 = vmatmul.mubr.f32.gmra.mrb[0].mxu0 %v717
      %v2334 = vpop.f32.mrb[0].mxu0
      %v2335 = vadd.f32 0.0, %v2334
      %v2336 = vpop.f32.mrb[0].mxu0
      %2337 = vmatprep.mubr.f32.mxu0 0.0
      %2338 = vmatmul.mubr.f32.gmra.mrb[0].mxu0 %v719
      %v2339 = vpop.f32.mrb[0].mxu0
      %v2340 = vadd.f32 0.0, %v2339
      %v2341 = vpop.f32.mrb[0].mxu0
      %2342 = vmatprep.mubr.f32.mxu0 0.0
      %2343 = vmatmul.mubr.f32.gmra.mrb[0].mxu0 %v721
      %v2344 = vpop.f32.mrb[0].mxu0
      %v2345 = vadd.f32 0.0, %v2344
      %v2346 = vpop.f32.mrb[0].mxu0
      %2347 = vmatprep.mubr.f32.mxu0 0.0
      %2348 = vmatmul.mubr.f32.gmra.mrb[0].mxu0 %v723
      %v2349 = vpop.f32.mrb[0].mxu0
      %v2350 = vadd.f32 0.0, %v2349
      %v2351 = vpop.f32.mrb[0].mxu0
      %2352 = vmatprep.mubr.f32.mxu0 0.0
      %2353 = vmatmul.mubr.f32.gmra.mrb[0].mxu0 %v725
      %v2354 = vpop.f32.mrb[0].mxu0
      %v2355 = vadd.f32 0.0, %v2354
      %v2356 = vpop.f32.mrb[0].mxu0
      %2357 = vmatprep.mubr.f32.mxu0 0.0
      %2358 = vmatmul.mubr.f32.gmra.mrb[0].mxu0 %v727
      %v2359 = vpop.f32.mrb[0].mxu0
      %v2360 = vadd.f32 0.0, %v2359
      %v2361 = vpop.f32.mrb[0].mxu0
      %2362 = vmatprep.mubr.f32.mxu0 0.0
      %2363 = vmatmul.mubr.f32.gmra.mrb[0].mxu0 %v729
      %v2364 = vpop.f32.mrb[0].mxu0
      %v2365 = vadd.f32 0.0, %v2364
      %v2366 = vpop.f32.mrb[0].mxu0
      %2367 = vmatprep.mubr.f32.mxu0 0.0
      %2368 = vmatmul.mubr.f32.gmra.mrb[0].mxu0 %v731
      %v2369 = vpop.f32.mrb[0].mxu0
      %v2370 = vadd.f32 0.0, %v2369
      %v2371 = vpop.f32.mrb[0].mxu0
      %2372 = vmatprep.mubr.f32.mxu0 0.0
      %2373 = vmatmul.mubr.f32.gmra.mrb[0].mxu0 %v733
      %v2374 = vpop.f32.mrb[0].mxu0
      %v2375 = vadd.f32 0.0, %v2374
      %v2376 = vpop.f32.mrb[0].mxu0
      %2377 = vmatprep.mubr.f32.mxu0 0.0
      %2378 = vmatmul.mubr.f32.gmra.mrb[0].mxu0 %v735
      %v2379 = vpop.f32.mrb[0].mxu0
      %v2380 = vadd.f32 0.0, %v2379
      %v2381 = vpop.f32.mrb[0].mxu0
      %2382 = vmatprep.mubr.f32.mxu0 0.0
      %2383 = vmatmul.mubr.f32.gmra.mrb[0].mxu0 %v737
      %v2384 = vpop.f32.mrb[0].mxu0
      %v2385 = vadd.f32 0.0, %v2384
      %v2386 = vpop.f32.mrb[0].mxu0
      %2387 = vmatprep.mubr.f32.mxu0 0.0
      %2388 = vmatmul.mubr.f32.gmra.mrb[0].mxu0 %v739
      %v2389 = vpop.f32.mrb[0].mxu0
      %v2390 = vadd.f32 0.0, %v2389
      %v2391 = vpop.f32.mrb[0].mxu0
      %2392 = vmatprep.mubr.f32.mxu0 0.0
      %2393 = vmatmul.mubr.f32.gmra.mrb[0].mxu0 %v741
      %v2394 = vpop.f32.mrb[0].mxu0
      %v2395 = vadd.f32 0.0, %v2394
      %v2396 = vpop.f32.mrb[0].mxu0
      %2397 = vmatprep.mubr.f32.mxu0 0.0
      %2398 = vmatmul.mubr.f32.gmra.mrb[0].mxu0 %v743
      %v2399 = vpop.f32.mrb[0].mxu0
      %v2400 = vadd.f32 0.0, %v2399
      %v2401 = vpop.f32.mrb[0].mxu0
      %2402 = vmatprep.mubr.f32.mxu0 0.0
      %2403 = vmatmul.mubr.f32.gmra.mrb[0].mxu0 %v745
      %v2404 = vpop.f32.mrb[0].mxu0
      %v2405 = vadd.f32 0.0, %v2404
      %v2406 = vpop.f32.mrb[0].mxu0
      %2407 = vmatprep.mubr.f32.mxu0 0.0
      %2408 = vmatmul.mubr.f32.gmra.mrb[0].mxu0 %v747
      %v2409 = vpop.f32.mrb[0].mxu0
      %v2410 = vadd.f32 0.0, %v2409
      %v2411 = vpop.f32.mrb[0].mxu0
      %2412 = vmatprep.mubr.f32.mxu0 0.0
      %2413 = vmatmul.mubr.f32.gmra.mrb[0].mxu0 %v749
      %v2414 = vpop.f32.mrb[0].mxu0
      %v2415 = vadd.f32 0.0, %v2414
      %v2416 = vpop.f32.mrb[0].mxu0
      %2417 = vmatprep.mubr.f32.mxu0 0.0
      %2418 = vmatmul.mubr.f32.gmra.mrb[0].mxu0 %v751
      %v2419 = vpop.f32.mrb[0].mxu0
      %v2420 = vadd.f32 0.0, %v2419
      %v2421 = vpop.f32.mrb[0].mxu0
      %2422 = vmatprep.mubr.f32.mxu0 0.0
      %2423 = vmatmul.mubr.f32.gmra.mrb[0].mxu0 %v753
      %v2424 = vpop.f32.mrb[0].mxu0
      %v2425 = vadd.f32 0.0, %v2424
      %v2426 = vpop.f32.mrb[0].mxu0
      %2427 = vmatprep.mubr.f32.mxu0 0.0
      %2428 = vmatmul.mubr.f32.gmra.mrb[0].mxu0 %v755
      %v2429 = vpop.f32.mrb[0].mxu0
      %v2430 = vadd.f32 0.0, %v2429
      %v2431 = vpop.f32.mrb[0].mxu0
      %2432 = vmatprep.mubr.f32.mxu0 0.0
      %2433 = vmatmul.mubr.f32.gmra.mrb[0].mxu0 %v757
      %v2434 = vpop.f32.mrb[0].mxu0
      %v2435 = vadd.f32 0.0, %v2434
      %v2436 = vpop.f32.mrb[0].mxu0
      %2437 = vmatprep.mubr.f32.mxu0 0.0
      %2438 = vmatmul.mubr.f32.gmra.mrb[0].mxu0 %v759
      %v2439 = vpop.f32.mrb[0].mxu0
      %v2440 = vadd.f32 0.0, %v2439
      %v2441 = vpop.f32.mrb[0].mxu0
      %2442 = vmatprep.mubr.f32.mxu0 0.0
      %2443 = vmatmul.mubr.f32.gmra.mrb[0].mxu0 %v761
      %v2444 = vpop.f32.mrb[0].mxu0
      %v2445 = vadd.f32 0.0, %v2444
      %v2446 = vpop.f32.mrb[0].mxu0
      %2447 = vmatprep.mubr.f32.mxu0 0.0
      %2448 = vmatmul.mubr.f32.gmra.mrb[0].mxu0 %v763
      %v2449 = vpop.f32.mrb[0].mxu0
      %v2450 = vadd.f32 0.0, %v2449
      %v2451 = vpop.f32.mrb[0].mxu0
      %2452 = vmatprep.mubr.f32.mxu0 0.0
      %2453 = vmatmul.mubr.f32.gmra.mrb[0].mxu0 %v765
      %v2454 = vpop.f32.mrb[0].mxu0
      %v2455 = vadd.f32 0.0, %v2454
      %v2456 = vpop.f32.mrb[0].mxu0
      %2457 = vmatprep.mubr.f32.mxu0 0.0
      %2458 = vmatmul.mubr.f32.gmra.mrb[0].mxu0 %v767
      %v2459 = vpop.f32.mrb[0].mxu0
      %v2460 = vadd.f32 0.0, %v2459
      %v2461 = vpop.f32.mrb[0].mxu0
      %2462 = vmatprep.mubr.f32.mxu0 0.0
      %2463 = vmatmul.mubr.f32.gmra.mrb[0].mxu0 %v1407
      %v2464 = vpop.f32.mrb[0].mxu0
      %v2465 = vadd.f32 0.0, %v2464
      %v2466 = vpop.f32.mrb[0].mxu0
      %2467 = vmatprep.mubr.f32.mxu0 0.0
      %2468 = vmatmul.mubr.f32.gmra.mrb[0].mxu0 %v1410
      %v2469 = vpop.f32.mrb[0].mxu0
      %v2470 = vadd.f32 0.0, %v2469
      %v2471 = vpop.f32.mrb[0].mxu0
      %2472 = vmatprep.mubr.f32.mxu0 0.0
      %2473 = vmatmul.mubr.f32.gmra.mrb[0].mxu0 %v2250
      %v2474 = vpop.f32.mrb[0].mxu0
      %v2475 = vadd.f32 0.0, %v2474
      %v2476 = vpop.f32.mrb[0].mxu0
      %2477 = vmatprep.mubr.f32.mxu0 0.0
      %2478 = vmatmul.mubr.f32.gmra.mrb[0].mxu0 %v2253
      %v2479 = vpop.f32.mrb[0].mxu0
      %v2480 = vadd.f32 0.0, %v2479
      %v2481 = vpop.f32.mrb[0].mxu0
      %2482 = vdwg.mxu0
      %v2483 = vadd.f32 %v2215, %v2325
      %v2484 = vadd.f32 %v2216, %v2330
      %v2485 = vadd.f32 %v2217, %v2335
      %v2486 = vadd.f32 %v2218, %v2340
      %v2487 = vadd.f32 %v2219, %v2345
      %v2488 = vadd.f32 %v2220, %v2350
      %v2489 = vadd.f32 %v2221, %v2355
      %v2490 = vadd.f32 %v2222, %v2360
      %v2491 = vadd.f32 %v2223, %v2365
      %v2492 = vadd.f32 %v2224, %v2370
      %v2493 = vadd.f32 %v2225, %v2375
      %v2494 = vadd.f32 %v2226, %v2380
      %v2495 = vadd.f32 %v2227, %v2385
      %v2496 = vadd.f32 %v2228, %v2390
      %v2497 = vadd.f32 %v2229, %v2395
      %v2498 = vadd.f32 %v2230, %v2400
      %v2499 = vadd.f32 %v2231, %v2405
      %v2500 = vadd.f32 %v2232, %v2410
      %v2501 = vadd.f32 %v2233, %v2415
      %v2502 = vadd.f32 %v2234, %v2420
      %v2503 = vadd.f32 %v2235, %v2425
      %v2504 = vadd.f32 %v2236, %v2430
      %v2505 = vadd.f32 %v2237, %v2435
      %v2506 = vadd.f32 %v2238, %v2440
      %v2507 = vadd.f32 %v2239, %v2445
      %v2508 = vadd.f32 %v2240, %v2450
      %v2509 = vadd.f32 %v2241, %v2455
      %v2510 = vadd.f32 %v2242, %v2460
      %v2511 = vadd.f32 %v2243, %v2465
      %v2512 = vadd.f32 %v2244, %v2470
      %v2513 = vadd.f32 %v2245, %v2475
      %v2514 = vadd.f32 %v2246, %v2480
      %v2516 = vrot.slane %v276, 1
      %v2517 = vrot.slane %v277, 1
      %v2518 = vsel %vm328, %v2516, %v2517
      %v2519 = vrot.slane %v278, 1
      %v2520 = vsel %vm328, %v2517, %v2519
      %s2521 = scalar_lea.vmem %s1, 28
      %v2522 = vld [vmem:[%s2521] sm:$0xf]
      %v2523 = vsel %vm411, %v2518, 0
      %v2525 = vsel %vm411, %v2520, 0
      %v2528 = vsel %vm476, %v2522, 0
      %2530 = vmatprep.subr.mxu0 0.0
      %2531 = vmatpush1.msra.mxu0 %v2528
      %2532 = vmatprep.subr.mxu0 0.0
      %2533 = vmatpush1.msra.mxu0 0.0
      %2534 = vmatprep.subr.mxu0 0.0
      %2535 = vmatpush1.msra.mxu0 0.0
      %2536 = vmatprep.subr.mxu0 0.0
      %2537 = vmatpush1.msra.mxu0 0.0
      %2538 = vmatprep.subr.mxu0 0.0
      %2539 = vmatpush1.msra.mxu0 0.0
      %2540 = vmatprep.subr.mxu0 0.0
      %2541 = vmatpush1.msra.mxu0 0.0
      %2542 = vmatprep.subr.mxu0 0.0
      %2543 = vmatpush1.msra.mxu0 0.0
      %2544 = vmatprep.subr.mxu0 0.0
      %2545 = vmatpush1.msra.mxu0 0.0
      %2546 = vmatprep.subr.mxu0 0.0
      %2547 = vmatpush1.msra.mxu0 0.0
      %2548 = vmatprep.subr.mxu0 0.0
      %2549 = vmatpush1.msra.mxu0 0.0
      %2550 = vmatprep.subr.mxu0 0.0
      %2551 = vmatpush1.msra.mxu0 0.0
      %2552 = vmatprep.subr.mxu0 0.0
      %2553 = vmatpush1.msra.mxu0 0.0
      %2554 = vmatprep.subr.mxu0 0.0
      %2555 = vmatpush1.msra.mxu0 0.0
      %2556 = vmatprep.subr.mxu0 0.0
      %2557 = vmatpush1.msra.mxu0 0.0
      %2558 = vmatprep.subr.mxu0 0.0
      %2559 = vmatpush1.msra.mxu0 0.0
      %2560 = vmatprep.subr.mxu0 0.0
      %2561 = vmatpush1.msra.mxu0 0.0
      %2562 = vmatprep.subr.mxu0 0.0
      %2563 = vmatpush1.msra.mxu0 0.0
      %2564 = vmatprep.subr.mxu0 0.0
      %2565 = vmatpush1.msra.mxu0 0.0
      %2566 = vmatprep.subr.mxu0 0.0
      %2567 = vmatpush1.msra.mxu0 0.0
      %2568 = vmatprep.subr.mxu0 0.0
      %2569 = vmatpush1.msra.mxu0 0.0
      %2570 = vmatprep.subr.mxu0 0.0
      %2571 = vmatpush1.msra.mxu0 0.0
      %2572 = vmatprep.subr.mxu0 0.0
      %2573 = vmatpush1.msra.mxu0 0.0
      %2574 = vmatprep.subr.mxu0 0.0
      %2575 = vmatpush1.msra.mxu0 0.0
      %2576 = vmatprep.subr.mxu0 0.0
      %2577 = vmatpush1.msra.mxu0 0.0
      %2578 = vmatprep.subr.mxu0 0.0
      %2579 = vmatpush1.msra.mxu0 0.0
      %2580 = vmatprep.subr.mxu0 0.0
      %2581 = vmatpush1.msra.mxu0 0.0
      %2582 = vmatprep.subr.mxu0 0.0
      %2583 = vmatpush1.msra.mxu0 0.0
      %2584 = vmatprep.subr.mxu0 0.0
      %2585 = vmatpush1.msra.mxu0 0.0
      %2586 = vmatprep.subr.mxu0 0.0
      %2587 = vmatpush1.msra.mxu0 0.0
      %2588 = vmatprep.subr.mxu0 0.0
      %2589 = vmatpush1.msra.mxu0 0.0
      %2590 = vmatprep.subr.mxu0 0.0
      %2591 = vmatpush1.msra.mxu0 0.0
      %2592 = vmatprep.subr.mxu0 0.0
      %2593 = vmatpush1.msra.mxu0 0.0
      %2594 = vmatprep.mubr.f32.mxu0 0.0
      %2595 = vmatmul.mubr.f32.gmra.mrb[0].mxu0 %v420
      %v2596 = vpop.f32.mrb[0].mxu0
      %v2597 = vadd.f32 0.0, %v2596
      %v2598 = vpop.f32.mrb[0].mxu0
      %2599 = vmatprep.mubr.f32.mxu0 0.0
      %2600 = vmatmul.mubr.f32.gmra.mrb[0].mxu0 %v422
      %v2601 = vpop.f32.mrb[0].mxu0
      %v2602 = vadd.f32 0.0, %v2601
      %v2603 = vpop.f32.mrb[0].mxu0
      %2604 = vmatprep.mubr.f32.mxu0 0.0
      %2605 = vmatmul.mubr.f32.gmra.mrb[0].mxu0 %v424
      %v2606 = vpop.f32.mrb[0].mxu0
      %v2607 = vadd.f32 0.0, %v2606
      %v2608 = vpop.f32.mrb[0].mxu0
      %2609 = vmatprep.mubr.f32.mxu0 0.0
      %2610 = vmatmul.mubr.f32.gmra.mrb[0].mxu0 %v426
      %v2611 = vpop.f32.mrb[0].mxu0
      %v2612 = vadd.f32 0.0, %v2611
      %v2613 = vpop.f32.mrb[0].mxu0
      %2614 = vmatprep.mubr.f32.mxu0 0.0
      %2615 = vmatmul.mubr.f32.gmra.mrb[0].mxu0 %v428
      %v2616 = vpop.f32.mrb[0].mxu0
      %v2617 = vadd.f32 0.0, %v2616
      %v2618 = vpop.f32.mrb[0].mxu0
      %2619 = vmatprep.mubr.f32.mxu0 0.0
      %2620 = vmatmul.mubr.f32.gmra.mrb[0].mxu0 %v430
      %v2621 = vpop.f32.mrb[0].mxu0
      %v2622 = vadd.f32 0.0, %v2621
      %v2623 = vpop.f32.mrb[0].mxu0
      %2624 = vmatprep.mubr.f32.mxu0 0.0
      %2625 = vmatmul.mubr.f32.gmra.mrb[0].mxu0 %v432
      %v2626 = vpop.f32.mrb[0].mxu0
      %v2627 = vadd.f32 0.0, %v2626
      %v2628 = vpop.f32.mrb[0].mxu0
      %2629 = vmatprep.mubr.f32.mxu0 0.0
      %2630 = vmatmul.mubr.f32.gmra.mrb[0].mxu0 %v434
      %v2631 = vpop.f32.mrb[0].mxu0
      %v2632 = vadd.f32 0.0, %v2631
      %v2633 = vpop.f32.mrb[0].mxu0
      %2634 = vmatprep.mubr.f32.mxu0 0.0
      %2635 = vmatmul.mubr.f32.gmra.mrb[0].mxu0 %v436
      %v2636 = vpop.f32.mrb[0].mxu0
      %v2637 = vadd.f32 0.0, %v2636
      %v2638 = vpop.f32.mrb[0].mxu0
      %2639 = vmatprep.mubr.f32.mxu0 0.0
      %2640 = vmatmul.mubr.f32.gmra.mrb[0].mxu0 %v438
      %v2641 = vpop.f32.mrb[0].mxu0
      %v2642 = vadd.f32 0.0, %v2641
      %v2643 = vpop.f32.mrb[0].mxu0
      %2644 = vmatprep.mubr.f32.mxu0 0.0
      %2645 = vmatmul.mubr.f32.gmra.mrb[0].mxu0 %v440
      %v2646 = vpop.f32.mrb[0].mxu0
      %v2647 = vadd.f32 0.0, %v2646
      %v2648 = vpop.f32.mrb[0].mxu0
      %2649 = vmatprep.mubr.f32.mxu0 0.0
      %2650 = vmatmul.mubr.f32.gmra.mrb[0].mxu0 %v442
      %v2651 = vpop.f32.mrb[0].mxu0
      %v2652 = vadd.f32 0.0, %v2651
      %v2653 = vpop.f32.mrb[0].mxu0
      %2654 = vmatprep.mubr.f32.mxu0 0.0
      %2655 = vmatmul.mubr.f32.gmra.mrb[0].mxu0 %v444
      %v2656 = vpop.f32.mrb[0].mxu0
      %v2657 = vadd.f32 0.0, %v2656
      %v2658 = vpop.f32.mrb[0].mxu0
      %2659 = vmatprep.mubr.f32.mxu0 0.0
      %2660 = vmatmul.mubr.f32.gmra.mrb[0].mxu0 %v446
      %v2661 = vpop.f32.mrb[0].mxu0
      %v2662 = vadd.f32 0.0, %v2661
      %v2663 = vpop.f32.mrb[0].mxu0
      %2664 = vmatprep.mubr.f32.mxu0 0.0
      %2665 = vmatmul.mubr.f32.gmra.mrb[0].mxu0 %v448
      %v2666 = vpop.f32.mrb[0].mxu0
      %v2667 = vadd.f32 0.0, %v2666
      %v2668 = vpop.f32.mrb[0].mxu0
      %2669 = vmatprep.mubr.f32.mxu0 0.0
      %2670 = vmatmul.mubr.f32.gmra.mrb[0].mxu0 %v450
      %v2671 = vpop.f32.mrb[0].mxu0
      %v2672 = vadd.f32 0.0, %v2671
      %v2673 = vpop.f32.mrb[0].mxu0
      %2674 = vmatprep.mubr.f32.mxu0 0.0
      %2675 = vmatmul.mubr.f32.gmra.mrb[0].mxu0 %v452
      %v2676 = vpop.f32.mrb[0].mxu0
      %v2677 = vadd.f32 0.0, %v2676
      %v2678 = vpop.f32.mrb[0].mxu0
      %2679 = vmatprep.mubr.f32.mxu0 0.0
      %2680 = vmatmul.mubr.f32.gmra.mrb[0].mxu0 %v454
      %v2681 = vpop.f32.mrb[0].mxu0
      %v2682 = vadd.f32 0.0, %v2681
      %v2683 = vpop.f32.mrb[0].mxu0
      %2684 = vmatprep.mubr.f32.mxu0 0.0
      %2685 = vmatmul.mubr.f32.gmra.mrb[0].mxu0 %v456
      %v2686 = vpop.f32.mrb[0].mxu0
      %v2687 = vadd.f32 0.0, %v2686
      %v2688 = vpop.f32.mrb[0].mxu0
      %2689 = vmatprep.mubr.f32.mxu0 0.0
      %2690 = vmatmul.mubr.f32.gmra.mrb[0].mxu0 %v458
      %v2691 = vpop.f32.mrb[0].mxu0
      %v2692 = vadd.f32 0.0, %v2691
      %v2693 = vpop.f32.mrb[0].mxu0
      %2694 = vmatprep.mubr.f32.mxu0 0.0
      %2695 = vmatmul.mubr.f32.gmra.mrb[0].mxu0 %v460
      %v2696 = vpop.f32.mrb[0].mxu0
      %v2697 = vadd.f32 0.0, %v2696
      %v2698 = vpop.f32.mrb[0].mxu0
      %2699 = vmatprep.mubr.f32.mxu0 0.0
      %2700 = vmatmul.mubr.f32.gmra.mrb[0].mxu0 %v462
      %v2701 = vpop.f32.mrb[0].mxu0
      %v2702 = vadd.f32 0.0, %v2701
      %v2703 = vpop.f32.mrb[0].mxu0
      %2704 = vmatprep.mubr.f32.mxu0 0.0
      %2705 = vmatmul.mubr.f32.gmra.mrb[0].mxu0 %v464
      %v2706 = vpop.f32.mrb[0].mxu0
      %v2707 = vadd.f32 0.0, %v2706
      %v2708 = vpop.f32.mrb[0].mxu0
      %2709 = vmatprep.mubr.f32.mxu0 0.0
      %2710 = vmatmul.mubr.f32.gmra.mrb[0].mxu0 %v466
      %v2711 = vpop.f32.mrb[0].mxu0
      %v2712 = vadd.f32 0.0, %v2711
      %v2713 = vpop.f32.mrb[0].mxu0
      %2714 = vmatprep.mubr.f32.mxu0 0.0
      %2715 = vmatmul.mubr.f32.gmra.mrb[0].mxu0 %v468
      %v2716 = vpop.f32.mrb[0].mxu0
      %v2717 = vadd.f32 0.0, %v2716
      %v2718 = vpop.f32.mrb[0].mxu0
      %2719 = vmatprep.mubr.f32.mxu0 0.0
      %2720 = vmatmul.mubr.f32.gmra.mrb[0].mxu0 %v470
      %v2721 = vpop.f32.mrb[0].mxu0
      %v2722 = vadd.f32 0.0, %v2721
      %v2723 = vpop.f32.mrb[0].mxu0
      %2724 = vmatprep.mubr.f32.mxu0 0.0
      %2725 = vmatmul.mubr.f32.gmra.mrb[0].mxu0 %v472
      %v2726 = vpop.f32.mrb[0].mxu0
      %v2727 = vadd.f32 0.0, %v2726
      %v2728 = vpop.f32.mrb[0].mxu0
      %2729 = vmatprep.mubr.f32.mxu0 0.0
      %2730 = vmatmul.mubr.f32.gmra.mrb[0].mxu0 %v474
      %v2731 = vpop.f32.mrb[0].mxu0
      %v2732 = vadd.f32 0.0, %v2731
      %v2733 = vpop.f32.mrb[0].mxu0
      %2734 = vmatprep.mubr.f32.mxu0 0.0
      %2735 = vmatmul.mubr.f32.gmra.mrb[0].mxu0 %v1712
      %v2736 = vpop.f32.mrb[0].mxu0
      %v2737 = vadd.f32 0.0, %v2736
      %v2738 = vpop.f32.mrb[0].mxu0
      %2739 = vmatprep.mubr.f32.mxu0 0.0
      %2740 = vmatmul.mubr.f32.gmra.mrb[0].mxu0 %v1714
      %v2741 = vpop.f32.mrb[0].mxu0
      %v2742 = vadd.f32 0.0, %v2741
      %v2743 = vpop.f32.mrb[0].mxu0
      %2744 = vmatprep.mubr.f32.mxu0 0.0
      %2745 = vmatmul.mubr.f32.gmra.mrb[0].mxu0 %v2523
      %v2746 = vpop.f32.mrb[0].mxu0
      %v2747 = vadd.f32 0.0, %v2746
      %v2748 = vpop.f32.mrb[0].mxu0
      %2749 = vmatprep.mubr.f32.mxu0 0.0
      %2750 = vmatmul.mubr.f32.gmra.mrb[0].mxu0 %v2525
      %v2751 = vpop.f32.mrb[0].mxu0
      %v2752 = vadd.f32 0.0, %v2751
      %v2753 = vpop.f32.mrb[0].mxu0
      %2754 = vdwg.mxu0
      %v2755 = vadd.f32 %v2483, %v2597
      %v2756 = vadd.f32 %v2484, %v2602
      %v2757 = vadd.f32 %v2485, %v2607
      %v2758 = vadd.f32 %v2486, %v2612
      %v2759 = vadd.f32 %v2487, %v2617
      %v2760 = vadd.f32 %v2488, %v2622
      %v2761 = vadd.f32 %v2489, %v2627
      %v2762 = vadd.f32 %v2490, %v2632
      %v2763 = vadd.f32 %v2491, %v2637
      %v2764 = vadd.f32 %v2492, %v2642
      %v2765 = vadd.f32 %v2493, %v2647
      %v2766 = vadd.f32 %v2494, %v2652
      %v2767 = vadd.f32 %v2495, %v2657
      %v2768 = vadd.f32 %v2496, %v2662
      %v2769 = vadd.f32 %v2497, %v2667
      %v2770 = vadd.f32 %v2498, %v2672
      %v2771 = vadd.f32 %v2499, %v2677
      %v2772 = vadd.f32 %v2500, %v2682
      %v2773 = vadd.f32 %v2501, %v2687
      %v2774 = vadd.f32 %v2502, %v2692
      %v2775 = vadd.f32 %v2503, %v2697
      %v2776 = vadd.f32 %v2504, %v2702
      %v2777 = vadd.f32 %v2505, %v2707
      %v2778 = vadd.f32 %v2506, %v2712
      %v2779 = vadd.f32 %v2507, %v2717
      %v2780 = vadd.f32 %v2508, %v2722
      %v2781 = vadd.f32 %v2509, %v2727
      %v2782 = vadd.f32 %v2510, %v2732
      %v2783 = vadd.f32 %v2511, %v2737
      %v2784 = vadd.f32 %v2512, %v2742
      %v2785 = vadd.f32 %v2513, %v2747
      %v2786 = vadd.f32 %v2514, %v2752
      %v2787 = vrot.slane %v276, 2
      %v2788 = vrot.slane %v277, 2
      %v2789 = vsel %vm997, %v2787, %v2788
      %v2790 = vrot.slane %v278, 2
      %v2791 = vsel %vm997, %v2788, %v2790
      %s2792 = scalar_lea.vmem %s1, 32
      %v2793 = vld [vmem:[%s2792] sm:$0xf]
      %v2794 = vsel %vm411, %v2789, 0
      %v2796 = vsel %vm411, %v2791, 0
      %v2799 = vsel %vm476, %v2793, 0
      %2801 = vmatprep.subr.mxu0 0.0
      %2802 = vmatpush1.msra.mxu0 %v2799
      %2803 = vmatprep.subr.mxu0 0.0
      %2804 = vmatpush1.msra.mxu0 0.0
      %2805 = vmatprep.subr.mxu0 0.0
      %2806 = vmatpush1.msra.mxu0 0.0
      %2807 = vmatprep.subr.mxu0 0.0
      %2808 = vmatpush1.msra.mxu0 0.0
      %2809 = vmatprep.subr.mxu0 0.0
      %2810 = vmatpush1.msra.mxu0 0.0
      %2811 = vmatprep.subr.mxu0 0.0
      %2812 = vmatpush1.msra.mxu0 0.0
      %2813 = vmatprep.subr.mxu0 0.0
      %2814 = vmatpush1.msra.mxu0 0.0
      %2815 = vmatprep.subr.mxu0 0.0
      %2816 = vmatpush1.msra.mxu0 0.0
      %2817 = vmatprep.subr.mxu0 0.0
      %2818 = vmatpush1.msra.mxu0 0.0
      %2819 = vmatprep.subr.mxu0 0.0
      %2820 = vmatpush1.msra.mxu0 0.0
      %2821 = vmatprep.subr.mxu0 0.0
      %2822 = vmatpush1.msra.mxu0 0.0
      %2823 = vmatprep.subr.mxu0 0.0
      %2824 = vmatpush1.msra.mxu0 0.0
      %2825 = vmatprep.subr.mxu0 0.0
      %2826 = vmatpush1.msra.mxu0 0.0
      %2827 = vmatprep.subr.mxu0 0.0
      %2828 = vmatpush1.msra.mxu0 0.0
      %2829 = vmatprep.subr.mxu0 0.0
      %2830 = vmatpush1.msra.mxu0 0.0
      %2831 = vmatprep.subr.mxu0 0.0
      %2832 = vmatpush1.msra.mxu0 0.0
      %2833 = vmatprep.subr.mxu0 0.0
      %2834 = vmatpush1.msra.mxu0 0.0
      %2835 = vmatprep.subr.mxu0 0.0
      %2836 = vmatpush1.msra.mxu0 0.0
      %2837 = vmatprep.subr.mxu0 0.0
      %2838 = vmatpush1.msra.mxu0 0.0
      %2839 = vmatprep.subr.mxu0 0.0
      %2840 = vmatpush1.msra.mxu0 0.0
      %2841 = vmatprep.subr.mxu0 0.0
      %2842 = vmatpush1.msra.mxu0 0.0
      %2843 = vmatprep.subr.mxu0 0.0
      %2844 = vmatpush1.msra.mxu0 0.0
      %2845 = vmatprep.subr.mxu0 0.0
      %2846 = vmatpush1.msra.mxu0 0.0
      %2847 = vmatprep.subr.mxu0 0.0
      %2848 = vmatpush1.msra.mxu0 0.0
      %2849 = vmatprep.subr.mxu0 0.0
      %2850 = vmatpush1.msra.mxu0 0.0
      %2851 = vmatprep.subr.mxu0 0.0
      %2852 = vmatpush1.msra.mxu0 0.0
      %2853 = vmatprep.subr.mxu0 0.0
      %2854 = vmatpush1.msra.mxu0 0.0
      %2855 = vmatprep.subr.mxu0 0.0
      %2856 = vmatpush1.msra.mxu0 0.0
      %2857 = vmatprep.subr.mxu0 0.0
      %2858 = vmatpush1.msra.mxu0 0.0
      %2859 = vmatprep.subr.mxu0 0.0
      %2860 = vmatpush1.msra.mxu0 0.0
      %2861 = vmatprep.subr.mxu0 0.0
      %2862 = vmatpush1.msra.mxu0 0.0
      %2863 = vmatprep.subr.mxu0 0.0
      %2864 = vmatpush1.msra.mxu0 0.0
      %2865 = vmatprep.mubr.f32.mxu0 0.0
      %2866 = vmatmul.mubr.f32.gmra.mrb[0].mxu0 %v1088
      %v2867 = vpop.f32.mrb[0].mxu0
      %v2868 = vadd.f32 0.0, %v2867
      %v2869 = vpop.f32.mrb[0].mxu0
      %2870 = vmatprep.mubr.f32.mxu0 0.0
      %2871 = vmatmul.mubr.f32.gmra.mrb[0].mxu0 %v1090
      %v2872 = vpop.f32.mrb[0].mxu0
      %v2873 = vadd.f32 0.0, %v2872
      %v2874 = vpop.f32.mrb[0].mxu0
      %2875 = vmatprep.mubr.f32.mxu0 0.0
      %2876 = vmatmul.mubr.f32.gmra.mrb[0].mxu0 %v1092
      %v2877 = vpop.f32.mrb[0].mxu0
      %v2878 = vadd.f32 0.0, %v2877
      %v2879 = vpop.f32.mrb[0].mxu0
      %2880 = vmatprep.mubr.f32.mxu0 0.0
      %2881 = vmatmul.mubr.f32.gmra.mrb[0].mxu0 %v1094
      %v2882 = vpop.f32.mrb[0].mxu0
      %v2883 = vadd.f32 0.0, %v2882
      %v2884 = vpop.f32.mrb[0].mxu0
      %2885 = vmatprep.mubr.f32.mxu0 0.0
      %2886 = vmatmul.mubr.f32.gmra.mrb[0].mxu0 %v1096
      %v2887 = vpop.f32.mrb[0].mxu0
      %v2888 = vadd.f32 0.0, %v2887
      %v2889 = vpop.f32.mrb[0].mxu0
      %2890 = vmatprep.mubr.f32.mxu0 0.0
      %2891 = vmatmul.mubr.f32.gmra.mrb[0].mxu0 %v1098
      %v2892 = vpop.f32.mrb[0].mxu0
      %v2893 = vadd.f32 0.0, %v2892
      %v2894 = vpop.f32.mrb[0].mxu0
      %2895 = vmatprep.mubr.f32.mxu0 0.0
      %2896 = vmatmul.mubr.f32.gmra.mrb[0].mxu0 %v1100
      %v2897 = vpop.f32.mrb[0].mxu0
      %v2898 = vadd.f32 0.0, %v2897
      %v2899 = vpop.f32.mrb[0].mxu0
      %2900 = vmatprep.mubr.f32.mxu0 0.0
      %2901 = vmatmul.mubr.f32.gmra.mrb[0].mxu0 %v1102
      %v2902 = vpop.f32.mrb[0].mxu0
      %v2903 = vadd.f32 0.0, %v2902
      %v2904 = vpop.f32.mrb[0].mxu0
      %2905 = vmatprep.mubr.f32.mxu0 0.0
      %2906 = vmatmul.mubr.f32.gmra.mrb[0].mxu0 %v1104
      %v2907 = vpop.f32.mrb[0].mxu0
      %v2908 = vadd.f32 0.0, %v2907
      %v2909 = vpop.f32.mrb[0].mxu0
      %2910 = vmatprep.mubr.f32.mxu0 0.0
      %2911 = vmatmul.mubr.f32.gmra.mrb[0].mxu0 %v1106
      %v2912 = vpop.f32.mrb[0].mxu0
      %v2913 = vadd.f32 0.0, %v2912
      %v2914 = vpop.f32.mrb[0].mxu0
      %2915 = vmatprep.mubr.f32.mxu0 0.0
      %2916 = vmatmul.mubr.f32.gmra.mrb[0].mxu0 %v1108
      %v2917 = vpop.f32.mrb[0].mxu0
      %v2918 = vadd.f32 0.0, %v2917
      %v2919 = vpop.f32.mrb[0].mxu0
      %2920 = vmatprep.mubr.f32.mxu0 0.0
      %2921 = vmatmul.mubr.f32.gmra.mrb[0].mxu0 %v1110
      %v2922 = vpop.f32.mrb[0].mxu0
      %v2923 = vadd.f32 0.0, %v2922
      %v2924 = vpop.f32.mrb[0].mxu0
      %2925 = vmatprep.mubr.f32.mxu0 0.0
      %2926 = vmatmul.mubr.f32.gmra.mrb[0].mxu0 %v1112
      %v2927 = vpop.f32.mrb[0].mxu0
      %v2928 = vadd.f32 0.0, %v2927
      %v2929 = vpop.f32.mrb[0].mxu0
      %2930 = vmatprep.mubr.f32.mxu0 0.0
      %2931 = vmatmul.mubr.f32.gmra.mrb[0].mxu0 %v1114
      %v2932 = vpop.f32.mrb[0].mxu0
      %v2933 = vadd.f32 0.0, %v2932
      %v2934 = vpop.f32.mrb[0].mxu0
      %2935 = vmatprep.mubr.f32.mxu0 0.0
      %2936 = vmatmul.mubr.f32.gmra.mrb[0].mxu0 %v1116
      %v2937 = vpop.f32.mrb[0].mxu0
      %v2938 = vadd.f32 0.0, %v2937
      %v2939 = vpop.f32.mrb[0].mxu0
      %2940 = vmatprep.mubr.f32.mxu0 0.0
      %2941 = vmatmul.mubr.f32.gmra.mrb[0].mxu0 %v1118
      %v2942 = vpop.f32.mrb[0].mxu0
      %v2943 = vadd.f32 0.0, %v2942
      %v2944 = vpop.f32.mrb[0].mxu0
      %2945 = vmatprep.mubr.f32.mxu0 0.0
      %2946 = vmatmul.mubr.f32.gmra.mrb[0].mxu0 %v1120
      %v2947 = vpop.f32.mrb[0].mxu0
      %v2948 = vadd.f32 0.0, %v2947
      %v2949 = vpop.f32.mrb[0].mxu0
      %2950 = vmatprep.mubr.f32.mxu0 0.0
      %2951 = vmatmul.mubr.f32.gmra.mrb[0].mxu0 %v1122
      %v2952 = vpop.f32.mrb[0].mxu0
      %v2953 = vadd.f32 0.0, %v2952
      %v2954 = vpop.f32.mrb[0].mxu0
      %2955 = vmatprep.mubr.f32.mxu0 0.0
      %2956 = vmatmul.mubr.f32.gmra.mrb[0].mxu0 %v1124
      %v2957 = vpop.f32.mrb[0].mxu0
      %v2958 = vadd.f32 0.0, %v2957
      %v2959 = vpop.f32.mrb[0].mxu0
      %2960 = vmatprep.mubr.f32.mxu0 0.0
      %2961 = vmatmul.mubr.f32.gmra.mrb[0].mxu0 %v1126
      %v2962 = vpop.f32.mrb[0].mxu0
      %v2963 = vadd.f32 0.0, %v2962
      %v2964 = vpop.f32.mrb[0].mxu0
      %2965 = vmatprep.mubr.f32.mxu0 0.0
      %2966 = vmatmul.mubr.f32.gmra.mrb[0].mxu0 %v1128
      %v2967 = vpop.f32.mrb[0].mxu0
      %v2968 = vadd.f32 0.0, %v2967
      %v2969 = vpop.f32.mrb[0].mxu0
      %2970 = vmatprep.mubr.f32.mxu0 0.0
      %2971 = vmatmul.mubr.f32.gmra.mrb[0].mxu0 %v1130
      %v2972 = vpop.f32.mrb[0].mxu0
      %v2973 = vadd.f32 0.0, %v2972
      %v2974 = vpop.f32.mrb[0].mxu0
      %2975 = vmatprep.mubr.f32.mxu0 0.0
      %2976 = vmatmul.mubr.f32.gmra.mrb[0].mxu0 %v1132
      %v2977 = vpop.f32.mrb[0].mxu0
      %v2978 = vadd.f32 0.0, %v2977
      %v2979 = vpop.f32.mrb[0].mxu0
      %2980 = vmatprep.mubr.f32.mxu0 0.0
      %2981 = vmatmul.mubr.f32.gmra.mrb[0].mxu0 %v1134
      %v2982 = vpop.f32.mrb[0].mxu0
      %v2983 = vadd.f32 0.0, %v2982
      %v2984 = vpop.f32.mrb[0].mxu0
      %2985 = vmatprep.mubr.f32.mxu0 0.0
      %2986 = vmatmul.mubr.f32.gmra.mrb[0].mxu0 %v1136
      %v2987 = vpop.f32.mrb[0].mxu0
      %v2988 = vadd.f32 0.0, %v2987
      %v2989 = vpop.f32.mrb[0].mxu0
      %2990 = vmatprep.mubr.f32.mxu0 0.0
      %2991 = vmatmul.mubr.f32.gmra.mrb[0].mxu0 %v1138
      %v2992 = vpop.f32.mrb[0].mxu0
      %v2993 = vadd.f32 0.0, %v2992
      %v2994 = vpop.f32.mrb[0].mxu0
      %2995 = vmatprep.mubr.f32.mxu0 0.0
      %2996 = vmatmul.mubr.f32.gmra.mrb[0].mxu0 %v1140
      %v2997 = vpop.f32.mrb[0].mxu0
      %v2998 = vadd.f32 0.0, %v2997
      %v2999 = vpop.f32.mrb[0].mxu0
      %3000 = vmatprep.mubr.f32.mxu0 0.0
      %3001 = vmatmul.mubr.f32.gmra.mrb[0].mxu0 %v1142
      %v3002 = vpop.f32.mrb[0].mxu0
      %v3003 = vadd.f32 0.0, %v3002
      %v3004 = vpop.f32.mrb[0].mxu0
      %3005 = vmatprep.mubr.f32.mxu0 0.0
      %3006 = vmatmul.mubr.f32.gmra.mrb[0].mxu0 %v1983
      %v3007 = vpop.f32.mrb[0].mxu0
      %v3008 = vadd.f32 0.0, %v3007
      %v3009 = vpop.f32.mrb[0].mxu0
      %3010 = vmatprep.mubr.f32.mxu0 0.0
      %3011 = vmatmul.mubr.f32.gmra.mrb[0].mxu0 %v1985
      %v3012 = vpop.f32.mrb[0].mxu0
      %v3013 = vadd.f32 0.0, %v3012
      %v3014 = vpop.f32.mrb[0].mxu0
      %3015 = vmatprep.mubr.f32.mxu0 0.0
      %3016 = vmatmul.mubr.f32.gmra.mrb[0].mxu0 %v2794
      %v3017 = vpop.f32.mrb[0].mxu0
      %v3018 = vadd.f32 0.0, %v3017
      %v3019 = vpop.f32.mrb[0].mxu0
      %3020 = vmatprep.mubr.f32.mxu0 0.0
      %3021 = vmatmul.mubr.f32.gmra.mrb[0].mxu0 %v2796
      %v3022 = vpop.f32.mrb[0].mxu0
      %v3023 = vadd.f32 0.0, %v3022
      %v3024 = vpop.f32.mrb[0].mxu0
      %3025 = vdwg.mxu0
      %v3026 = vadd.f32 %v2755, %v2868
      %v3027 = vadd.f32 %v2756, %v2873
      %v3028 = vadd.f32 %v2757, %v2878
      %v3029 = vadd.f32 %v2758, %v2883
      %v3030 = vadd.f32 %v2759, %v2888
      %v3031 = vadd.f32 %v2760, %v2893
      %v3032 = vadd.f32 %v2761, %v2898
      %v3033 = vadd.f32 %v2762, %v2903
      %v3034 = vadd.f32 %v2763, %v2908
      %v3035 = vadd.f32 %v2764, %v2913
      %v3036 = vadd.f32 %v2765, %v2918
      %v3037 = vadd.f32 %v2766, %v2923
      %v3038 = vadd.f32 %v2767, %v2928
      %v3039 = vadd.f32 %v2768, %v2933
      %v3040 = vadd.f32 %v2769, %v2938
      %v3041 = vadd.f32 %v2770, %v2943
      %v3042 = vadd.f32 %v2771, %v2948
      %v3043 = vadd.f32 %v2772, %v2953
      %v3044 = vadd.f32 %v2773, %v2958
      %v3045 = vadd.f32 %v2774, %v2963
      %v3046 = vadd.f32 %v2775, %v2968
      %v3047 = vadd.f32 %v2776, %v2973
      %v3048 = vadd.f32 %v2777, %v2978
      %v3049 = vadd.f32 %v2778, %v2983
      %v3050 = vadd.f32 %v2779, %v2988
      %v3051 = vadd.f32 %v2780, %v2993
      %v3052 = vadd.f32 %v2781, %v2998
      %v3053 = vadd.f32 %v2782, %v3003
      %v3054 = vadd.f32 %v2783, %v3008
      %v3055 = vadd.f32 %v2784, %v3013
      %v3056 = vadd.f32 %v2785, %v3018
      %v3057 = vadd.f32 %v2786, %v3023
      %v3058 = vld [vmem:[%s2] sm:$0x1]
      %v3060 = vlaneseq
      %v3061 = vshrl.u32 %v3060, 7
      %v3062 = vsub.s32 0, %v3061
      %v3063 = vrot.slane %v3058, %v3062
      %v3065 = vadd.f32 %v3026, %v3063
      %v3066 = vadd.f32 %v3027, %v3063
      %v3067 = vadd.f32 %v3028, %v3063
      %v3068 = vadd.f32 %v3029, %v3063
      %v3069 = vadd.f32 %v3030, %v3063
      %v3070 = vadd.f32 %v3031, %v3063
      %v3071 = vadd.f32 %v3032, %v3063
      %v3072 = vadd.f32 %v3033, %v3063
      %v3073 = vadd.f32 %v3034, %v3063
      %v3074 = vadd.f32 %v3035, %v3063
      %v3075 = vadd.f32 %v3036, %v3063
      %v3076 = vadd.f32 %v3037, %v3063
      %v3077 = vadd.f32 %v3038, %v3063
      %v3078 = vadd.f32 %v3039, %v3063
      %v3079 = vadd.f32 %v3040, %v3063
      %v3080 = vadd.f32 %v3041, %v3063
      %v3081 = vadd.f32 %v3042, %v3063
      %v3082 = vadd.f32 %v3043, %v3063
      %v3083 = vadd.f32 %v3044, %v3063
      %v3084 = vadd.f32 %v3045, %v3063
      %v3085 = vadd.f32 %v3046, %v3063
      %v3086 = vadd.f32 %v3047, %v3063
      %v3087 = vadd.f32 %v3048, %v3063
      %v3088 = vadd.f32 %v3049, %v3063
      %v3089 = vadd.f32 %v3050, %v3063
      %v3090 = vadd.f32 %v3051, %v3063
      %v3091 = vadd.f32 %v3052, %v3063
      %v3092 = vadd.f32 %v3053, %v3063
      %v3093 = vadd.f32 %v3054, %v3063
      %v3094 = vadd.f32 %v3055, %v3063
      %v3095 = vadd.f32 %v3056, %v3063
      %v3096 = vadd.f32 %v3057, %v3063
      %v3097 = vmax.f32 %v3065, 0.0
      %v3098 = vmax.f32 %v3066, 0.0
      %v3099 = vmax.f32 %v3067, 0.0
      %v3100 = vmax.f32 %v3068, 0.0
      %v3101 = vmax.f32 %v3069, 0.0
      %v3102 = vmax.f32 %v3070, 0.0
      %v3103 = vmax.f32 %v3071, 0.0
      %v3104 = vmax.f32 %v3072, 0.0
      %v3105 = vmax.f32 %v3073, 0.0
      %v3106 = vmax.f32 %v3074, 0.0
      %v3107 = vmax.f32 %v3075, 0.0
      %v3108 = vmax.f32 %v3076, 0.0
      %v3109 = vmax.f32 %v3077, 0.0
      %v3110 = vmax.f32 %v3078, 0.0
      %v3111 = vmax.f32 %v3079, 0.0
      %v3112 = vmax.f32 %v3080, 0.0
      %v3113 = vmax.f32 %v3081, 0.0
      %v3114 = vmax.f32 %v3082, 0.0
      %v3115 = vmax.f32 %v3083, 0.0
      %v3116 = vmax.f32 %v3084, 0.0
      %v3117 = vmax.f32 %v3085, 0.0
      %v3118 = vmax.f32 %v3086, 0.0
      %v3119 = vmax.f32 %v3087, 0.0
      %v3120 = vmax.f32 %v3088, 0.0
      %v3121 = vmax.f32 %v3089, 0.0
      %v3122 = vmax.f32 %v3090, 0.0
      %v3123 = vmax.f32 %v3091, 0.0
      %v3124 = vmax.f32 %v3092, 0.0
      %v3125 = vmax.f32 %v3093, 0.0
      %v3126 = vmax.f32 %v3094, 0.0
      %v3127 = vmax.f32 %v3095, 0.0
      %v3128 = vmax.f32 %v3096, 0.0
      %3129 = vst.msk [vmem:[#allocation2] sm:$0xff] %vm411, 0.0
      %3130 = vst.msk [vmem:[#allocation2 + $0x8] sm:$0xff] %vm411, 0.0
      %vm3131 = vcmask 25600
      %3132 = vst.msk [vmem:[#allocation2 + $0x10] sm:$0x3] %vm3131, 0.0
      %3133 = vst.msk [vmem:[#allocation2 + $0x18] sm:$0xff] %vm411, 0.0
      %3134 = vst.msk [vmem:[#allocation2 + $0x20] sm:$0xff] %vm411, 0.0
      %3135 = vst.msk [vmem:[#allocation2 + $0x28] sm:$0x3] %vm3131, 0.0
      %3136 = vst.msk [vmem:[#allocation2 + $0x30] sm:$0xff] %vm411, 0.0
      %3137 = vst.msk [vmem:[#allocation2 + $0x38] sm:$0xff] %vm411, 0.0
      %3138 = vst.msk [vmem:[#allocation2 + $0x40] sm:$0x3] %vm3131, 0.0
      %3139 = vst.msk [vmem:[#allocation2 + $0x48] sm:$0xff] %vm411, 0.0
      %3140 = vst.msk [vmem:[#allocation2 + $0x50] sm:$0xff] %vm411, 0.0
      %3141 = vst.msk [vmem:[#allocation2 + $0x58] sm:$0x3] %vm3131, 0.0
      %3142 = vst.msk [vmem:[#allocation2 + $0x60] sm:$0xff] %vm411, 0.0
      %3143 = vst.msk [vmem:[#allocation2 + $0x68] sm:$0xff] %vm411, 0.0
      %3144 = vst.msk [vmem:[#allocation2 + $0x70] sm:$0x3] %vm3131, 0.0
      %3145 = vst.msk [vmem:[#allocation2 + $0x78] sm:$0xff] %vm411, 0.0
      %3146 = vst.msk [vmem:[#allocation2 + $0x80] sm:$0xff] %vm411, 0.0
      %3147 = vst.msk [vmem:[#allocation2 + $0x88] sm:$0x3] %vm3131, 0.0
      %3148 = vst.msk [vmem:[#allocation2 + $0x90] sm:$0xff] %vm411, 0.0
      %3149 = vst.msk [vmem:[#allocation2 + $0x98] sm:$0xff] %vm411, 0.0
      %3150 = vst.msk [vmem:[#allocation2 + $0xa0] sm:$0x3] %vm3131, 0.0
      %3151 = vst.msk [vmem:[#allocation2 + $0xa8] sm:$0xff] %vm411, 0.0
      %3152 = vst.msk [vmem:[#allocation2 + $0xb0] sm:$0xff] %vm411, 0.0
      %3153 = vst.msk [vmem:[#allocation2 + $0xb8] sm:$0x3] %vm3131, 0.0
      %3154 = vst.msk [vmem:[#allocation2 + $0xc0] sm:$0xff] %vm411, 0.0
      %3155 = vst.msk [vmem:[#allocation2 + $0xc8] sm:$0xff] %vm411, 0.0
      %3156 = vst.msk [vmem:[#allocation2 + $0xd0] sm:$0x3] %vm3131, 0.0
      %3157 = vst.msk [vmem:[#allocation2 + $0xd8] sm:$0xff] %vm411, 0.0
      %3158 = vst.msk [vmem:[#allocation2 + $0xe0] sm:$0xff] %vm411, 0.0
      %3159 = vst.msk [vmem:[#allocation2 + $0xe8] sm:$0x3] %vm3131, 0.0
      %3160 = vst.msk [vmem:[#allocation2 + $0xf0] sm:$0xff] %vm411, 0.0
      %3161 = vst.msk [vmem:[#allocation2 + $0xf8] sm:$0xff] %vm411, 0.0
      %3162 = vst.msk [vmem:[#allocation2 + $0x100] sm:$0x3] %vm3131, 0.0
      %3163 = vst.msk [vmem:[#allocation2 + $0x108] sm:$0xff] %vm411, 0.0
      %3164 = vst.msk [vmem:[#allocation2 + $0x110] sm:$0xff] %vm411, 0.0
      %3165 = vst.msk [vmem:[#allocation2 + $0x118] sm:$0x3] %vm3131, 0.0
      %3166 = vst.msk [vmem:[#allocation2 + $0x120] sm:$0xff] %vm411, 0.0
      %3167 = vst.msk [vmem:[#allocation2 + $0x128] sm:$0xff] %vm411, 0.0
      %3168 = vst.msk [vmem:[#allocation2 + $0x130] sm:$0x3] %vm3131, 0.0
      %3169 = vst.msk [vmem:[#allocation2 + $0x138] sm:$0xff] %vm411, 0.0
      %3170 = vst.msk [vmem:[#allocation2 + $0x140] sm:$0xff] %vm411, 0.0
      %3171 = vst.msk [vmem:[#allocation2 + $0x148] sm:$0x3] %vm3131, 0.0
      %3172 = vst.msk [vmem:[#allocation2 + $0x150] sm:$0xff] %vm411, 0.0
      %3173 = vst.msk [vmem:[#allocation2 + $0x158] sm:$0xff] %vm411, 0.0
      %3174 = vst.msk [vmem:[#allocation2 + $0x160] sm:$0x3] %vm3131, 0.0
      %3175 = vst.msk [vmem:[#allocation2 + $0x168] sm:$0xff] %vm411, 0.0
      %3176 = vst.msk [vmem:[#allocation2 + $0x170] sm:$0xff] %vm411, 0.0
      %3177 = vst.msk [vmem:[#allocation2 + $0x178] sm:$0x3] %vm3131, 0.0
      %3178 = vst.msk [vmem:[#allocation2 + $0x180] sm:$0xff] %vm411, 0.0
      %3179 = vst.msk [vmem:[#allocation2 + $0x188] sm:$0xff] %vm411, 0.0
      %3180 = vst.msk [vmem:[#allocation2 + $0x190] sm:$0x3] %vm3131, 0.0
      %3181 = vst.msk [vmem:[#allocation2 + $0x198] sm:$0xff] %vm411, 0.0
      %3182 = vst.msk [vmem:[#allocation2 + $0x1a0] sm:$0xff] %vm411, 0.0
      %3183 = vst.msk [vmem:[#allocation2 + $0x1a8] sm:$0x3] %vm3131, 0.0
      %s3184 = scalar_lea.vmem [#allocation2], 24
      %3185 = vst.msk [vmem:[%s3184 + $0x1] sm:$0xff] %vm411, %v3097
      %3186 = vst.msk [vmem:[%s3184 + $0x9] sm:$0xff] %vm411, %v3098
      %3187 = vst.msk [vmem:[%s3184 + $0x19] sm:$0xff] %vm411, %v3099
      %3188 = vst.msk [vmem:[%s3184 + $0x21] sm:$0xff] %vm411, %v3100
      %3189 = vst.msk [vmem:[%s3184 + $0x31] sm:$0xff] %vm411, %v3101
      %3190 = vst.msk [vmem:[%s3184 + $0x39] sm:$0xff] %vm411, %v3102
      %3191 = vst.msk [vmem:[%s3184 + $0x49] sm:$0xff] %vm411, %v3103
      %3192 = vst.msk [vmem:[%s3184 + $0x51] sm:$0xff] %vm411, %v3104
      %3193 = vst.msk [vmem:[%s3184 + $0x61] sm:$0xff] %vm411, %v3105
      %3194 = vst.msk [vmem:[%s3184 + $0x69] sm:$0xff] %vm411, %v3106
      %3195 = vst.msk [vmem:[%s3184 + $0x79] sm:$0xff] %vm411, %v3107
      %3196 = vst.msk [vmem:[%s3184 + $0x81] sm:$0xff] %vm411, %v3108
      %3197 = vst.msk [vmem:[%s3184 + $0x91] sm:$0xff] %vm411, %v3109
      %3198 = vst.msk [vmem:[%s3184 + $0x99] sm:$0xff] %vm411, %v3110
      %3199 = vst.msk [vmem:[%s3184 + $0xa9] sm:$0xff] %vm411, %v3111
      %3200 = vst.msk [vmem:[%s3184 + $0xb1] sm:$0xff] %vm411, %v3112
      %3201 = vst.msk [vmem:[%s3184 + $0xc1] sm:$0xff] %vm411, %v3113
      %3202 = vst.msk [vmem:[%s3184 + $0xc9] sm:$0xff] %vm411, %v3114
      %3203 = vst.msk [vmem:[%s3184 + $0xd9] sm:$0xff] %vm411, %v3115
      %3204 = vst.msk [vmem:[%s3184 + $0xe1] sm:$0xff] %vm411, %v3116
      %3205 = vst.msk [vmem:[%s3184 + $0xf1] sm:$0xff] %vm411, %v3117
      %3206 = vst.msk [vmem:[%s3184 + $0xf9] sm:$0xff] %vm411, %v3118
      %3207 = vst.msk [vmem:[%s3184 + $0x109] sm:$0xff] %vm411, %v3119
      %3208 = vst.msk [vmem:[%s3184 + $0x111] sm:$0xff] %vm411, %v3120
      %3209 = vst.msk [vmem:[%s3184 + $0x121] sm:$0xff] %vm411, %v3121
      %3210 = vst.msk [vmem:[%s3184 + $0x129] sm:$0xff] %vm411, %v3122
      %3211 = vst.msk [vmem:[%s3184 + $0x139] sm:$0xff] %vm411, %v3123
      %3212 = vst.msk [vmem:[%s3184 + $0x141] sm:$0xff] %vm411, %v3124
      %3213 = vst.msk [vmem:[%s3184 + $0x151] sm:$0xff] %vm411, %v3125
      %3214 = vst.msk [vmem:[%s3184 + $0x159] sm:$0xff] %vm411, %v3126
      %3215 = vst.msk [vmem:[%s3184 + $0x169] sm:$0xff] %vm411, %v3127
      %3216 = vst.msk [vmem:[%s3184 + $0x171] sm:$0xff] %vm411, %v3128
      %v3217 = vld [vmem:[#allocation2] sm:$0xff]
      %v3218 = vld [vmem:[#allocation2 + $0x8] sm:$0xff]
      %v3219 = vld [vmem:[#allocation2 + $0x10] sm:$0x3]
      %v3220 = vld [vmem:[#allocation2 + $0x18] sm:$0xff]
      %v3221 = vld [vmem:[#allocation2 + $0x20] sm:$0xff]
      %v3222 = vld [vmem:[#allocation2 + $0x28] sm:$0x3]
      %v3223 = vld [vmem:[#allocation2 + $0x30] sm:$0xff]
      %v3224 = vld [vmem:[#allocation2 + $0x38] sm:$0xff]
      %v3225 = vld [vmem:[#allocation2 + $0x40] sm:$0x3]
      %v3226 = vld [vmem:[#allocation2 + $0x48] sm:$0xff]
      %v3227 = vld [vmem:[#allocation2 + $0x50] sm:$0xff]
      %v3228 = vld [vmem:[#allocation2 + $0x58] sm:$0x3]
      %v3229 = vld [vmem:[#allocation2 + $0x60] sm:$0xff]
      %v3230 = vld [vmem:[#allocation2 + $0x68] sm:$0xff]
      %v3231 = vld [vmem:[#allocation2 + $0x70] sm:$0x3]
      %v3232 = vld [vmem:[#allocation2 + $0x78] sm:$0xff]
      %v3233 = vld [vmem:[#allocation2 + $0x80] sm:$0xff]
      %v3234 = vld [vmem:[#allocation2 + $0x88] sm:$0x3]
      %v3235 = vld [vmem:[#allocation2 + $0x90] sm:$0xff]
      %v3236 = vld [vmem:[#allocation2 + $0x98] sm:$0xff]
      %v3237 = vld [vmem:[#allocation2 + $0xa0] sm:$0x3]
      %v3238 = vld [vmem:[#allocation2 + $0xa8] sm:$0xff]
      %v3239 = vld [vmem:[#allocation2 + $0xb0] sm:$0xff]
      %v3240 = vld [vmem:[#allocation2 + $0xb8] sm:$0x3]
      %v3241 = vld [vmem:[#allocation2 + $0xc0] sm:$0xff]
      %v3242 = vld [vmem:[#allocation2 + $0xc8] sm:$0xff]
      %v3243 = vld [vmem:[#allocation2 + $0xd0] sm:$0x3]
      %v3244 = vld [vmem:[#allocation2 + $0xd8] sm:$0xff]
      %v3245 = vld [vmem:[#allocation2 + $0xe0] sm:$0xff]
      %v3246 = vld [vmem:[#allocation2 + $0xe8] sm:$0x3]
      %v3247 = vld [vmem:[#allocation2 + $0xf0] sm:$0xff]
      %v3248 = vld [vmem:[#allocation2 + $0xf8] sm:$0xff]
      %v3249 = vld [vmem:[#allocation2 + $0x100] sm:$0x3]
      %v3250 = vld [vmem:[#allocation2 + $0x108] sm:$0xff]
      %v3251 = vld [vmem:[#allocation2 + $0x110] sm:$0xff]
      %v3252 = vld [vmem:[#allocation2 + $0x118] sm:$0x3]
      %v3253 = vld [vmem:[#allocation2 + $0x120] sm:$0xff]
      %v3254 = vld [vmem:[#allocation2 + $0x128] sm:$0xff]
      %v3255 = vld [vmem:[#allocation2 + $0x130] sm:$0x3]
      %v3256 = vld [vmem:[#allocation2 + $0x138] sm:$0xff]
      %v3257 = vld [vmem:[#allocation2 + $0x140] sm:$0xff]
      %v3258 = vld [vmem:[#allocation2 + $0x148] sm:$0x3]
      %v3259 = vld [vmem:[#allocation2 + $0x150] sm:$0xff]
      %v3260 = vld [vmem:[#allocation2 + $0x158] sm:$0xff]
      %v3261 = vld [vmem:[#allocation2 + $0x160] sm:$0x3]
      %v3262 = vld [vmem:[#allocation2 + $0x168] sm:$0xff]
      %v3263 = vld [vmem:[#allocation2 + $0x170] sm:$0xff]
      %v3264 = vld [vmem:[#allocation2 + $0x178] sm:$0x3]
      %v3265 = vld [vmem:[#allocation2 + $0x180] sm:$0xff]
      %v3266 = vld [vmem:[#allocation2 + $0x188] sm:$0xff]
      %v3267 = vld [vmem:[#allocation2 + $0x190] sm:$0x3]
      %v3268 = vld [vmem:[#allocation2 + $0x198] sm:$0xff]
      %v3269 = vld [vmem:[#allocation2 + $0x1a0] sm:$0xff]
      %v3270 = vld [vmem:[#allocation2 + $0x1a8] sm:$0x3]
      %v3271 = vld [vmem:[%s3] sm:$0xf]
      %v3320 = vrot.slane %v3217, 1
      %v3321 = vrot.slane %v3218, 1
      %v3322 = vsel %vm328, %v3320, %v3321
      %v3323 = vrot.slane %v3219, 1
      %v3324 = vsel %vm328, %v3321, %v3323
      %v3325 = vrot.slane %v3220, 1
      %v3326 = vrot.slane %v3221, 1
      %v3327 = vsel %vm328, %v3325, %v3326
      %v3328 = vrot.slane %v3222, 1
      %v3329 = vsel %vm328, %v3326, %v3328
      %v3330 = vrot.slane %v3223, 1
      %v3331 = vrot.slane %v3224, 1
      %v3332 = vsel %vm328, %v3330, %v3331
      %v3333 = vrot.slane %v3225, 1
      %v3334 = vsel %vm328, %v3331, %v3333
      %v3335 = vrot.slane %v3226, 1
      %v3336 = vrot.slane %v3227, 1
      %v3337 = vsel %vm328, %v3335, %v3336
      %v3338 = vrot.slane %v3228, 1
      %v3339 = vsel %vm328, %v3336, %v3338
      %v3340 = vrot.slane %v3229, 1
      %v3341 = vrot.slane %v3230, 1
      %v3342 = vsel %vm328, %v3340, %v3341
      %v3343 = vrot.slane %v3231, 1
      %v3344 = vsel %vm328, %v3341, %v3343
      %v3345 = vrot.slane %v3232, 1
      %v3346 = vrot.slane %v3233, 1
      %v3347 = vsel %vm328, %v3345, %v3346
      %v3348 = vrot.slane %v3234, 1
      %v3349 = vsel %vm328, %v3346, %v3348
      %v3350 = vrot.slane %v3235, 1
      %v3351 = vrot.slane %v3236, 1
      %v3352 = vsel %vm328, %v3350, %v3351
      %v3353 = vrot.slane %v3237, 1
      %v3354 = vsel %vm328, %v3351, %v3353
      %v3355 = vrot.slane %v3238, 1
      %v3356 = vrot.slane %v3239, 1
      %v3357 = vsel %vm328, %v3355, %v3356
      %v3358 = vrot.slane %v3240, 1
      %v3359 = vsel %vm328, %v3356, %v3358
      %v3360 = vrot.slane %v3241, 1
      %v3361 = vrot.slane %v3242, 1
      %v3362 = vsel %vm328, %v3360, %v3361
      %v3363 = vrot.slane %v3243, 1
      %v3364 = vsel %vm328, %v3361, %v3363
      %v3365 = vrot.slane %v3244, 1
      %v3366 = vrot.slane %v3245, 1
      %v3367 = vsel %vm328, %v3365, %v3366
      %v3368 = vrot.slane %v3246, 1
      %v3369 = vsel %vm328, %v3366, %v3368
      %v3370 = vrot.slane %v3247, 1
      %v3371 = vrot.slane %v3248, 1
      %v3372 = vsel %vm328, %v3370, %v3371
      %v3373 = vrot.slane %v3249, 1
      %v3374 = vsel %vm328, %v3371, %v3373
      %v3375 = vrot.slane %v3250, 1
      %v3376 = vrot.slane %v3251, 1
      %v3377 = vsel %vm328, %v3375, %v3376
      %v3378 = vrot.slane %v3252, 1
      %v3379 = vsel %vm328, %v3376, %v3378
      %v3380 = vrot.slane %v3253, 1
      %v3381 = vrot.slane %v3254, 1
      %v3382 = vsel %vm328, %v3380, %v3381
      %v3383 = vrot.slane %v3255, 1
      %v3384 = vsel %vm328, %v3381, %v3383
      %v3385 = vrot.slane %v3256, 1
      %v3386 = vrot.slane %v3257, 1
      %v3387 = vsel %vm328, %v3385, %v3386
      %v3388 = vrot.slane %v3258, 1
      %v3389 = vsel %vm328, %v3386, %v3388
      %v3390 = vrot.slane %v3259, 1
      %v3391 = vrot.slane %v3260, 1
      %v3392 = vsel %vm328, %v3390, %v3391
      %v3393 = vrot.slane %v3261, 1
      %v3394 = vsel %vm328, %v3391, %v3393
      %v3395 = vrot.slane %v3262, 1
      %v3396 = vrot.slane %v3263, 1
      %v3397 = vsel %vm328, %v3395, %v3396
      %v3398 = vrot.slane %v3264, 1
      %v3399 = vsel %vm328, %v3396, %v3398
      %s3400 = scalar_lea.vmem %s3, 4
      %v3401 = vld [vmem:[%s3400] sm:$0xf]
      %v3402 = vsel %vm411, %v3322, 0
      %v3404 = vsel %vm411, %v3324, 0
      %v3406 = vsel %vm411, %v3327, 0
      %v3408 = vsel %vm411, %v3329, 0
      %v3410 = vsel %vm411, %v3332, 0
      %v3412 = vsel %vm411, %v3334, 0
      %v3414 = vsel %vm411, %v3337, 0
      %v3416 = vsel %vm411, %v3339, 0
      %v3418 = vsel %vm411, %v3342, 0
      %v3420 = vsel %vm411, %v3344, 0
      %v3422 = vsel %vm411, %v3347, 0
      %v3424 = vsel %vm411, %v3349, 0
      %v3426 = vsel %vm411, %v3352, 0
      %v3428 = vsel %vm411, %v3354, 0
      %v3430 = vsel %vm411, %v3357, 0
      %v3432 = vsel %vm411, %v3359, 0
      %v3434 = vsel %vm411, %v3362, 0
      %v3436 = vsel %vm411, %v3364, 0
      %v3438 = vsel %vm411, %v3367, 0
      %v3440 = vsel %vm411, %v3369, 0
      %v3442 = vsel %vm411, %v3372, 0
      %v3444 = vsel %vm411, %v3374, 0
      %v3446 = vsel %vm411, %v3377, 0
      %v3448 = vsel %vm411, %v3379, 0
      %v3450 = vsel %vm411, %v3382, 0
      %v3452 = vsel %vm411, %v3384, 0
      %v3454 = vsel %vm411, %v3387, 0
      %v3456 = vsel %vm411, %v3389, 0
      %v3458 = vsel %vm411, %v3392, 0
      %v3460 = vsel %vm411, %v3394, 0
      %v3462 = vsel %vm411, %v3397, 0
      %v3464 = vsel %vm411, %v3399, 0
      %v3467 = vsel %vm476, %v3401, 0
      %3469 = vmatprep.subr.mxu0 0.0
      %3470 = vmatpush1.msra.mxu0 %v3467
      %3471 = vmatprep.subr.mxu0 0.0
      %3472 = vmatpush1.msra.mxu0 0.0
      %3473 = vmatprep.subr.mxu0 0.0
      %3474 = vmatpush1.msra.mxu0 0.0
      %3475 = vmatprep.subr.mxu0 0.0
      %3476 = vmatpush1.msra.mxu0 0.0
      %3477 = vmatprep.subr.mxu0 0.0
      %3478 = vmatpush1.msra.mxu0 0.0
      %3479 = vmatprep.subr.mxu0 0.0
      %3480 = vmatpush1.msra.mxu0 0.0
      %3481 = vmatprep.subr.mxu0 0.0
      %3482 = vmatpush1.msra.mxu0 0.0
      %3483 = vmatprep.subr.mxu0 0.0
      %3484 = vmatpush1.msra.mxu0 0.0
      %3485 = vmatprep.subr.mxu0 0.0
      %3486 = vmatpush1.msra.mxu0 0.0
      %3487 = vmatprep.subr.mxu0 0.0
      %3488 = vmatpush1.msra.mxu0 0.0
      %3489 = vmatprep.subr.mxu0 0.0
      %3490 = vmatpush1.msra.mxu0 0.0
      %3491 = vmatprep.subr.mxu0 0.0
      %3492 = vmatpush1.msra.mxu0 0.0
      %3493 = vmatprep.subr.mxu0 0.0
      %3494 = vmatpush1.msra.mxu0 0.0
      %3495 = vmatprep.subr.mxu0 0.0
      %3496 = vmatpush1.msra.mxu0 0.0
      %3497 = vmatprep.subr.mxu0 0.0
      %3498 = vmatpush1.msra.mxu0 0.0
      %3499 = vmatprep.subr.mxu0 0.0
      %3500 = vmatpush1.msra.mxu0 0.0
      %3501 = vmatprep.subr.mxu0 0.0
      %3502 = vmatpush1.msra.mxu0 0.0
      %3503 = vmatprep.subr.mxu0 0.0
      %3504 = vmatpush1.msra.mxu0 0.0
      %3505 = vmatprep.subr.mxu0 0.0
      %3506 = vmatpush1.msra.mxu0 0.0
      %3507 = vmatprep.subr.mxu0 0.0
      %3508 = vmatpush1.msra.mxu0 0.0
      %3509 = vmatprep.subr.mxu0 0.0
      %3510 = vmatpush1.msra.mxu0 0.0
      %3511 = vmatprep.subr.mxu0 0.0
      %3512 = vmatpush1.msra.mxu0 0.0
      %3513 = vmatprep.subr.mxu0 0.0
      %3514 = vmatpush1.msra.mxu0 0.0
      %3515 = vmatprep.subr.mxu0 0.0
      %3516 = vmatpush1.msra.mxu0 0.0
      %3517 = vmatprep.subr.mxu0 0.0
      %3518 = vmatpush1.msra.mxu0 0.0
      %3519 = vmatprep.subr.mxu0 0.0
      %3520 = vmatpush1.msra.mxu0 0.0
      %3521 = vmatprep.subr.mxu0 0.0
      %3522 = vmatpush1.msra.mxu0 0.0
      %3523 = vmatprep.subr.mxu0 0.0
      %3524 = vmatpush1.msra.mxu0 0.0
      %3525 = vmatprep.subr.mxu0 0.0
      %3526 = vmatpush1.msra.mxu0 0.0
      %3527 = vmatprep.subr.mxu0 0.0
      %3528 = vmatpush1.msra.mxu0 0.0
      %3529 = vmatprep.subr.mxu0 0.0
      %3530 = vmatpush1.msra.mxu0 0.0
      %3531 = vmatprep.subr.mxu0 0.0
      %3532 = vmatpush1.msra.mxu0 0.0
      %3533 = vmatprep.mubr.f32.mxu0 0.0
      %3534 = vmatmul.mubr.f32.gmra.mrb[0].mxu0 %v3402
      %v3535 = vpop.f32.mrb[0].mxu0
      %v3536 = vadd.f32 0.0, %v3535
      %v3537 = vpop.f32.mrb[0].mxu0
      %3538 = vmatprep.mubr.f32.mxu0 0.0
      %3539 = vmatmul.mubr.f32.gmra.mrb[0].mxu0 %v3404
      %v3540 = vpop.f32.mrb[0].mxu0
      %v3541 = vadd.f32 0.0, %v3540
      %v3542 = vpop.f32.mrb[0].mxu0
      %3543 = vmatprep.mubr.f32.mxu0 0.0
      %3544 = vmatmul.mubr.f32.gmra.mrb[0].mxu0 %v3406
      %v3545 = vpop.f32.mrb[0].mxu0
      %v3546 = vadd.f32 0.0, %v3545
      %v3547 = vpop.f32.mrb[0].mxu0
      %3548 = vmatprep.mubr.f32.mxu0 0.0
      %3549 = vmatmul.mubr.f32.gmra.mrb[0].mxu0 %v3408
      %v3550 = vpop.f32.mrb[0].mxu0
      %v3551 = vadd.f32 0.0, %v3550
      %v3552 = vpop.f32.mrb[0].mxu0
      %3553 = vmatprep.mubr.f32.mxu0 0.0
      %3554 = vmatmul.mubr.f32.gmra.mrb[0].mxu0 %v3410
      %v3555 = vpop.f32.mrb[0].mxu0
      %v3556 = vadd.f32 0.0, %v3555
      %v3557 = vpop.f32.mrb[0].mxu0
      %3558 = vmatprep.mubr.f32.mxu0 0.0
      %3559 = vmatmul.mubr.f32.gmra.mrb[0].mxu0 %v3412
      %v3560 = vpop.f32.mrb[0].mxu0
      %v3561 = vadd.f32 0.0, %v3560
      %v3562 = vpop.f32.mrb[0].mxu0
      %3563 = vmatprep.mubr.f32.mxu0 0.0
      %3564 = vmatmul.mubr.f32.gmra.mrb[0].mxu0 %v3414
      %v3565 = vpop.f32.mrb[0].mxu0
      %v3566 = vadd.f32 0.0, %v3565
      %v3567 = vpop.f32.mrb[0].mxu0
      %3568 = vmatprep.mubr.f32.mxu0 0.0
      %3569 = vmatmul.mubr.f32.gmra.mrb[0].mxu0 %v3416
      %v3570 = vpop.f32.mrb[0].mxu0
      %v3571 = vadd.f32 0.0, %v3570
      %v3572 = vpop.f32.mrb[0].mxu0
      %3573 = vmatprep.mubr.f32.mxu0 0.0
      %3574 = vmatmul.mubr.f32.gmra.mrb[0].mxu0 %v3418
      %v3575 = vpop.f32.mrb[0].mxu0
      %v3576 = vadd.f32 0.0, %v3575
      %v3577 = vpop.f32.mrb[0].mxu0
      %3578 = vmatprep.mubr.f32.mxu0 0.0
      %3579 = vmatmul.mubr.f32.gmra.mrb[0].mxu0 %v3420
      %v3580 = vpop.f32.mrb[0].mxu0
      %v3581 = vadd.f32 0.0, %v3580
      %v3582 = vpop.f32.mrb[0].mxu0
      %3583 = vmatprep.mubr.f32.mxu0 0.0
      %3584 = vmatmul.mubr.f32.gmra.mrb[0].mxu0 %v3422
      %v3585 = vpop.f32.mrb[0].mxu0
      %v3586 = vadd.f32 0.0, %v3585
      %v3587 = vpop.f32.mrb[0].mxu0
      %3588 = vmatprep.mubr.f32.mxu0 0.0
      %3589 = vmatmul.mubr.f32.gmra.mrb[0].mxu0 %v3424
      %v3590 = vpop.f32.mrb[0].mxu0
      %v3591 = vadd.f32 0.0, %v3590
      %v3592 = vpop.f32.mrb[0].mxu0
      %3593 = vmatprep.mubr.f32.mxu0 0.0
      %3594 = vmatmul.mubr.f32.gmra.mrb[0].mxu0 %v3426
      %v3595 = vpop.f32.mrb[0].mxu0
      %v3596 = vadd.f32 0.0, %v3595
      %v3597 = vpop.f32.mrb[0].mxu0
      %3598 = vmatprep.mubr.f32.mxu0 0.0
      %3599 = vmatmul.mubr.f32.gmra.mrb[0].mxu0 %v3428
      %v3600 = vpop.f32.mrb[0].mxu0
      %v3601 = vadd.f32 0.0, %v3600
      %v3602 = vpop.f32.mrb[0].mxu0
      %3603 = vmatprep.mubr.f32.mxu0 0.0
      %3604 = vmatmul.mubr.f32.gmra.mrb[0].mxu0 %v3430
      %v3605 = vpop.f32.mrb[0].mxu0
      %v3606 = vadd.f32 0.0, %v3605
      %v3607 = vpop.f32.mrb[0].mxu0
      %3608 = vmatprep.mubr.f32.mxu0 0.0
      %3609 = vmatmul.mubr.f32.gmra.mrb[0].mxu0 %v3432
      %v3610 = vpop.f32.mrb[0].mxu0
      %v3611 = vadd.f32 0.0, %v3610
      %v3612 = vpop.f32.mrb[0].mxu0
      %3613 = vmatprep.mubr.f32.mxu0 0.0
      %3614 = vmatmul.mubr.f32.gmra.mrb[0].mxu0 %v3434
      %v3615 = vpop.f32.mrb[0].mxu0
      %v3616 = vadd.f32 0.0, %v3615
      %v3617 = vpop.f32.mrb[0].mxu0
      %3618 = vmatprep.mubr.f32.mxu0 0.0
      %3619 = vmatmul.mubr.f32.gmra.mrb[0].mxu0 %v3436
      %v3620 = vpop.f32.mrb[0].mxu0
      %v3621 = vadd.f32 0.0, %v3620
      %v3622 = vpop.f32.mrb[0].mxu0
      %3623 = vmatprep.mubr.f32.mxu0 0.0
      %3624 = vmatmul.mubr.f32.gmra.mrb[0].mxu0 %v3438
      %v3625 = vpop.f32.mrb[0].mxu0
      %v3626 = vadd.f32 0.0, %v3625
      %v3627 = vpop.f32.mrb[0].mxu0
      %3628 = vmatprep.mubr.f32.mxu0 0.0
      %3629 = vmatmul.mubr.f32.gmra.mrb[0].mxu0 %v3440
      %v3630 = vpop.f32.mrb[0].mxu0
      %v3631 = vadd.f32 0.0, %v3630
      %v3632 = vpop.f32.mrb[0].mxu0
      %3633 = vmatprep.mubr.f32.mxu0 0.0
      %3634 = vmatmul.mubr.f32.gmra.mrb[0].mxu0 %v3442
      %v3635 = vpop.f32.mrb[0].mxu0
      %v3636 = vadd.f32 0.0, %v3635
      %v3637 = vpop.f32.mrb[0].mxu0
      %3638 = vmatprep.mubr.f32.mxu0 0.0
      %3639 = vmatmul.mubr.f32.gmra.mrb[0].mxu0 %v3444
      %v3640 = vpop.f32.mrb[0].mxu0
      %v3641 = vadd.f32 0.0, %v3640
      %v3642 = vpop.f32.mrb[0].mxu0
      %3643 = vmatprep.mubr.f32.mxu0 0.0
      %3644 = vmatmul.mubr.f32.gmra.mrb[0].mxu0 %v3446
      %v3645 = vpop.f32.mrb[0].mxu0
      %v3646 = vadd.f32 0.0, %v3645
      %v3647 = vpop.f32.mrb[0].mxu0
      %3648 = vmatprep.mubr.f32.mxu0 0.0
      %3649 = vmatmul.mubr.f32.gmra.mrb[0].mxu0 %v3448
      %v3650 = vpop.f32.mrb[0].mxu0
      %v3651 = vadd.f32 0.0, %v3650
      %v3652 = vpop.f32.mrb[0].mxu0
      %3653 = vmatprep.mubr.f32.mxu0 0.0
      %3654 = vmatmul.mubr.f32.gmra.mrb[0].mxu0 %v3450
      %v3655 = vpop.f32.mrb[0].mxu0
      %v3656 = vadd.f32 0.0, %v3655
      %v3657 = vpop.f32.mrb[0].mxu0
      %3658 = vmatprep.mubr.f32.mxu0 0.0
      %3659 = vmatmul.mubr.f32.gmra.mrb[0].mxu0 %v3452
      %v3660 = vpop.f32.mrb[0].mxu0
      %v3661 = vadd.f32 0.0, %v3660
      %v3662 = vpop.f32.mrb[0].mxu0
      %3663 = vmatprep.mubr.f32.mxu0 0.0
      %3664 = vmatmul.mubr.f32.gmra.mrb[0].mxu0 %v3454
      %v3665 = vpop.f32.mrb[0].mxu0
      %v3666 = vadd.f32 0.0, %v3665
      %v3667 = vpop.f32.mrb[0].mxu0
      %3668 = vmatprep.mubr.f32.mxu0 0.0
      %3669 = vmatmul.mubr.f32.gmra.mrb[0].mxu0 %v3456
      %v3670 = vpop.f32.mrb[0].mxu0
      %v3671 = vadd.f32 0.0, %v3670
      %v3672 = vpop.f32.mrb[0].mxu0
      %3673 = vmatprep.mubr.f32.mxu0 0.0
      %3674 = vmatmul.mubr.f32.gmra.mrb[0].mxu0 %v3458
      %v3675 = vpop.f32.mrb[0].mxu0
      %v3676 = vadd.f32 0.0, %v3675
      %v3677 = vpop.f32.mrb[0].mxu0
      %3678 = vmatprep.mubr.f32.mxu0 0.0
      %3679 = vmatmul.mubr.f32.gmra.mrb[0].mxu0 %v3460
      %v3680 = vpop.f32.mrb[0].mxu0
      %v3681 = vadd.f32 0.0, %v3680
      %v3682 = vpop.f32.mrb[0].mxu0
      %3683 = vmatprep.mubr.f32.mxu0 0.0
      %3684 = vmatmul.mubr.f32.gmra.mrb[0].mxu0 %v3462
      %v3685 = vpop.f32.mrb[0].mxu0
      %v3686 = vadd.f32 0.0, %v3685
      %v3687 = vpop.f32.mrb[0].mxu0
      %3688 = vmatprep.mubr.f32.mxu0 0.0
      %3689 = vmatmul.mubr.f32.gmra.mrb[0].mxu0 %v3464
      %v3690 = vpop.f32.mrb[0].mxu0
      %v3691 = vadd.f32 0.0, %v3690
      %v3692 = vpop.f32.mrb[0].mxu0
      %3693 = vdwg.mxu0
      %v3694 = vsel %vm411, %v3217, 0
      %v3696 = vsel %vm411, %v3218, 0
      %v3698 = vsel %vm411, %v3220, 0
      %v3700 = vsel %vm411, %v3221, 0
      %v3702 = vsel %vm411, %v3223, 0
      %v3704 = vsel %vm411, %v3224, 0
      %v3706 = vsel %vm411, %v3226, 0
      %v3708 = vsel %vm411, %v3227, 0
      %v3710 = vsel %vm411, %v3229, 0
      %v3712 = vsel %vm411, %v3230, 0
      %v3714 = vsel %vm411, %v3232, 0
      %v3716 = vsel %vm411, %v3233, 0
      %v3718 = vsel %vm411, %v3235, 0
      %v3720 = vsel %vm411, %v3236, 0
      %v3722 = vsel %vm411, %v3238, 0
      %v3724 = vsel %vm411, %v3239, 0
      %v3726 = vsel %vm411, %v3241, 0
      %v3728 = vsel %vm411, %v3242, 0
      %v3730 = vsel %vm411, %v3244, 0
      %v3732 = vsel %vm411, %v3245, 0
      %v3734 = vsel %vm411, %v3247, 0
      %v3736 = vsel %vm411, %v3248, 0
      %v3738 = vsel %vm411, %v3250, 0
      %v3740 = vsel %vm411, %v3251, 0
      %v3742 = vsel %vm411, %v3253, 0
      %v3744 = vsel %vm411, %v3254, 0
      %v3746 = vsel %vm411, %v3256, 0
      %v3748 = vsel %vm411, %v3257, 0
      %v3750 = vsel %vm411, %v3259, 0
      %v3752 = vsel %vm411, %v3260, 0
      %v3754 = vsel %vm411, %v3262, 0
      %v3756 = vsel %vm411, %v3263, 0
      %v3759 = vsel %vm476, %v3271, 0
      %3761 = vmatprep.subr.mxu0 0.0
      %3762 = vmatpush1.msra.mxu0 %v3759
      %3763 = vmatprep.subr.mxu0 0.0
      %3764 = vmatpush1.msra.mxu0 0.0
      %3765 = vmatprep.subr.mxu0 0.0
      %3766 = vmatpush1.msra.mxu0 0.0
      %3767 = vmatprep.subr.mxu0 0.0
      %3768 = vmatpush1.msra.mxu0 0.0
      %3769 = vmatprep.subr.mxu0 0.0
      %3770 = vmatpush1.msra.mxu0 0.0
      %3771 = vmatprep.subr.mxu0 0.0
      %3772 = vmatpush1.msra.mxu0 0.0
      %3773 = vmatprep.subr.mxu0 0.0
      %3774 = vmatpush1.msra.mxu0 0.0
      %3775 = vmatprep.subr.mxu0 0.0
      %3776 = vmatpush1.msra.mxu0 0.0
      %3777 = vmatprep.subr.mxu0 0.0
      %3778 = vmatpush1.msra.mxu0 0.0
      %3779 = vmatprep.subr.mxu0 0.0
      %3780 = vmatpush1.msra.mxu0 0.0
      %3781 = vmatprep.subr.mxu0 0.0
      %3782 = vmatpush1.msra.mxu0 0.0
      %3783 = vmatprep.subr.mxu0 0.0
      %3784 = vmatpush1.msra.mxu0 0.0
      %3785 = vmatprep.subr.mxu0 0.0
      %3786 = vmatpush1.msra.mxu0 0.0
      %3787 = vmatprep.subr.mxu0 0.0
      %3788 = vmatpush1.msra.mxu0 0.0
      %3789 = vmatprep.subr.mxu0 0.0
      %3790 = vmatpush1.msra.mxu0 0.0
      %3791 = vmatprep.subr.mxu0 0.0
      %3792 = vmatpush1.msra.mxu0 0.0
      %3793 = vmatprep.subr.mxu0 0.0
      %3794 = vmatpush1.msra.mxu0 0.0
      %3795 = vmatprep.subr.mxu0 0.0
      %3796 = vmatpush1.msra.mxu0 0.0
      %3797 = vmatprep.subr.mxu0 0.0
      %3798 = vmatpush1.msra.mxu0 0.0
      %3799 = vmatprep.subr.mxu0 0.0
      %3800 = vmatpush1.msra.mxu0 0.0
      %3801 = vmatprep.subr.mxu0 0.0
      %3802 = vmatpush1.msra.mxu0 0.0
      %3803 = vmatprep.subr.mxu0 0.0
      %3804 = vmatpush1.msra.mxu0 0.0
      %3805 = vmatprep.subr.mxu0 0.0
      %3806 = vmatpush1.msra.mxu0 0.0
      %3807 = vmatprep.subr.mxu0 0.0
      %3808 = vmatpush1.msra.mxu0 0.0
      %3809 = vmatprep.subr.mxu0 0.0
      %3810 = vmatpush1.msra.mxu0 0.0
      %3811 = vmatprep.subr.mxu0 0.0
      %3812 = vmatpush1.msra.mxu0 0.0
      %3813 = vmatprep.subr.mxu0 0.0
      %3814 = vmatpush1.msra.mxu0 0.0
      %3815 = vmatprep.subr.mxu0 0.0
      %3816 = vmatpush1.msra.mxu0 0.0
      %3817 = vmatprep.subr.mxu0 0.0
      %3818 = vmatpush1.msra.mxu0 0.0
      %3819 = vmatprep.subr.mxu0 0.0
      %3820 = vmatpush1.msra.mxu0 0.0
      %3821 = vmatprep.subr.mxu0 0.0
      %3822 = vmatpush1.msra.mxu0 0.0
      %3823 = vmatprep.subr.mxu0 0.0
      %3824 = vmatpush1.msra.mxu0 0.0
      %3825 = vmatprep.mubr.f32.mxu0 0.0
      %3826 = vmatmul.mubr.f32.gmra.mrb[0].mxu0 %v3694
      %v3827 = vpop.f32.mrb[0].mxu0
      %v3828 = vadd.f32 %v3536, %v3827
      %v3829 = vpop.f32.mrb[0].mxu0
      %3830 = vmatprep.mubr.f32.mxu0 0.0
      %3831 = vmatmul.mubr.f32.gmra.mrb[0].mxu0 %v3696
      %v3832 = vpop.f32.mrb[0].mxu0
      %v3833 = vadd.f32 %v3541, %v3832
      %v3834 = vpop.f32.mrb[0].mxu0
      %3835 = vmatprep.mubr.f32.mxu0 0.0
      %3836 = vmatmul.mubr.f32.gmra.mrb[0].mxu0 %v3698
      %v3837 = vpop.f32.mrb[0].mxu0
      %v3838 = vadd.f32 %v3546, %v3837
      %v3839 = vpop.f32.mrb[0].mxu0
      %3840 = vmatprep.mubr.f32.mxu0 0.0
      %3841 = vmatmul.mubr.f32.gmra.mrb[0].mxu0 %v3700
      %v3842 = vpop.f32.mrb[0].mxu0
      %v3843 = vadd.f32 %v3551, %v3842
      %v3844 = vpop.f32.mrb[0].mxu0
      %3845 = vmatprep.mubr.f32.mxu0 0.0
      %3846 = vmatmul.mubr.f32.gmra.mrb[0].mxu0 %v3702
      %v3847 = vpop.f32.mrb[0].mxu0
      %v3848 = vadd.f32 %v3556, %v3847
      %v3849 = vpop.f32.mrb[0].mxu0
      %3850 = vmatprep.mubr.f32.mxu0 0.0
      %3851 = vmatmul.mubr.f32.gmra.mrb[0].mxu0 %v3704
      %v3852 = vpop.f32.mrb[0].mxu0
      %v3853 = vadd.f32 %v3561, %v3852
      %v3854 = vpop.f32.mrb[0].mxu0
      %3855 = vmatprep.mubr.f32.mxu0 0.0
      %3856 = vmatmul.mubr.f32.gmra.mrb[0].mxu0 %v3706
      %v3857 = vpop.f32.mrb[0].mxu0
      %v3858 = vadd.f32 %v3566, %v3857
      %v3859 = vpop.f32.mrb[0].mxu0
      %3860 = vmatprep.mubr.f32.mxu0 0.0
      %3861 = vmatmul.mubr.f32.gmra.mrb[0].mxu0 %v3708
      %v3862 = vpop.f32.mrb[0].mxu0
      %v3863 = vadd.f32 %v3571, %v3862
      %v3864 = vpop.f32.mrb[0].mxu0
      %3865 = vmatprep.mubr.f32.mxu0 0.0
      %3866 = vmatmul.mubr.f32.gmra.mrb[0].mxu0 %v3710
      %v3867 = vpop.f32.mrb[0].mxu0
      %v3868 = vadd.f32 %v3576, %v3867
      %v3869 = vpop.f32.mrb[0].mxu0
      %3870 = vmatprep.mubr.f32.mxu0 0.0
      %3871 = vmatmul.mubr.f32.gmra.mrb[0].mxu0 %v3712
      %v3872 = vpop.f32.mrb[0].mxu0
      %v3873 = vadd.f32 %v3581, %v3872
      %v3874 = vpop.f32.mrb[0].mxu0
      %3875 = vmatprep.mubr.f32.mxu0 0.0
      %3876 = vmatmul.mubr.f32.gmra.mrb[0].mxu0 %v3714
      %v3877 = vpop.f32.mrb[0].mxu0
      %v3878 = vadd.f32 %v3586, %v3877
      %v3879 = vpop.f32.mrb[0].mxu0
      %3880 = vmatprep.mubr.f32.mxu0 0.0
      %3881 = vmatmul.mubr.f32.gmra.mrb[0].mxu0 %v3716
      %v3882 = vpop.f32.mrb[0].mxu0
      %v3883 = vadd.f32 %v3591, %v3882
      %v3884 = vpop.f32.mrb[0].mxu0
      %3885 = vmatprep.mubr.f32.mxu0 0.0
      %3886 = vmatmul.mubr.f32.gmra.mrb[0].mxu0 %v3718
      %v3887 = vpop.f32.mrb[0].mxu0
      %v3888 = vadd.f32 %v3596, %v3887
      %v3889 = vpop.f32.mrb[0].mxu0
      %3890 = vmatprep.mubr.f32.mxu0 0.0
      %3891 = vmatmul.mubr.f32.gmra.mrb[0].mxu0 %v3720
      %v3892 = vpop.f32.mrb[0].mxu0
      %v3893 = vadd.f32 %v3601, %v3892
      %v3894 = vpop.f32.mrb[0].mxu0
      %3895 = vmatprep.mubr.f32.mxu0 0.0
      %3896 = vmatmul.mubr.f32.gmra.mrb[0].mxu0 %v3722
      %v3897 = vpop.f32.mrb[0].mxu0
      %v3898 = vadd.f32 %v3606, %v3897
      %v3899 = vpop.f32.mrb[0].mxu0
      %3900 = vmatprep.mubr.f32.mxu0 0.0
      %3901 = vmatmul.mubr.f32.gmra.mrb[0].mxu0 %v3724
      %v3902 = vpop.f32.mrb[0].mxu0
      %v3903 = vadd.f32 %v3611, %v3902
      %v3904 = vpop.f32.mrb[0].mxu0
      %3905 = vmatprep.mubr.f32.mxu0 0.0
      %3906 = vmatmul.mubr.f32.gmra.mrb[0].mxu0 %v3726
      %v3907 = vpop.f32.mrb[0].mxu0
      %v3908 = vadd.f32 %v3616, %v3907
      %v3909 = vpop.f32.mrb[0].mxu0
      %3910 = vmatprep.mubr.f32.mxu0 0.0
      %3911 = vmatmul.mubr.f32.gmra.mrb[0].mxu0 %v3728
      %v3912 = vpop.f32.mrb[0].mxu0
      %v3913 = vadd.f32 %v3621, %v3912
      %v3914 = vpop.f32.mrb[0].mxu0
      %3915 = vmatprep.mubr.f32.mxu0 0.0
      %3916 = vmatmul.mubr.f32.gmra.mrb[0].mxu0 %v3730
      %v3917 = vpop.f32.mrb[0].mxu0
      %v3918 = vadd.f32 %v3626, %v3917
      %v3919 = vpop.f32.mrb[0].mxu0
      %3920 = vmatprep.mubr.f32.mxu0 0.0
      %3921 = vmatmul.mubr.f32.gmra.mrb[0].mxu0 %v3732
      %v3922 = vpop.f32.mrb[0].mxu0
      %v3923 = vadd.f32 %v3631, %v3922
      %v3924 = vpop.f32.mrb[0].mxu0
      %3925 = vmatprep.mubr.f32.mxu0 0.0
      %3926 = vmatmul.mubr.f32.gmra.mrb[0].mxu0 %v3734
      %v3927 = vpop.f32.mrb[0].mxu0
      %v3928 = vadd.f32 %v3636, %v3927
      %v3929 = vpop.f32.mrb[0].mxu0
      %3930 = vmatprep.mubr.f32.mxu0 0.0
      %3931 = vmatmul.mubr.f32.gmra.mrb[0].mxu0 %v3736
      %v3932 = vpop.f32.mrb[0].mxu0
      %v3933 = vadd.f32 %v3641, %v3932
      %v3934 = vpop.f32.mrb[0].mxu0
      %3935 = vmatprep.mubr.f32.mxu0 0.0
      %3936 = vmatmul.mubr.f32.gmra.mrb[0].mxu0 %v3738
      %v3937 = vpop.f32.mrb[0].mxu0
      %v3938 = vadd.f32 %v3646, %v3937
      %v3939 = vpop.f32.mrb[0].mxu0
      %3940 = vmatprep.mubr.f32.mxu0 0.0
      %3941 = vmatmul.mubr.f32.gmra.mrb[0].mxu0 %v3740
      %v3942 = vpop.f32.mrb[0].mxu0
      %v3943 = vadd.f32 %v3651, %v3942
      %v3944 = vpop.f32.mrb[0].mxu0
      %3945 = vmatprep.mubr.f32.mxu0 0.0
      %3946 = vmatmul.mubr.f32.gmra.mrb[0].mxu0 %v3742
      %v3947 = vpop.f32.mrb[0].mxu0
      %v3948 = vadd.f32 %v3656, %v3947
      %v3949 = vpop.f32.mrb[0].mxu0
      %3950 = vmatprep.mubr.f32.mxu0 0.0
      %3951 = vmatmul.mubr.f32.gmra.mrb[0].mxu0 %v3744
      %v3952 = vpop.f32.mrb[0].mxu0
      %v3953 = vadd.f32 %v3661, %v3952
      %v3954 = vpop.f32.mrb[0].mxu0
      %3955 = vmatprep.mubr.f32.mxu0 0.0
      %3956 = vmatmul.mubr.f32.gmra.mrb[0].mxu0 %v3746
      %v3957 = vpop.f32.mrb[0].mxu0
      %v3958 = vadd.f32 %v3666, %v3957
      %v3959 = vpop.f32.mrb[0].mxu0
      %3960 = vmatprep.mubr.f32.mxu0 0.0
      %3961 = vmatmul.mubr.f32.gmra.mrb[0].mxu0 %v3748
      %v3962 = vpop.f32.mrb[0].mxu0
      %v3963 = vadd.f32 %v3671, %v3962
      %v3964 = vpop.f32.mrb[0].mxu0
      %3965 = vmatprep.mubr.f32.mxu0 0.0
      %3966 = vmatmul.mubr.f32.gmra.mrb[0].mxu0 %v3750
      %v3967 = vpop.f32.mrb[0].mxu0
      %v3968 = vadd.f32 %v3676, %v3967
      %v3969 = vpop.f32.mrb[0].mxu0
      %3970 = vmatprep.mubr.f32.mxu0 0.0
      %3971 = vmatmul.mubr.f32.gmra.mrb[0].mxu0 %v3752
      %v3972 = vpop.f32.mrb[0].mxu0
      %v3973 = vadd.f32 %v3681, %v3972
      %v3974 = vpop.f32.mrb[0].mxu0
      %3975 = vmatprep.mubr.f32.mxu0 0.0
      %3976 = vmatmul.mubr.f32.gmra.mrb[0].mxu0 %v3754
      %v3977 = vpop.f32.mrb[0].mxu0
      %v3978 = vadd.f32 %v3686, %v3977
      %v3979 = vpop.f32.mrb[0].mxu0
      %3980 = vmatprep.mubr.f32.mxu0 0.0
      %3981 = vmatmul.mubr.f32.gmra.mrb[0].mxu0 %v3756
      %v3982 = vpop.f32.mrb[0].mxu0
      %v3983 = vadd.f32 %v3691, %v3982
      %v3984 = vpop.f32.mrb[0].mxu0
      %3985 = vdwg.mxu0
      %v3986 = vrot.slane %v3217, 2
      %v3987 = vrot.slane %v3218, 2
      %v3988 = vsel %vm997, %v3986, %v3987
      %v3989 = vrot.slane %v3219, 2
      %v3990 = vsel %vm997, %v3987, %v3989
      %v3991 = vrot.slane %v3220, 2
      %v3992 = vrot.slane %v3221, 2
      %v3993 = vsel %vm997, %v3991, %v3992
      %v3994 = vrot.slane %v3222, 2
      %v3995 = vsel %vm997, %v3992, %v3994
      %v3996 = vrot.slane %v3223, 2
      %v3997 = vrot.slane %v3224, 2
      %v3998 = vsel %vm997, %v3996, %v3997
      %v3999 = vrot.slane %v3225, 2
      %v4000 = vsel %vm997, %v3997, %v3999
      %v4001 = vrot.slane %v3226, 2
      %v4002 = vrot.slane %v3227, 2
      %v4003 = vsel %vm997, %v4001, %v4002
      %v4004 = vrot.slane %v3228, 2
      %v4005 = vsel %vm997, %v4002, %v4004
      %v4006 = vrot.slane %v3229, 2
      %v4007 = vrot.slane %v3230, 2
      %v4008 = vsel %vm997, %v4006, %v4007
      %v4009 = vrot.slane %v3231, 2
      %v4010 = vsel %vm997, %v4007, %v4009
      %v4011 = vrot.slane %v3232, 2
      %v4012 = vrot.slane %v3233, 2
      %v4013 = vsel %vm997, %v4011, %v4012
      %v4014 = vrot.slane %v3234, 2
      %v4015 = vsel %vm997, %v4012, %v4014
      %v4016 = vrot.slane %v3235, 2
      %v4017 = vrot.slane %v3236, 2
      %v4018 = vsel %vm997, %v4016, %v4017
      %v4019 = vrot.slane %v3237, 2
      %v4020 = vsel %vm997, %v4017, %v4019
      %v4021 = vrot.slane %v3238, 2
      %v4022 = vrot.slane %v3239, 2
      %v4023 = vsel %vm997, %v4021, %v4022
      %v4024 = vrot.slane %v3240, 2
      %v4025 = vsel %vm997, %v4022, %v4024
      %v4026 = vrot.slane %v3241, 2
      %v4027 = vrot.slane %v3242, 2
      %v4028 = vsel %vm997, %v4026, %v4027
      %v4029 = vrot.slane %v3243, 2
      %v4030 = vsel %vm997, %v4027, %v4029
      %v4031 = vrot.slane %v3244, 2
      %v4032 = vrot.slane %v3245, 2
      %v4033 = vsel %vm997, %v4031, %v4032
      %v4034 = vrot.slane %v3246, 2
      %v4035 = vsel %vm997, %v4032, %v4034
      %v4036 = vrot.slane %v3247, 2
      %v4037 = vrot.slane %v3248, 2
      %v4038 = vsel %vm997, %v4036, %v4037
      %v4039 = vrot.slane %v3249, 2
      %v4040 = vsel %vm997, %v4037, %v4039
      %v4041 = vrot.slane %v3250, 2
      %v4042 = vrot.slane %v3251, 2
      %v4043 = vsel %vm997, %v4041, %v4042
      %v4044 = vrot.slane %v3252, 2
      %v4045 = vsel %vm997, %v4042, %v4044
      %v4046 = vrot.slane %v3253, 2
      %v4047 = vrot.slane %v3254, 2
      %v4048 = vsel %vm997, %v4046, %v4047
      %v4049 = vrot.slane %v3255, 2
      %v4050 = vsel %vm997, %v4047, %v4049
      %v4051 = vrot.slane %v3256, 2
      %v4052 = vrot.slane %v3257, 2
      %v4053 = vsel %vm997, %v4051, %v4052
      %v4054 = vrot.slane %v3258, 2
      %v4055 = vsel %vm997, %v4052, %v4054
      %v4056 = vrot.slane %v3259, 2
      %v4057 = vrot.slane %v3260, 2
      %v4058 = vsel %vm997, %v4056, %v4057
      %v4059 = vrot.slane %v3261, 2
      %v4060 = vsel %vm997, %v4057, %v4059
      %v4061 = vrot.slane %v3262, 2
      %v4062 = vrot.slane %v3263, 2
      %v4063 = vsel %vm997, %v4061, %v4062
      %v4064 = vrot.slane %v3264, 2
      %v4065 = vsel %vm997, %v4062, %v4064
      %s4066 = scalar_lea.vmem %s3, 8
      %v4067 = vld [vmem:[%s4066] sm:$0xf]
      %v4068 = vsel %vm411, %v3988, 0
      %v4070 = vsel %vm411, %v3990, 0
      %v4072 = vsel %vm411, %v3993, 0
      %v4074 = vsel %vm411, %v3995, 0
      %v4076 = vsel %vm411, %v3998, 0
      %v4078 = vsel %vm411, %v4000, 0
      %v4080 = vsel %vm411, %v4003, 0
      %v4082 = vsel %vm411, %v4005, 0
      %v4084 = vsel %vm411, %v4008, 0
      %v4086 = vsel %vm411, %v4010, 0
      %v4088 = vsel %vm411, %v4013, 0
      %v4090 = vsel %vm411, %v4015, 0
      %v4092 = vsel %vm411, %v4018, 0
      %v4094 = vsel %vm411, %v4020, 0
      %v4096 = vsel %vm411, %v4023, 0
      %v4098 = vsel %vm411, %v4025, 0
      %v4100 = vsel %vm411, %v4028, 0
      %v4102 = vsel %vm411, %v4030, 0
      %v4104 = vsel %vm411, %v4033, 0
      %v4106 = vsel %vm411, %v4035, 0
      %v4108 = vsel %vm411, %v4038, 0
      %v4110 = vsel %vm411, %v4040, 0
      %v4112 = vsel %vm411, %v4043, 0
      %v4114 = vsel %vm411, %v4045, 0
      %v4116 = vsel %vm411, %v4048, 0
      %v4118 = vsel %vm411, %v4050, 0
      %v4120 = vsel %vm411, %v4053, 0
      %v4122 = vsel %vm411, %v4055, 0
      %v4124 = vsel %vm411, %v4058, 0
      %v4126 = vsel %vm411, %v4060, 0
      %v4128 = vsel %vm411, %v4063, 0
      %v4130 = vsel %vm411, %v4065, 0
      %v4133 = vsel %vm476, %v4067, 0
      %4135 = vmatprep.subr.mxu0 0.0
      %4136 = vmatpush1.msra.mxu0 %v4133
      %4137 = vmatprep.subr.mxu0 0.0
      %4138 = vmatpush1.msra.mxu0 0.0
      %4139 = vmatprep.subr.mxu0 0.0
      %4140 = vmatpush1.msra.mxu0 0.0
      %4141 = vmatprep.subr.mxu0 0.0
      %4142 = vmatpush1.msra.mxu0 0.0
      %4143 = vmatprep.subr.mxu0 0.0
      %4144 = vmatpush1.msra.mxu0 0.0
      %4145 = vmatprep.subr.mxu0 0.0
      %4146 = vmatpush1.msra.mxu0 0.0
      %4147 = vmatprep.subr.mxu0 0.0
      %4148 = vmatpush1.msra.mxu0 0.0
      %4149 = vmatprep.subr.mxu0 0.0
      %4150 = vmatpush1.msra.mxu0 0.0
      %4151 = vmatprep.subr.mxu0 0.0
      %4152 = vmatpush1.msra.mxu0 0.0
      %4153 = vmatprep.subr.mxu0 0.0
      %4154 = vmatpush1.msra.mxu0 0.0
      %4155 = vmatprep.subr.mxu0 0.0
      %4156 = vmatpush1.msra.mxu0 0.0
      %4157 = vmatprep.subr.mxu0 0.0
      %4158 = vmatpush1.msra.mxu0 0.0
      %4159 = vmatprep.subr.mxu0 0.0
      %4160 = vmatpush1.msra.mxu0 0.0
      %4161 = vmatprep.subr.mxu0 0.0
      %4162 = vmatpush1.msra.mxu0 0.0
      %4163 = vmatprep.subr.mxu0 0.0
      %4164 = vmatpush1.msra.mxu0 0.0
      %4165 = vmatprep.subr.mxu0 0.0
      %4166 = vmatpush1.msra.mxu0 0.0
      %4167 = vmatprep.subr.mxu0 0.0
      %4168 = vmatpush1.msra.mxu0 0.0
      %4169 = vmatprep.subr.mxu0 0.0
      %4170 = vmatpush1.msra.mxu0 0.0
      %4171 = vmatprep.subr.mxu0 0.0
      %4172 = vmatpush1.msra.mxu0 0.0
      %4173 = vmatprep.subr.mxu0 0.0
      %4174 = vmatpush1.msra.mxu0 0.0
      %4175 = vmatprep.subr.mxu0 0.0
      %4176 = vmatpush1.msra.mxu0 0.0
      %4177 = vmatprep.subr.mxu0 0.0
      %4178 = vmatpush1.msra.mxu0 0.0
      %4179 = vmatprep.subr.mxu0 0.0
      %4180 = vmatpush1.msra.mxu0 0.0
      %4181 = vmatprep.subr.mxu0 0.0
      %4182 = vmatpush1.msra.mxu0 0.0
      %4183 = vmatprep.subr.mxu0 0.0
      %4184 = vmatpush1.msra.mxu0 0.0
      %4185 = vmatprep.subr.mxu0 0.0
      %4186 = vmatpush1.msra.mxu0 0.0
      %4187 = vmatprep.subr.mxu0 0.0
      %4188 = vmatpush1.msra.mxu0 0.0
      %4189 = vmatprep.subr.mxu0 0.0
      %4190 = vmatpush1.msra.mxu0 0.0
      %4191 = vmatprep.subr.mxu0 0.0
      %4192 = vmatpush1.msra.mxu0 0.0
      %4193 = vmatprep.subr.mxu0 0.0
      %4194 = vmatpush1.msra.mxu0 0.0
      %4195 = vmatprep.subr.mxu0 0.0
      %4196 = vmatpush1.msra.mxu0 0.0
      %4197 = vmatprep.subr.mxu0 0.0
      %4198 = vmatpush1.msra.mxu0 0.0
      %4199 = vmatprep.mubr.f32.mxu0 0.0
      %4200 = vmatmul.mubr.f32.gmra.mrb[0].mxu0 %v4068
      %v4201 = vpop.f32.mrb[0].mxu0
      %v4202 = vadd.f32 0.0, %v4201
      %v4203 = vpop.f32.mrb[0].mxu0
      %4204 = vmatprep.mubr.f32.mxu0 0.0
      %4205 = vmatmul.mubr.f32.gmra.mrb[0].mxu0 %v4070
      %v4206 = vpop.f32.mrb[0].mxu0
      %v4207 = vadd.f32 0.0, %v4206
      %v4208 = vpop.f32.mrb[0].mxu0
      %4209 = vmatprep.mubr.f32.mxu0 0.0
      %4210 = vmatmul.mubr.f32.gmra.mrb[0].mxu0 %v4072
      %v4211 = vpop.f32.mrb[0].mxu0
      %v4212 = vadd.f32 0.0, %v4211
      %v4213 = vpop.f32.mrb[0].mxu0
      %4214 = vmatprep.mubr.f32.mxu0 0.0
      %4215 = vmatmul.mubr.f32.gmra.mrb[0].mxu0 %v4074
      %v4216 = vpop.f32.mrb[0].mxu0
      %v4217 = vadd.f32 0.0, %v4216
      %v4218 = vpop.f32.mrb[0].mxu0
      %4219 = vmatprep.mubr.f32.mxu0 0.0
      %4220 = vmatmul.mubr.f32.gmra.mrb[0].mxu0 %v4076
      %v4221 = vpop.f32.mrb[0].mxu0
      %v4222 = vadd.f32 0.0, %v4221
      %v4223 = vpop.f32.mrb[0].mxu0
      %4224 = vmatprep.mubr.f32.mxu0 0.0
      %4225 = vmatmul.mubr.f32.gmra.mrb[0].mxu0 %v4078
      %v4226 = vpop.f32.mrb[0].mxu0
      %v4227 = vadd.f32 0.0, %v4226
      %v4228 = vpop.f32.mrb[0].mxu0
      %4229 = vmatprep.mubr.f32.mxu0 0.0
      %4230 = vmatmul.mubr.f32.gmra.mrb[0].mxu0 %v4080
      %v4231 = vpop.f32.mrb[0].mxu0
      %v4232 = vadd.f32 0.0, %v4231
      %v4233 = vpop.f32.mrb[0].mxu0
      %4234 = vmatprep.mubr.f32.mxu0 0.0
      %4235 = vmatmul.mubr.f32.gmra.mrb[0].mxu0 %v4082
      %v4236 = vpop.f32.mrb[0].mxu0
      %v4237 = vadd.f32 0.0, %v4236
      %v4238 = vpop.f32.mrb[0].mxu0
      %4239 = vmatprep.mubr.f32.mxu0 0.0
      %4240 = vmatmul.mubr.f32.gmra.mrb[0].mxu0 %v4084
      %v4241 = vpop.f32.mrb[0].mxu0
      %v4242 = vadd.f32 0.0, %v4241
      %v4243 = vpop.f32.mrb[0].mxu0
      %4244 = vmatprep.mubr.f32.mxu0 0.0
      %4245 = vmatmul.mubr.f32.gmra.mrb[0].mxu0 %v4086
      %v4246 = vpop.f32.mrb[0].mxu0
      %v4247 = vadd.f32 0.0, %v4246
      %v4248 = vpop.f32.mrb[0].mxu0
      %4249 = vmatprep.mubr.f32.mxu0 0.0
      %4250 = vmatmul.mubr.f32.gmra.mrb[0].mxu0 %v4088
      %v4251 = vpop.f32.mrb[0].mxu0
      %v4252 = vadd.f32 0.0, %v4251
      %v4253 = vpop.f32.mrb[0].mxu0
      %4254 = vmatprep.mubr.f32.mxu0 0.0
      %4255 = vmatmul.mubr.f32.gmra.mrb[0].mxu0 %v4090
      %v4256 = vpop.f32.mrb[0].mxu0
      %v4257 = vadd.f32 0.0, %v4256
      %v4258 = vpop.f32.mrb[0].mxu0
      %4259 = vmatprep.mubr.f32.mxu0 0.0
      %4260 = vmatmul.mubr.f32.gmra.mrb[0].mxu0 %v4092
      %v4261 = vpop.f32.mrb[0].mxu0
      %v4262 = vadd.f32 0.0, %v4261
      %v4263 = vpop.f32.mrb[0].mxu0
      %4264 = vmatprep.mubr.f32.mxu0 0.0
      %4265 = vmatmul.mubr.f32.gmra.mrb[0].mxu0 %v4094
      %v4266 = vpop.f32.mrb[0].mxu0
      %v4267 = vadd.f32 0.0, %v4266
      %v4268 = vpop.f32.mrb[0].mxu0
      %4269 = vmatprep.mubr.f32.mxu0 0.0
      %4270 = vmatmul.mubr.f32.gmra.mrb[0].mxu0 %v4096
      %v4271 = vpop.f32.mrb[0].mxu0
      %v4272 = vadd.f32 0.0, %v4271
      %v4273 = vpop.f32.mrb[0].mxu0
      %4274 = vmatprep.mubr.f32.mxu0 0.0
      %4275 = vmatmul.mubr.f32.gmra.mrb[0].mxu0 %v4098
      %v4276 = vpop.f32.mrb[0].mxu0
      %v4277 = vadd.f32 0.0, %v4276
      %v4278 = vpop.f32.mrb[0].mxu0
      %4279 = vmatprep.mubr.f32.mxu0 0.0
      %4280 = vmatmul.mubr.f32.gmra.mrb[0].mxu0 %v4100
      %v4281 = vpop.f32.mrb[0].mxu0
      %v4282 = vadd.f32 0.0, %v4281
      %v4283 = vpop.f32.mrb[0].mxu0
      %4284 = vmatprep.mubr.f32.mxu0 0.0
      %4285 = vmatmul.mubr.f32.gmra.mrb[0].mxu0 %v4102
      %v4286 = vpop.f32.mrb[0].mxu0
      %v4287 = vadd.f32 0.0, %v4286
      %v4288 = vpop.f32.mrb[0].mxu0
      %4289 = vmatprep.mubr.f32.mxu0 0.0
      %4290 = vmatmul.mubr.f32.gmra.mrb[0].mxu0 %v4104
      %v4291 = vpop.f32.mrb[0].mxu0
      %v4292 = vadd.f32 0.0, %v4291
      %v4293 = vpop.f32.mrb[0].mxu0
      %4294 = vmatprep.mubr.f32.mxu0 0.0
      %4295 = vmatmul.mubr.f32.gmra.mrb[0].mxu0 %v4106
      %v4296 = vpop.f32.mrb[0].mxu0
      %v4297 = vadd.f32 0.0, %v4296
      %v4298 = vpop.f32.mrb[0].mxu0
      %4299 = vmatprep.mubr.f32.mxu0 0.0
      %4300 = vmatmul.mubr.f32.gmra.mrb[0].mxu0 %v4108
      %v4301 = vpop.f32.mrb[0].mxu0
      %v4302 = vadd.f32 0.0, %v4301
      %v4303 = vpop.f32.mrb[0].mxu0
      %4304 = vmatprep.mubr.f32.mxu0 0.0
      %4305 = vmatmul.mubr.f32.gmra.mrb[0].mxu0 %v4110
      %v4306 = vpop.f32.mrb[0].mxu0
      %v4307 = vadd.f32 0.0, %v4306
      %v4308 = vpop.f32.mrb[0].mxu0
      %4309 = vmatprep.mubr.f32.mxu0 0.0
      %4310 = vmatmul.mubr.f32.gmra.mrb[0].mxu0 %v4112
      %v4311 = vpop.f32.mrb[0].mxu0
      %v4312 = vadd.f32 0.0, %v4311
      %v4313 = vpop.f32.mrb[0].mxu0
      %4314 = vmatprep.mubr.f32.mxu0 0.0
      %4315 = vmatmul.mubr.f32.gmra.mrb[0].mxu0 %v4114
      %v4316 = vpop.f32.mrb[0].mxu0
      %v4317 = vadd.f32 0.0, %v4316
      %v4318 = vpop.f32.mrb[0].mxu0
      %4319 = vmatprep.mubr.f32.mxu0 0.0
      %4320 = vmatmul.mubr.f32.gmra.mrb[0].mxu0 %v4116
      %v4321 = vpop.f32.mrb[0].mxu0
      %v4322 = vadd.f32 0.0, %v4321
      %v4323 = vpop.f32.mrb[0].mxu0
      %4324 = vmatprep.mubr.f32.mxu0 0.0
      %4325 = vmatmul.mubr.f32.gmra.mrb[0].mxu0 %v4118
      %v4326 = vpop.f32.mrb[0].mxu0
      %v4327 = vadd.f32 0.0, %v4326
      %v4328 = vpop.f32.mrb[0].mxu0
      %4329 = vmatprep.mubr.f32.mxu0 0.0
      %4330 = vmatmul.mubr.f32.gmra.mrb[0].mxu0 %v4120
      %v4331 = vpop.f32.mrb[0].mxu0
      %v4332 = vadd.f32 0.0, %v4331
      %v4333 = vpop.f32.mrb[0].mxu0
      %4334 = vmatprep.mubr.f32.mxu0 0.0
      %4335 = vmatmul.mubr.f32.gmra.mrb[0].mxu0 %v4122
      %v4336 = vpop.f32.mrb[0].mxu0
      %v4337 = vadd.f32 0.0, %v4336
      %v4338 = vpop.f32.mrb[0].mxu0
      %4339 = vmatprep.mubr.f32.mxu0 0.0
      %4340 = vmatmul.mubr.f32.gmra.mrb[0].mxu0 %v4124
      %v4341 = vpop.f32.mrb[0].mxu0
      %v4342 = vadd.f32 0.0, %v4341
      %v4343 = vpop.f32.mrb[0].mxu0
      %4344 = vmatprep.mubr.f32.mxu0 0.0
      %4345 = vmatmul.mubr.f32.gmra.mrb[0].mxu0 %v4126
      %v4346 = vpop.f32.mrb[0].mxu0
      %v4347 = vadd.f32 0.0, %v4346
      %v4348 = vpop.f32.mrb[0].mxu0
      %4349 = vmatprep.mubr.f32.mxu0 0.0
      %4350 = vmatmul.mubr.f32.gmra.mrb[0].mxu0 %v4128
      %v4351 = vpop.f32.mrb[0].mxu0
      %v4352 = vadd.f32 0.0, %v4351
      %v4353 = vpop.f32.mrb[0].mxu0
      %4354 = vmatprep.mubr.f32.mxu0 0.0
      %4355 = vmatmul.mubr.f32.gmra.mrb[0].mxu0 %v4130
      %v4356 = vpop.f32.mrb[0].mxu0
      %v4357 = vadd.f32 0.0, %v4356
      %v4358 = vpop.f32.mrb[0].mxu0
      %4359 = vdwg.mxu0
      %v4360 = vadd.f32 %v3828, %v4202
      %v4361 = vadd.f32 %v3833, %v4207
      %v4362 = vadd.f32 %v3838, %v4212
      %v4363 = vadd.f32 %v3843, %v4217
      %v4364 = vadd.f32 %v3848, %v4222
      %v4365 = vadd.f32 %v3853, %v4227
      %v4366 = vadd.f32 %v3858, %v4232
      %v4367 = vadd.f32 %v3863, %v4237
      %v4368 = vadd.f32 %v3868, %v4242
      %v4369 = vadd.f32 %v3873, %v4247
      %v4370 = vadd.f32 %v3878, %v4252
      %v4371 = vadd.f32 %v3883, %v4257
      %v4372 = vadd.f32 %v3888, %v4262
      %v4373 = vadd.f32 %v3893, %v4267
      %v4374 = vadd.f32 %v3898, %v4272
      %v4375 = vadd.f32 %v3903, %v4277
      %v4376 = vadd.f32 %v3908, %v4282
      %v4377 = vadd.f32 %v3913, %v4287
      %v4378 = vadd.f32 %v3918, %v4292
      %v4379 = vadd.f32 %v3923, %v4297
      %v4380 = vadd.f32 %v3928, %v4302
      %v4381 = vadd.f32 %v3933, %v4307
      %v4382 = vadd.f32 %v3938, %v4312
      %v4383 = vadd.f32 %v3943, %v4317
      %v4384 = vadd.f32 %v3948, %v4322
      %v4385 = vadd.f32 %v3953, %v4327
      %v4386 = vadd.f32 %v3958, %v4332
      %v4387 = vadd.f32 %v3963, %v4337
      %v4388 = vadd.f32 %v3968, %v4342
      %v4389 = vadd.f32 %v3973, %v4347
      %v4390 = vadd.f32 %v3978, %v4352
      %v4391 = vadd.f32 %v3983, %v4357
      %s4392 = scalar_lea.vmem %s3, 12
      %v4393 = vld [vmem:[%s4392] sm:$0xf]
      %v4395 = vsel %vm411, %v3265, 0
      %v4398 = vsel %vm411, %v3266, 0
      %v4401 = vsel %vm476, %v4393, 0
      %4403 = vmatprep.subr.mxu0 0.0
      %4404 = vmatpush1.msra.mxu0 %v4401
      %4405 = vmatprep.subr.mxu0 0.0
      %4406 = vmatpush1.msra.mxu0 0.0
      %4407 = vmatprep.subr.mxu0 0.0
      %4408 = vmatpush1.msra.mxu0 0.0
      %4409 = vmatprep.subr.mxu0 0.0
      %4410 = vmatpush1.msra.mxu0 0.0
      %4411 = vmatprep.subr.mxu0 0.0
      %4412 = vmatpush1.msra.mxu0 0.0
      %4413 = vmatprep.subr.mxu0 0.0
      %4414 = vmatpush1.msra.mxu0 0.0
      %4415 = vmatprep.subr.mxu0 0.0
      %4416 = vmatpush1.msra.mxu0 0.0
      %4417 = vmatprep.subr.mxu0 0.0
      %4418 = vmatpush1.msra.mxu0 0.0
      %4419 = vmatprep.subr.mxu0 0.0
      %4420 = vmatpush1.msra.mxu0 0.0
      %4421 = vmatprep.subr.mxu0 0.0
      %4422 = vmatpush1.msra.mxu0 0.0
      %4423 = vmatprep.subr.mxu0 0.0
      %4424 = vmatpush1.msra.mxu0 0.0
      %4425 = vmatprep.subr.mxu0 0.0
      %4426 = vmatpush1.msra.mxu0 0.0
      %4427 = vmatprep.subr.mxu0 0.0
      %4428 = vmatpush1.msra.mxu0 0.0
      %4429 = vmatprep.subr.mxu0 0.0
      %4430 = vmatpush1.msra.mxu0 0.0
      %4431 = vmatprep.subr.mxu0 0.0
      %4432 = vmatpush1.msra.mxu0 0.0
      %4433 = vmatprep.subr.mxu0 0.0
      %4434 = vmatpush1.msra.mxu0 0.0
      %4435 = vmatprep.subr.mxu0 0.0
      %4436 = vmatpush1.msra.mxu0 0.0
      %4437 = vmatprep.subr.mxu0 0.0
      %4438 = vmatpush1.msra.mxu0 0.0
      %4439 = vmatprep.subr.mxu0 0.0
      %4440 = vmatpush1.msra.mxu0 0.0
      %4441 = vmatprep.subr.mxu0 0.0
      %4442 = vmatpush1.msra.mxu0 0.0
      %4443 = vmatprep.subr.mxu0 0.0
      %4444 = vmatpush1.msra.mxu0 0.0
      %4445 = vmatprep.subr.mxu0 0.0
      %4446 = vmatpush1.msra.mxu0 0.0
      %4447 = vmatprep.subr.mxu0 0.0
      %4448 = vmatpush1.msra.mxu0 0.0
      %4449 = vmatprep.subr.mxu0 0.0
      %4450 = vmatpush1.msra.mxu0 0.0
      %4451 = vmatprep.subr.mxu0 0.0
      %4452 = vmatpush1.msra.mxu0 0.0
      %4453 = vmatprep.subr.mxu0 0.0
      %4454 = vmatpush1.msra.mxu0 0.0
      %4455 = vmatprep.subr.mxu0 0.0
      %4456 = vmatpush1.msra.mxu0 0.0
      %4457 = vmatprep.subr.mxu0 0.0
      %4458 = vmatpush1.msra.mxu0 0.0
      %4459 = vmatprep.subr.mxu0 0.0
      %4460 = vmatpush1.msra.mxu0 0.0
      %4461 = vmatprep.subr.mxu0 0.0
      %4462 = vmatpush1.msra.mxu0 0.0
      %4463 = vmatprep.subr.mxu0 0.0
      %4464 = vmatpush1.msra.mxu0 0.0
      %4465 = vmatprep.subr.mxu0 0.0
      %4466 = vmatpush1.msra.mxu0 0.0
      %4467 = vmatprep.mubr.f32.mxu0 0.0
      %4468 = vmatmul.mubr.f32.gmra.mrb[0].mxu0 %v3698
      %v4469 = vpop.f32.mrb[0].mxu0
      %v4470 = vadd.f32 0.0, %v4469
      %v4471 = vpop.f32.mrb[0].mxu0
      %4472 = vmatprep.mubr.f32.mxu0 0.0
      %4473 = vmatmul.mubr.f32.gmra.mrb[0].mxu0 %v3700
      %v4474 = vpop.f32.mrb[0].mxu0
      %v4475 = vadd.f32 0.0, %v4474
      %v4476 = vpop.f32.mrb[0].mxu0
      %4477 = vmatprep.mubr.f32.mxu0 0.0
      %4478 = vmatmul.mubr.f32.gmra.mrb[0].mxu0 %v3702
      %v4479 = vpop.f32.mrb[0].mxu0
      %v4480 = vadd.f32 0.0, %v4479
      %v4481 = vpop.f32.mrb[0].mxu0
      %4482 = vmatprep.mubr.f32.mxu0 0.0
      %4483 = vmatmul.mubr.f32.gmra.mrb[0].mxu0 %v3704
      %v4484 = vpop.f32.mrb[0].mxu0
      %v4485 = vadd.f32 0.0, %v4484
      %v4486 = vpop.f32.mrb[0].mxu0
      %4487 = vmatprep.mubr.f32.mxu0 0.0
      %4488 = vmatmul.mubr.f32.gmra.mrb[0].mxu0 %v3706
      %v4489 = vpop.f32.mrb[0].mxu0
      %v4490 = vadd.f32 0.0, %v4489
      %v4491 = vpop.f32.mrb[0].mxu0
      %4492 = vmatprep.mubr.f32.mxu0 0.0
      %4493 = vmatmul.mubr.f32.gmra.mrb[0].mxu0 %v3708
      %v4494 = vpop.f32.mrb[0].mxu0
      %v4495 = vadd.f32 0.0, %v4494
      %v4496 = vpop.f32.mrb[0].mxu0
      %4497 = vmatprep.mubr.f32.mxu0 0.0
      %4498 = vmatmul.mubr.f32.gmra.mrb[0].mxu0 %v3710
      %v4499 = vpop.f32.mrb[0].mxu0
      %v4500 = vadd.f32 0.0, %v4499
      %v4501 = vpop.f32.mrb[0].mxu0
      %4502 = vmatprep.mubr.f32.mxu0 0.0
      %4503 = vmatmul.mubr.f32.gmra.mrb[0].mxu0 %v3712
      %v4504 = vpop.f32.mrb[0].mxu0
      %v4505 = vadd.f32 0.0, %v4504
      %v4506 = vpop.f32.mrb[0].mxu0
      %4507 = vmatprep.mubr.f32.mxu0 0.0
      %4508 = vmatmul.mubr.f32.gmra.mrb[0].mxu0 %v3714
      %v4509 = vpop.f32.mrb[0].mxu0
      %v4510 = vadd.f32 0.0, %v4509
      %v4511 = vpop.f32.mrb[0].mxu0
      %4512 = vmatprep.mubr.f32.mxu0 0.0
      %4513 = vmatmul.mubr.f32.gmra.mrb[0].mxu0 %v3716
      %v4514 = vpop.f32.mrb[0].mxu0
      %v4515 = vadd.f32 0.0, %v4514
      %v4516 = vpop.f32.mrb[0].mxu0
      %4517 = vmatprep.mubr.f32.mxu0 0.0
      %4518 = vmatmul.mubr.f32.gmra.mrb[0].mxu0 %v3718
      %v4519 = vpop.f32.mrb[0].mxu0
      %v4520 = vadd.f32 0.0, %v4519
      %v4521 = vpop.f32.mrb[0].mxu0
      %4522 = vmatprep.mubr.f32.mxu0 0.0
      %4523 = vmatmul.mubr.f32.gmra.mrb[0].mxu0 %v3720
      %v4524 = vpop.f32.mrb[0].mxu0
      %v4525 = vadd.f32 0.0, %v4524
      %v4526 = vpop.f32.mrb[0].mxu0
      %4527 = vmatprep.mubr.f32.mxu0 0.0
      %4528 = vmatmul.mubr.f32.gmra.mrb[0].mxu0 %v3722
      %v4529 = vpop.f32.mrb[0].mxu0
      %v4530 = vadd.f32 0.0, %v4529
      %v4531 = vpop.f32.mrb[0].mxu0
      %4532 = vmatprep.mubr.f32.mxu0 0.0
      %4533 = vmatmul.mubr.f32.gmra.mrb[0].mxu0 %v3724
      %v4534 = vpop.f32.mrb[0].mxu0
      %v4535 = vadd.f32 0.0, %v4534
      %v4536 = vpop.f32.mrb[0].mxu0
      %4537 = vmatprep.mubr.f32.mxu0 0.0
      %4538 = vmatmul.mubr.f32.gmra.mrb[0].mxu0 %v3726
      %v4539 = vpop.f32.mrb[0].mxu0
      %v4540 = vadd.f32 0.0, %v4539
      %v4541 = vpop.f32.mrb[0].mxu0
      %4542 = vmatprep.mubr.f32.mxu0 0.0
      %4543 = vmatmul.mubr.f32.gmra.mrb[0].mxu0 %v3728
      %v4544 = vpop.f32.mrb[0].mxu0
      %v4545 = vadd.f32 0.0, %v4544
      %v4546 = vpop.f32.mrb[0].mxu0
      %4547 = vmatprep.mubr.f32.mxu0 0.0
      %4548 = vmatmul.mubr.f32.gmra.mrb[0].mxu0 %v3730
      %v4549 = vpop.f32.mrb[0].mxu0
      %v4550 = vadd.f32 0.0, %v4549
      %v4551 = vpop.f32.mrb[0].mxu0
      %4552 = vmatprep.mubr.f32.mxu0 0.0
      %4553 = vmatmul.mubr.f32.gmra.mrb[0].mxu0 %v3732
      %v4554 = vpop.f32.mrb[0].mxu0
      %v4555 = vadd.f32 0.0, %v4554
      %v4556 = vpop.f32.mrb[0].mxu0
      %4557 = vmatprep.mubr.f32.mxu0 0.0
      %4558 = vmatmul.mubr.f32.gmra.mrb[0].mxu0 %v3734
      %v4559 = vpop.f32.mrb[0].mxu0
      %v4560 = vadd.f32 0.0, %v4559
      %v4561 = vpop.f32.mrb[0].mxu0
      %4562 = vmatprep.mubr.f32.mxu0 0.0
      %4563 = vmatmul.mubr.f32.gmra.mrb[0].mxu0 %v3736
      %v4564 = vpop.f32.mrb[0].mxu0
      %v4565 = vadd.f32 0.0, %v4564
      %v4566 = vpop.f32.mrb[0].mxu0
      %4567 = vmatprep.mubr.f32.mxu0 0.0
      %4568 = vmatmul.mubr.f32.gmra.mrb[0].mxu0 %v3738
      %v4569 = vpop.f32.mrb[0].mxu0
      %v4570 = vadd.f32 0.0, %v4569
      %v4571 = vpop.f32.mrb[0].mxu0
      %4572 = vmatprep.mubr.f32.mxu0 0.0
      %4573 = vmatmul.mubr.f32.gmra.mrb[0].mxu0 %v3740
      %v4574 = vpop.f32.mrb[0].mxu0
      %v4575 = vadd.f32 0.0, %v4574
      %v4576 = vpop.f32.mrb[0].mxu0
      %4577 = vmatprep.mubr.f32.mxu0 0.0
      %4578 = vmatmul.mubr.f32.gmra.mrb[0].mxu0 %v3742
      %v4579 = vpop.f32.mrb[0].mxu0
      %v4580 = vadd.f32 0.0, %v4579
      %v4581 = vpop.f32.mrb[0].mxu0
      %4582 = vmatprep.mubr.f32.mxu0 0.0
      %4583 = vmatmul.mubr.f32.gmra.mrb[0].mxu0 %v3744
      %v4584 = vpop.f32.mrb[0].mxu0
      %v4585 = vadd.f32 0.0, %v4584
      %v4586 = vpop.f32.mrb[0].mxu0
      %4587 = vmatprep.mubr.f32.mxu0 0.0
      %4588 = vmatmul.mubr.f32.gmra.mrb[0].mxu0 %v3746
      %v4589 = vpop.f32.mrb[0].mxu0
      %v4590 = vadd.f32 0.0, %v4589
      %v4591 = vpop.f32.mrb[0].mxu0
      %4592 = vmatprep.mubr.f32.mxu0 0.0
      %4593 = vmatmul.mubr.f32.gmra.mrb[0].mxu0 %v3748
      %v4594 = vpop.f32.mrb[0].mxu0
      %v4595 = vadd.f32 0.0, %v4594
      %v4596 = vpop.f32.mrb[0].mxu0
      %4597 = vmatprep.mubr.f32.mxu0 0.0
      %4598 = vmatmul.mubr.f32.gmra.mrb[0].mxu0 %v3750
      %v4599 = vpop.f32.mrb[0].mxu0
      %v4600 = vadd.f32 0.0, %v4599
      %v4601 = vpop.f32.mrb[0].mxu0
      %4602 = vmatprep.mubr.f32.mxu0 0.0
      %4603 = vmatmul.mubr.f32.gmra.mrb[0].mxu0 %v3752
      %v4604 = vpop.f32.mrb[0].mxu0
      %v4605 = vadd.f32 0.0, %v4604
      %v4606 = vpop.f32.mrb[0].mxu0
      %4607 = vmatprep.mubr.f32.mxu0 0.0
      %4608 = vmatmul.mubr.f32.gmra.mrb[0].mxu0 %v3754
      %v4609 = vpop.f32.mrb[0].mxu0
      %v4610 = vadd.f32 0.0, %v4609
      %v4611 = vpop.f32.mrb[0].mxu0
      %4612 = vmatprep.mubr.f32.mxu0 0.0
      %4613 = vmatmul.mubr.f32.gmra.mrb[0].mxu0 %v3756
      %v4614 = vpop.f32.mrb[0].mxu0
      %v4615 = vadd.f32 0.0, %v4614
      %v4616 = vpop.f32.mrb[0].mxu0
      %4617 = vmatprep.mubr.f32.mxu0 0.0
      %4618 = vmatmul.mubr.f32.gmra.mrb[0].mxu0 %v4395
      %v4619 = vpop.f32.mrb[0].mxu0
      %v4620 = vadd.f32 0.0, %v4619
      %v4621 = vpop.f32.mrb[0].mxu0
      %4622 = vmatprep.mubr.f32.mxu0 0.0
      %4623 = vmatmul.mubr.f32.gmra.mrb[0].mxu0 %v4398
      %v4624 = vpop.f32.mrb[0].mxu0
      %v4625 = vadd.f32 0.0, %v4624
      %v4626 = vpop.f32.mrb[0].mxu0
      %4627 = vdwg.mxu0
      %v4628 = vadd.f32 %v4360, %v4470
      %v4629 = vadd.f32 %v4361, %v4475
      %v4630 = vadd.f32 %v4362, %v4480
      %v4631 = vadd.f32 %v4363, %v4485
      %v4632 = vadd.f32 %v4364, %v4490
      %v4633 = vadd.f32 %v4365, %v4495
      %v4634 = vadd.f32 %v4366, %v4500
      %v4635 = vadd.f32 %v4367, %v4505
      %v4636 = vadd.f32 %v4368, %v4510
      %v4637 = vadd.f32 %v4369, %v4515
      %v4638 = vadd.f32 %v4370, %v4520
      %v4639 = vadd.f32 %v4371, %v4525
      %v4640 = vadd.f32 %v4372, %v4530
      %v4641 = vadd.f32 %v4373, %v4535
      %v4642 = vadd.f32 %v4374, %v4540
      %v4643 = vadd.f32 %v4375, %v4545
      %v4644 = vadd.f32 %v4376, %v4550
      %v4645 = vadd.f32 %v4377, %v4555
      %v4646 = vadd.f32 %v4378, %v4560
      %v4647 = vadd.f32 %v4379, %v4565
      %v4648 = vadd.f32 %v4380, %v4570
      %v4649 = vadd.f32 %v4381, %v4575
      %v4650 = vadd.f32 %v4382, %v4580
      %v4651 = vadd.f32 %v4383, %v4585
      %v4652 = vadd.f32 %v4384, %v4590
      %v4653 = vadd.f32 %v4385, %v4595
      %v4654 = vadd.f32 %v4386, %v4600
      %v4655 = vadd.f32 %v4387, %v4605
      %v4656 = vadd.f32 %v4388, %v4610
      %v4657 = vadd.f32 %v4389, %v4615
      %v4658 = vadd.f32 %v4390, %v4620
      %v4659 = vadd.f32 %v4391, %v4625
      %v4661 = vrot.slane %v3265, 1
      %v4662 = vrot.slane %v3266, 1
      %v4663 = vsel %vm328, %v4661, %v4662
      %v4664 = vrot.slane %v3267, 1
      %v4665 = vsel %vm328, %v4662, %v4664
      %s4666 = scalar_lea.vmem %s3, 16
      %v4667 = vld [vmem:[%s4666] sm:$0xf]
      %v4668 = vsel %vm411, %v4663, 0
      %v4670 = vsel %vm411, %v4665, 0
      %v4673 = vsel %vm476, %v4667, 0
      %4675 = vmatprep.subr.mxu0 0.0
      %4676 = vmatpush1.msra.mxu0 %v4673
      %4677 = vmatprep.subr.mxu0 0.0
      %4678 = vmatpush1.msra.mxu0 0.0
      %4679 = vmatprep.subr.mxu0 0.0
      %4680 = vmatpush1.msra.mxu0 0.0
      %4681 = vmatprep.subr.mxu0 0.0
      %4682 = vmatpush1.msra.mxu0 0.0
      %4683 = vmatprep.subr.mxu0 0.0
      %4684 = vmatpush1.msra.mxu0 0.0
      %4685 = vmatprep.subr.mxu0 0.0
      %4686 = vmatpush1.msra.mxu0 0.0
      %4687 = vmatprep.subr.mxu0 0.0
      %4688 = vmatpush1.msra.mxu0 0.0
      %4689 = vmatprep.subr.mxu0 0.0
      %4690 = vmatpush1.msra.mxu0 0.0
      %4691 = vmatprep.subr.mxu0 0.0
      %4692 = vmatpush1.msra.mxu0 0.0
      %4693 = vmatprep.subr.mxu0 0.0
      %4694 = vmatpush1.msra.mxu0 0.0
      %4695 = vmatprep.subr.mxu0 0.0
      %4696 = vmatpush1.msra.mxu0 0.0
      %4697 = vmatprep.subr.mxu0 0.0
      %4698 = vmatpush1.msra.mxu0 0.0
      %4699 = vmatprep.subr.mxu0 0.0
      %4700 = vmatpush1.msra.mxu0 0.0
      %4701 = vmatprep.subr.mxu0 0.0
      %4702 = vmatpush1.msra.mxu0 0.0
      %4703 = vmatprep.subr.mxu0 0.0
      %4704 = vmatpush1.msra.mxu0 0.0
      %4705 = vmatprep.subr.mxu0 0.0
      %4706 = vmatpush1.msra.mxu0 0.0
      %4707 = vmatprep.subr.mxu0 0.0
      %4708 = vmatpush1.msra.mxu0 0.0
      %4709 = vmatprep.subr.mxu0 0.0
      %4710 = vmatpush1.msra.mxu0 0.0
      %4711 = vmatprep.subr.mxu0 0.0
      %4712 = vmatpush1.msra.mxu0 0.0
      %4713 = vmatprep.subr.mxu0 0.0
      %4714 = vmatpush1.msra.mxu0 0.0
      %4715 = vmatprep.subr.mxu0 0.0
      %4716 = vmatpush1.msra.mxu0 0.0
      %4717 = vmatprep.subr.mxu0 0.0
      %4718 = vmatpush1.msra.mxu0 0.0
      %4719 = vmatprep.subr.mxu0 0.0
      %4720 = vmatpush1.msra.mxu0 0.0
      %4721 = vmatprep.subr.mxu0 0.0
      %4722 = vmatpush1.msra.mxu0 0.0
      %4723 = vmatprep.subr.mxu0 0.0
      %4724 = vmatpush1.msra.mxu0 0.0
      %4725 = vmatprep.subr.mxu0 0.0
      %4726 = vmatpush1.msra.mxu0 0.0
      %4727 = vmatprep.subr.mxu0 0.0
      %4728 = vmatpush1.msra.mxu0 0.0
      %4729 = vmatprep.subr.mxu0 0.0
      %4730 = vmatpush1.msra.mxu0 0.0
      %4731 = vmatprep.subr.mxu0 0.0
      %4732 = vmatpush1.msra.mxu0 0.0
      %4733 = vmatprep.subr.mxu0 0.0
      %4734 = vmatpush1.msra.mxu0 0.0
      %4735 = vmatprep.subr.mxu0 0.0
      %4736 = vmatpush1.msra.mxu0 0.0
      %4737 = vmatprep.subr.mxu0 0.0
      %4738 = vmatpush1.msra.mxu0 0.0
      %4739 = vmatprep.mubr.f32.mxu0 0.0
      %4740 = vmatmul.mubr.f32.gmra.mrb[0].mxu0 %v3406
      %v4741 = vpop.f32.mrb[0].mxu0
      %v4742 = vadd.f32 0.0, %v4741
      %v4743 = vpop.f32.mrb[0].mxu0
      %4744 = vmatprep.mubr.f32.mxu0 0.0
      %4745 = vmatmul.mubr.f32.gmra.mrb[0].mxu0 %v3408
      %v4746 = vpop.f32.mrb[0].mxu0
      %v4747 = vadd.f32 0.0, %v4746
      %v4748 = vpop.f32.mrb[0].mxu0
      %4749 = vmatprep.mubr.f32.mxu0 0.0
      %4750 = vmatmul.mubr.f32.gmra.mrb[0].mxu0 %v3410
      %v4751 = vpop.f32.mrb[0].mxu0
      %v4752 = vadd.f32 0.0, %v4751
      %v4753 = vpop.f32.mrb[0].mxu0
      %4754 = vmatprep.mubr.f32.mxu0 0.0
      %4755 = vmatmul.mubr.f32.gmra.mrb[0].mxu0 %v3412
      %v4756 = vpop.f32.mrb[0].mxu0
      %v4757 = vadd.f32 0.0, %v4756
      %v4758 = vpop.f32.mrb[0].mxu0
      %4759 = vmatprep.mubr.f32.mxu0 0.0
      %4760 = vmatmul.mubr.f32.gmra.mrb[0].mxu0 %v3414
      %v4761 = vpop.f32.mrb[0].mxu0
      %v4762 = vadd.f32 0.0, %v4761
      %v4763 = vpop.f32.mrb[0].mxu0
      %4764 = vmatprep.mubr.f32.mxu0 0.0
      %4765 = vmatmul.mubr.f32.gmra.mrb[0].mxu0 %v3416
      %v4766 = vpop.f32.mrb[0].mxu0
      %v4767 = vadd.f32 0.0, %v4766
      %v4768 = vpop.f32.mrb[0].mxu0
      %4769 = vmatprep.mubr.f32.mxu0 0.0
      %4770 = vmatmul.mubr.f32.gmra.mrb[0].mxu0 %v3418
      %v4771 = vpop.f32.mrb[0].mxu0
      %v4772 = vadd.f32 0.0, %v4771
      %v4773 = vpop.f32.mrb[0].mxu0
      %4774 = vmatprep.mubr.f32.mxu0 0.0
      %4775 = vmatmul.mubr.f32.gmra.mrb[0].mxu0 %v3420
      %v4776 = vpop.f32.mrb[0].mxu0
      %v4777 = vadd.f32 0.0, %v4776
      %v4778 = vpop.f32.mrb[0].mxu0
      %4779 = vmatprep.mubr.f32.mxu0 0.0
      %4780 = vmatmul.mubr.f32.gmra.mrb[0].mxu0 %v3422
      %v4781 = vpop.f32.mrb[0].mxu0
      %v4782 = vadd.f32 0.0, %v4781
      %v4783 = vpop.f32.mrb[0].mxu0
      %4784 = vmatprep.mubr.f32.mxu0 0.0
      %4785 = vmatmul.mubr.f32.gmra.mrb[0].mxu0 %v3424
      %v4786 = vpop.f32.mrb[0].mxu0
      %v4787 = vadd.f32 0.0, %v4786
      %v4788 = vpop.f32.mrb[0].mxu0
      %4789 = vmatprep.mubr.f32.mxu0 0.0
      %4790 = vmatmul.mubr.f32.gmra.mrb[0].mxu0 %v3426
      %v4791 = vpop.f32.mrb[0].mxu0
      %v4792 = vadd.f32 0.0, %v4791
      %v4793 = vpop.f32.mrb[0].mxu0
      %4794 = vmatprep.mubr.f32.mxu0 0.0
      %4795 = vmatmul.mubr.f32.gmra.mrb[0].mxu0 %v3428
      %v4796 = vpop.f32.mrb[0].mxu0
      %v4797 = vadd.f32 0.0, %v4796
      %v4798 = vpop.f32.mrb[0].mxu0
      %4799 = vmatprep.mubr.f32.mxu0 0.0
      %4800 = vmatmul.mubr.f32.gmra.mrb[0].mxu0 %v3430
      %v4801 = vpop.f32.mrb[0].mxu0
      %v4802 = vadd.f32 0.0, %v4801
      %v4803 = vpop.f32.mrb[0].mxu0
      %4804 = vmatprep.mubr.f32.mxu0 0.0
      %4805 = vmatmul.mubr.f32.gmra.mrb[0].mxu0 %v3432
      %v4806 = vpop.f32.mrb[0].mxu0
      %v4807 = vadd.f32 0.0, %v4806
      %v4808 = vpop.f32.mrb[0].mxu0
      %4809 = vmatprep.mubr.f32.mxu0 0.0
      %4810 = vmatmul.mubr.f32.gmra.mrb[0].mxu0 %v3434
      %v4811 = vpop.f32.mrb[0].mxu0
      %v4812 = vadd.f32 0.0, %v4811
      %v4813 = vpop.f32.mrb[0].mxu0
      %4814 = vmatprep.mubr.f32.mxu0 0.0
      %4815 = vmatmul.mubr.f32.gmra.mrb[0].mxu0 %v3436
      %v4816 = vpop.f32.mrb[0].mxu0
      %v4817 = vadd.f32 0.0, %v4816
      %v4818 = vpop.f32.mrb[0].mxu0
      %4819 = vmatprep.mubr.f32.mxu0 0.0
      %4820 = vmatmul.mubr.f32.gmra.mrb[0].mxu0 %v3438
      %v4821 = vpop.f32.mrb[0].mxu0
      %v4822 = vadd.f32 0.0, %v4821
      %v4823 = vpop.f32.mrb[0].mxu0
      %4824 = vmatprep.mubr.f32.mxu0 0.0
      %4825 = vmatmul.mubr.f32.gmra.mrb[0].mxu0 %v3440
      %v4826 = vpop.f32.mrb[0].mxu0
      %v4827 = vadd.f32 0.0, %v4826
      %v4828 = vpop.f32.mrb[0].mxu0
      %4829 = vmatprep.mubr.f32.mxu0 0.0
      %4830 = vmatmul.mubr.f32.gmra.mrb[0].mxu0 %v3442
      %v4831 = vpop.f32.mrb[0].mxu0
      %v4832 = vadd.f32 0.0, %v4831
      %v4833 = vpop.f32.mrb[0].mxu0
      %4834 = vmatprep.mubr.f32.mxu0 0.0
      %4835 = vmatmul.mubr.f32.gmra.mrb[0].mxu0 %v3444
      %v4836 = vpop.f32.mrb[0].mxu0
      %v4837 = vadd.f32 0.0, %v4836
      %v4838 = vpop.f32.mrb[0].mxu0
      %4839 = vmatprep.mubr.f32.mxu0 0.0
      %4840 = vmatmul.mubr.f32.gmra.mrb[0].mxu0 %v3446
      %v4841 = vpop.f32.mrb[0].mxu0
      %v4842 = vadd.f32 0.0, %v4841
      %v4843 = vpop.f32.mrb[0].mxu0
      %4844 = vmatprep.mubr.f32.mxu0 0.0
      %4845 = vmatmul.mubr.f32.gmra.mrb[0].mxu0 %v3448
      %v4846 = vpop.f32.mrb[0].mxu0
      %v4847 = vadd.f32 0.0, %v4846
      %v4848 = vpop.f32.mrb[0].mxu0
      %4849 = vmatprep.mubr.f32.mxu0 0.0
      %4850 = vmatmul.mubr.f32.gmra.mrb[0].mxu0 %v3450
      %v4851 = vpop.f32.mrb[0].mxu0
      %v4852 = vadd.f32 0.0, %v4851
      %v4853 = vpop.f32.mrb[0].mxu0
      %4854 = vmatprep.mubr.f32.mxu0 0.0
      %4855 = vmatmul.mubr.f32.gmra.mrb[0].mxu0 %v3452
      %v4856 = vpop.f32.mrb[0].mxu0
      %v4857 = vadd.f32 0.0, %v4856
      %v4858 = vpop.f32.mrb[0].mxu0
      %4859 = vmatprep.mubr.f32.mxu0 0.0
      %4860 = vmatmul.mubr.f32.gmra.mrb[0].mxu0 %v3454
      %v4861 = vpop.f32.mrb[0].mxu0
      %v4862 = vadd.f32 0.0, %v4861
      %v4863 = vpop.f32.mrb[0].mxu0
      %4864 = vmatprep.mubr.f32.mxu0 0.0
      %4865 = vmatmul.mubr.f32.gmra.mrb[0].mxu0 %v3456
      %v4866 = vpop.f32.mrb[0].mxu0
      %v4867 = vadd.f32 0.0, %v4866
      %v4868 = vpop.f32.mrb[0].mxu0
      %4869 = vmatprep.mubr.f32.mxu0 0.0
      %4870 = vmatmul.mubr.f32.gmra.mrb[0].mxu0 %v3458
      %v4871 = vpop.f32.mrb[0].mxu0
      %v4872 = vadd.f32 0.0, %v4871
      %v4873 = vpop.f32.mrb[0].mxu0
      %4874 = vmatprep.mubr.f32.mxu0 0.0
      %4875 = vmatmul.mubr.f32.gmra.mrb[0].mxu0 %v3460
      %v4876 = vpop.f32.mrb[0].mxu0
      %v4877 = vadd.f32 0.0, %v4876
      %v4878 = vpop.f32.mrb[0].mxu0
      %4879 = vmatprep.mubr.f32.mxu0 0.0
      %4880 = vmatmul.mubr.f32.gmra.mrb[0].mxu0 %v3462
      %v4881 = vpop.f32.mrb[0].mxu0
      %v4882 = vadd.f32 0.0, %v4881
      %v4883 = vpop.f32.mrb[0].mxu0
      %4884 = vmatprep.mubr.f32.mxu0 0.0
      %4885 = vmatmul.mubr.f32.gmra.mrb[0].mxu0 %v3464
      %v4886 = vpop.f32.mrb[0].mxu0
      %v4887 = vadd.f32 0.0, %v4886
      %v4888 = vpop.f32.mrb[0].mxu0
      %4889 = vmatprep.mubr.f32.mxu0 0.0
      %4890 = vmatmul.mubr.f32.gmra.mrb[0].mxu0 %v4668
      %v4891 = vpop.f32.mrb[0].mxu0
      %v4892 = vadd.f32 0.0, %v4891
      %v4893 = vpop.f32.mrb[0].mxu0
      %4894 = vmatprep.mubr.f32.mxu0 0.0
      %4895 = vmatmul.mubr.f32.gmra.mrb[0].mxu0 %v4670
      %v4896 = vpop.f32.mrb[0].mxu0
      %v4897 = vadd.f32 0.0, %v4896
      %v4898 = vpop.f32.mrb[0].mxu0
      %4899 = vdwg.mxu0
      %v4900 = vadd.f32 %v4628, %v4742
      %v4901 = vadd.f32 %v4629, %v4747
      %v4902 = vadd.f32 %v4630, %v4752
      %v4903 = vadd.f32 %v4631, %v4757
      %v4904 = vadd.f32 %v4632, %v4762
      %v4905 = vadd.f32 %v4633, %v4767
      %v4906 = vadd.f32 %v4634, %v4772
      %v4907 = vadd.f32 %v4635, %v4777
      %v4908 = vadd.f32 %v4636, %v4782
      %v4909 = vadd.f32 %v4637, %v4787
      %v4910 = vadd.f32 %v4638, %v4792
      %v4911 = vadd.f32 %v4639, %v4797
      %v4912 = vadd.f32 %v4640, %v4802
      %v4913 = vadd.f32 %v4641, %v4807
      %v4914 = vadd.f32 %v4642, %v4812
      %v4915 = vadd.f32 %v4643, %v4817
      %v4916 = vadd.f32 %v4644, %v4822
      %v4917 = vadd.f32 %v4645, %v4827
      %v4918 = vadd.f32 %v4646, %v4832
      %v4919 = vadd.f32 %v4647, %v4837
      %v4920 = vadd.f32 %v4648, %v4842
      %v4921 = vadd.f32 %v4649, %v4847
      %v4922 = vadd.f32 %v4650, %v4852
      %v4923 = vadd.f32 %v4651, %v4857
      %v4924 = vadd.f32 %v4652, %v4862
      %v4925 = vadd.f32 %v4653, %v4867
      %v4926 = vadd.f32 %v4654, %v4872
      %v4927 = vadd.f32 %v4655, %v4877
      %v4928 = vadd.f32 %v4656, %v4882
      %v4929 = vadd.f32 %v4657, %v4887
      %v4930 = vadd.f32 %v4658, %v4892
      %v4931 = vadd.f32 %v4659, %v4897
      %v4932 = vrot.slane %v3265, 2
      %v4933 = vrot.slane %v3266, 2
      %v4934 = vsel %vm997, %v4932, %v4933
      %v4935 = vrot.slane %v3267, 2
      %v4936 = vsel %vm997, %v4933, %v4935
      %s4937 = scalar_lea.vmem %s3, 20
      %v4938 = vld [vmem:[%s4937] sm:$0xf]
      %v4939 = vsel %vm411, %v4934, 0
      %v4941 = vsel %vm411, %v4936, 0
      %v4944 = vsel %vm476, %v4938, 0
      %4946 = vmatprep.subr.mxu0 0.0
      %4947 = vmatpush1.msra.mxu0 %v4944
      %4948 = vmatprep.subr.mxu0 0.0
      %4949 = vmatpush1.msra.mxu0 0.0
      %4950 = vmatprep.subr.mxu0 0.0
      %4951 = vmatpush1.msra.mxu0 0.0
      %4952 = vmatprep.subr.mxu0 0.0
      %4953 = vmatpush1.msra.mxu0 0.0
      %4954 = vmatprep.subr.mxu0 0.0
      %4955 = vmatpush1.msra.mxu0 0.0
      %4956 = vmatprep.subr.mxu0 0.0
      %4957 = vmatpush1.msra.mxu0 0.0
      %4958 = vmatprep.subr.mxu0 0.0
      %4959 = vmatpush1.msra.mxu0 0.0
      %4960 = vmatprep.subr.mxu0 0.0
      %4961 = vmatpush1.msra.mxu0 0.0
      %4962 = vmatprep.subr.mxu0 0.0
      %4963 = vmatpush1.msra.mxu0 0.0
      %4964 = vmatprep.subr.mxu0 0.0
      %4965 = vmatpush1.msra.mxu0 0.0
      %4966 = vmatprep.subr.mxu0 0.0
      %4967 = vmatpush1.msra.mxu0 0.0
      %4968 = vmatprep.subr.mxu0 0.0
      %4969 = vmatpush1.msra.mxu0 0.0
      %4970 = vmatprep.subr.mxu0 0.0
      %4971 = vmatpush1.msra.mxu0 0.0
      %4972 = vmatprep.subr.mxu0 0.0
      %4973 = vmatpush1.msra.mxu0 0.0
      %4974 = vmatprep.subr.mxu0 0.0
      %4975 = vmatpush1.msra.mxu0 0.0
      %4976 = vmatprep.subr.mxu0 0.0
      %4977 = vmatpush1.msra.mxu0 0.0
      %4978 = vmatprep.subr.mxu0 0.0
      %4979 = vmatpush1.msra.mxu0 0.0
      %4980 = vmatprep.subr.mxu0 0.0
      %4981 = vmatpush1.msra.mxu0 0.0
      %4982 = vmatprep.subr.mxu0 0.0
      %4983 = vmatpush1.msra.mxu0 0.0
      %4984 = vmatprep.subr.mxu0 0.0
      %4985 = vmatpush1.msra.mxu0 0.0
      %4986 = vmatprep.subr.mxu0 0.0
      %4987 = vmatpush1.msra.mxu0 0.0
      %4988 = vmatprep.subr.mxu0 0.0
      %4989 = vmatpush1.msra.mxu0 0.0
      %4990 = vmatprep.subr.mxu0 0.0
      %4991 = vmatpush1.msra.mxu0 0.0
      %4992 = vmatprep.subr.mxu0 0.0
      %4993 = vmatpush1.msra.mxu0 0.0
      %4994 = vmatprep.subr.mxu0 0.0
      %4995 = vmatpush1.msra.mxu0 0.0
      %4996 = vmatprep.subr.mxu0 0.0
      %4997 = vmatpush1.msra.mxu0 0.0
      %4998 = vmatprep.subr.mxu0 0.0
      %4999 = vmatpush1.msra.mxu0 0.0
      %5000 = vmatprep.subr.mxu0 0.0
      %5001 = vmatpush1.msra.mxu0 0.0
      %5002 = vmatprep.subr.mxu0 0.0
      %5003 = vmatpush1.msra.mxu0 0.0
      %5004 = vmatprep.subr.mxu0 0.0
      %5005 = vmatpush1.msra.mxu0 0.0
      %5006 = vmatprep.subr.mxu0 0.0
      %5007 = vmatpush1.msra.mxu0 0.0
      %5008 = vmatprep.subr.mxu0 0.0
      %5009 = vmatpush1.msra.mxu0 0.0
      %5010 = vmatprep.mubr.f32.mxu0 0.0
      %5011 = vmatmul.mubr.f32.gmra.mrb[0].mxu0 %v4072
      %v5012 = vpop.f32.mrb[0].mxu0
      %v5013 = vadd.f32 0.0, %v5012
      %v5014 = vpop.f32.mrb[0].mxu0
      %5015 = vmatprep.mubr.f32.mxu0 0.0
      %5016 = vmatmul.mubr.f32.gmra.mrb[0].mxu0 %v4074
      %v5017 = vpop.f32.mrb[0].mxu0
      %v5018 = vadd.f32 0.0, %v5017
      %v5019 = vpop.f32.mrb[0].mxu0
      %5020 = vmatprep.mubr.f32.mxu0 0.0
      %5021 = vmatmul.mubr.f32.gmra.mrb[0].mxu0 %v4076
      %v5022 = vpop.f32.mrb[0].mxu0
      %v5023 = vadd.f32 0.0, %v5022
      %v5024 = vpop.f32.mrb[0].mxu0
      %5025 = vmatprep.mubr.f32.mxu0 0.0
      %5026 = vmatmul.mubr.f32.gmra.mrb[0].mxu0 %v4078
      %v5027 = vpop.f32.mrb[0].mxu0
      %v5028 = vadd.f32 0.0, %v5027
      %v5029 = vpop.f32.mrb[0].mxu0
      %5030 = vmatprep.mubr.f32.mxu0 0.0
      %5031 = vmatmul.mubr.f32.gmra.mrb[0].mxu0 %v4080
      %v5032 = vpop.f32.mrb[0].mxu0
      %v5033 = vadd.f32 0.0, %v5032
      %v5034 = vpop.f32.mrb[0].mxu0
      %5035 = vmatprep.mubr.f32.mxu0 0.0
      %5036 = vmatmul.mubr.f32.gmra.mrb[0].mxu0 %v4082
      %v5037 = vpop.f32.mrb[0].mxu0
      %v5038 = vadd.f32 0.0, %v5037
      %v5039 = vpop.f32.mrb[0].mxu0
      %5040 = vmatprep.mubr.f32.mxu0 0.0
      %5041 = vmatmul.mubr.f32.gmra.mrb[0].mxu0 %v4084
      %v5042 = vpop.f32.mrb[0].mxu0
      %v5043 = vadd.f32 0.0, %v5042
      %v5044 = vpop.f32.mrb[0].mxu0
      %5045 = vmatprep.mubr.f32.mxu0 0.0
      %5046 = vmatmul.mubr.f32.gmra.mrb[0].mxu0 %v4086
      %v5047 = vpop.f32.mrb[0].mxu0
      %v5048 = vadd.f32 0.0, %v5047
      %v5049 = vpop.f32.mrb[0].mxu0
      %5050 = vmatprep.mubr.f32.mxu0 0.0
      %5051 = vmatmul.mubr.f32.gmra.mrb[0].mxu0 %v4088
      %v5052 = vpop.f32.mrb[0].mxu0
      %v5053 = vadd.f32 0.0, %v5052
      %v5054 = vpop.f32.mrb[0].mxu0
      %5055 = vmatprep.mubr.f32.mxu0 0.0
      %5056 = vmatmul.mubr.f32.gmra.mrb[0].mxu0 %v4090
      %v5057 = vpop.f32.mrb[0].mxu0
      %v5058 = vadd.f32 0.0, %v5057
      %v5059 = vpop.f32.mrb[0].mxu0
      %5060 = vmatprep.mubr.f32.mxu0 0.0
      %5061 = vmatmul.mubr.f32.gmra.mrb[0].mxu0 %v4092
      %v5062 = vpop.f32.mrb[0].mxu0
      %v5063 = vadd.f32 0.0, %v5062
      %v5064 = vpop.f32.mrb[0].mxu0
      %5065 = vmatprep.mubr.f32.mxu0 0.0
      %5066 = vmatmul.mubr.f32.gmra.mrb[0].mxu0 %v4094
      %v5067 = vpop.f32.mrb[0].mxu0
      %v5068 = vadd.f32 0.0, %v5067
      %v5069 = vpop.f32.mrb[0].mxu0
      %5070 = vmatprep.mubr.f32.mxu0 0.0
      %5071 = vmatmul.mubr.f32.gmra.mrb[0].mxu0 %v4096
      %v5072 = vpop.f32.mrb[0].mxu0
      %v5073 = vadd.f32 0.0, %v5072
      %v5074 = vpop.f32.mrb[0].mxu0
      %5075 = vmatprep.mubr.f32.mxu0 0.0
      %5076 = vmatmul.mubr.f32.gmra.mrb[0].mxu0 %v4098
      %v5077 = vpop.f32.mrb[0].mxu0
      %v5078 = vadd.f32 0.0, %v5077
      %v5079 = vpop.f32.mrb[0].mxu0
      %5080 = vmatprep.mubr.f32.mxu0 0.0
      %5081 = vmatmul.mubr.f32.gmra.mrb[0].mxu0 %v4100
      %v5082 = vpop.f32.mrb[0].mxu0
      %v5083 = vadd.f32 0.0, %v5082
      %v5084 = vpop.f32.mrb[0].mxu0
      %5085 = vmatprep.mubr.f32.mxu0 0.0
      %5086 = vmatmul.mubr.f32.gmra.mrb[0].mxu0 %v4102
      %v5087 = vpop.f32.mrb[0].mxu0
      %v5088 = vadd.f32 0.0, %v5087
      %v5089 = vpop.f32.mrb[0].mxu0
      %5090 = vmatprep.mubr.f32.mxu0 0.0
      %5091 = vmatmul.mubr.f32.gmra.mrb[0].mxu0 %v4104
      %v5092 = vpop.f32.mrb[0].mxu0
      %v5093 = vadd.f32 0.0, %v5092
      %v5094 = vpop.f32.mrb[0].mxu0
      %5095 = vmatprep.mubr.f32.mxu0 0.0
      %5096 = vmatmul.mubr.f32.gmra.mrb[0].mxu0 %v4106
      %v5097 = vpop.f32.mrb[0].mxu0
      %v5098 = vadd.f32 0.0, %v5097
      %v5099 = vpop.f32.mrb[0].mxu0
      %5100 = vmatprep.mubr.f32.mxu0 0.0
      %5101 = vmatmul.mubr.f32.gmra.mrb[0].mxu0 %v4108
      %v5102 = vpop.f32.mrb[0].mxu0
      %v5103 = vadd.f32 0.0, %v5102
      %v5104 = vpop.f32.mrb[0].mxu0
      %5105 = vmatprep.mubr.f32.mxu0 0.0
      %5106 = vmatmul.mubr.f32.gmra.mrb[0].mxu0 %v4110
      %v5107 = vpop.f32.mrb[0].mxu0
      %v5108 = vadd.f32 0.0, %v5107
      %v5109 = vpop.f32.mrb[0].mxu0
      %5110 = vmatprep.mubr.f32.mxu0 0.0
      %5111 = vmatmul.mubr.f32.gmra.mrb[0].mxu0 %v4112
      %v5112 = vpop.f32.mrb[0].mxu0
      %v5113 = vadd.f32 0.0, %v5112
      %v5114 = vpop.f32.mrb[0].mxu0
      %5115 = vmatprep.mubr.f32.mxu0 0.0
      %5116 = vmatmul.mubr.f32.gmra.mrb[0].mxu0 %v4114
      %v5117 = vpop.f32.mrb[0].mxu0
      %v5118 = vadd.f32 0.0, %v5117
      %v5119 = vpop.f32.mrb[0].mxu0
      %5120 = vmatprep.mubr.f32.mxu0 0.0
      %5121 = vmatmul.mubr.f32.gmra.mrb[0].mxu0 %v4116
      %v5122 = vpop.f32.mrb[0].mxu0
      %v5123 = vadd.f32 0.0, %v5122
      %v5124 = vpop.f32.mrb[0].mxu0
      %5125 = vmatprep.mubr.f32.mxu0 0.0
      %5126 = vmatmul.mubr.f32.gmra.mrb[0].mxu0 %v4118
      %v5127 = vpop.f32.mrb[0].mxu0
      %v5128 = vadd.f32 0.0, %v5127
      %v5129 = vpop.f32.mrb[0].mxu0
      %5130 = vmatprep.mubr.f32.mxu0 0.0
      %5131 = vmatmul.mubr.f32.gmra.mrb[0].mxu0 %v4120
      %v5132 = vpop.f32.mrb[0].mxu0
      %v5133 = vadd.f32 0.0, %v5132
      %v5134 = vpop.f32.mrb[0].mxu0
      %5135 = vmatprep.mubr.f32.mxu0 0.0
      %5136 = vmatmul.mubr.f32.gmra.mrb[0].mxu0 %v4122
      %v5137 = vpop.f32.mrb[0].mxu0
      %v5138 = vadd.f32 0.0, %v5137
      %v5139 = vpop.f32.mrb[0].mxu0
      %5140 = vmatprep.mubr.f32.mxu0 0.0
      %5141 = vmatmul.mubr.f32.gmra.mrb[0].mxu0 %v4124
      %v5142 = vpop.f32.mrb[0].mxu0
      %v5143 = vadd.f32 0.0, %v5142
      %v5144 = vpop.f32.mrb[0].mxu0
      %5145 = vmatprep.mubr.f32.mxu0 0.0
      %5146 = vmatmul.mubr.f32.gmra.mrb[0].mxu0 %v4126
      %v5147 = vpop.f32.mrb[0].mxu0
      %v5148 = vadd.f32 0.0, %v5147
      %v5149 = vpop.f32.mrb[0].mxu0
      %5150 = vmatprep.mubr.f32.mxu0 0.0
      %5151 = vmatmul.mubr.f32.gmra.mrb[0].mxu0 %v4128
      %v5152 = vpop.f32.mrb[0].mxu0
      %v5153 = vadd.f32 0.0, %v5152
      %v5154 = vpop.f32.mrb[0].mxu0
      %5155 = vmatprep.mubr.f32.mxu0 0.0
      %5156 = vmatmul.mubr.f32.gmra.mrb[0].mxu0 %v4130
      %v5157 = vpop.f32.mrb[0].mxu0
      %v5158 = vadd.f32 0.0, %v5157
      %v5159 = vpop.f32.mrb[0].mxu0
      %5160 = vmatprep.mubr.f32.mxu0 0.0
      %5161 = vmatmul.mubr.f32.gmra.mrb[0].mxu0 %v4939
      %v5162 = vpop.f32.mrb[0].mxu0
      %v5163 = vadd.f32 0.0, %v5162
      %v5164 = vpop.f32.mrb[0].mxu0
      %5165 = vmatprep.mubr.f32.mxu0 0.0
      %5166 = vmatmul.mubr.f32.gmra.mrb[0].mxu0 %v4941
      %v5167 = vpop.f32.mrb[0].mxu0
      %v5168 = vadd.f32 0.0, %v5167
      %v5169 = vpop.f32.mrb[0].mxu0
      %5170 = vdwg.mxu0
      %v5171 = vadd.f32 %v4900, %v5013
      %v5172 = vadd.f32 %v4901, %v5018
      %v5173 = vadd.f32 %v4902, %v5023
      %v5174 = vadd.f32 %v4903, %v5028
      %v5175 = vadd.f32 %v4904, %v5033
      %v5176 = vadd.f32 %v4905, %v5038
      %v5177 = vadd.f32 %v4906, %v5043
      %v5178 = vadd.f32 %v4907, %v5048
      %v5179 = vadd.f32 %v4908, %v5053
      %v5180 = vadd.f32 %v4909, %v5058
      %v5181 = vadd.f32 %v4910, %v5063
      %v5182 = vadd.f32 %v4911, %v5068
      %v5183 = vadd.f32 %v4912, %v5073
      %v5184 = vadd.f32 %v4913, %v5078
      %v5185 = vadd.f32 %v4914, %v5083
      %v5186 = vadd.f32 %v4915, %v5088
      %v5187 = vadd.f32 %v4916, %v5093
      %v5188 = vadd.f32 %v4917, %v5098
      %v5189 = vadd.f32 %v4918, %v5103
      %v5190 = vadd.f32 %v4919, %v5108
      %v5191 = vadd.f32 %v4920, %v5113
      %v5192 = vadd.f32 %v4921, %v5118
      %v5193 = vadd.f32 %v4922, %v5123
      %v5194 = vadd.f32 %v4923, %v5128
      %v5195 = vadd.f32 %v4924, %v5133
      %v5196 = vadd.f32 %v4925, %v5138
      %v5197 = vadd.f32 %v4926, %v5143
      %v5198 = vadd.f32 %v4927, %v5148
      %v5199 = vadd.f32 %v4928, %v5153
      %v5200 = vadd.f32 %v4929, %v5158
      %v5201 = vadd.f32 %v4930, %v5163
      %v5202 = vadd.f32 %v4931, %v5168
      %s5203 = scalar_lea.vmem %s3, 24
      %v5204 = vld [vmem:[%s5203] sm:$0xf]
      %v5206 = vsel %vm411, %v3268, 0
      %v5209 = vsel %vm411, %v3269, 0
      %v5212 = vsel %vm476, %v5204, 0
      %5214 = vmatprep.subr.mxu0 0.0
      %5215 = vmatpush1.msra.mxu0 %v5212
      %5216 = vmatprep.subr.mxu0 0.0
      %5217 = vmatpush1.msra.mxu0 0.0
      %5218 = vmatprep.subr.mxu0 0.0
      %5219 = vmatpush1.msra.mxu0 0.0
      %5220 = vmatprep.subr.mxu0 0.0
      %5221 = vmatpush1.msra.mxu0 0.0
      %5222 = vmatprep.subr.mxu0 0.0
      %5223 = vmatpush1.msra.mxu0 0.0
      %5224 = vmatprep.subr.mxu0 0.0
      %5225 = vmatpush1.msra.mxu0 0.0
      %5226 = vmatprep.subr.mxu0 0.0
      %5227 = vmatpush1.msra.mxu0 0.0
      %5228 = vmatprep.subr.mxu0 0.0
      %5229 = vmatpush1.msra.mxu0 0.0
      %5230 = vmatprep.subr.mxu0 0.0
      %5231 = vmatpush1.msra.mxu0 0.0
      %5232 = vmatprep.subr.mxu0 0.0
      %5233 = vmatpush1.msra.mxu0 0.0
      %5234 = vmatprep.subr.mxu0 0.0
      %5235 = vmatpush1.msra.mxu0 0.0
      %5236 = vmatprep.subr.mxu0 0.0
      %5237 = vmatpush1.msra.mxu0 0.0
      %5238 = vmatprep.subr.mxu0 0.0
      %5239 = vmatpush1.msra.mxu0 0.0
      %5240 = vmatprep.subr.mxu0 0.0
      %5241 = vmatpush1.msra.mxu0 0.0
      %5242 = vmatprep.subr.mxu0 0.0
      %5243 = vmatpush1.msra.mxu0 0.0
      %5244 = vmatprep.subr.mxu0 0.0
      %5245 = vmatpush1.msra.mxu0 0.0
      %5246 = vmatprep.subr.mxu0 0.0
      %5247 = vmatpush1.msra.mxu0 0.0
      %5248 = vmatprep.subr.mxu0 0.0
      %5249 = vmatpush1.msra.mxu0 0.0
      %5250 = vmatprep.subr.mxu0 0.0
      %5251 = vmatpush1.msra.mxu0 0.0
      %5252 = vmatprep.subr.mxu0 0.0
      %5253 = vmatpush1.msra.mxu0 0.0
      %5254 = vmatprep.subr.mxu0 0.0
      %5255 = vmatpush1.msra.mxu0 0.0
      %5256 = vmatprep.subr.mxu0 0.0
      %5257 = vmatpush1.msra.mxu0 0.0
      %5258 = vmatprep.subr.mxu0 0.0
      %5259 = vmatpush1.msra.mxu0 0.0
      %5260 = vmatprep.subr.mxu0 0.0
      %5261 = vmatpush1.msra.mxu0 0.0
      %5262 = vmatprep.subr.mxu0 0.0
      %5263 = vmatpush1.msra.mxu0 0.0
      %5264 = vmatprep.subr.mxu0 0.0
      %5265 = vmatpush1.msra.mxu0 0.0
      %5266 = vmatprep.subr.mxu0 0.0
      %5267 = vmatpush1.msra.mxu0 0.0
      %5268 = vmatprep.subr.mxu0 0.0
      %5269 = vmatpush1.msra.mxu0 0.0
      %5270 = vmatprep.subr.mxu0 0.0
      %5271 = vmatpush1.msra.mxu0 0.0
      %5272 = vmatprep.subr.mxu0 0.0
      %5273 = vmatpush1.msra.mxu0 0.0
      %5274 = vmatprep.subr.mxu0 0.0
      %5275 = vmatpush1.msra.mxu0 0.0
      %5276 = vmatprep.subr.mxu0 0.0
      %5277 = vmatpush1.msra.mxu0 0.0
      %5278 = vmatprep.mubr.f32.mxu0 0.0
      %5279 = vmatmul.mubr.f32.gmra.mrb[0].mxu0 %v3702
      %v5280 = vpop.f32.mrb[0].mxu0
      %v5281 = vadd.f32 0.0, %v5280
      %v5282 = vpop.f32.mrb[0].mxu0
      %5283 = vmatprep.mubr.f32.mxu0 0.0
      %5284 = vmatmul.mubr.f32.gmra.mrb[0].mxu0 %v3704
      %v5285 = vpop.f32.mrb[0].mxu0
      %v5286 = vadd.f32 0.0, %v5285
      %v5287 = vpop.f32.mrb[0].mxu0
      %5288 = vmatprep.mubr.f32.mxu0 0.0
      %5289 = vmatmul.mubr.f32.gmra.mrb[0].mxu0 %v3706
      %v5290 = vpop.f32.mrb[0].mxu0
      %v5291 = vadd.f32 0.0, %v5290
      %v5292 = vpop.f32.mrb[0].mxu0
      %5293 = vmatprep.mubr.f32.mxu0 0.0
      %5294 = vmatmul.mubr.f32.gmra.mrb[0].mxu0 %v3708
      %v5295 = vpop.f32.mrb[0].mxu0
      %v5296 = vadd.f32 0.0, %v5295
      %v5297 = vpop.f32.mrb[0].mxu0
      %5298 = vmatprep.mubr.f32.mxu0 0.0
      %5299 = vmatmul.mubr.f32.gmra.mrb[0].mxu0 %v3710
      %v5300 = vpop.f32.mrb[0].mxu0
      %v5301 = vadd.f32 0.0, %v5300
      %v5302 = vpop.f32.mrb[0].mxu0
      %5303 = vmatprep.mubr.f32.mxu0 0.0
      %5304 = vmatmul.mubr.f32.gmra.mrb[0].mxu0 %v3712
      %v5305 = vpop.f32.mrb[0].mxu0
      %v5306 = vadd.f32 0.0, %v5305
      %v5307 = vpop.f32.mrb[0].mxu0
      %5308 = vmatprep.mubr.f32.mxu0 0.0
      %5309 = vmatmul.mubr.f32.gmra.mrb[0].mxu0 %v3714
      %v5310 = vpop.f32.mrb[0].mxu0
      %v5311 = vadd.f32 0.0, %v5310
      %v5312 = vpop.f32.mrb[0].mxu0
      %5313 = vmatprep.mubr.f32.mxu0 0.0
      %5314 = vmatmul.mubr.f32.gmra.mrb[0].mxu0 %v3716
      %v5315 = vpop.f32.mrb[0].mxu0
      %v5316 = vadd.f32 0.0, %v5315
      %v5317 = vpop.f32.mrb[0].mxu0
      %5318 = vmatprep.mubr.f32.mxu0 0.0
      %5319 = vmatmul.mubr.f32.gmra.mrb[0].mxu0 %v3718
      %v5320 = vpop.f32.mrb[0].mxu0
      %v5321 = vadd.f32 0.0, %v5320
      %v5322 = vpop.f32.mrb[0].mxu0
      %5323 = vmatprep.mubr.f32.mxu0 0.0
      %5324 = vmatmul.mubr.f32.gmra.mrb[0].mxu0 %v3720
      %v5325 = vpop.f32.mrb[0].mxu0
      %v5326 = vadd.f32 0.0, %v5325
      %v5327 = vpop.f32.mrb[0].mxu0
      %5328 = vmatprep.mubr.f32.mxu0 0.0
      %5329 = vmatmul.mubr.f32.gmra.mrb[0].mxu0 %v3722
      %v5330 = vpop.f32.mrb[0].mxu0
      %v5331 = vadd.f32 0.0, %v5330
      %v5332 = vpop.f32.mrb[0].mxu0
      %5333 = vmatprep.mubr.f32.mxu0 0.0
      %5334 = vmatmul.mubr.f32.gmra.mrb[0].mxu0 %v3724
      %v5335 = vpop.f32.mrb[0].mxu0
      %v5336 = vadd.f32 0.0, %v5335
      %v5337 = vpop.f32.mrb[0].mxu0
      %5338 = vmatprep.mubr.f32.mxu0 0.0
      %5339 = vmatmul.mubr.f32.gmra.mrb[0].mxu0 %v3726
      %v5340 = vpop.f32.mrb[0].mxu0
      %v5341 = vadd.f32 0.0, %v5340
      %v5342 = vpop.f32.mrb[0].mxu0
      %5343 = vmatprep.mubr.f32.mxu0 0.0
      %5344 = vmatmul.mubr.f32.gmra.mrb[0].mxu0 %v3728
      %v5345 = vpop.f32.mrb[0].mxu0
      %v5346 = vadd.f32 0.0, %v5345
      %v5347 = vpop.f32.mrb[0].mxu0
      %5348 = vmatprep.mubr.f32.mxu0 0.0
      %5349 = vmatmul.mubr.f32.gmra.mrb[0].mxu0 %v3730
      %v5350 = vpop.f32.mrb[0].mxu0
      %v5351 = vadd.f32 0.0, %v5350
      %v5352 = vpop.f32.mrb[0].mxu0
      %5353 = vmatprep.mubr.f32.mxu0 0.0
      %5354 = vmatmul.mubr.f32.gmra.mrb[0].mxu0 %v3732
      %v5355 = vpop.f32.mrb[0].mxu0
      %v5356 = vadd.f32 0.0, %v5355
      %v5357 = vpop.f32.mrb[0].mxu0
      %5358 = vmatprep.mubr.f32.mxu0 0.0
      %5359 = vmatmul.mubr.f32.gmra.mrb[0].mxu0 %v3734
      %v5360 = vpop.f32.mrb[0].mxu0
      %v5361 = vadd.f32 0.0, %v5360
      %v5362 = vpop.f32.mrb[0].mxu0
      %5363 = vmatprep.mubr.f32.mxu0 0.0
      %5364 = vmatmul.mubr.f32.gmra.mrb[0].mxu0 %v3736
      %v5365 = vpop.f32.mrb[0].mxu0
      %v5366 = vadd.f32 0.0, %v5365
      %v5367 = vpop.f32.mrb[0].mxu0
      %5368 = vmatprep.mubr.f32.mxu0 0.0
      %5369 = vmatmul.mubr.f32.gmra.mrb[0].mxu0 %v3738
      %v5370 = vpop.f32.mrb[0].mxu0
      %v5371 = vadd.f32 0.0, %v5370
      %v5372 = vpop.f32.mrb[0].mxu0
      %5373 = vmatprep.mubr.f32.mxu0 0.0
      %5374 = vmatmul.mubr.f32.gmra.mrb[0].mxu0 %v3740
      %v5375 = vpop.f32.mrb[0].mxu0
      %v5376 = vadd.f32 0.0, %v5375
      %v5377 = vpop.f32.mrb[0].mxu0
      %5378 = vmatprep.mubr.f32.mxu0 0.0
      %5379 = vmatmul.mubr.f32.gmra.mrb[0].mxu0 %v3742
      %v5380 = vpop.f32.mrb[0].mxu0
      %v5381 = vadd.f32 0.0, %v5380
      %v5382 = vpop.f32.mrb[0].mxu0
      %5383 = vmatprep.mubr.f32.mxu0 0.0
      %5384 = vmatmul.mubr.f32.gmra.mrb[0].mxu0 %v3744
      %v5385 = vpop.f32.mrb[0].mxu0
      %v5386 = vadd.f32 0.0, %v5385
      %v5387 = vpop.f32.mrb[0].mxu0
      %5388 = vmatprep.mubr.f32.mxu0 0.0
      %5389 = vmatmul.mubr.f32.gmra.mrb[0].mxu0 %v3746
      %v5390 = vpop.f32.mrb[0].mxu0
      %v5391 = vadd.f32 0.0, %v5390
      %v5392 = vpop.f32.mrb[0].mxu0
      %5393 = vmatprep.mubr.f32.mxu0 0.0
      %5394 = vmatmul.mubr.f32.gmra.mrb[0].mxu0 %v3748
      %v5395 = vpop.f32.mrb[0].mxu0
      %v5396 = vadd.f32 0.0, %v5395
      %v5397 = vpop.f32.mrb[0].mxu0
      %5398 = vmatprep.mubr.f32.mxu0 0.0
      %5399 = vmatmul.mubr.f32.gmra.mrb[0].mxu0 %v3750
      %v5400 = vpop.f32.mrb[0].mxu0
      %v5401 = vadd.f32 0.0, %v5400
      %v5402 = vpop.f32.mrb[0].mxu0
      %5403 = vmatprep.mubr.f32.mxu0 0.0
      %5404 = vmatmul.mubr.f32.gmra.mrb[0].mxu0 %v3752
      %v5405 = vpop.f32.mrb[0].mxu0
      %v5406 = vadd.f32 0.0, %v5405
      %v5407 = vpop.f32.mrb[0].mxu0
      %5408 = vmatprep.mubr.f32.mxu0 0.0
      %5409 = vmatmul.mubr.f32.gmra.mrb[0].mxu0 %v3754
      %v5410 = vpop.f32.mrb[0].mxu0
      %v5411 = vadd.f32 0.0, %v5410
      %v5412 = vpop.f32.mrb[0].mxu0
      %5413 = vmatprep.mubr.f32.mxu0 0.0
      %5414 = vmatmul.mubr.f32.gmra.mrb[0].mxu0 %v3756
      %v5415 = vpop.f32.mrb[0].mxu0
      %v5416 = vadd.f32 0.0, %v5415
      %v5417 = vpop.f32.mrb[0].mxu0
      %5418 = vmatprep.mubr.f32.mxu0 0.0
      %5419 = vmatmul.mubr.f32.gmra.mrb[0].mxu0 %v4395
      %v5420 = vpop.f32.mrb[0].mxu0
      %v5421 = vadd.f32 0.0, %v5420
      %v5422 = vpop.f32.mrb[0].mxu0
      %5423 = vmatprep.mubr.f32.mxu0 0.0
      %5424 = vmatmul.mubr.f32.gmra.mrb[0].mxu0 %v4398
      %v5425 = vpop.f32.mrb[0].mxu0
      %v5426 = vadd.f32 0.0, %v5425
      %v5427 = vpop.f32.mrb[0].mxu0
      %5428 = vmatprep.mubr.f32.mxu0 0.0
      %5429 = vmatmul.mubr.f32.gmra.mrb[0].mxu0 %v5206
      %v5430 = vpop.f32.mrb[0].mxu0
      %v5431 = vadd.f32 0.0, %v5430
      %v5432 = vpop.f32.mrb[0].mxu0
      %5433 = vmatprep.mubr.f32.mxu0 0.0
      %5434 = vmatmul.mubr.f32.gmra.mrb[0].mxu0 %v5209
      %v5435 = vpop.f32.mrb[0].mxu0
      %v5436 = vadd.f32 0.0, %v5435
      %v5437 = vpop.f32.mrb[0].mxu0
      %5438 = vdwg.mxu0
      %v5439 = vadd.f32 %v5171, %v5281
      %v5440 = vadd.f32 %v5172, %v5286
      %v5441 = vadd.f32 %v5173, %v5291
      %v5442 = vadd.f32 %v5174, %v5296
      %v5443 = vadd.f32 %v5175, %v5301
      %v5444 = vadd.f32 %v5176, %v5306
      %v5445 = vadd.f32 %v5177, %v5311
      %v5446 = vadd.f32 %v5178, %v5316
      %v5447 = vadd.f32 %v5179, %v5321
      %v5448 = vadd.f32 %v5180, %v5326
      %v5449 = vadd.f32 %v5181, %v5331
      %v5450 = vadd.f32 %v5182, %v5336
      %v5451 = vadd.f32 %v5183, %v5341
      %v5452 = vadd.f32 %v5184, %v5346
      %v5453 = vadd.f32 %v5185, %v5351
      %v5454 = vadd.f32 %v5186, %v5356
      %v5455 = vadd.f32 %v5187, %v5361
      %v5456 = vadd.f32 %v5188, %v5366
      %v5457 = vadd.f32 %v5189, %v5371
      %v5458 = vadd.f32 %v5190, %v5376
      %v5459 = vadd.f32 %v5191, %v5381
      %v5460 = vadd.f32 %v5192, %v5386
      %v5461 = vadd.f32 %v5193, %v5391
      %v5462 = vadd.f32 %v5194, %v5396
      %v5463 = vadd.f32 %v5195, %v5401
      %v5464 = vadd.f32 %v5196, %v5406
      %v5465 = vadd.f32 %v5197, %v5411
      %v5466 = vadd.f32 %v5198, %v5416
      %v5467 = vadd.f32 %v5199, %v5421
      %v5468 = vadd.f32 %v5200, %v5426
      %v5469 = vadd.f32 %v5201, %v5431
      %v5470 = vadd.f32 %v5202, %v5436
      %v5472 = vrot.slane %v3268, 1
      %v5473 = vrot.slane %v3269, 1
      %v5474 = vsel %vm328, %v5472, %v5473
      %v5475 = vrot.slane %v3270, 1
      %v5476 = vsel %vm328, %v5473, %v5475
      %s5477 = scalar_lea.vmem %s3, 28
      %v5478 = vld [vmem:[%s5477] sm:$0xf]
      %v5479 = vsel %vm411, %v5474, 0
      %v5481 = vsel %vm411, %v5476, 0
      %v5484 = vsel %vm476, %v5478, 0
      %5486 = vmatprep.subr.mxu0 0.0
      %5487 = vmatpush1.msra.mxu0 %v5484
      %5488 = vmatprep.subr.mxu0 0.0
      %5489 = vmatpush1.msra.mxu0 0.0
      %5490 = vmatprep.subr.mxu0 0.0
      %5491 = vmatpush1.msra.mxu0 0.0
      %5492 = vmatprep.subr.mxu0 0.0
      %5493 = vmatpush1.msra.mxu0 0.0
      %5494 = vmatprep.subr.mxu0 0.0
      %5495 = vmatpush1.msra.mxu0 0.0
      %5496 = vmatprep.subr.mxu0 0.0
      %5497 = vmatpush1.msra.mxu0 0.0
      %5498 = vmatprep.subr.mxu0 0.0
      %5499 = vmatpush1.msra.mxu0 0.0
      %5500 = vmatprep.subr.mxu0 0.0
      %5501 = vmatpush1.msra.mxu0 0.0
      %5502 = vmatprep.subr.mxu0 0.0
      %5503 = vmatpush1.msra.mxu0 0.0
      %5504 = vmatprep.subr.mxu0 0.0
      %5505 = vmatpush1.msra.mxu0 0.0
      %5506 = vmatprep.subr.mxu0 0.0
      %5507 = vmatpush1.msra.mxu0 0.0
      %5508 = vmatprep.subr.mxu0 0.0
      %5509 = vmatpush1.msra.mxu0 0.0
      %5510 = vmatprep.subr.mxu0 0.0
      %5511 = vmatpush1.msra.mxu0 0.0
      %5512 = vmatprep.subr.mxu0 0.0
      %5513 = vmatpush1.msra.mxu0 0.0
      %5514 = vmatprep.subr.mxu0 0.0
      %5515 = vmatpush1.msra.mxu0 0.0
      %5516 = vmatprep.subr.mxu0 0.0
      %5517 = vmatpush1.msra.mxu0 0.0
      %5518 = vmatprep.subr.mxu0 0.0
      %5519 = vmatpush1.msra.mxu0 0.0
      %5520 = vmatprep.subr.mxu0 0.0
      %5521 = vmatpush1.msra.mxu0 0.0
      %5522 = vmatprep.subr.mxu0 0.0
      %5523 = vmatpush1.msra.mxu0 0.0
      %5524 = vmatprep.subr.mxu0 0.0
      %5525 = vmatpush1.msra.mxu0 0.0
      %5526 = vmatprep.subr.mxu0 0.0
      %5527 = vmatpush1.msra.mxu0 0.0
      %5528 = vmatprep.subr.mxu0 0.0
      %5529 = vmatpush1.msra.mxu0 0.0
      %5530 = vmatprep.subr.mxu0 0.0
      %5531 = vmatpush1.msra.mxu0 0.0
      %5532 = vmatprep.subr.mxu0 0.0
      %5533 = vmatpush1.msra.mxu0 0.0
      %5534 = vmatprep.subr.mxu0 0.0
      %5535 = vmatpush1.msra.mxu0 0.0
      %5536 = vmatprep.subr.mxu0 0.0
      %5537 = vmatpush1.msra.mxu0 0.0
      %5538 = vmatprep.subr.mxu0 0.0
      %5539 = vmatpush1.msra.mxu0 0.0
      %5540 = vmatprep.subr.mxu0 0.0
      %5541 = vmatpush1.msra.mxu0 0.0
      %5542 = vmatprep.subr.mxu0 0.0
      %5543 = vmatpush1.msra.mxu0 0.0
      %5544 = vmatprep.subr.mxu0 0.0
      %5545 = vmatpush1.msra.mxu0 0.0
      %5546 = vmatprep.subr.mxu0 0.0
      %5547 = vmatpush1.msra.mxu0 0.0
      %5548 = vmatprep.subr.mxu0 0.0
      %5549 = vmatpush1.msra.mxu0 0.0
      %5550 = vmatprep.mubr.f32.mxu0 0.0
      %5551 = vmatmul.mubr.f32.gmra.mrb[0].mxu0 %v3410
      %v5552 = vpop.f32.mrb[0].mxu0
      %v5553 = vadd.f32 0.0, %v5552
      %v5554 = vpop.f32.mrb[0].mxu0
      %5555 = vmatprep.mubr.f32.mxu0 0.0
      %5556 = vmatmul.mubr.f32.gmra.mrb[0].mxu0 %v3412
      %v5557 = vpop.f32.mrb[0].mxu0
      %v5558 = vadd.f32 0.0, %v5557
      %v5559 = vpop.f32.mrb[0].mxu0
      %5560 = vmatprep.mubr.f32.mxu0 0.0
      %5561 = vmatmul.mubr.f32.gmra.mrb[0].mxu0 %v3414
      %v5562 = vpop.f32.mrb[0].mxu0
      %v5563 = vadd.f32 0.0, %v5562
      %v5564 = vpop.f32.mrb[0].mxu0
      %5565 = vmatprep.mubr.f32.mxu0 0.0
      %5566 = vmatmul.mubr.f32.gmra.mrb[0].mxu0 %v3416
      %v5567 = vpop.f32.mrb[0].mxu0
      %v5568 = vadd.f32 0.0, %v5567
      %v5569 = vpop.f32.mrb[0].mxu0
      %5570 = vmatprep.mubr.f32.mxu0 0.0
      %5571 = vmatmul.mubr.f32.gmra.mrb[0].mxu0 %v3418
      %v5572 = vpop.f32.mrb[0].mxu0
      %v5573 = vadd.f32 0.0, %v5572
      %v5574 = vpop.f32.mrb[0].mxu0
      %5575 = vmatprep.mubr.f32.mxu0 0.0
      %5576 = vmatmul.mubr.f32.gmra.mrb[0].mxu0 %v3420
      %v5577 = vpop.f32.mrb[0].mxu0
      %v5578 = vadd.f32 0.0, %v5577
      %v5579 = vpop.f32.mrb[0].mxu0
      %5580 = vmatprep.mubr.f32.mxu0 0.0
      %5581 = vmatmul.mubr.f32.gmra.mrb[0].mxu0 %v3422
      %v5582 = vpop.f32.mrb[0].mxu0
      %v5583 = vadd.f32 0.0, %v5582
      %v5584 = vpop.f32.mrb[0].mxu0
      %5585 = vmatprep.mubr.f32.mxu0 0.0
      %5586 = vmatmul.mubr.f32.gmra.mrb[0].mxu0 %v3424
      %v5587 = vpop.f32.mrb[0].mxu0
      %v5588 = vadd.f32 0.0, %v5587
      %v5589 = vpop.f32.mrb[0].mxu0
      %5590 = vmatprep.mubr.f32.mxu0 0.0
      %5591 = vmatmul.mubr.f32.gmra.mrb[0].mxu0 %v3426
      %v5592 = vpop.f32.mrb[0].mxu0
      %v5593 = vadd.f32 0.0, %v5592
      %v5594 = vpop.f32.mrb[0].mxu0
      %5595 = vmatprep.mubr.f32.mxu0 0.0
      %5596 = vmatmul.mubr.f32.gmra.mrb[0].mxu0 %v3428
      %v5597 = vpop.f32.mrb[0].mxu0
      %v5598 = vadd.f32 0.0, %v5597
      %v5599 = vpop.f32.mrb[0].mxu0
      %5600 = vmatprep.mubr.f32.mxu0 0.0
      %5601 = vmatmul.mubr.f32.gmra.mrb[0].mxu0 %v3430
      %v5602 = vpop.f32.mrb[0].mxu0
      %v5603 = vadd.f32 0.0, %v5602
      %v5604 = vpop.f32.mrb[0].mxu0
      %5605 = vmatprep.mubr.f32.mxu0 0.0
      %5606 = vmatmul.mubr.f32.gmra.mrb[0].mxu0 %v3432
      %v5607 = vpop.f32.mrb[0].mxu0
      %v5608 = vadd.f32 0.0, %v5607
      %v5609 = vpop.f32.mrb[0].mxu0
      %5610 = vmatprep.mubr.f32.mxu0 0.0
      %5611 = vmatmul.mubr.f32.gmra.mrb[0].mxu0 %v3434
      %v5612 = vpop.f32.mrb[0].mxu0
      %v5613 = vadd.f32 0.0, %v5612
      %v5614 = vpop.f32.mrb[0].mxu0
      %5615 = vmatprep.mubr.f32.mxu0 0.0
      %5616 = vmatmul.mubr.f32.gmra.mrb[0].mxu0 %v3436
      %v5617 = vpop.f32.mrb[0].mxu0
      %v5618 = vadd.f32 0.0, %v5617
      %v5619 = vpop.f32.mrb[0].mxu0
      %5620 = vmatprep.mubr.f32.mxu0 0.0
      %5621 = vmatmul.mubr.f32.gmra.mrb[0].mxu0 %v3438
      %v5622 = vpop.f32.mrb[0].mxu0
      %v5623 = vadd.f32 0.0, %v5622
      %v5624 = vpop.f32.mrb[0].mxu0
      %5625 = vmatprep.mubr.f32.mxu0 0.0
      %5626 = vmatmul.mubr.f32.gmra.mrb[0].mxu0 %v3440
      %v5627 = vpop.f32.mrb[0].mxu0
      %v5628 = vadd.f32 0.0, %v5627
      %v5629 = vpop.f32.mrb[0].mxu0
      %5630 = vmatprep.mubr.f32.mxu0 0.0
      %5631 = vmatmul.mubr.f32.gmra.mrb[0].mxu0 %v3442
      %v5632 = vpop.f32.mrb[0].mxu0
      %v5633 = vadd.f32 0.0, %v5632
      %v5634 = vpop.f32.mrb[0].mxu0
      %5635 = vmatprep.mubr.f32.mxu0 0.0
      %5636 = vmatmul.mubr.f32.gmra.mrb[0].mxu0 %v3444
      %v5637 = vpop.f32.mrb[0].mxu0
      %v5638 = vadd.f32 0.0, %v5637
      %v5639 = vpop.f32.mrb[0].mxu0
      %5640 = vmatprep.mubr.f32.mxu0 0.0
      %5641 = vmatmul.mubr.f32.gmra.mrb[0].mxu0 %v3446
      %v5642 = vpop.f32.mrb[0].mxu0
      %v5643 = vadd.f32 0.0, %v5642
      %v5644 = vpop.f32.mrb[0].mxu0
      %5645 = vmatprep.mubr.f32.mxu0 0.0
      %5646 = vmatmul.mubr.f32.gmra.mrb[0].mxu0 %v3448
      %v5647 = vpop.f32.mrb[0].mxu0
      %v5648 = vadd.f32 0.0, %v5647
      %v5649 = vpop.f32.mrb[0].mxu0
      %5650 = vmatprep.mubr.f32.mxu0 0.0
      %5651 = vmatmul.mubr.f32.gmra.mrb[0].mxu0 %v3450
      %v5652 = vpop.f32.mrb[0].mxu0
      %v5653 = vadd.f32 0.0, %v5652
      %v5654 = vpop.f32.mrb[0].mxu0
      %5655 = vmatprep.mubr.f32.mxu0 0.0
      %5656 = vmatmul.mubr.f32.gmra.mrb[0].mxu0 %v3452
      %v5657 = vpop.f32.mrb[0].mxu0
      %v5658 = vadd.f32 0.0, %v5657
      %v5659 = vpop.f32.mrb[0].mxu0
      %5660 = vmatprep.mubr.f32.mxu0 0.0
      %5661 = vmatmul.mubr.f32.gmra.mrb[0].mxu0 %v3454
      %v5662 = vpop.f32.mrb[0].mxu0
      %v5663 = vadd.f32 0.0, %v5662
      %v5664 = vpop.f32.mrb[0].mxu0
      %5665 = vmatprep.mubr.f32.mxu0 0.0
      %5666 = vmatmul.mubr.f32.gmra.mrb[0].mxu0 %v3456
      %v5667 = vpop.f32.mrb[0].mxu0
      %v5668 = vadd.f32 0.0, %v5667
      %v5669 = vpop.f32.mrb[0].mxu0
      %5670 = vmatprep.mubr.f32.mxu0 0.0
      %5671 = vmatmul.mubr.f32.gmra.mrb[0].mxu0 %v3458
      %v5672 = vpop.f32.mrb[0].mxu0
      %v5673 = vadd.f32 0.0, %v5672
      %v5674 = vpop.f32.mrb[0].mxu0
      %5675 = vmatprep.mubr.f32.mxu0 0.0
      %5676 = vmatmul.mubr.f32.gmra.mrb[0].mxu0 %v3460
      %v5677 = vpop.f32.mrb[0].mxu0
      %v5678 = vadd.f32 0.0, %v5677
      %v5679 = vpop.f32.mrb[0].mxu0
      %5680 = vmatprep.mubr.f32.mxu0 0.0
      %5681 = vmatmul.mubr.f32.gmra.mrb[0].mxu0 %v3462
      %v5682 = vpop.f32.mrb[0].mxu0
      %v5683 = vadd.f32 0.0, %v5682
      %v5684 = vpop.f32.mrb[0].mxu0
      %5685 = vmatprep.mubr.f32.mxu0 0.0
      %5686 = vmatmul.mubr.f32.gmra.mrb[0].mxu0 %v3464
      %v5687 = vpop.f32.mrb[0].mxu0
      %v5688 = vadd.f32 0.0, %v5687
      %v5689 = vpop.f32.mrb[0].mxu0
      %5690 = vmatprep.mubr.f32.mxu0 0.0
      %5691 = vmatmul.mubr.f32.gmra.mrb[0].mxu0 %v4668
      %v5692 = vpop.f32.mrb[0].mxu0
      %v5693 = vadd.f32 0.0, %v5692
      %v5694 = vpop.f32.mrb[0].mxu0
      %5695 = vmatprep.mubr.f32.mxu0 0.0
      %5696 = vmatmul.mubr.f32.gmra.mrb[0].mxu0 %v4670
      %v5697 = vpop.f32.mrb[0].mxu0
      %v5698 = vadd.f32 0.0, %v5697
      %v5699 = vpop.f32.mrb[0].mxu0
      %5700 = vmatprep.mubr.f32.mxu0 0.0
      %5701 = vmatmul.mubr.f32.gmra.mrb[0].mxu0 %v5479
      %v5702 = vpop.f32.mrb[0].mxu0
      %v5703 = vadd.f32 0.0, %v5702
      %v5704 = vpop.f32.mrb[0].mxu0
      %5705 = vmatprep.mubr.f32.mxu0 0.0
      %5706 = vmatmul.mubr.f32.gmra.mrb[0].mxu0 %v5481
      %v5707 = vpop.f32.mrb[0].mxu0
      %v5708 = vadd.f32 0.0, %v5707
      %v5709 = vpop.f32.mrb[0].mxu0
      %5710 = vdwg.mxu0
      %v5711 = vadd.f32 %v5439, %v5553
      %v5712 = vadd.f32 %v5440, %v5558
      %v5713 = vadd.f32 %v5441, %v5563
      %v5714 = vadd.f32 %v5442, %v5568
      %v5715 = vadd.f32 %v5443, %v5573
      %v5716 = vadd.f32 %v5444, %v5578
      %v5717 = vadd.f32 %v5445, %v5583
      %v5718 = vadd.f32 %v5446, %v5588
      %v5719 = vadd.f32 %v5447, %v5593
      %v5720 = vadd.f32 %v5448, %v5598
      %v5721 = vadd.f32 %v5449, %v5603
      %v5722 = vadd.f32 %v5450, %v5608
      %v5723 = vadd.f32 %v5451, %v5613
      %v5724 = vadd.f32 %v5452, %v5618
      %v5725 = vadd.f32 %v5453, %v5623
      %v5726 = vadd.f32 %v5454, %v5628
      %v5727 = vadd.f32 %v5455, %v5633
      %v5728 = vadd.f32 %v5456, %v5638
      %v5729 = vadd.f32 %v5457, %v5643
      %v5730 = vadd.f32 %v5458, %v5648
      %v5731 = vadd.f32 %v5459, %v5653
      %v5732 = vadd.f32 %v5460, %v5658
      %v5733 = vadd.f32 %v5461, %v5663
      %v5734 = vadd.f32 %v5462, %v5668
      %v5735 = vadd.f32 %v5463, %v5673
      %v5736 = vadd.f32 %v5464, %v5678
      %v5737 = vadd.f32 %v5465, %v5683
      %v5738 = vadd.f32 %v5466, %v5688
      %v5739 = vadd.f32 %v5467, %v5693
      %v5740 = vadd.f32 %v5468, %v5698
      %v5741 = vadd.f32 %v5469, %v5703
      %v5742 = vadd.f32 %v5470, %v5708
      %v5743 = vrot.slane %v3268, 2
      %v5744 = vrot.slane %v3269, 2
      %v5745 = vsel %vm997, %v5743, %v5744
      %v5746 = vrot.slane %v3270, 2
      %v5747 = vsel %vm997, %v5744, %v5746
      %s5748 = scalar_lea.vmem %s3, 32
      %v5749 = vld [vmem:[%s5748] sm:$0xf]
      %v5750 = vsel %vm411, %v5745, 0
      %v5752 = vsel %vm411, %v5747, 0
      %v5755 = vsel %vm476, %v5749, 0
      %5757 = vmatprep.subr.mxu0 0.0
      %5758 = vmatpush1.msra.mxu0 %v5755
      %5759 = vmatprep.subr.mxu0 0.0
      %5760 = vmatpush1.msra.mxu0 0.0
      %5761 = vmatprep.subr.mxu0 0.0
      %5762 = vmatpush1.msra.mxu0 0.0
      %5763 = vmatprep.subr.mxu0 0.0
      %5764 = vmatpush1.msra.mxu0 0.0
      %5765 = vmatprep.subr.mxu0 0.0
      %5766 = vmatpush1.msra.mxu0 0.0
      %5767 = vmatprep.subr.mxu0 0.0
      %5768 = vmatpush1.msra.mxu0 0.0
      %5769 = vmatprep.subr.mxu0 0.0
      %5770 = vmatpush1.msra.mxu0 0.0
      %5771 = vmatprep.subr.mxu0 0.0
      %5772 = vmatpush1.msra.mxu0 0.0
      %5773 = vmatprep.subr.mxu0 0.0
      %5774 = vmatpush1.msra.mxu0 0.0
      %5775 = vmatprep.subr.mxu0 0.0
      %5776 = vmatpush1.msra.mxu0 0.0
      %5777 = vmatprep.subr.mxu0 0.0
      %5778 = vmatpush1.msra.mxu0 0.0
      %5779 = vmatprep.subr.mxu0 0.0
      %5780 = vmatpush1.msra.mxu0 0.0
      %5781 = vmatprep.subr.mxu0 0.0
      %5782 = vmatpush1.msra.mxu0 0.0
      %5783 = vmatprep.subr.mxu0 0.0
      %5784 = vmatpush1.msra.mxu0 0.0
      %5785 = vmatprep.subr.mxu0 0.0
      %5786 = vmatpush1.msra.mxu0 0.0
      %5787 = vmatprep.subr.mxu0 0.0
      %5788 = vmatpush1.msra.mxu0 0.0
      %5789 = vmatprep.subr.mxu0 0.0
      %5790 = vmatpush1.msra.mxu0 0.0
      %5791 = vmatprep.subr.mxu0 0.0
      %5792 = vmatpush1.msra.mxu0 0.0
      %5793 = vmatprep.subr.mxu0 0.0
      %5794 = vmatpush1.msra.mxu0 0.0
      %5795 = vmatprep.subr.mxu0 0.0
      %5796 = vmatpush1.msra.mxu0 0.0
      %5797 = vmatprep.subr.mxu0 0.0
      %5798 = vmatpush1.msra.mxu0 0.0
      %5799 = vmatprep.subr.mxu0 0.0
      %5800 = vmatpush1.msra.mxu0 0.0
      %5801 = vmatprep.subr.mxu0 0.0
      %5802 = vmatpush1.msra.mxu0 0.0
      %5803 = vmatprep.subr.mxu0 0.0
      %5804 = vmatpush1.msra.mxu0 0.0
      %5805 = vmatprep.subr.mxu0 0.0
      %5806 = vmatpush1.msra.mxu0 0.0
      %5807 = vmatprep.subr.mxu0 0.0
      %5808 = vmatpush1.msra.mxu0 0.0
      %5809 = vmatprep.subr.mxu0 0.0
      %5810 = vmatpush1.msra.mxu0 0.0
      %5811 = vmatprep.subr.mxu0 0.0
      %5812 = vmatpush1.msra.mxu0 0.0
      %5813 = vmatprep.subr.mxu0 0.0
      %5814 = vmatpush1.msra.mxu0 0.0
      %5815 = vmatprep.subr.mxu0 0.0
      %5816 = vmatpush1.msra.mxu0 0.0
      %5817 = vmatprep.subr.mxu0 0.0
      %5818 = vmatpush1.msra.mxu0 0.0
      %5819 = vmatprep.subr.mxu0 0.0
      %5820 = vmatpush1.msra.mxu0 0.0
      %5821 = vmatprep.mubr.f32.mxu0 0.0
      %5822 = vmatmul.mubr.f32.gmra.mrb[0].mxu0 %v4076
      %v5823 = vpop.f32.mrb[0].mxu0
      %v5824 = vadd.f32 0.0, %v5823
      %v5825 = vpop.f32.mrb[0].mxu0
      %5826 = vmatprep.mubr.f32.mxu0 0.0
      %5827 = vmatmul.mubr.f32.gmra.mrb[0].mxu0 %v4078
      %v5828 = vpop.f32.mrb[0].mxu0
      %v5829 = vadd.f32 0.0, %v5828
      %v5830 = vpop.f32.mrb[0].mxu0
      %5831 = vmatprep.mubr.f32.mxu0 0.0
      %5832 = vmatmul.mubr.f32.gmra.mrb[0].mxu0 %v4080
      %v5833 = vpop.f32.mrb[0].mxu0
      %v5834 = vadd.f32 0.0, %v5833
      %v5835 = vpop.f32.mrb[0].mxu0
      %5836 = vmatprep.mubr.f32.mxu0 0.0
      %5837 = vmatmul.mubr.f32.gmra.mrb[0].mxu0 %v4082
      %v5838 = vpop.f32.mrb[0].mxu0
      %v5839 = vadd.f32 0.0, %v5838
      %v5840 = vpop.f32.mrb[0].mxu0
      %5841 = vmatprep.mubr.f32.mxu0 0.0
      %5842 = vmatmul.mubr.f32.gmra.mrb[0].mxu0 %v4084
      %v5843 = vpop.f32.mrb[0].mxu0
      %v5844 = vadd.f32 0.0, %v5843
      %v5845 = vpop.f32.mrb[0].mxu0
      %5846 = vmatprep.mubr.f32.mxu0 0.0
      %5847 = vmatmul.mubr.f32.gmra.mrb[0].mxu0 %v4086
      %v5848 = vpop.f32.mrb[0].mxu0
      %v5849 = vadd.f32 0.0, %v5848
      %v5850 = vpop.f32.mrb[0].mxu0
      %5851 = vmatprep.mubr.f32.mxu0 0.0
      %5852 = vmatmul.mubr.f32.gmra.mrb[0].mxu0 %v4088
      %v5853 = vpop.f32.mrb[0].mxu0
      %v5854 = vadd.f32 0.0, %v5853
      %v5855 = vpop.f32.mrb[0].mxu0
      %5856 = vmatprep.mubr.f32.mxu0 0.0
      %5857 = vmatmul.mubr.f32.gmra.mrb[0].mxu0 %v4090
      %v5858 = vpop.f32.mrb[0].mxu0
      %v5859 = vadd.f32 0.0, %v5858
      %v5860 = vpop.f32.mrb[0].mxu0
      %5861 = vmatprep.mubr.f32.mxu0 0.0
      %5862 = vmatmul.mubr.f32.gmra.mrb[0].mxu0 %v4092
      %v5863 = vpop.f32.mrb[0].mxu0
      %v5864 = vadd.f32 0.0, %v5863
      %v5865 = vpop.f32.mrb[0].mxu0
      %5866 = vmatprep.mubr.f32.mxu0 0.0
      %5867 = vmatmul.mubr.f32.gmra.mrb[0].mxu0 %v4094
      %v5868 = vpop.f32.mrb[0].mxu0
      %v5869 = vadd.f32 0.0, %v5868
      %v5870 = vpop.f32.mrb[0].mxu0
      %5871 = vmatprep.mubr.f32.mxu0 0.0
      %5872 = vmatmul.mubr.f32.gmra.mrb[0].mxu0 %v4096
      %v5873 = vpop.f32.mrb[0].mxu0
      %v5874 = vadd.f32 0.0, %v5873
      %v5875 = vpop.f32.mrb[0].mxu0
      %5876 = vmatprep.mubr.f32.mxu0 0.0
      %5877 = vmatmul.mubr.f32.gmra.mrb[0].mxu0 %v4098
      %v5878 = vpop.f32.mrb[0].mxu0
      %v5879 = vadd.f32 0.0, %v5878
      %v5880 = vpop.f32.mrb[0].mxu0
      %5881 = vmatprep.mubr.f32.mxu0 0.0
      %5882 = vmatmul.mubr.f32.gmra.mrb[0].mxu0 %v4100
      %v5883 = vpop.f32.mrb[0].mxu0
      %v5884 = vadd.f32 0.0, %v5883
      %v5885 = vpop.f32.mrb[0].mxu0
      %5886 = vmatprep.mubr.f32.mxu0 0.0
      %5887 = vmatmul.mubr.f32.gmra.mrb[0].mxu0 %v4102
      %v5888 = vpop.f32.mrb[0].mxu0
      %v5889 = vadd.f32 0.0, %v5888
      %v5890 = vpop.f32.mrb[0].mxu0
      %5891 = vmatprep.mubr.f32.mxu0 0.0
      %5892 = vmatmul.mubr.f32.gmra.mrb[0].mxu0 %v4104
      %v5893 = vpop.f32.mrb[0].mxu0
      %v5894 = vadd.f32 0.0, %v5893
      %v5895 = vpop.f32.mrb[0].mxu0
      %5896 = vmatprep.mubr.f32.mxu0 0.0
      %5897 = vmatmul.mubr.f32.gmra.mrb[0].mxu0 %v4106
      %v5898 = vpop.f32.mrb[0].mxu0
      %v5899 = vadd.f32 0.0, %v5898
      %v5900 = vpop.f32.mrb[0].mxu0
      %5901 = vmatprep.mubr.f32.mxu0 0.0
      %5902 = vmatmul.mubr.f32.gmra.mrb[0].mxu0 %v4108
      %v5903 = vpop.f32.mrb[0].mxu0
      %v5904 = vadd.f32 0.0, %v5903
      %v5905 = vpop.f32.mrb[0].mxu0
      %5906 = vmatprep.mubr.f32.mxu0 0.0
      %5907 = vmatmul.mubr.f32.gmra.mrb[0].mxu0 %v4110
      %v5908 = vpop.f32.mrb[0].mxu0
      %v5909 = vadd.f32 0.0, %v5908
      %v5910 = vpop.f32.mrb[0].mxu0
      %5911 = vmatprep.mubr.f32.mxu0 0.0
      %5912 = vmatmul.mubr.f32.gmra.mrb[0].mxu0 %v4112
      %v5913 = vpop.f32.mrb[0].mxu0
      %v5914 = vadd.f32 0.0, %v5913
      %v5915 = vpop.f32.mrb[0].mxu0
      %5916 = vmatprep.mubr.f32.mxu0 0.0
      %5917 = vmatmul.mubr.f32.gmra.mrb[0].mxu0 %v4114
      %v5918 = vpop.f32.mrb[0].mxu0
      %v5919 = vadd.f32 0.0, %v5918
      %v5920 = vpop.f32.mrb[0].mxu0
      %5921 = vmatprep.mubr.f32.mxu0 0.0
      %5922 = vmatmul.mubr.f32.gmra.mrb[0].mxu0 %v4116
      %v5923 = vpop.f32.mrb[0].mxu0
      %v5924 = vadd.f32 0.0, %v5923
      %v5925 = vpop.f32.mrb[0].mxu0
      %5926 = vmatprep.mubr.f32.mxu0 0.0
      %5927 = vmatmul.mubr.f32.gmra.mrb[0].mxu0 %v4118
      %v5928 = vpop.f32.mrb[0].mxu0
      %v5929 = vadd.f32 0.0, %v5928
      %v5930 = vpop.f32.mrb[0].mxu0
      %5931 = vmatprep.mubr.f32.mxu0 0.0
      %5932 = vmatmul.mubr.f32.gmra.mrb[0].mxu0 %v4120
      %v5933 = vpop.f32.mrb[0].mxu0
      %v5934 = vadd.f32 0.0, %v5933
      %v5935 = vpop.f32.mrb[0].mxu0
      %5936 = vmatprep.mubr.f32.mxu0 0.0
      %5937 = vmatmul.mubr.f32.gmra.mrb[0].mxu0 %v4122
      %v5938 = vpop.f32.mrb[0].mxu0
      %v5939 = vadd.f32 0.0, %v5938
      %v5940 = vpop.f32.mrb[0].mxu0
      %5941 = vmatprep.mubr.f32.mxu0 0.0
      %5942 = vmatmul.mubr.f32.gmra.mrb[0].mxu0 %v4124
      %v5943 = vpop.f32.mrb[0].mxu0
      %v5944 = vadd.f32 0.0, %v5943
      %v5945 = vpop.f32.mrb[0].mxu0
      %5946 = vmatprep.mubr.f32.mxu0 0.0
      %5947 = vmatmul.mubr.f32.gmra.mrb[0].mxu0 %v4126
      %v5948 = vpop.f32.mrb[0].mxu0
      %v5949 = vadd.f32 0.0, %v5948
      %v5950 = vpop.f32.mrb[0].mxu0
      %5951 = vmatprep.mubr.f32.mxu0 0.0
      %5952 = vmatmul.mubr.f32.gmra.mrb[0].mxu0 %v4128
      %v5953 = vpop.f32.mrb[0].mxu0
      %v5954 = vadd.f32 0.0, %v5953
      %v5955 = vpop.f32.mrb[0].mxu0
      %5956 = vmatprep.mubr.f32.mxu0 0.0
      %5957 = vmatmul.mubr.f32.gmra.mrb[0].mxu0 %v4130
      %v5958 = vpop.f32.mrb[0].mxu0
      %v5959 = vadd.f32 0.0, %v5958
      %v5960 = vpop.f32.mrb[0].mxu0
      %5961 = vmatprep.mubr.f32.mxu0 0.0
      %5962 = vmatmul.mubr.f32.gmra.mrb[0].mxu0 %v4939
      %v5963 = vpop.f32.mrb[0].mxu0
      %v5964 = vadd.f32 0.0, %v5963
      %v5965 = vpop.f32.mrb[0].mxu0
      %5966 = vmatprep.mubr.f32.mxu0 0.0
      %5967 = vmatmul.mubr.f32.gmra.mrb[0].mxu0 %v4941
      %v5968 = vpop.f32.mrb[0].mxu0
      %v5969 = vadd.f32 0.0, %v5968
      %v5970 = vpop.f32.mrb[0].mxu0
      %5971 = vmatprep.mubr.f32.mxu0 0.0
      %5972 = vmatmul.mubr.f32.gmra.mrb[0].mxu0 %v5750
      %v5973 = vpop.f32.mrb[0].mxu0
      %v5974 = vadd.f32 0.0, %v5973
      %v5975 = vpop.f32.mrb[0].mxu0
      %5976 = vmatprep.mubr.f32.mxu0 0.0
      %5977 = vmatmul.mubr.f32.gmra.mrb[0].mxu0 %v5752
      %v5978 = vpop.f32.mrb[0].mxu0
      %v5979 = vadd.f32 0.0, %v5978
      %v5980 = vpop.f32.mrb[0].mxu0
      %5981 = vdwg.mxu0
      %v5982 = vadd.f32 %v5711, %v5824
      %v5983 = vadd.f32 %v5712, %v5829
      %v5984 = vadd.f32 %v5713, %v5834
      %v5985 = vadd.f32 %v5714, %v5839
      %v5986 = vadd.f32 %v5715, %v5844
      %v5987 = vadd.f32 %v5716, %v5849
      %v5988 = vadd.f32 %v5717, %v5854
      %v5989 = vadd.f32 %v5718, %v5859
      %v5990 = vadd.f32 %v5719, %v5864
      %v5991 = vadd.f32 %v5720, %v5869
      %v5992 = vadd.f32 %v5721, %v5874
      %v5993 = vadd.f32 %v5722, %v5879
      %v5994 = vadd.f32 %v5723, %v5884
      %v5995 = vadd.f32 %v5724, %v5889
      %v5996 = vadd.f32 %v5725, %v5894
      %v5997 = vadd.f32 %v5726, %v5899
      %v5998 = vadd.f32 %v5727, %v5904
      %v5999 = vadd.f32 %v5728, %v5909
      %v6000 = vadd.f32 %v5729, %v5914
      %v6001 = vadd.f32 %v5730, %v5919
      %v6002 = vadd.f32 %v5731, %v5924
      %v6003 = vadd.f32 %v5732, %v5929
      %v6004 = vadd.f32 %v5733, %v5934
      %v6005 = vadd.f32 %v5734, %v5939
      %v6006 = vadd.f32 %v5735, %v5944
      %v6007 = vadd.f32 %v5736, %v5949
      %v6008 = vadd.f32 %v5737, %v5954
      %v6009 = vadd.f32 %v5738, %v5959
      %v6010 = vadd.f32 %v5739, %v5964
      %v6011 = vadd.f32 %v5740, %v5969
      %v6012 = vadd.f32 %v5741, %v5974
      %v6013 = vadd.f32 %v5742, %v5979
      %v6014 = vld [vmem:[%s4] sm:$0x1]
      %v6016 = vlaneseq
      %v6017 = vshrl.u32 %v6016, 7
      %v6018 = vsub.s32 0, %v6017
      %v6019 = vrot.slane %v6014, %v6018
      %v6021 = vadd.f32 %v5982, %v6019
      %v6022 = vadd.f32 %v5983, %v6019
      %v6023 = vadd.f32 %v5984, %v6019
      %v6024 = vadd.f32 %v5985, %v6019
      %v6025 = vadd.f32 %v5986, %v6019
      %v6026 = vadd.f32 %v5987, %v6019
      %v6027 = vadd.f32 %v5988, %v6019
      %v6028 = vadd.f32 %v5989, %v6019
      %v6029 = vadd.f32 %v5990, %v6019
      %v6030 = vadd.f32 %v5991, %v6019
      %v6031 = vadd.f32 %v5992, %v6019
      %v6032 = vadd.f32 %v5993, %v6019
      %v6033 = vadd.f32 %v5994, %v6019
      %v6034 = vadd.f32 %v5995, %v6019
      %v6035 = vadd.f32 %v5996, %v6019
      %v6036 = vadd.f32 %v5997, %v6019
      %v6037 = vadd.f32 %v5998, %v6019
      %v6038 = vadd.f32 %v5999, %v6019
      %v6039 = vadd.f32 %v6000, %v6019
      %v6040 = vadd.f32 %v6001, %v6019
      %v6041 = vadd.f32 %v6002, %v6019
      %v6042 = vadd.f32 %v6003, %v6019
      %v6043 = vadd.f32 %v6004, %v6019
      %v6044 = vadd.f32 %v6005, %v6019
      %v6045 = vadd.f32 %v6006, %v6019
      %v6046 = vadd.f32 %v6007, %v6019
      %v6047 = vadd.f32 %v6008, %v6019
      %v6048 = vadd.f32 %v6009, %v6019
      %v6049 = vadd.f32 %v6010, %v6019
      %v6050 = vadd.f32 %v6011, %v6019
      %v6051 = vadd.f32 %v6012, %v6019
      %v6052 = vadd.f32 %v6013, %v6019
      %v6053 = vadd.f32 %v6021, %v336
      %v6054 = vadd.f32 %v6022, %v338
      %v6055 = vadd.f32 %v6023, %v341
      %v6056 = vadd.f32 %v6024, %v343
      %v6057 = vadd.f32 %v6025, %v346
      %v6058 = vadd.f32 %v6026, %v348
      %v6059 = vadd.f32 %v6027, %v351
      %v6060 = vadd.f32 %v6028, %v353
      %v6061 = vadd.f32 %v6029, %v356
      %v6062 = vadd.f32 %v6030, %v358
      %v6063 = vadd.f32 %v6031, %v361
      %v6064 = vadd.f32 %v6032, %v363
      %v6065 = vadd.f32 %v6033, %v366
      %v6066 = vadd.f32 %v6034, %v368
      %v6067 = vadd.f32 %v6035, %v371
      %v6068 = vadd.f32 %v6036, %v373
      %v6069 = vadd.f32 %v6037, %v376
      %v6070 = vadd.f32 %v6038, %v378
      %v6071 = vadd.f32 %v6039, %v381
      %v6072 = vadd.f32 %v6040, %v383
      %v6073 = vadd.f32 %v6041, %v386
      %v6074 = vadd.f32 %v6042, %v388
      %v6075 = vadd.f32 %v6043, %v391
      %v6076 = vadd.f32 %v6044, %v393
      %v6077 = vadd.f32 %v6045, %v396
      %v6078 = vadd.f32 %v6046, %v398
      %v6079 = vadd.f32 %v6047, %v401
      %v6080 = vadd.f32 %v6048, %v403
      %v6081 = vadd.f32 %v6049, %v406
      %v6082 = vadd.f32 %v6050, %v408
      %v6083 = vadd.f32 %v6051, %v1675
      %v6084 = vadd.f32 %v6052, %v1677
      %v6085 = vmax.f32 %v6053, 0.0
      %v6086 = vmax.f32 %v6054, 0.0
      %v6087 = vmax.f32 %v6055, 0.0
      %v6088 = vmax.f32 %v6056, 0.0
      %v6089 = vmax.f32 %v6057, 0.0
      %v6090 = vmax.f32 %v6058, 0.0
      %v6091 = vmax.f32 %v6059, 0.0
      %v6092 = vmax.f32 %v6060, 0.0
      %v6093 = vmax.f32 %v6061, 0.0
      %v6094 = vmax.f32 %v6062, 0.0
      %v6095 = vmax.f32 %v6063, 0.0
      %v6096 = vmax.f32 %v6064, 0.0
      %v6097 = vmax.f32 %v6065, 0.0
      %v6098 = vmax.f32 %v6066, 0.0
      %v6099 = vmax.f32 %v6067, 0.0
      %v6100 = vmax.f32 %v6068, 0.0
      %v6101 = vmax.f32 %v6069, 0.0
      %v6102 = vmax.f32 %v6070, 0.0
      %v6103 = vmax.f32 %v6071, 0.0
      %v6104 = vmax.f32 %v6072, 0.0
      %v6105 = vmax.f32 %v6073, 0.0
      %v6106 = vmax.f32 %v6074, 0.0
      %v6107 = vmax.f32 %v6075, 0.0
      %v6108 = vmax.f32 %v6076, 0.0
      %v6109 = vmax.f32 %v6077, 0.0
      %v6110 = vmax.f32 %v6078, 0.0
      %v6111 = vmax.f32 %v6079, 0.0
      %v6112 = vmax.f32 %v6080, 0.0
      %v6113 = vmax.f32 %v6081, 0.0
      %v6114 = vmax.f32 %v6082, 0.0
      %v6115 = vmax.f32 %v6083, 0.0
      %v6116 = vmax.f32 %v6084, 0.0
      %6117 = vst.msk [vmem:[%s224] sm:$0xff] %vm411, %v6085
      %6118 = vst.msk [vmem:[%s224 + $0x8] sm:$0xff] %vm411, %v6086
      %6119 = vst.msk [vmem:[%s224 + $0x10] sm:$0xff] %vm411, %v6087
      %6120 = vst.msk [vmem:[%s224 + $0x18] sm:$0xff] %vm411, %v6088
      %6121 = vst.msk [vmem:[%s224 + $0x20] sm:$0xff] %vm411, %v6089
      %6122 = vst.msk [vmem:[%s224 + $0x28] sm:$0xff] %vm411, %v6090
      %6123 = vst.msk [vmem:[%s224 + $0x30] sm:$0xff] %vm411, %v6091
      %6124 = vst.msk [vmem:[%s224 + $0x38] sm:$0xff] %vm411, %v6092
      %6125 = vst.msk [vmem:[%s224 + $0x40] sm:$0xff] %vm411, %v6093
      %6126 = vst.msk [vmem:[%s224 + $0x48] sm:$0xff] %vm411, %v6094
      %6127 = vst.msk [vmem:[%s224 + $0x50] sm:$0xff] %vm411, %v6095
      %6128 = vst.msk [vmem:[%s224 + $0x58] sm:$0xff] %vm411, %v6096
      %6129 = vst.msk [vmem:[%s224 + $0x60] sm:$0xff] %vm411, %v6097
      %6130 = vst.msk [vmem:[%s224 + $0x68] sm:$0xff] %vm411, %v6098
      %6131 = vst.msk [vmem:[%s224 + $0x70] sm:$0xff] %vm411, %v6099
      %6132 = vst.msk [vmem:[%s224 + $0x78] sm:$0xff] %vm411, %v6100
      %6133 = vst.msk [vmem:[%s224 + $0x80] sm:$0xff] %vm411, %v6101
      %6134 = vst.msk [vmem:[%s224 + $0x88] sm:$0xff] %vm411, %v6102
      %6135 = vst.msk [vmem:[%s224 + $0x90] sm:$0xff] %vm411, %v6103
      %6136 = vst.msk [vmem:[%s224 + $0x98] sm:$0xff] %vm411, %v6104
      %6137 = vst.msk [vmem:[%s224 + $0xa0] sm:$0xff] %vm411, %v6105
      %6138 = vst.msk [vmem:[%s224 + $0xa8] sm:$0xff] %vm411, %v6106
      %6139 = vst.msk [vmem:[%s224 + $0xb0] sm:$0xff] %vm411, %v6107
      %6140 = vst.msk [vmem:[%s224 + $0xb8] sm:$0xff] %vm411, %v6108
      %6141 = vst.msk [vmem:[%s224 + $0xc0] sm:$0xff] %vm411, %v6109
      %6142 = vst.msk [vmem:[%s224 + $0xc8] sm:$0xff] %vm411, %v6110
      %6143 = vst.msk [vmem:[%s224 + $0xd0] sm:$0xff] %vm411, %v6111
      %6144 = vst.msk [vmem:[%s224 + $0xd8] sm:$0xff] %vm411, %v6112
      %6145 = vst.msk [vmem:[%s224 + $0xe0] sm:$0xff] %vm411, %v6113
      %6146 = vst.msk [vmem:[%s224 + $0xe8] sm:$0xff] %vm411, %v6114
      %6147 = vst.msk [vmem:[%s224 + $0xf0] sm:$0xff] %vm411, %v6115
      %6148 = vst.msk [vmem:[%s224 + $0xf8] sm:$0xff] %vm411, %v6116
      %p6149 = scmp.lt.s32.totalorder %s16, 1
      %s6150 = scalar_select %p6149, %s16, 1
      %s6151 = smul.addr %s6150, 32
      %s6152 = smul.addr %s6151, 8
      %s6153 = scalar_lea.vmem %s5, %s6152
      // Predicated region
      $region41: #{tpu_custom_call.1} parent=39 // pred_check
        %p6154 = pneg %p144
      $region42: #{tpu_custom_call.1} parent=39 // pred_check_branch
        %6156 = sbr.rel (%p6154) target = $region44
      $region43: #{tpu_custom_call.1} parent=39 // pred_region
        _
      $region44: #{tpu_custom_call.1} parent=39 // pred_fallthru
        _
    $region40: #{tpu_custom_call.1} parent=5 // pred_fallthru
      _
    %p6157 = scmp.le.s32.totalorder 2, %s11
    // Predicated region
    $region45: #{tpu_custom_call.1} parent=5 // pred_check
      %p6158 = pneg %p6157
    $region46: #{tpu_custom_call.1} parent=5 // pred_check_branch
      %6160 = sbr.rel (%p6158) target = $region48
    $region47: #{tpu_custom_call.1} parent=5 // pred_region
      %s6161 = ssub.s32 %s11, 2
      // Predicated region
      $region49: #{tpu_custom_call.1} parent=47 // pred_check
        %p6162 = pneg %p150
      $region50: #{tpu_custom_call.1} parent=47 // pred_check_branch
        %6164 = sbr.rel (%p6162) target = $region52
      $region51: #{tpu_custom_call.1} parent=47 // pred_region
        %p6165 = scmp.lt.s32.totalorder %s17, 1
        %s6166 = scalar_select %p6165, %s17, 1
        %s6167 = smul.addr %s6166, 32
        %s6168 = smul.addr %s6167, 8
        %s6169 = scalar_lea.vmem %s5, %s6168
      $region52: #{tpu_custom_call.1} parent=47 // pred_fallthru
        _
    $region48: #{tpu_custom_call.1} parent=5 // pred_fallthru
      _
  $region6: #{tpu_custom_call.1} parent=0 // loop_footer
    %s15 = sadd.s32 1, %s11
  $region7: #{tpu_custom_call.1} parent=0 // loop_footer_branch
    %10 = sbr.rel target = $region3
  $region8: #{tpu_custom_call.1} parent=0 // loop_exit
    _

</llo_original>
